<compile_context>
chip_gen: v7x
topology: tpu7x:2x2x1
jax: 0.10.0
libtpu: 0.0.40
codegen_flags: <defaults>
</compile_context>

<pallas_src>
import functools

import jax
import jax.numpy as jnp
from jax.experimental import pallas as pl


# ----------------------- helpers traced inside the kernels -----------------------

def _layernorm(z, g, b):
    mu = jnp.mean(z, axis=-1, keepdims=True)
    var = jnp.mean((z - mu) ** 2, axis=-1, keepdims=True)
    return (z - mu) * jax.lax.rsqrt(var + jnp.float32(1e-5)) * g + b


def _embed(tok, table, pos):
    """tok: (M, 1) int32; table: (V, E); pos: (M, E).  One-hot-matmul gather + pos add."""
    m = tok.shape[0]
    v = table.shape[0]
    onehot = (jax.lax.broadcasted_iota(jnp.int32, (m, v), 1) == tok).astype(jnp.float32)
    return jnp.dot(onehot, table, preferred_element_type=jnp.float32) + pos


def _attention_context(q_all, k_all, v_all, keep, *, h, dk):
    """Multi-head attention; returns the concatenated per-head context (M, E).

    q_all: (M, E); k_all/v_all: (N, E); keep: (1, N) or (M, N) of 0/1 floats.
    The output projection (Wo) is applied OUTSIDE, once, over the whole batch.
    """
    neg = (jnp.float32(1.0) - keep) * jnp.float32(-1e10)    # hoisted out of the head loop
    inv_sqrt_dk = jnp.float32(1.0 / (dk ** 0.5))
    ctx = []
    for hi in range(h):                                     # static unrolled, h is small
        sl = slice(hi * dk, (hi + 1) * dk)
        s = jax.lax.dot_general(q_all[:, sl], k_all[:, sl],
                                (((1,), (1,)), ((), ())),
                                preferred_element_type=jnp.float32)      # (M, N)
        # exact masked_fill(mask == False, -1e10) BEFORE the 1/sqrt(dk) scale (PyTorch order)
        s = s * keep + neg
        s = s * inv_sqrt_dk
        s = s - jnp.max(s, axis=-1, keepdims=True)
        p = jnp.exp(s)
        p = p * pl.reciprocal(jnp.sum(p, axis=-1, keepdims=True))        # EUP divide
        ctx.append(jnp.dot(p, v_all[:, sl], preferred_element_type=jnp.float32))
    return jnp.concatenate(ctx, axis=-1)                    # heads contiguous -> (M, E)


def _encoder_block(x, src_keep, w, *, B, S, E, h, dk):
    """x: (B*S, E); src_keep: (B, S).  Returns (B*S, E)."""
    (wqkv, bqkv, wo, bo, ln1g, ln1b, w1, b1, w2, b2, ln2g, ln2b) = w
    qkv = jnp.dot(x, wqkv, preferred_element_type=jnp.float32) + bqkv      # (B*S, 3E)
    ctx = []
    for b in range(B):                                                     # static loop
        r = slice(b * S, (b + 1) * S)
        qkv_b = qkv[r]
        ctx.append(_attention_context(qkv_b[:, :E], qkv_b[:, E:2 * E], qkv_b[:, 2 * E:],
                                      src_keep[b:b + 1, :], h=h, dk=dk))
    ctx = jnp.concatenate(ctx, axis=0)                                     # (B*S, E)
    attn = jnp.dot(ctx, wo, preferred_element_type=jnp.float32) + bo       # single Wo matmul
    sub1 = _layernorm(attn + x, ln1g, ln1b)                                # dropout = identity
    hid = jnp.maximum(jnp.dot(sub1, w1, preferred_element_type=jnp.float32) + b1, 0.0)
    y = jnp.dot(hid, w2, preferred_element_type=jnp.float32) + b2
    return _layernorm(y + sub1, ln2g, ln2b)


def _decoder_block(t, enc, src_keep, tgt_keep, w, *, B, S, T, E, h, dk):
    """t: (B*T, E); enc: (B*S, E); src_keep: (B, S); tgt_keep: (B, T, T)."""
    (wqkv, bqkv, wo_s, bo_s, ln1g, ln1b,
     wq_c, bq_c, wkv_c, bkv_c, wo_c, bo_c, ln2g, ln2b,
     w1, b1, w2, b2, ln3g, ln3b) = w

    # masked self-attention over the target
    qkv = jnp.dot(t, wqkv, preferred_element_type=jnp.float32) + bqkv      # (B*T, 3E)
    ctx = []
    for b in range(B):
        r = slice(b * T, (b + 1) * T)
        qkv_b = qkv[r]
        ctx.append(_attention_context(qkv_b[:, :E], qkv_b[:, E:2 * E], qkv_b[:, 2 * E:],
                                      tgt_keep[b], h=h, dk=dk))
    ctx = jnp.concatenate(ctx, axis=0)
    attn = jnp.dot(ctx, wo_s, preferred_element_type=jnp.float32) + bo_s
    sub1 = _layernorm(attn + t, ln1g, ln1b)

    # cross-attention: Q from sub1, K/V from the encoder output
    q_c = jnp.dot(sub1, wq_c, preferred_element_type=jnp.float32) + bq_c   # (B*T, E)
    kv_c = jnp.dot(enc, wkv_c, preferred_element_type=jnp.float32) + bkv_c  # (B*S, 2E)
    ctx2 = []
    for b in range(B):
        rt = slice(b * T, (b + 1) * T)
        rs = slice(b * S, (b + 1) * S)
        kv_b = kv_c[rs]
        ctx2.append(_attention_context(q_c[rt], kv_b[:, :E], kv_b[:, E:],
                                       src_keep[b:b + 1, :], h=h, dk=dk))
    ctx2 = jnp.concatenate(ctx2, axis=0)
    attn2 = jnp.dot(ctx2, wo_c, preferred_element_type=jnp.float32) + bo_c
    sub2 = _layernorm(attn2 + sub1, ln2g, ln2b)

    # feed-forward
    hid = jnp.maximum(jnp.dot(sub2, w1, preferred_element_type=jnp.float32) + b1, 0.0)
    y = jnp.dot(hid, w2, preferred_element_type=jnp.float32) + b2
    return _layernorm(y + sub2, ln3g, ln3b)


# --------------------------------- Pallas kernels ---------------------------------

_N_ENC_W = 12
_N_DEC_W = 20


def _full_forward_kernel(*refs, B, S, T, E, h, dk):
    """Whole forward pass (encoder + decoder + fc) in one kernel invocation."""
    (src_tok_ref, tgt_tok_ref, src_pos_ref, tgt_pos_ref,
     src_mask_ref, tgt_mask_ref, src_tab_ref, tgt_tab_ref, *rest) = refs
    enc_w = tuple(r[...] for r in rest[:_N_ENC_W])
    dec_w = tuple(r[...] for r in rest[_N_ENC_W:_N_ENC_W + _N_DEC_W])
    fc_w = rest[_N_ENC_W + _N_DEC_W][...]
    fc_b = rest[_N_ENC_W + _N_DEC_W + 1][...]
    logits_ref = rest[_N_ENC_W + _N_DEC_W + 2]
    enc_ref = rest[_N_ENC_W + _N_DEC_W + 3]

    src_keep = src_mask_ref[...]                 # (B, S)   0/1 padding mask
    tgt_keep = tgt_mask_ref[...]                 # (B, T, T) 0/1 causal mask

    # encoder (only the last block of the stack matters -- see module semantics note)
    x = _embed(src_tok_ref[...], src_tab_ref[...], src_pos_ref[...])       # (B*S, E)
    enc = _encoder_block(x, src_keep, enc_w, B=B, S=S, E=E, h=h, dk=dk)
    enc_ref[...] = enc

    # decoder + vocab projection (lane-dense padded output)
    t = _embed(tgt_tok_ref[...], tgt_tab_ref[...], tgt_pos_ref[...])       # (B*T, E)
    dec = _decoder_block(t, enc, src_keep, tgt_keep, dec_w,
                         B=B, S=S, T=T, E=E, h=h, dk=dk)
    logits_ref[...] = jnp.dot(dec, fc_w, preferred_element_type=jnp.float32) + fc_b


def _decode_forward_kernel(*refs, B, S, T, E, h, dk):
    """Decoder-only forward when a precomputed `encoded` is supplied."""
    (tgt_tok_ref, tgt_pos_ref, enc_ref, src_mask_ref, tgt_mask_ref, tgt_tab_ref,
     *rest) = refs
    dec_w = tuple(r[...] for r in rest[:_N_DEC_W])
    fc_w = rest[_N_DEC_W][...]
    fc_b = rest[_N_DEC_W + 1][...]
    logits_ref = rest[_N_DEC_W + 2]

    t = _embed(tgt_tok_ref[...], tgt_tab_ref[...], tgt_pos_ref[...])
    dec = _decoder_block(t, enc_ref[...], src_mask_ref[...], tgt_mask_ref[...],
                         dec_w, B=B, S=S, T=T, E=E, h=h, dk=dk)
    logits_ref[...] = jnp.dot(dec, fc_w, preferred_element_type=jnp.float32) + fc_b


# --------------------------------- model wrapper ---------------------------------

_ENC_KEYS = ("wqkv", "bqkv", "wo", "bo", "ln1_g", "ln1_b",
             "w1", "b1", "w2", "b2", "ln2_g", "ln2_b")
_DEC_KEYS = ("self_wqkv", "self_bqkv", "self_wo", "self_bo", "ln1_g", "ln1_b",
             "cross_wq", "cross_bq", "cross_wkv", "cross_bkv", "cross_wo", "cross_bo",
             "ln2_g", "ln2_b", "w1", "b1", "w2", "b2", "ln3_g", "ln3_b")


def custom_transformer(prepared, src_tokens, tgt_tokens, src_mask, tgt_mask,
                       src_pos_embed, tgt_pos_embed, encoded=None, *,
                       h, edim, tgt_vocab):
    """Matches CustomTransformer.forward.  h / edim / tgt_vocab are static Python ints."""
    B, S = src_tokens.shape
    T = tgt_tokens.shape[1]
    E = edim
    assert E % h == 0
    dk = E // h
    fcp = prepared["fc"]
    Vpad = fcp["w"].shape[1]

    # compact mask layouts: PyTorch-style (B,1,1,S) padding and (B,1,T,T) causal masks
    src_keep = src_mask.astype(jnp.float32).reshape(B, S)
    tgt_keep = tgt_mask.astype(jnp.float32).reshape(B, T, T)
    src_tok = src_tokens.astype(jnp.int32).reshape(B * S, 1)
    tgt_tok = tgt_tokens.astype(jnp.int32).reshape(B * T, 1)
    src_pos = src_pos_embed.reshape(B * S, E)
    tgt_pos = tgt_pos_embed.reshape(B * T, E)

    dec_w = [prepared["decoder"][-1][k] for k in _DEC_KEYS]

    if encoded is None:
        enc_w = [prepared["encoder"][-1][k] for k in _ENC_KEYS]
        kern = functools.partial(_full_forward_kernel, B=B, S=S, T=T, E=E, h=h, dk=dk)
        logits_pad, enc_flat = pl.pallas_call(
            kern,
            out_shape=(jax.ShapeDtypeStruct((B * T, Vpad), jnp.float32),
                       jax.ShapeDtypeStruct((B * S, E), jnp.float32)),
        )(src_tok, tgt_tok, src_pos, tgt_pos, src_keep, tgt_keep,
          prepared["src_embedding"], prepared["tgt_embedding"],
          *enc_w, *dec_w, fcp["w"], fcp["b"])
        encoded_out = enc_flat.reshape(B, S, E)
    else:
        kern = functools.partial(_decode_forward_kernel, B=B, S=S, T=T, E=E, h=h, dk=dk)
        logits_pad = pl.pallas_call(
            kern,
            out_shape=jax.ShapeDtypeStruct((B * T, Vpad), jnp.float32),
        )(tgt_tok, tgt_pos, encoded.reshape(B * S, E), src_keep, tgt_keep,
          prepared["tgt_embedding"], *dec_w, fcp["w"], fcp["b"])
        encoded_out = encoded

    # tgt_vocab is a *static* Python int bound via functools.partial, so this slice is
    # legal under jit; the padded columns never leave this function.
    output = logits_pad[:, :tgt_vocab].reshape(B, T, tgt_vocab)
    return output, encoded_out


# ----------------------------- Parameter init (PyTorch layout) -----------------------------

def init_linear_params(key, din, dout):
    k1, k2 = jax.random.split(key)
    bound = 1.0 / (din ** 0.5)
    return {
        "W": jax.random.uniform(k1, (dout, din), jnp.float32, -bound, bound),
        "b": jax.random.uniform(k2, (dout,), jnp.float32, -bound, bound),
    }


def init_mha_params(key, edim):
    ks = jax.random.split(key, 4)
    return {
        "key": init_linear_params(ks[0], edim, edim),
        "query": init_linear_params(ks[1], edim, edim),
        "value": init_linear_params(ks[2], edim, edim),
        "linear": init_linear_params(ks[3], edim, edim),
    }


def init_encoder_block(key, edim, hdim):
    ks = jax.random.split(key, 3)
    return {
        "mha": init_mha_params(ks[0], edim),
        "ln1_g": jnp.ones((edim,), jnp.float32), "ln1_b": jnp.zeros((edim,), jnp.float32),
        "ln2_g": jnp.ones((edim,), jnp.float32), "ln2_b": jnp.zeros((edim,), jnp.float32),
        "fc1": init_linear_params(ks[1], edim, hdim),
        "fc2": init_linear_params(ks[2], hdim, edim),
    }


def init_decoder_block(key, edim, hdim):
    ks = jax.random.split(key, 4)
    return {
        "mha_cross": init_mha_params(ks[0], edim),
        "mha_self": init_mha_params(ks[1], edim),
        "ln1_g": jnp.ones((edim,), jnp.float32), "ln1_b": jnp.zeros((edim,), jnp.float32),
        "ln2_g": jnp.ones((edim,), jnp.float32), "ln2_b": jnp.zeros((edim,), jnp.float32),
        "ln3_g": jnp.ones((edim,), jnp.float32), "ln3_b": jnp.zeros((edim,), jnp.float32),
        "fc1": init_linear_params(ks[2], edim, hdim),
        "fc2": init_linear_params(ks[3], hdim, edim),
    }


def init_params(key, nx, edim, hdim, src_vocab, tgt_vocab):
    ks = jax.random.split(key, 4 + 2 * nx)
    return {
        "src_embedding": jax.random.normal(ks[0], (src_vocab, edim), jnp.float32),
        "tgt_embedding": jax.random.normal(ks[1], (tgt_vocab, edim), jnp.float32),
        "fc": init_linear_params(ks[2], edim, tgt_vocab),
        "encoder": [init_encoder_block(ks[4 + i], edim, hdim) for i in range(nx)],
        "decoder": [init_decoder_block(ks[4 + nx + i], edim, hdim) for i in range(nx)],
    }


# ----------------------------- one-time parameter preparation -----------------------------
# Transpose / concatenate / pad weights ONCE into kernel-friendly layouts.

def _prep_mha_self(p, edim):
    return {
        "wqkv": jnp.concatenate(
            [p["query"]["W"].T, p["key"]["W"].T, p["value"]["W"].T], axis=1),   # (E, 3E)
        "bqkv": jnp.concatenate(
            [p["query"]["b"], p["key"]["b"], p["value"]["b"]]).reshape(1, 3 * edim),
        "wo": p["linear"]["W"].T,                                               # (E, E)
        "bo": p["linear"]["b"].reshape(1, edim),
    }


def _prep_mha_cross(p, edim):
    return {
        "wq": p["query"]["W"].T,
        "bq": p["query"]["b"].reshape(1, edim),
        "wkv": jnp.concatenate([p["key"]["W"].T, p["value"]["W"].T], axis=1),   # (E, 2E)
        "bkv": jnp.concatenate([p["key"]["b"], p["value"]["b"]]).reshape(1, 2 * edim),
        "wo": p["linear"]["W"].T,
        "bo": p["linear"]["b"].reshape(1, edim),
    }


def _prep_encoder_block(bp, edim, hdim):
    mha = _prep_mha_self(bp["mha"], edim)
    return {
        "wqkv": mha["wqkv"], "bqkv": mha["bqkv"], "wo": mha["wo"], "bo": mha["bo"],
        "ln1_g": bp["ln1_g"].reshape(1, edim), "ln1_b": bp["ln1_b"].reshape(1, edim),
        "w1": bp["fc1"]["W"].T, "b1": bp["fc1"]["b"].reshape(1, hdim),
        "w2": bp["fc2"]["W"].T, "b2": bp["fc2"]["b"].reshape(1, edim),
        "ln2_g": bp["ln2_g"].reshape(1, edim), "ln2_b": bp["ln2_b"].reshape(1, edim),
    }


def _prep_decoder_block(bp, edim, hdim):
    s = _prep_mha_self(bp["mha_self"], edim)
    c = _prep_mha_cross(bp["mha_cross"], edim)
    return {
        "self_wqkv": s["wqkv"], "self_bqkv": s["bqkv"], "self_wo": s["wo"], "self_bo": s["bo"],
        "ln1_g": bp["ln1_g"].reshape(1, edim), "ln1_b": bp["ln1_b"].reshape(1, edim),
        "cross_wq": c["wq"], "cross_bq": c["bq"], "cross_wkv": c["wkv"], "cross_bkv": c["bkv"],
        "cross_wo": c["wo"], "cross_bo": c["bo"],
        "ln2_g": bp["ln2_g"].reshape(1, edim), "ln2_b": bp["ln2_b"].reshape(1, edim),
        "w1": bp["fc1"]["W"].T, "b1": bp["fc1"]["b"].reshape(1, hdim),
        "w2": bp["fc2"]["W"].T, "b2": bp["fc2"]["b"].reshape(1, edim),
        "ln3_g": bp["ln3_g"].reshape(1, edim), "ln3_b": bp["ln3_b"].reshape(1, edim),
    }


def _prep_fc(p, edim):
    V = p["W"].shape[0]
    Vpad = ((V + 127) // 128) * 128           # lane-dense output store inside the kernel
    w = jnp.zeros((edim, Vpad), jnp.float32).at[:, :V].set(p["W"].T)
    b = jnp.zeros((1, Vpad), jnp.float32).at[:, :V].set(p["b"].reshape(1, V))
    return {"w": w, "b": b}                   # NOTE: no Python ints inside the jit pytree


def prepare_params(params, edim, hdim):
    return {
        "src_embedding": params["src_embedding"],
        "tgt_embedding": params["tgt_embedding"],
        "fc": _prep_fc(params["fc"], edim),
        "encoder": [_prep_encoder_block(b, edim, hdim) for b in params["encoder"]],
        "decoder": [_prep_decoder_block(b, edim, hdim) for b in params["decoder"]],
    }


# ----------------------------- Main -----------------------------

if __name__ == "__main__":
    nx, edim, h, hdim = 2, 32, 4, 64
    dropout = 0.0                       # dropout layers are identity here
    src_vocab, tgt_vocab = 50, 60
    B, S, T = 2, 8, 8

    root = jax.random.PRNGKey(0)
    kp, k1, k2, k3, k4 = jax.random.split(root, 5)

    params = init_params(kp, nx, edim, hdim, src_vocab, tgt_vocab)
    prepared = prepare_params(params, edim, hdim)   # one-time layout prep

    src_tokens = jax.random.randint(k1, (B, S), 0, src_vocab)
    tgt_tokens = jax.random.randint(k2, (B, T), 0, tgt_vocab)
    src_pos_embed = jax.random.normal(k3, (B, S, edim), jnp.float32)
    tgt_pos_embed = jax.random.normal(k4, (B, T, edim), jnp.float32)

    # src_mask: (B,1,1,S) all-valid padding mask; tgt_mask: (B,1,T,T) causal.
    src_mask = jnp.ones((B, 1, 1, S), jnp.float32)
    tgt_mask = jnp.broadcast_to(
        jnp.tril(jnp.ones((T, T), jnp.float32))[None, None], (B, 1, T, T))

    forward = jax.jit(functools.partial(custom_transformer, h=h, edim=edim,
                                        tgt_vocab=tgt_vocab))

    # full path (encoder + decoder + fc, one fused kernel)
    output, encoded = forward(prepared, src_tokens, tgt_tokens, src_mask, tgt_mask,
                              src_pos_embed, tgt_pos_embed)
    jax.block_until_ready((output, encoded))

    assert output.shape == (B, T, tgt_vocab)
    assert encoded.shape == (B, S, edim)
    assert bool(jnp.all(jnp.isfinite(output)))

    # decoder-only reuse path (precomputed `encoded`, as in the PyTorch forward)
    output2, encoded2 = forward(prepared, src_tokens, tgt_tokens, src_mask, tgt_mask,
                                src_pos_embed, tgt_pos_embed, encoded)
    jax.block_until_ready(output2)
    assert output2.shape == (B, T, tgt_vocab)
    assert bool(jnp.allclose(output, output2, rtol=1e-5, atol=1e-5))

    print("KERNEL_OK")
</pallas_src>

<mosaic_0001>
module attributes {stable_mosaic.version = 11 : i64} {
  func.func @_full_forward_kernel(%arg0: memref<16x1xi32, #tpu.memory_space<vmem>>, %arg1: memref<16x1xi32, #tpu.memory_space<vmem>>, %arg2: memref<16x32xf32, #tpu.memory_space<vmem>>, %arg3: memref<16x32xf32, #tpu.memory_space<vmem>>, %arg4: memref<2x8xf32, #tpu.memory_space<vmem>>, %arg5: memref<2x8x8xf32, #tpu.memory_space<vmem>>, %arg6: memref<50x32xf32, #tpu.memory_space<vmem>>, %arg7: memref<60x32xf32, #tpu.memory_space<vmem>>, %arg8: memref<32x96xf32, #tpu.memory_space<vmem>>, %arg9: memref<1x96xf32, #tpu.memory_space<vmem>>, %arg10: memref<32x32xf32, #tpu.memory_space<vmem>>, %arg11: memref<1x32xf32, #tpu.memory_space<vmem>>, %arg12: memref<1x32xf32, #tpu.memory_space<vmem>>, %arg13: memref<1x32xf32, #tpu.memory_space<vmem>>, %arg14: memref<32x64xf32, #tpu.memory_space<vmem>>, %arg15: memref<1x64xf32, #tpu.memory_space<vmem>>, %arg16: memref<64x32xf32, #tpu.memory_space<vmem>>, %arg17: memref<1x32xf32, #tpu.memory_space<vmem>>, %arg18: memref<1x32xf32, #tpu.memory_space<vmem>>, %arg19: memref<1x32xf32, #tpu.memory_space<vmem>>, %arg20: memref<32x96xf32, #tpu.memory_space<vmem>>, %arg21: memref<1x96xf32, #tpu.memory_space<vmem>>, %arg22: memref<32x32xf32, #tpu.memory_space<vmem>>, %arg23: memref<1x32xf32, #tpu.memory_space<vmem>>, %arg24: memref<1x32xf32, #tpu.memory_space<vmem>>, %arg25: memref<1x32xf32, #tpu.memory_space<vmem>>, %arg26: memref<32x32xf32, #tpu.memory_space<vmem>>, %arg27: memref<1x32xf32, #tpu.memory_space<vmem>>, %arg28: memref<32x64xf32, #tpu.memory_space<vmem>>, %arg29: memref<1x64xf32, #tpu.memory_space<vmem>>, %arg30: memref<32x32xf32, #tpu.memory_space<vmem>>, %arg31: memref<1x32xf32, #tpu.memory_space<vmem>>, %arg32: memref<1x32xf32, #tpu.memory_space<vmem>>, %arg33: memref<1x32xf32, #tpu.memory_space<vmem>>, %arg34: memref<32x64xf32, #tpu.memory_space<vmem>>, %arg35: memref<1x64xf32, #tpu.memory_space<vmem>>, %arg36: memref<64x32xf32, #tpu.memory_space<vmem>>, %arg37: memref<1x32xf32, #tpu.memory_space<vmem>>, %arg38: memref<1x32xf32, #tpu.memory_space<vmem>>, %arg39: memref<1x32xf32, #tpu.memory_space<vmem>>, %arg40: memref<32x128xf32, #tpu.memory_space<vmem>>, %arg41: memref<1x128xf32, #tpu.memory_space<vmem>>, %arg42: memref<16x128xf32, #tpu.memory_space<vmem>>, %arg43: memref<16x32xf32, #tpu.memory_space<vmem>>) attributes {dimension_semantics = [], scalar_prefetch = 0 : i64, scratch_operands = 0 : i64, tpu.core_type = #tpu.core_type<tc>} {
    %c0 = arith.constant 0 : index
    %c0_0 = arith.constant 0 : index
    %0 = vector.load %arg8[%c0, %c0_0] : memref<32x96xf32, #tpu.memory_space<vmem>>, vector<32x96xf32>
    %c0_1 = arith.constant 0 : index
    %c0_2 = arith.constant 0 : index
    %1 = vector.load %arg9[%c0_1, %c0_2] : memref<1x96xf32, #tpu.memory_space<vmem>>, vector<1x96xf32>
    %c0_3 = arith.constant 0 : index
    %c0_4 = arith.constant 0 : index
    %2 = vector.load %arg10[%c0_3, %c0_4] : memref<32x32xf32, #tpu.memory_space<vmem>>, vector<32x32xf32>
    %c0_5 = arith.constant 0 : index
    %c0_6 = arith.constant 0 : index
    %3 = vector.load %arg11[%c0_5, %c0_6] : memref<1x32xf32, #tpu.memory_space<vmem>>, vector<1x32xf32>
    %c0_7 = arith.constant 0 : index
    %c0_8 = arith.constant 0 : index
    %4 = vector.load %arg12[%c0_7, %c0_8] : memref<1x32xf32, #tpu.memory_space<vmem>>, vector<1x32xf32>
    %c0_9 = arith.constant 0 : index
    %c0_10 = arith.constant 0 : index
    %5 = vector.load %arg13[%c0_9, %c0_10] : memref<1x32xf32, #tpu.memory_space<vmem>>, vector<1x32xf32>
    %c0_11 = arith.constant 0 : index
    %c0_12 = arith.constant 0 : index
    %6 = vector.load %arg14[%c0_11, %c0_12] : memref<32x64xf32, #tpu.memory_space<vmem>>, vector<32x64xf32>
    %c0_13 = arith.constant 0 : index
    %c0_14 = arith.constant 0 : index
    %7 = vector.load %arg15[%c0_13, %c0_14] : memref<1x64xf32, #tpu.memory_space<vmem>>, vector<1x64xf32>
    %c0_15 = arith.constant 0 : index
    %c0_16 = arith.constant 0 : index
    %8 = vector.load %arg16[%c0_15, %c0_16] : memref<64x32xf32, #tpu.memory_space<vmem>>, vector<64x32xf32>
    %c0_17 = arith.constant 0 : index
    %c0_18 = arith.constant 0 : index
    %9 = vector.load %arg17[%c0_17, %c0_18] : memref<1x32xf32, #tpu.memory_space<vmem>>, vector<1x32xf32>
    %c0_19 = arith.constant 0 : index
    %c0_20 = arith.constant 0 : index
    %10 = vector.load %arg18[%c0_19, %c0_20] : memref<1x32xf32, #tpu.memory_space<vmem>>, vector<1x32xf32>
    %c0_21 = arith.constant 0 : index
    %c0_22 = arith.constant 0 : index
    %11 = vector.load %arg19[%c0_21, %c0_22] : memref<1x32xf32, #tpu.memory_space<vmem>>, vector<1x32xf32>
    %c0_23 = arith.constant 0 : index
    %c0_24 = arith.constant 0 : index
    %12 = vector.load %arg20[%c0_23, %c0_24] : memref<32x96xf32, #tpu.memory_space<vmem>>, vector<32x96xf32>
    %c0_25 = arith.constant 0 : index
    %c0_26 = arith.constant 0 : index
    %13 = vector.load %arg21[%c0_25, %c0_26] : memref<1x96xf32, #tpu.memory_space<vmem>>, vector<1x96xf32>
    %c0_27 = arith.constant 0 : index
    %c0_28 = arith.constant 0 : index
    %14 = vector.load %arg22[%c0_27, %c0_28] : memref<32x32xf32, #tpu.memory_space<vmem>>, vector<32x32xf32>
    %c0_29 = arith.constant 0 : index
    %c0_30 = arith.constant 0 : index
    %15 = vector.load %arg23[%c0_29, %c0_30] : memref<1x32xf32, #tpu.memory_space<vmem>>, vector<1x32xf32>
    %c0_31 = arith.constant 0 : index
    %c0_32 = arith.constant 0 : index
    %16 = vector.load %arg24[%c0_31, %c0_32] : memref<1x32xf32, #tpu.memory_space<vmem>>, vector<1x32xf32>
    %c0_33 = arith.constant 0 : index
    %c0_34 = arith.constant 0 : index
    %17 = vector.load %arg25[%c0_33, %c0_34] : memref<1x32xf32, #tpu.memory_space<vmem>>, vector<1x32xf32>
    %c0_35 = arith.constant 0 : index
    %c0_36 = arith.constant 0 : index
    %18 = vector.load %arg26[%c0_35, %c0_36] : memref<32x32xf32, #tpu.memory_space<vmem>>, vector<32x32xf32>
    %c0_37 = arith.constant 0 : index
    %c0_38 = arith.constant 0 : index
    %19 = vector.load %arg27[%c0_37, %c0_38] : memref<1x32xf32, #tpu.memory_space<vmem>>, vector<1x32xf32>
    %c0_39 = arith.constant 0 : index
    %c0_40 = arith.constant 0 : index
    %20 = vector.load %arg28[%c0_39, %c0_40] : memref<32x64xf32, #tpu.memory_space<vmem>>, vector<32x64xf32>
    %c0_41 = arith.constant 0 : index
    %c0_42 = arith.constant 0 : index
    %21 = vector.load %arg29[%c0_41, %c0_42] : memref<1x64xf32, #tpu.memory_space<vmem>>, vector<1x64xf32>
    %c0_43 = arith.constant 0 : index
    %c0_44 = arith.constant 0 : index
    %22 = vector.load %arg30[%c0_43, %c0_44] : memref<32x32xf32, #tpu.memory_space<vmem>>, vector<32x32xf32>
    %c0_45 = arith.constant 0 : index
    %c0_46 = arith.constant 0 : index
    %23 = vector.load %arg31[%c0_45, %c0_46] : memref<1x32xf32, #tpu.memory_space<vmem>>, vector<1x32xf32>
    %c0_47 = arith.constant 0 : index
    %c0_48 = arith.constant 0 : index
    %24 = vector.load %arg32[%c0_47, %c0_48] : memref<1x32xf32, #tpu.memory_space<vmem>>, vector<1x32xf32>
    %c0_49 = arith.constant 0 : index
    %c0_50 = arith.constant 0 : index
    %25 = vector.load %arg33[%c0_49, %c0_50] : memref<1x32xf32, #tpu.memory_space<vmem>>, vector<1x32xf32>
    %c0_51 = arith.constant 0 : index
    %c0_52 = arith.constant 0 : index
    %26 = vector.load %arg34[%c0_51, %c0_52] : memref<32x64xf32, #tpu.memory_space<vmem>>, vector<32x64xf32>
    %c0_53 = arith.constant 0 : index
    %c0_54 = arith.constant 0 : index
    %27 = vector.load %arg35[%c0_53, %c0_54] : memref<1x64xf32, #tpu.memory_space<vmem>>, vector<1x64xf32>
    %c0_55 = arith.constant 0 : index
    %c0_56 = arith.constant 0 : index
    %28 = vector.load %arg36[%c0_55, %c0_56] : memref<64x32xf32, #tpu.memory_space<vmem>>, vector<64x32xf32>
    %c0_57 = arith.constant 0 : index
    %c0_58 = arith.constant 0 : index
    %29 = vector.load %arg37[%c0_57, %c0_58] : memref<1x32xf32, #tpu.memory_space<vmem>>, vector<1x32xf32>
    %c0_59 = arith.constant 0 : index
    %c0_60 = arith.constant 0 : index
    %30 = vector.load %arg38[%c0_59, %c0_60] : memref<1x32xf32, #tpu.memory_space<vmem>>, vector<1x32xf32>
    %c0_61 = arith.constant 0 : index
    %c0_62 = arith.constant 0 : index
    %31 = vector.load %arg39[%c0_61, %c0_62] : memref<1x32xf32, #tpu.memory_space<vmem>>, vector<1x32xf32>
    %c0_63 = arith.constant 0 : index
    %c0_64 = arith.constant 0 : index
    %32 = vector.load %arg40[%c0_63, %c0_64] : memref<32x128xf32, #tpu.memory_space<vmem>>, vector<32x128xf32>
    %c0_65 = arith.constant 0 : index
    %c0_66 = arith.constant 0 : index
    %33 = vector.load %arg41[%c0_65, %c0_66] : memref<1x128xf32, #tpu.memory_space<vmem>>, vector<1x128xf32>
    %c0_67 = arith.constant 0 : index
    %c0_68 = arith.constant 0 : index
    %34 = vector.load %arg4[%c0_67, %c0_68] : memref<2x8xf32, #tpu.memory_space<vmem>>, vector<2x8xf32>
    %c0_69 = arith.constant 0 : index
    %c0_70 = arith.constant 0 : index
    %c0_71 = arith.constant 0 : index
    %35 = vector.load %arg5[%c0_69, %c0_70, %c0_71] : memref<2x8x8xf32, #tpu.memory_space<vmem>>, vector<2x8x8xf32>
    %c0_72 = arith.constant 0 : index
    %c0_73 = arith.constant 0 : index
    %36 = vector.load %arg0[%c0_72, %c0_73] : memref<16x1xi32, #tpu.memory_space<vmem>>, vector<16x1xi32>
    %c0_74 = arith.constant 0 : index
    %c0_75 = arith.constant 0 : index
    %37 = vector.load %arg6[%c0_74, %c0_75] : memref<50x32xf32, #tpu.memory_space<vmem>>, vector<50x32xf32>
    %c0_76 = arith.constant 0 : index
    %c0_77 = arith.constant 0 : index
    %38 = vector.load %arg2[%c0_76, %c0_77] : memref<16x32xf32, #tpu.memory_space<vmem>>, vector<16x32xf32>
    %39 = tpu.iota {dimensions = array<i32: 1>} : vector<16x50xi32>
    %40 = vector.broadcast %36 : vector<16x1xi32> to vector<16x50xi32>
    %41 = arith.cmpi eq, %39, %40 : vector<16x50xi32>
    %42 = arith.extui %41 : vector<16x50xi1> to vector<16x50xi32>
    %43 = arith.sitofp %42 : vector<16x50xi32> to vector<16x50xf32>
    %cst = arith.constant dense<0.000000e+00> : vector<16x32xf32>
    %44 = tpu.matmul %43, %37, %cst {dimension_numbers = #tpu.dot_dimension_numbers<[1], [0], [0], [1], [0, 0, 1, 1], [], []>} : vector<16x50xf32>, vector<50x32xf32>, vector<16x32xf32> -> vector<16x32xf32>
    %45 = arith.addf %44, %38 : vector<16x32xf32>
    %cst_78 = arith.constant dense<0.000000e+00> : vector<16x96xf32>
    %46 = tpu.matmul %45, %0, %cst_78 {dimension_numbers = #tpu.dot_dimension_numbers<[1], [0], [0], [1], [0, 0, 1, 1], [], []>} : vector<16x32xf32>, vector<32x96xf32>, vector<16x96xf32> -> vector<16x96xf32>
    %47 = vector.broadcast %1 : vector<1x96xf32> to vector<16x96xf32>
    %48 = arith.addf %46, %47 : vector<16x96xf32>
    %49 = vector.extract_strided_slice %48 {offsets = [0, 0], sizes = [8, 96], strides = [1, 1]} : vector<16x96xf32> to vector<8x96xf32>
    %50 = vector.extract_strided_slice %49 {offsets = [0, 0], sizes = [8, 32], strides = [1, 1]} : vector<8x96xf32> to vector<8x32xf32>
    %51 = vector.extract_strided_slice %49 {offsets = [0, 32], sizes = [8, 32], strides = [1, 1]} : vector<8x96xf32> to vector<8x32xf32>
    %52 = vector.extract_strided_slice %49 {offsets = [0, 64], sizes = [8, 32], strides = [1, 1]} : vector<8x96xf32> to vector<8x32xf32>
    %53 = vector.extract_strided_slice %34 {offsets = [0, 0], sizes = [1, 8], strides = [1, 1]} : vector<2x8xf32> to vector<1x8xf32>
    %cst_79 = arith.constant 1.000000e+00 : f32
    %54 = vector.broadcast %cst_79 : f32 to vector<1x8xf32>
    %55 = arith.subf %54, %53 : vector<1x8xf32>
    %cst_80 = arith.constant -1.000000e+10 : f32
    %56 = vector.broadcast %cst_80 : f32 to vector<1x8xf32>
    %57 = arith.mulf %55, %56 : vector<1x8xf32>
    %58 = vector.extract_strided_slice %50 {offsets = [0, 0], sizes = [8, 8], strides = [1, 1]} : vector<8x32xf32> to vector<8x8xf32>
    %59 = vector.extract_strided_slice %51 {offsets = [0, 0], sizes = [8, 8], strides = [1, 1]} : vector<8x32xf32> to vector<8x8xf32>
    %cst_81 = arith.constant dense<0.000000e+00> : vector<8x8xf32>
    %60 = tpu.matmul %58, %59, %cst_81 {dimension_numbers = #tpu.dot_dimension_numbers<[1], [1], [0], [0], [0, 0, 1, 0], [], []>} : vector<8x8xf32>, vector<8x8xf32>, vector<8x8xf32> -> vector<8x8xf32>
    %61 = vector.broadcast %53 : vector<1x8xf32> to vector<8x8xf32>
    %62 = arith.mulf %60, %61 : vector<8x8xf32>
    %63 = vector.broadcast %57 : vector<1x8xf32> to vector<8x8xf32>
    %64 = arith.addf %62, %63 : vector<8x8xf32>
    %cst_82 = arith.constant 0.353553385 : f32
    %65 = vector.broadcast %cst_82 : f32 to vector<8x8xf32>
    %66 = arith.mulf %64, %65 : vector<8x8xf32>
    %cst_83 = arith.constant dense<0xFF800000> : vector<8xf32>
    %67 = vector.multi_reduction <maximumf>, %66, %cst_83 [1] : vector<8x8xf32> to vector<8xf32>
    %68 = vector.shape_cast %67 : vector<8xf32> to vector<8x1xf32>
    %69 = vector.broadcast %68 : vector<8x1xf32> to vector<8x8xf32>
    %70 = arith.subf %66, %69 : vector<8x8xf32>
    %71 = math.exp %70 : vector<8x8xf32>
    %cst_84 = arith.constant dense<0.000000e+00> : vector<8xf32>
    %72 = vector.multi_reduction <add>, %71, %cst_84 [1] : vector<8x8xf32> to vector<8xf32>
    %73 = vector.shape_cast %72 : vector<8xf32> to vector<8x1xf32>
    %74 = tpu.reciprocal %73 : vector<8x1xf32> -> vector<8x1xf32>
    %75 = vector.broadcast %74 : vector<8x1xf32> to vector<8x8xf32>
    %76 = arith.mulf %71, %75 : vector<8x8xf32>
    %77 = vector.extract_strided_slice %52 {offsets = [0, 0], sizes = [8, 8], strides = [1, 1]} : vector<8x32xf32> to vector<8x8xf32>
    %cst_85 = arith.constant dense<0.000000e+00> : vector<8x8xf32>
    %78 = tpu.matmul %76, %77, %cst_85 {dimension_numbers = #tpu.dot_dimension_numbers<[1], [0], [0], [1], [0, 0, 1, 1], [], []>} : vector<8x8xf32>, vector<8x8xf32>, vector<8x8xf32> -> vector<8x8xf32>
    %79 = vector.extract_strided_slice %50 {offsets = [0, 8], sizes = [8, 8], strides = [1, 1]} : vector<8x32xf32> to vector<8x8xf32>
    %80 = vector.extract_strided_slice %51 {offsets = [0, 8], sizes = [8, 8], strides = [1, 1]} : vector<8x32xf32> to vector<8x8xf32>
    %cst_86 = arith.constant dense<0.000000e+00> : vector<8x8xf32>
    %81 = tpu.matmul %79, %80, %cst_86 {dimension_numbers = #tpu.dot_dimension_numbers<[1], [1], [0], [0], [0, 0, 1, 0], [], []>} : vector<8x8xf32>, vector<8x8xf32>, vector<8x8xf32> -> vector<8x8xf32>
    %82 = vector.broadcast %53 : vector<1x8xf32> to vector<8x8xf32>
    %83 = arith.mulf %81, %82 : vector<8x8xf32>
    %84 = vector.broadcast %57 : vector<1x8xf32> to vector<8x8xf32>
    %85 = arith.addf %83, %84 : vector<8x8xf32>
    %cst_87 = arith.constant 0.353553385 : f32
    %86 = vector.broadcast %cst_87 : f32 to vector<8x8xf32>
    %87 = arith.mulf %85, %86 : vector<8x8xf32>
    %cst_88 = arith.constant dense<0xFF800000> : vector<8xf32>
    %88 = vector.multi_reduction <maximumf>, %87, %cst_88 [1] : vector<8x8xf32> to vector<8xf32>
    %89 = vector.shape_cast %88 : vector<8xf32> to vector<8x1xf32>
    %90 = vector.broadcast %89 : vector<8x1xf32> to vector<8x8xf32>
    %91 = arith.subf %87, %90 : vector<8x8xf32>
    %92 = math.exp %91 : vector<8x8xf32>
    %cst_89 = arith.constant dense<0.000000e+00> : vector<8xf32>
    %93 = vector.multi_reduction <add>, %92, %cst_89 [1] : vector<8x8xf32> to vector<8xf32>
    %94 = vector.shape_cast %93 : vector<8xf32> to vector<8x1xf32>
    %95 = tpu.reciprocal %94 : vector<8x1xf32> -> vector<8x1xf32>
    %96 = vector.broadcast %95 : vector<8x1xf32> to vector<8x8xf32>
    %97 = arith.mulf %92, %96 : vector<8x8xf32>
    %98 = vector.extract_strided_slice %52 {offsets = [0, 8], sizes = [8, 8], strides = [1, 1]} : vector<8x32xf32> to vector<8x8xf32>
    %cst_90 = arith.constant dense<0.000000e+00> : vector<8x8xf32>
    %99 = tpu.matmul %97, %98, %cst_90 {dimension_numbers = #tpu.dot_dimension_numbers<[1], [0], [0], [1], [0, 0, 1, 1], [], []>} : vector<8x8xf32>, vector<8x8xf32>, vector<8x8xf32> -> vector<8x8xf32>
    %100 = vector.extract_strided_slice %50 {offsets = [0, 16], sizes = [8, 8], strides = [1, 1]} : vector<8x32xf32> to vector<8x8xf32>
    %101 = vector.extract_strided_slice %51 {offsets = [0, 16], sizes = [8, 8], strides = [1, 1]} : vector<8x32xf32> to vector<8x8xf32>
    %cst_91 = arith.constant dense<0.000000e+00> : vector<8x8xf32>
    %102 = tpu.matmul %100, %101, %cst_91 {dimension_numbers = #tpu.dot_dimension_numbers<[1], [1], [0], [0], [0, 0, 1, 0], [], []>} : vector<8x8xf32>, vector<8x8xf32>, vector<8x8xf32> -> vector<8x8xf32>
    %103 = vector.broadcast %53 : vector<1x8xf32> to vector<8x8xf32>
    %104 = arith.mulf %102, %103 : vector<8x8xf32>
    %105 = vector.broadcast %57 : vector<1x8xf32> to vector<8x8xf32>
    %106 = arith.addf %104, %105 : vector<8x8xf32>
    %cst_92 = arith.constant 0.353553385 : f32
    %107 = vector.broadcast %cst_92 : f32 to vector<8x8xf32>
    %108 = arith.mulf %106, %107 : vector<8x8xf32>
    %cst_93 = arith.constant dense<0xFF800000> : vector<8xf32>
    %109 = vector.multi_reduction <maximumf>, %108, %cst_93 [1] : vector<8x8xf32> to vector<8xf32>
    %110 = vector.shape_cast %109 : vector<8xf32> to vector<8x1xf32>
    %111 = vector.broadcast %110 : vector<8x1xf32> to vector<8x8xf32>
    %112 = arith.subf %108, %111 : vector<8x8xf32>
    %113 = math.exp %112 : vector<8x8xf32>
    %cst_94 = arith.constant dense<0.000000e+00> : vector<8xf32>
    %114 = vector.multi_reduction <add>, %113, %cst_94 [1] : vector<8x8xf32> to vector<8xf32>
    %115 = vector.shape_cast %114 : vector<8xf32> to vector<8x1xf32>
    %116 = tpu.reciprocal %115 : vector<8x1xf32> -> vector<8x1xf32>
    %117 = vector.broadcast %116 : vector<8x1xf32> to vector<8x8xf32>
    %118 = arith.mulf %113, %117 : vector<8x8xf32>
    %119 = vector.extract_strided_slice %52 {offsets = [0, 16], sizes = [8, 8], strides = [1, 1]} : vector<8x32xf32> to vector<8x8xf32>
    %cst_95 = arith.constant dense<0.000000e+00> : vector<8x8xf32>
    %120 = tpu.matmul %118, %119, %cst_95 {dimension_numbers = #tpu.dot_dimension_numbers<[1], [0], [0], [1], [0, 0, 1, 1], [], []>} : vector<8x8xf32>, vector<8x8xf32>, vector<8x8xf32> -> vector<8x8xf32>
    %121 = vector.extract_strided_slice %50 {offsets = [0, 24], sizes = [8, 8], strides = [1, 1]} : vector<8x32xf32> to vector<8x8xf32>
    %122 = vector.extract_strided_slice %51 {offsets = [0, 24], sizes = [8, 8], strides = [1, 1]} : vector<8x32xf32> to vector<8x8xf32>
    %cst_96 = arith.constant dense<0.000000e+00> : vector<8x8xf32>
    %123 = tpu.matmul %121, %122, %cst_96 {dimension_numbers = #tpu.dot_dimension_numbers<[1], [1], [0], [0], [0, 0, 1, 0], [], []>} : vector<8x8xf32>, vector<8x8xf32>, vector<8x8xf32> -> vector<8x8xf32>
    %124 = vector.broadcast %53 : vector<1x8xf32> to vector<8x8xf32>
    %125 = arith.mulf %123, %124 : vector<8x8xf32>
    %126 = vector.broadcast %57 : vector<1x8xf32> to vector<8x8xf32>
    %127 = arith.addf %125, %126 : vector<8x8xf32>
    %cst_97 = arith.constant 0.353553385 : f32
    %128 = vector.broadcast %cst_97 : f32 to vector<8x8xf32>
    %129 = arith.mulf %127, %128 : vector<8x8xf32>
    %cst_98 = arith.constant dense<0xFF800000> : vector<8xf32>
    %130 = vector.multi_reduction <maximumf>, %129, %cst_98 [1] : vector<8x8xf32> to vector<8xf32>
    %131 = vector.shape_cast %130 : vector<8xf32> to vector<8x1xf32>
    %132 = vector.broadcast %131 : vector<8x1xf32> to vector<8x8xf32>
    %133 = arith.subf %129, %132 : vector<8x8xf32>
    %134 = math.exp %133 : vector<8x8xf32>
    %cst_99 = arith.constant dense<0.000000e+00> : vector<8xf32>
    %135 = vector.multi_reduction <add>, %134, %cst_99 [1] : vector<8x8xf32> to vector<8xf32>
    %136 = vector.shape_cast %135 : vector<8xf32> to vector<8x1xf32>
    %137 = tpu.reciprocal %136 : vector<8x1xf32> -> vector<8x1xf32>
    %138 = vector.broadcast %137 : vector<8x1xf32> to vector<8x8xf32>
    %139 = arith.mulf %134, %138 : vector<8x8xf32>
    %140 = vector.extract_strided_slice %52 {offsets = [0, 24], sizes = [8, 8], strides = [1, 1]} : vector<8x32xf32> to vector<8x8xf32>
    %cst_100 = arith.constant dense<0.000000e+00> : vector<8x8xf32>
    %141 = tpu.matmul %139, %140, %cst_100 {dimension_numbers = #tpu.dot_dimension_numbers<[1], [0], [0], [1], [0, 0, 1, 1], [], []>} : vector<8x8xf32>, vector<8x8xf32>, vector<8x8xf32> -> vector<8x8xf32>
    %142 = tpu.concatenate %78, %99, %120, %141 in 1 : vector<8x8xf32>, vector<8x8xf32>, vector<8x8xf32>, vector<8x8xf32> -> vector<8x32xf32>
    %143 = vector.extract_strided_slice %48 {offsets = [8, 0], sizes = [8, 96], strides = [1, 1]} : vector<16x96xf32> to vector<8x96xf32>
    %144 = vector.extract_strided_slice %143 {offsets = [0, 0], sizes = [8, 32], strides = [1, 1]} : vector<8x96xf32> to vector<8x32xf32>
    %145 = vector.extract_strided_slice %143 {offsets = [0, 32], sizes = [8, 32], strides = [1, 1]} : vector<8x96xf32> to vector<8x32xf32>
    %146 = vector.extract_strided_slice %143 {offsets = [0, 64], sizes = [8, 32], strides = [1, 1]} : vector<8x96xf32> to vector<8x32xf32>
    %147 = vector.extract_strided_slice %34 {offsets = [1, 0], sizes = [1, 8], strides = [1, 1]} : vector<2x8xf32> to vector<1x8xf32>
    %cst_101 = arith.constant 1.000000e+00 : f32
    %148 = vector.broadcast %cst_101 : f32 to vector<1x8xf32>
    %149 = arith.subf %148, %147 : vector<1x8xf32>
    %cst_102 = arith.constant -1.000000e+10 : f32
    %150 = vector.broadcast %cst_102 : f32 to vector<1x8xf32>
    %151 = arith.mulf %149, %150 : vector<1x8xf32>
    %152 = vector.extract_strided_slice %144 {offsets = [0, 0], sizes = [8, 8], strides = [1, 1]} : vector<8x32xf32> to vector<8x8xf32>
    %153 = vector.extract_strided_slice %145 {offsets = [0, 0], sizes = [8, 8], strides = [1, 1]} : vector<8x32xf32> to vector<8x8xf32>
    %cst_103 = arith.constant dense<0.000000e+00> : vector<8x8xf32>
    %154 = tpu.matmul %152, %153, %cst_103 {dimension_numbers = #tpu.dot_dimension_numbers<[1], [1], [0], [0], [0, 0, 1, 0], [], []>} : vector<8x8xf32>, vector<8x8xf32>, vector<8x8xf32> -> vector<8x8xf32>
    %155 = vector.broadcast %147 : vector<1x8xf32> to vector<8x8xf32>
    %156 = arith.mulf %154, %155 : vector<8x8xf32>
    %157 = vector.broadcast %151 : vector<1x8xf32> to vector<8x8xf32>
    %158 = arith.addf %156, %157 : vector<8x8xf32>
    %cst_104 = arith.constant 0.353553385 : f32
    %159 = vector.broadcast %cst_104 : f32 to vector<8x8xf32>
    %160 = arith.mulf %158, %159 : vector<8x8xf32>
    %cst_105 = arith.constant dense<0xFF800000> : vector<8xf32>
    %161 = vector.multi_reduction <maximumf>, %160, %cst_105 [1] : vector<8x8xf32> to vector<8xf32>
    %162 = vector.shape_cast %161 : vector<8xf32> to vector<8x1xf32>
    %163 = vector.broadcast %162 : vector<8x1xf32> to vector<8x8xf32>
    %164 = arith.subf %160, %163 : vector<8x8xf32>
    %165 = math.exp %164 : vector<8x8xf32>
    %cst_106 = arith.constant dense<0.000000e+00> : vector<8xf32>
    %166 = vector.multi_reduction <add>, %165, %cst_106 [1] : vector<8x8xf32> to vector<8xf32>
    %167 = vector.shape_cast %166 : vector<8xf32> to vector<8x1xf32>
    %168 = tpu.reciprocal %167 : vector<8x1xf32> -> vector<8x1xf32>
    %169 = vector.broadcast %168 : vector<8x1xf32> to vector<8x8xf32>
    %170 = arith.mulf %165, %169 : vector<8x8xf32>
    %171 = vector.extract_strided_slice %146 {offsets = [0, 0], sizes = [8, 8], strides = [1, 1]} : vector<8x32xf32> to vector<8x8xf32>
    %cst_107 = arith.constant dense<0.000000e+00> : vector<8x8xf32>
    %172 = tpu.matmul %170, %171, %cst_107 {dimension_numbers = #tpu.dot_dimension_numbers<[1], [0], [0], [1], [0, 0, 1, 1], [], []>} : vector<8x8xf32>, vector<8x8xf32>, vector<8x8xf32> -> vector<8x8xf32>
    %173 = vector.extract_strided_slice %144 {offsets = [0, 8], sizes = [8, 8], strides = [1, 1]} : vector<8x32xf32> to vector<8x8xf32>
    %174 = vector.extract_strided_slice %145 {offsets = [0, 8], sizes = [8, 8], strides = [1, 1]} : vector<8x32xf32> to vector<8x8xf32>
    %cst_108 = arith.constant dense<0.000000e+00> : vector<8x8xf32>
    %175 = tpu.matmul %173, %174, %cst_108 {dimension_numbers = #tpu.dot_dimension_numbers<[1], [1], [0], [0], [0, 0, 1, 0], [], []>} : vector<8x8xf32>, vector<8x8xf32>, vector<8x8xf32> -> vector<8x8xf32>
    %176 = vector.broadcast %147 : vector<1x8xf32> to vector<8x8xf32>
    %177 = arith.mulf %175, %176 : vector<8x8xf32>
    %178 = vector.broadcast %151 : vector<1x8xf32> to vector<8x8xf32>
    %179 = arith.addf %177, %178 : vector<8x8xf32>
    %cst_109 = arith.constant 0.353553385 : f32
    %180 = vector.broadcast %cst_109 : f32 to vector<8x8xf32>
    %181 = arith.mulf %179, %180 : vector<8x8xf32>
    %cst_110 = arith.constant dense<0xFF800000> : vector<8xf32>
    %182 = vector.multi_reduction <maximumf>, %181, %cst_110 [1] : vector<8x8xf32> to vector<8xf32>
    %183 = vector.shape_cast %182 : vector<8xf32> to vector<8x1xf32>
    %184 = vector.broadcast %183 : vector<8x1xf32> to vector<8x8xf32>
    %185 = arith.subf %181, %184 : vector<8x8xf32>
    %186 = math.exp %185 : vector<8x8xf32>
    %cst_111 = arith.constant dense<0.000000e+00> : vector<8xf32>
    %187 = vector.multi_reduction <add>, %186, %cst_111 [1] : vector<8x8xf32> to vector<8xf32>
    %188 = vector.shape_cast %187 : vector<8xf32> to vector<8x1xf32>
    %189 = tpu.reciprocal %188 : vector<8x1xf32> -> vector<8x1xf32>
    %190 = vector.broadcast %189 : vector<8x1xf32> to vector<8x8xf32>
    %191 = arith.mulf %186, %190 : vector<8x8xf32>
    %192 = vector.extract_strided_slice %146 {offsets = [0, 8], sizes = [8, 8], strides = [1, 1]} : vector<8x32xf32> to vector<8x8xf32>
    %cst_112 = arith.constant dense<0.000000e+00> : vector<8x8xf32>
    %193 = tpu.matmul %191, %192, %cst_112 {dimension_numbers = #tpu.dot_dimension_numbers<[1], [0], [0], [1], [0, 0, 1, 1], [], []>} : vector<8x8xf32>, vector<8x8xf32>, vector<8x8xf32> -> vector<8x8xf32>
    %194 = vector.extract_strided_slice %144 {offsets = [0, 16], sizes = [8, 8], strides = [1, 1]} : vector<8x32xf32> to vector<8x8xf32>
    %195 = vector.extract_strided_slice %145 {offsets = [0, 16], sizes = [8, 8], strides = [1, 1]} : vector<8x32xf32> to vector<8x8xf32>
    %cst_113 = arith.constant dense<0.000000e+00> : vector<8x8xf32>
    %196 = tpu.matmul %194, %195, %cst_113 {dimension_numbers = #tpu.dot_dimension_numbers<[1], [1], [0], [0], [0, 0, 1, 0], [], []>} : vector<8x8xf32>, vector<8x8xf32>, vector<8x8xf32> -> vector<8x8xf32>
    %197 = vector.broadcast %147 : vector<1x8xf32> to vector<8x8xf32>
    %198 = arith.mulf %196, %197 : vector<8x8xf32>
    %199 = vector.broadcast %151 : vector<1x8xf32> to vector<8x8xf32>
    %200 = arith.addf %198, %199 : vector<8x8xf32>
    %cst_114 = arith.constant 0.353553385 : f32
    %201 = vector.broadcast %cst_114 : f32 to vector<8x8xf32>
    %202 = arith.mulf %200, %201 : vector<8x8xf32>
    %cst_115 = arith.constant dense<0xFF800000> : vector<8xf32>
    %203 = vector.multi_reduction <maximumf>, %202, %cst_115 [1] : vector<8x8xf32> to vector<8xf32>
    %204 = vector.shape_cast %203 : vector<8xf32> to vector<8x1xf32>
    %205 = vector.broadcast %204 : vector<8x1xf32> to vector<8x8xf32>
    %206 = arith.subf %202, %205 : vector<8x8xf32>
    %207 = math.exp %206 : vector<8x8xf32>
    %cst_116 = arith.constant dense<0.000000e+00> : vector<8xf32>
    %208 = vector.multi_reduction <add>, %207, %cst_116 [1] : vector<8x8xf32> to vector<8xf32>
    %209 = vector.shape_cast %208 : vector<8xf32> to vector<8x1xf32>
    %210 = tpu.reciprocal %209 : vector<8x1xf32> -> vector<8x1xf32>
    %211 = vector.broadcast %210 : vector<8x1xf32> to vector<8x8xf32>
    %212 = arith.mulf %207, %211 : vector<8x8xf32>
    %213 = vector.extract_strided_slice %146 {offsets = [0, 16], sizes = [8, 8], strides = [1, 1]} : vector<8x32xf32> to vector<8x8xf32>
    %cst_117 = arith.constant dense<0.000000e+00> : vector<8x8xf32>
    %214 = tpu.matmul %212, %213, %cst_117 {dimension_numbers = #tpu.dot_dimension_numbers<[1], [0], [0], [1], [0, 0, 1, 1], [], []>} : vector<8x8xf32>, vector<8x8xf32>, vector<8x8xf32> -> vector<8x8xf32>
    %215 = vector.extract_strided_slice %144 {offsets = [0, 24], sizes = [8, 8], strides = [1, 1]} : vector<8x32xf32> to vector<8x8xf32>
    %216 = vector.extract_strided_slice %145 {offsets = [0, 24], sizes = [8, 8], strides = [1, 1]} : vector<8x32xf32> to vector<8x8xf32>
    %cst_118 = arith.constant dense<0.000000e+00> : vector<8x8xf32>
    %217 = tpu.matmul %215, %216, %cst_118 {dimension_numbers = #tpu.dot_dimension_numbers<[1], [1], [0], [0], [0, 0, 1, 0], [], []>} : vector<8x8xf32>, vector<8x8xf32>, vector<8x8xf32> -> vector<8x8xf32>
    %218 = vector.broadcast %147 : vector<1x8xf32> to vector<8x8xf32>
    %219 = arith.mulf %217, %218 : vector<8x8xf32>
    %220 = vector.broadcast %151 : vector<1x8xf32> to vector<8x8xf32>
    %221 = arith.addf %219, %220 : vector<8x8xf32>
    %cst_119 = arith.constant 0.353553385 : f32
    %222 = vector.broadcast %cst_119 : f32 to vector<8x8xf32>
    %223 = arith.mulf %221, %222 : vector<8x8xf32>
    %cst_120 = arith.constant dense<0xFF800000> : vector<8xf32>
    %224 = vector.multi_reduction <maximumf>, %223, %cst_120 [1] : vector<8x8xf32> to vector<8xf32>
    %225 = vector.shape_cast %224 : vector<8xf32> to vector<8x1xf32>
    %226 = vector.broadcast %225 : vector<8x1xf32> to vector<8x8xf32>
    %227 = arith.subf %223, %226 : vector<8x8xf32>
    %228 = math.exp %227 : vector<8x8xf32>
    %cst_121 = arith.constant dense<0.000000e+00> : vector<8xf32>
    %229 = vector.multi_reduction <add>, %228, %cst_121 [1] : vector<8x8xf32> to vector<8xf32>
    %230 = vector.shape_cast %229 : vector<8xf32> to vector<8x1xf32>
    %231 = tpu.reciprocal %230 : vector<8x1xf32> -> vector<8x1xf32>
    %232 = vector.broadcast %231 : vector<8x1xf32> to vector<8x8xf32>
    %233 = arith.mulf %228, %232 : vector<8x8xf32>
    %234 = vector.extract_strided_slice %146 {offsets = [0, 24], sizes = [8, 8], strides = [1, 1]} : vector<8x32xf32> to vector<8x8xf32>
    %cst_122 = arith.constant dense<0.000000e+00> : vector<8x8xf32>
    %235 = tpu.matmul %233, %234, %cst_122 {dimension_numbers = #tpu.dot_dimension_numbers<[1], [0], [0], [1], [0, 0, 1, 1], [], []>} : vector<8x8xf32>, vector<8x8xf32>, vector<8x8xf32> -> vector<8x8xf32>
    %236 = tpu.concatenate %172, %193, %214, %235 in 1 : vector<8x8xf32>, vector<8x8xf32>, vector<8x8xf32>, vector<8x8xf32> -> vector<8x32xf32>
    %237 = tpu.concatenate %142, %236 in 0 : vector<8x32xf32>, vector<8x32xf32> -> vector<16x32xf32>
    %cst_123 = arith.constant dense<0.000000e+00> : vector<16x32xf32>
    %238 = tpu.matmul %237, %2, %cst_123 {dimension_numbers = #tpu.dot_dimension_numbers<[1], [0], [0], [1], [0, 0, 1, 1], [], []>} : vector<16x32xf32>, vector<32x32xf32>, vector<16x32xf32> -> vector<16x32xf32>
    %239 = vector.broadcast %3 : vector<1x32xf32> to vector<16x32xf32>
    %240 = arith.addf %238, %239 : vector<16x32xf32>
    %241 = arith.addf %240, %45 : vector<16x32xf32>
    %cst_124 = arith.constant dense<0.000000e+00> : vector<16xf32>
    %242 = vector.multi_reduction <add>, %241, %cst_124 [1] : vector<16x32xf32> to vector<16xf32>
    %243 = vector.shape_cast %242 : vector<16xf32> to vector<16x1xf32>
    %cst_125 = arith.constant 3.200000e+01 : f32
    %244 = vector.broadcast %cst_125 : f32 to vector<16x1xf32>
    %245 = arith.divf %243, %244 : vector<16x1xf32>
    %246 = vector.broadcast %245 : vector<16x1xf32> to vector<16x32xf32>
    %247 = arith.subf %241, %246 : vector<16x32xf32>
    %248 = arith.mulf %247, %247 : vector<16x32xf32>
    %cst_126 = arith.constant dense<0.000000e+00> : vector<16xf32>
    %249 = vector.multi_reduction <add>, %248, %cst_126 [1] : vector<16x32xf32> to vector<16xf32>
    %250 = vector.shape_cast %249 : vector<16xf32> to vector<16x1xf32>
    %cst_127 = arith.constant 3.200000e+01 : f32
    %251 = vector.broadcast %cst_127 : f32 to vector<16x1xf32>
    %252 = arith.divf %250, %251 : vector<16x1xf32>
    %253 = vector.broadcast %245 : vector<16x1xf32> to vector<16x32xf32>
    %254 = arith.subf %241, %253 : vector<16x32xf32>
    %cst_128 = arith.constant 9.99999974E-6 : f32
    %255 = vector.broadcast %cst_128 : f32 to vector<16x1xf32>
    %256 = arith.addf %252, %255 : vector<16x1xf32>
    %257 = math.rsqrt %256 : vector<16x1xf32>
    %258 = vector.broadcast %257 : vector<16x1xf32> to vector<16x32xf32>
    %259 = arith.mulf %254, %258 : vector<16x32xf32>
    %260 = vector.broadcast %4 : vector<1x32xf32> to vector<16x32xf32>
    %261 = arith.mulf %259, %260 : vector<16x32xf32>
    %262 = vector.broadcast %5 : vector<1x32xf32> to vector<16x32xf32>
    %263 = arith.addf %261, %262 : vector<16x32xf32>
    %cst_129 = arith.constant dense<0.000000e+00> : vector<16x64xf32>
    %264 = tpu.matmul %263, %6, %cst_129 {dimension_numbers = #tpu.dot_dimension_numbers<[1], [0], [0], [1], [0, 0, 1, 1], [], []>} : vector<16x32xf32>, vector<32x64xf32>, vector<16x64xf32> -> vector<16x64xf32>
    %265 = vector.broadcast %7 : vector<1x64xf32> to vector<16x64xf32>
    %266 = arith.addf %264, %265 : vector<16x64xf32>
    %cst_130 = arith.constant 0.000000e+00 : f32
    %267 = vector.broadcast %cst_130 : f32 to vector<16x64xf32>
    %268 = arith.maximumf %266, %267 : vector<16x64xf32>
    %cst_131 = arith.constant dense<0.000000e+00> : vector<16x32xf32>
    %269 = tpu.matmul %268, %8, %cst_131 {dimension_numbers = #tpu.dot_dimension_numbers<[1], [0], [0], [1], [0, 0, 1, 1], [], []>} : vector<16x64xf32>, vector<64x32xf32>, vector<16x32xf32> -> vector<16x32xf32>
    %270 = vector.broadcast %9 : vector<1x32xf32> to vector<16x32xf32>
    %271 = arith.addf %269, %270 : vector<16x32xf32>
    %272 = arith.addf %271, %263 : vector<16x32xf32>
    %cst_132 = arith.constant dense<0.000000e+00> : vector<16xf32>
    %273 = vector.multi_reduction <add>, %272, %cst_132 [1] : vector<16x32xf32> to vector<16xf32>
    %274 = vector.shape_cast %273 : vector<16xf32> to vector<16x1xf32>
    %cst_133 = arith.constant 3.200000e+01 : f32
    %275 = vector.broadcast %cst_133 : f32 to vector<16x1xf32>
    %276 = arith.divf %274, %275 : vector<16x1xf32>
    %277 = vector.broadcast %276 : vector<16x1xf32> to vector<16x32xf32>
    %278 = arith.subf %272, %277 : vector<16x32xf32>
    %279 = arith.mulf %278, %278 : vector<16x32xf32>
    %cst_134 = arith.constant dense<0.000000e+00> : vector<16xf32>
    %280 = vector.multi_reduction <add>, %279, %cst_134 [1] : vector<16x32xf32> to vector<16xf32>
    %281 = vector.shape_cast %280 : vector<16xf32> to vector<16x1xf32>
    %cst_135 = arith.constant 3.200000e+01 : f32
    %282 = vector.broadcast %cst_135 : f32 to vector<16x1xf32>
    %283 = arith.divf %281, %282 : vector<16x1xf32>
    %284 = vector.broadcast %276 : vector<16x1xf32> to vector<16x32xf32>
    %285 = arith.subf %272, %284 : vector<16x32xf32>
    %cst_136 = arith.constant 9.99999974E-6 : f32
    %286 = vector.broadcast %cst_136 : f32 to vector<16x1xf32>
    %287 = arith.addf %283, %286 : vector<16x1xf32>
    %288 = math.rsqrt %287 : vector<16x1xf32>
    %289 = vector.broadcast %288 : vector<16x1xf32> to vector<16x32xf32>
    %290 = arith.mulf %285, %289 : vector<16x32xf32>
    %291 = vector.broadcast %10 : vector<1x32xf32> to vector<16x32xf32>
    %292 = arith.mulf %290, %291 : vector<16x32xf32>
    %293 = vector.broadcast %11 : vector<1x32xf32> to vector<16x32xf32>
    %294 = arith.addf %292, %293 : vector<16x32xf32>
    %c0_137 = arith.constant 0 : index
    %c0_138 = arith.constant 0 : index
    %295 = vector.load %arg43[%c0_137, %c0_138] : memref<16x32xf32, #tpu.memory_space<vmem>>, vector<16x32xf32>
    tpu.vector_store %arg43[%c0_137, %c0_138], %294 {strides = array<i32>} : memref<16x32xf32, #tpu.memory_space<vmem>>, vector<16x32xf32>,
    %c0_139 = arith.constant 0 : index
    %c0_140 = arith.constant 0 : index
    %296 = vector.load %arg1[%c0_139, %c0_140] : memref<16x1xi32, #tpu.memory_space<vmem>>, vector<16x1xi32>
    %c0_141 = arith.constant 0 : index
    %c0_142 = arith.constant 0 : index
    %297 = vector.load %arg7[%c0_141, %c0_142] : memref<60x32xf32, #tpu.memory_space<vmem>>, vector<60x32xf32>
    %c0_143 = arith.constant 0 : index
    %c0_144 = arith.constant 0 : index
    %298 = vector.load %arg3[%c0_143, %c0_144] : memref<16x32xf32, #tpu.memory_space<vmem>>, vector<16x32xf32>
    %299 = tpu.iota {dimensions = array<i32: 1>} : vector<16x60xi32>
    %300 = vector.broadcast %296 : vector<16x1xi32> to vector<16x60xi32>
    %301 = arith.cmpi eq, %299, %300 : vector<16x60xi32>
    %302 = arith.extui %301 : vector<16x60xi1> to vector<16x60xi32>
    %303 = arith.sitofp %302 : vector<16x60xi32> to vector<16x60xf32>
    %cst_145 = arith.constant dense<0.000000e+00> : vector<16x32xf32>
    %304 = tpu.matmul %303, %297, %cst_145 {dimension_numbers = #tpu.dot_dimension_numbers<[1], [0], [0], [1], [0, 0, 1, 1], [], []>} : vector<16x60xf32>, vector<60x32xf32>, vector<16x32xf32> -> vector<16x32xf32>
    %305 = arith.addf %304, %298 : vector<16x32xf32>
    %cst_146 = arith.constant dense<0.000000e+00> : vector<16x96xf32>
    %306 = tpu.matmul %305, %12, %cst_146 {dimension_numbers = #tpu.dot_dimension_numbers<[1], [0], [0], [1], [0, 0, 1, 1], [], []>} : vector<16x32xf32>, vector<32x96xf32>, vector<16x96xf32> -> vector<16x96xf32>
    %307 = vector.broadcast %13 : vector<1x96xf32> to vector<16x96xf32>
    %308 = arith.addf %306, %307 : vector<16x96xf32>
    %309 = vector.extract_strided_slice %308 {offsets = [0, 0], sizes = [8, 96], strides = [1, 1]} : vector<16x96xf32> to vector<8x96xf32>
    %310 = vector.extract_strided_slice %309 {offsets = [0, 0], sizes = [8, 32], strides = [1, 1]} : vector<8x96xf32> to vector<8x32xf32>
    %311 = vector.extract_strided_slice %309 {offsets = [0, 32], sizes = [8, 32], strides = [1, 1]} : vector<8x96xf32> to vector<8x32xf32>
    %312 = vector.extract_strided_slice %309 {offsets = [0, 64], sizes = [8, 32], strides = [1, 1]} : vector<8x96xf32> to vector<8x32xf32>
    %313 = vector.extract_strided_slice %35 {offsets = [0, 0, 0], sizes = [1, 8, 8], strides = [1, 1, 1]} : vector<2x8x8xf32> to vector<1x8x8xf32>
    %314 = vector.shape_cast %313 : vector<1x8x8xf32> to vector<8x8xf32>
    %cst_147 = arith.constant 1.000000e+00 : f32
    %315 = vector.broadcast %cst_147 : f32 to vector<8x8xf32>
    %316 = arith.subf %315, %314 : vector<8x8xf32>
    %cst_148 = arith.constant -1.000000e+10 : f32
    %317 = vector.broadcast %cst_148 : f32 to vector<8x8xf32>
    %318 = arith.mulf %316, %317 : vector<8x8xf32>
    %319 = vector.extract_strided_slice %310 {offsets = [0, 0], sizes = [8, 8], strides = [1, 1]} : vector<8x32xf32> to vector<8x8xf32>
    %320 = vector.extract_strided_slice %311 {offsets = [0, 0], sizes = [8, 8], strides = [1, 1]} : vector<8x32xf32> to vector<8x8xf32>
    %cst_149 = arith.constant dense<0.000000e+00> : vector<8x8xf32>
    %321 = tpu.matmul %319, %320, %cst_149 {dimension_numbers = #tpu.dot_dimension_numbers<[1], [1], [0], [0], [0, 0, 1, 0], [], []>} : vector<8x8xf32>, vector<8x8xf32>, vector<8x8xf32> -> vector<8x8xf32>
    %322 = arith.mulf %321, %314 : vector<8x8xf32>
    %323 = arith.addf %322, %318 : vector<8x8xf32>
    %cst_150 = arith.constant 0.353553385 : f32
    %324 = vector.broadcast %cst_150 : f32 to vector<8x8xf32>
    %325 = arith.mulf %323, %324 : vector<8x8xf32>
    %cst_151 = arith.constant dense<0xFF800000> : vector<8xf32>
    %326 = vector.multi_reduction <maximumf>, %325, %cst_151 [1] : vector<8x8xf32> to vector<8xf32>
    %327 = vector.shape_cast %326 : vector<8xf32> to vector<8x1xf32>
    %328 = vector.broadcast %327 : vector<8x1xf32> to vector<8x8xf32>
    %329 = arith.subf %325, %328 : vector<8x8xf32>
    %330 = math.exp %329 : vector<8x8xf32>
    %cst_152 = arith.constant dense<0.000000e+00> : vector<8xf32>
    %331 = vector.multi_reduction <add>, %330, %cst_152 [1] : vector<8x8xf32> to vector<8xf32>
    %332 = vector.shape_cast %331 : vector<8xf32> to vector<8x1xf32>
    %333 = tpu.reciprocal %332 : vector<8x1xf32> -> vector<8x1xf32>
    %334 = vector.broadcast %333 : vector<8x1xf32> to vector<8x8xf32>
    %335 = arith.mulf %330, %334 : vector<8x8xf32>
    %336 = vector.extract_strided_slice %312 {offsets = [0, 0], sizes = [8, 8], strides = [1, 1]} : vector<8x32xf32> to vector<8x8xf32>
    %cst_153 = arith.constant dense<0.000000e+00> : vector<8x8xf32>
    %337 = tpu.matmul %335, %336, %cst_153 {dimension_numbers = #tpu.dot_dimension_numbers<[1], [0], [0], [1], [0, 0, 1, 1], [], []>} : vector<8x8xf32>, vector<8x8xf32>, vector<8x8xf32> -> vector<8x8xf32>
    %338 = vector.extract_strided_slice %310 {offsets = [0, 8], sizes = [8, 8], strides = [1, 1]} : vector<8x32xf32> to vector<8x8xf32>
    %339 = vector.extract_strided_slice %311 {offsets = [0, 8], sizes = [8, 8], strides = [1, 1]} : vector<8x32xf32> to vector<8x8xf32>
    %cst_154 = arith.constant dense<0.000000e+00> : vector<8x8xf32>
    %340 = tpu.matmul %338, %339, %cst_154 {dimension_numbers = #tpu.dot_dimension_numbers<[1], [1], [0], [0], [0, 0, 1, 0], [], []>} : vector<8x8xf32>, vector<8x8xf32>, vector<8x8xf32> -> vector<8x8xf32>
    %341 = arith.mulf %340, %314 : vector<8x8xf32>
    %342 = arith.addf %341, %318 : vector<8x8xf32>
    %cst_155 = arith.constant 0.353553385 : f32
    %343 = vector.broadcast %cst_155 : f32 to vector<8x8xf32>
    %344 = arith.mulf %342, %343 : vector<8x8xf32>
    %cst_156 = arith.constant dense<0xFF800000> : vector<8xf32>
    %345 = vector.multi_reduction <maximumf>, %344, %cst_156 [1] : vector<8x8xf32> to vector<8xf32>
    %346 = vector.shape_cast %345 : vector<8xf32> to vector<8x1xf32>
    %347 = vector.broadcast %346 : vector<8x1xf32> to vector<8x8xf32>
    %348 = arith.subf %344, %347 : vector<8x8xf32>
    %349 = math.exp %348 : vector<8x8xf32>
    %cst_157 = arith.constant dense<0.000000e+00> : vector<8xf32>
    %350 = vector.multi_reduction <add>, %349, %cst_157 [1] : vector<8x8xf32> to vector<8xf32>
    %351 = vector.shape_cast %350 : vector<8xf32> to vector<8x1xf32>
    %352 = tpu.reciprocal %351 : vector<8x1xf32> -> vector<8x1xf32>
    %353 = vector.broadcast %352 : vector<8x1xf32> to vector<8x8xf32>
    %354 = arith.mulf %349, %353 : vector<8x8xf32>
    %355 = vector.extract_strided_slice %312 {offsets = [0, 8], sizes = [8, 8], strides = [1, 1]} : vector<8x32xf32> to vector<8x8xf32>
    %cst_158 = arith.constant dense<0.000000e+00> : vector<8x8xf32>
    %356 = tpu.matmul %354, %355, %cst_158 {dimension_numbers = #tpu.dot_dimension_numbers<[1], [0], [0], [1], [0, 0, 1, 1], [], []>} : vector<8x8xf32>, vector<8x8xf32>, vector<8x8xf32> -> vector<8x8xf32>
    %357 = vector.extract_strided_slice %310 {offsets = [0, 16], sizes = [8, 8], strides = [1, 1]} : vector<8x32xf32> to vector<8x8xf32>
    %358 = vector.extract_strided_slice %311 {offsets = [0, 16], sizes = [8, 8], strides = [1, 1]} : vector<8x32xf32> to vector<8x8xf32>
    %cst_159 = arith.constant dense<0.000000e+00> : vector<8x8xf32>
    %359 = tpu.matmul %357, %358, %cst_159 {dimension_numbers = #tpu.dot_dimension_numbers<[1], [1], [0], [0], [0, 0, 1, 0], [], []>} : vector<8x8xf32>, vector<8x8xf32>, vector<8x8xf32> -> vector<8x8xf32>
    %360 = arith.mulf %359, %314 : vector<8x8xf32>
    %361 = arith.addf %360, %318 : vector<8x8xf32>
    %cst_160 = arith.constant 0.353553385 : f32
    %362 = vector.broadcast %cst_160 : f32 to vector<8x8xf32>
    %363 = arith.mulf %361, %362 : vector<8x8xf32>
    %cst_161 = arith.constant dense<0xFF800000> : vector<8xf32>
    %364 = vector.multi_reduction <maximumf>, %363, %cst_161 [1] : vector<8x8xf32> to vector<8xf32>
    %365 = vector.shape_cast %364 : vector<8xf32> to vector<8x1xf32>
    %366 = vector.broadcast %365 : vector<8x1xf32> to vector<8x8xf32>
    %367 = arith.subf %363, %366 : vector<8x8xf32>
    %368 = math.exp %367 : vector<8x8xf32>
    %cst_162 = arith.constant dense<0.000000e+00> : vector<8xf32>
    %369 = vector.multi_reduction <add>, %368, %cst_162 [1] : vector<8x8xf32> to vector<8xf32>
    %370 = vector.shape_cast %369 : vector<8xf32> to vector<8x1xf32>
    %371 = tpu.reciprocal %370 : vector<8x1xf32> -> vector<8x1xf32>
    %372 = vector.broadcast %371 : vector<8x1xf32> to vector<8x8xf32>
    %373 = arith.mulf %368, %372 : vector<8x8xf32>
    %374 = vector.extract_strided_slice %312 {offsets = [0, 16], sizes = [8, 8], strides = [1, 1]} : vector<8x32xf32> to vector<8x8xf32>
    %cst_163 = arith.constant dense<0.000000e+00> : vector<8x8xf32>
    %375 = tpu.matmul %373, %374, %cst_163 {dimension_numbers = #tpu.dot_dimension_numbers<[1], [0], [0], [1], [0, 0, 1, 1], [], []>} : vector<8x8xf32>, vector<8x8xf32>, vector<8x8xf32> -> vector<8x8xf32>
    %376 = vector.extract_strided_slice %310 {offsets = [0, 24], sizes = [8, 8], strides = [1, 1]} : vector<8x32xf32> to vector<8x8xf32>
    %377 = vector.extract_strided_slice %311 {offsets = [0, 24], sizes = [8, 8], strides = [1, 1]} : vector<8x32xf32> to vector<8x8xf32>
    %cst_164 = arith.constant dense<0.000000e+00> : vector<8x8xf32>
    %378 = tpu.matmul %376, %377, %cst_164 {dimension_numbers = #tpu.dot_dimension_numbers<[1], [1], [0], [0], [0, 0, 1, 0], [], []>} : vector<8x8xf32>, vector<8x8xf32>, vector<8x8xf32> -> vector<8x8xf32>
    %379 = arith.mulf %378, %314 : vector<8x8xf32>
    %380 = arith.addf %379, %318 : vector<8x8xf32>
    %cst_165 = arith.constant 0.353553385 : f32
    %381 = vector.broadcast %cst_165 : f32 to vector<8x8xf32>
    %382 = arith.mulf %380, %381 : vector<8x8xf32>
    %cst_166 = arith.constant dense<0xFF800000> : vector<8xf32>
    %383 = vector.multi_reduction <maximumf>, %382, %cst_166 [1] : vector<8x8xf32> to vector<8xf32>
    %384 = vector.shape_cast %383 : vector<8xf32> to vector<8x1xf32>
    %385 = vector.broadcast %384 : vector<8x1xf32> to vector<8x8xf32>
    %386 = arith.subf %382, %385 : vector<8x8xf32>
    %387 = math.exp %386 : vector<8x8xf32>
    %cst_167 = arith.constant dense<0.000000e+00> : vector<8xf32>
    %388 = vector.multi_reduction <add>, %387, %cst_167 [1] : vector<8x8xf32> to vector<8xf32>
    %389 = vector.shape_cast %388 : vector<8xf32> to vector<8x1xf32>
    %390 = tpu.reciprocal %389 : vector<8x1xf32> -> vector<8x1xf32>
    %391 = vector.broadcast %390 : vector<8x1xf32> to vector<8x8xf32>
    %392 = arith.mulf %387, %391 : vector<8x8xf32>
    %393 = vector.extract_strided_slice %312 {offsets = [0, 24], sizes = [8, 8], strides = [1, 1]} : vector<8x32xf32> to vector<8x8xf32>
    %cst_168 = arith.constant dense<0.000000e+00> : vector<8x8xf32>
    %394 = tpu.matmul %392, %393, %cst_168 {dimension_numbers = #tpu.dot_dimension_numbers<[1], [0], [0], [1], [0, 0, 1, 1], [], []>} : vector<8x8xf32>, vector<8x8xf32>, vector<8x8xf32> -> vector<8x8xf32>
    %395 = tpu.concatenate %337, %356, %375, %394 in 1 : vector<8x8xf32>, vector<8x8xf32>, vector<8x8xf32>, vector<8x8xf32> -> vector<8x32xf32>
    %396 = vector.extract_strided_slice %308 {offsets = [8, 0], sizes = [8, 96], strides = [1, 1]} : vector<16x96xf32> to vector<8x96xf32>
    %397 = vector.extract_strided_slice %396 {offsets = [0, 0], sizes = [8, 32], strides = [1, 1]} : vector<8x96xf32> to vector<8x32xf32>
    %398 = vector.extract_strided_slice %396 {offsets = [0, 32], sizes = [8, 32], strides = [1, 1]} : vector<8x96xf32> to vector<8x32xf32>
    %399 = vector.extract_strided_slice %396 {offsets = [0, 64], sizes = [8, 32], strides = [1, 1]} : vector<8x96xf32> to vector<8x32xf32>
    %400 = vector.extract_strided_slice %35 {offsets = [1, 0, 0], sizes = [1, 8, 8], strides = [1, 1, 1]} : vector<2x8x8xf32> to vector<1x8x8xf32>
    %401 = vector.shape_cast %400 : vector<1x8x8xf32> to vector<8x8xf32>
    %cst_169 = arith.constant 1.000000e+00 : f32
    %402 = vector.broadcast %cst_169 : f32 to vector<8x8xf32>
    %403 = arith.subf %402, %401 : vector<8x8xf32>
    %cst_170 = arith.constant -1.000000e+10 : f32
    %404 = vector.broadcast %cst_170 : f32 to vector<8x8xf32>
    %405 = arith.mulf %403, %404 : vector<8x8xf32>
    %406 = vector.extract_strided_slice %397 {offsets = [0, 0], sizes = [8, 8], strides = [1, 1]} : vector<8x32xf32> to vector<8x8xf32>
    %407 = vector.extract_strided_slice %398 {offsets = [0, 0], sizes = [8, 8], strides = [1, 1]} : vector<8x32xf32> to vector<8x8xf32>
    %cst_171 = arith.constant dense<0.000000e+00> : vector<8x8xf32>
    %408 = tpu.matmul %406, %407, %cst_171 {dimension_numbers = #tpu.dot_dimension_numbers<[1], [1], [0], [0], [0, 0, 1, 0], [], []>} : vector<8x8xf32>, vector<8x8xf32>, vector<8x8xf32> -> vector<8x8xf32>
    %409 = arith.mulf %408, %401 : vector<8x8xf32>
    %410 = arith.addf %409, %405 : vector<8x8xf32>
    %cst_172 = arith.constant 0.353553385 : f32
    %411 = vector.broadcast %cst_172 : f32 to vector<8x8xf32>
    %412 = arith.mulf %410, %411 : vector<8x8xf32>
    %cst_173 = arith.constant dense<0xFF800000> : vector<8xf32>
    %413 = vector.multi_reduction <maximumf>, %412, %cst_173 [1] : vector<8x8xf32> to vector<8xf32>
    %414 = vector.shape_cast %413 : vector<8xf32> to vector<8x1xf32>
    %415 = vector.broadcast %414 : vector<8x1xf32> to vector<8x8xf32>
    %416 = arith.subf %412, %415 : vector<8x8xf32>
    %417 = math.exp %416 : vector<8x8xf32>
    %cst_174 = arith.constant dense<0.000000e+00> : vector<8xf32>
    %418 = vector.multi_reduction <add>, %417, %cst_174 [1] : vector<8x8xf32> to vector<8xf32>
    %419 = vector.shape_cast %418 : vector<8xf32> to vector<8x1xf32>
    %420 = tpu.reciprocal %419 : vector<8x1xf32> -> vector<8x1xf32>
    %421 = vector.broadcast %420 : vector<8x1xf32> to vector<8x8xf32>
    %422 = arith.mulf %417, %421 : vector<8x8xf32>
    %423 = vector.extract_strided_slice %399 {offsets = [0, 0], sizes = [8, 8], strides = [1, 1]} : vector<8x32xf32> to vector<8x8xf32>
    %cst_175 = arith.constant dense<0.000000e+00> : vector<8x8xf32>
    %424 = tpu.matmul %422, %423, %cst_175 {dimension_numbers = #tpu.dot_dimension_numbers<[1], [0], [0], [1], [0, 0, 1, 1], [], []>} : vector<8x8xf32>, vector<8x8xf32>, vector<8x8xf32> -> vector<8x8xf32>
    %425 = vector.extract_strided_slice %397 {offsets = [0, 8], sizes = [8, 8], strides = [1, 1]} : vector<8x32xf32> to vector<8x8xf32>
    %426 = vector.extract_strided_slice %398 {offsets = [0, 8], sizes = [8, 8], strides = [1, 1]} : vector<8x32xf32> to vector<8x8xf32>
    %cst_176 = arith.constant dense<0.000000e+00> : vector<8x8xf32>
    %427 = tpu.matmul %425, %426, %cst_176 {dimension_numbers = #tpu.dot_dimension_numbers<[1], [1], [0], [0], [0, 0, 1, 0], [], []>} : vector<8x8xf32>, vector<8x8xf32>, vector<8x8xf32> -> vector<8x8xf32>
    %428 = arith.mulf %427, %401 : vector<8x8xf32>
    %429 = arith.addf %428, %405 : vector<8x8xf32>
    %cst_177 = arith.constant 0.353553385 : f32
    %430 = vector.broadcast %cst_177 : f32 to vector<8x8xf32>
    %431 = arith.mulf %429, %430 : vector<8x8xf32>
    %cst_178 = arith.constant dense<0xFF800000> : vector<8xf32>
    %432 = vector.multi_reduction <maximumf>, %431, %cst_178 [1] : vector<8x8xf32> to vector<8xf32>
    %433 = vector.shape_cast %432 : vector<8xf32> to vector<8x1xf32>
    %434 = vector.broadcast %433 : vector<8x1xf32> to vector<8x8xf32>
    %435 = arith.subf %431, %434 : vector<8x8xf32>
    %436 = math.exp %435 : vector<8x8xf32>
    %cst_179 = arith.constant dense<0.000000e+00> : vector<8xf32>
    %437 = vector.multi_reduction <add>, %436, %cst_179 [1] : vector<8x8xf32> to vector<8xf32>
    %438 = vector.shape_cast %437 : vector<8xf32> to vector<8x1xf32>
    %439 = tpu.reciprocal %438 : vector<8x1xf32> -> vector<8x1xf32>
    %440 = vector.broadcast %439 : vector<8x1xf32> to vector<8x8xf32>
    %441 = arith.mulf %436, %440 : vector<8x8xf32>
    %442 = vector.extract_strided_slice %399 {offsets = [0, 8], sizes = [8, 8], strides = [1, 1]} : vector<8x32xf32> to vector<8x8xf32>
    %cst_180 = arith.constant dense<0.000000e+00> : vector<8x8xf32>
    %443 = tpu.matmul %441, %442, %cst_180 {dimension_numbers = #tpu.dot_dimension_numbers<[1], [0], [0], [1], [0, 0, 1, 1], [], []>} : vector<8x8xf32>, vector<8x8xf32>, vector<8x8xf32> -> vector<8x8xf32>
    %444 = vector.extract_strided_slice %397 {offsets = [0, 16], sizes = [8, 8], strides = [1, 1]} : vector<8x32xf32> to vector<8x8xf32>
    %445 = vector.extract_strided_slice %398 {offsets = [0, 16], sizes = [8, 8], strides = [1, 1]} : vector<8x32xf32> to vector<8x8xf32>
    %cst_181 = arith.constant dense<0.000000e+00> : vector<8x8xf32>
    %446 = tpu.matmul %444, %445, %cst_181 {dimension_numbers = #tpu.dot_dimension_numbers<[1], [1], [0], [0], [0, 0, 1, 0], [], []>} : vector<8x8xf32>, vector<8x8xf32>, vector<8x8xf32> -> vector<8x8xf32>
    %447 = arith.mulf %446, %401 : vector<8x8xf32>
    %448 = arith.addf %447, %405 : vector<8x8xf32>
    %cst_182 = arith.constant 0.353553385 : f32
    %449 = vector.broadcast %cst_182 : f32 to vector<8x8xf32>
    %450 = arith.mulf %448, %449 : vector<8x8xf32>
    %cst_183 = arith.constant dense<0xFF800000> : vector<8xf32>
    %451 = vector.multi_reduction <maximumf>, %450, %cst_183 [1] : vector<8x8xf32> to vector<8xf32>
    %452 = vector.shape_cast %451 : vector<8xf32> to vector<8x1xf32>
    %453 = vector.broadcast %452 : vector<8x1xf32> to vector<8x8xf32>
    %454 = arith.subf %450, %453 : vector<8x8xf32>
    %455 = math.exp %454 : vector<8x8xf32>
    %cst_184 = arith.constant dense<0.000000e+00> : vector<8xf32>
    %456 = vector.multi_reduction <add>, %455, %cst_184 [1] : vector<8x8xf32> to vector<8xf32>
    %457 = vector.shape_cast %456 : vector<8xf32> to vector<8x1xf32>
    %458 = tpu.reciprocal %457 : vector<8x1xf32> -> vector<8x1xf32>
    %459 = vector.broadcast %458 : vector<8x1xf32> to vector<8x8xf32>
    %460 = arith.mulf %455, %459 : vector<8x8xf32>
    %461 = vector.extract_strided_slice %399 {offsets = [0, 16], sizes = [8, 8], strides = [1, 1]} : vector<8x32xf32> to vector<8x8xf32>
    %cst_185 = arith.constant dense<0.000000e+00> : vector<8x8xf32>
    %462 = tpu.matmul %460, %461, %cst_185 {dimension_numbers = #tpu.dot_dimension_numbers<[1], [0], [0], [1], [0, 0, 1, 1], [], []>} : vector<8x8xf32>, vector<8x8xf32>, vector<8x8xf32> -> vector<8x8xf32>
    %463 = vector.extract_strided_slice %397 {offsets = [0, 24], sizes = [8, 8], strides = [1, 1]} : vector<8x32xf32> to vector<8x8xf32>
    %464 = vector.extract_strided_slice %398 {offsets = [0, 24], sizes = [8, 8], strides = [1, 1]} : vector<8x32xf32> to vector<8x8xf32>
    %cst_186 = arith.constant dense<0.000000e+00> : vector<8x8xf32>
    %465 = tpu.matmul %463, %464, %cst_186 {dimension_numbers = #tpu.dot_dimension_numbers<[1], [1], [0], [0], [0, 0, 1, 0], [], []>} : vector<8x8xf32>, vector<8x8xf32>, vector<8x8xf32> -> vector<8x8xf32>
    %466 = arith.mulf %465, %401 : vector<8x8xf32>
    %467 = arith.addf %466, %405 : vector<8x8xf32>
    %cst_187 = arith.constant 0.353553385 : f32
    %468 = vector.broadcast %cst_187 : f32 to vector<8x8xf32>
    %469 = arith.mulf %467, %468 : vector<8x8xf32>
    %cst_188 = arith.constant dense<0xFF800000> : vector<8xf32>
    %470 = vector.multi_reduction <maximumf>, %469, %cst_188 [1] : vector<8x8xf32> to vector<8xf32>
    %471 = vector.shape_cast %470 : vector<8xf32> to vector<8x1xf32>
    %472 = vector.broadcast %471 : vector<8x1xf32> to vector<8x8xf32>
    %473 = arith.subf %469, %472 : vector<8x8xf32>
    %474 = math.exp %473 : vector<8x8xf32>
    %cst_189 = arith.constant dense<0.000000e+00> : vector<8xf32>
    %475 = vector.multi_reduction <add>, %474, %cst_189 [1] : vector<8x8xf32> to vector<8xf32>
    %476 = vector.shape_cast %475 : vector<8xf32> to vector<8x1xf32>
    %477 = tpu.reciprocal %476 : vector<8x1xf32> -> vector<8x1xf32>
    %478 = vector.broadcast %477 : vector<8x1xf32> to vector<8x8xf32>
    %479 = arith.mulf %474, %478 : vector<8x8xf32>
    %480 = vector.extract_strided_slice %399 {offsets = [0, 24], sizes = [8, 8], strides = [1, 1]} : vector<8x32xf32> to vector<8x8xf32>
    %cst_190 = arith.constant dense<0.000000e+00> : vector<8x8xf32>
    %481 = tpu.matmul %479, %480, %cst_190 {dimension_numbers = #tpu.dot_dimension_numbers<[1], [0], [0], [1], [0, 0, 1, 1], [], []>} : vector<8x8xf32>, vector<8x8xf32>, vector<8x8xf32> -> vector<8x8xf32>
    %482 = tpu.concatenate %424, %443, %462, %481 in 1 : vector<8x8xf32>, vector<8x8xf32>, vector<8x8xf32>, vector<8x8xf32> -> vector<8x32xf32>
    %483 = tpu.concatenate %395, %482 in 0 : vector<8x32xf32>, vector<8x32xf32> -> vector<16x32xf32>
    %cst_191 = arith.constant dense<0.000000e+00> : vector<16x32xf32>
    %484 = tpu.matmul %483, %14, %cst_191 {dimension_numbers = #tpu.dot_dimension_numbers<[1], [0], [0], [1], [0, 0, 1, 1], [], []>} : vector<16x32xf32>, vector<32x32xf32>, vector<16x32xf32> -> vector<16x32xf32>
    %485 = vector.broadcast %15 : vector<1x32xf32> to vector<16x32xf32>
    %486 = arith.addf %484, %485 : vector<16x32xf32>
    %487 = arith.addf %486, %305 : vector<16x32xf32>
    %cst_192 = arith.constant dense<0.000000e+00> : vector<16xf32>
    %488 = vector.multi_reduction <add>, %487, %cst_192 [1] : vector<16x32xf32> to vector<16xf32>
    %489 = vector.shape_cast %488 : vector<16xf32> to vector<16x1xf32>
    %cst_193 = arith.constant 3.200000e+01 : f32
    %490 = vector.broadcast %cst_193 : f32 to vector<16x1xf32>
    %491 = arith.divf %489, %490 : vector<16x1xf32>
    %492 = vector.broadcast %491 : vector<16x1xf32> to vector<16x32xf32>
    %493 = arith.subf %487, %492 : vector<16x32xf32>
    %494 = arith.mulf %493, %493 : vector<16x32xf32>
    %cst_194 = arith.constant dense<0.000000e+00> : vector<16xf32>
    %495 = vector.multi_reduction <add>, %494, %cst_194 [1] : vector<16x32xf32> to vector<16xf32>
    %496 = vector.shape_cast %495 : vector<16xf32> to vector<16x1xf32>
    %cst_195 = arith.constant 3.200000e+01 : f32
    %497 = vector.broadcast %cst_195 : f32 to vector<16x1xf32>
    %498 = arith.divf %496, %497 : vector<16x1xf32>
    %499 = vector.broadcast %491 : vector<16x1xf32> to vector<16x32xf32>
    %500 = arith.subf %487, %499 : vector<16x32xf32>
    %cst_196 = arith.constant 9.99999974E-6 : f32
    %501 = vector.broadcast %cst_196 : f32 to vector<16x1xf32>
    %502 = arith.addf %498, %501 : vector<16x1xf32>
    %503 = math.rsqrt %502 : vector<16x1xf32>
    %504 = vector.broadcast %503 : vector<16x1xf32> to vector<16x32xf32>
    %505 = arith.mulf %500, %504 : vector<16x32xf32>
    %506 = vector.broadcast %16 : vector<1x32xf32> to vector<16x32xf32>
    %507 = arith.mulf %505, %506 : vector<16x32xf32>
    %508 = vector.broadcast %17 : vector<1x32xf32> to vector<16x32xf32>
    %509 = arith.addf %507, %508 : vector<16x32xf32>
    %cst_197 = arith.constant dense<0.000000e+00> : vector<16x32xf32>
    %510 = tpu.matmul %509, %18, %cst_197 {dimension_numbers = #tpu.dot_dimension_numbers<[1], [0], [0], [1], [0, 0, 1, 1], [], []>} : vector<16x32xf32>, vector<32x32xf32>, vector<16x32xf32> -> vector<16x32xf32>
    %511 = vector.broadcast %19 : vector<1x32xf32> to vector<16x32xf32>
    %512 = arith.addf %510, %511 : vector<16x32xf32>
    %cst_198 = arith.constant dense<0.000000e+00> : vector<16x64xf32>
    %513 = tpu.matmul %294, %20, %cst_198 {dimension_numbers = #tpu.dot_dimension_numbers<[1], [0], [0], [1], [0, 0, 1, 1], [], []>} : vector<16x32xf32>, vector<32x64xf32>, vector<16x64xf32> -> vector<16x64xf32>
    %514 = vector.broadcast %21 : vector<1x64xf32> to vector<16x64xf32>
    %515 = arith.addf %513, %514 : vector<16x64xf32>
    %516 = vector.extract_strided_slice %515 {offsets = [0, 0], sizes = [8, 64], strides = [1, 1]} : vector<16x64xf32> to vector<8x64xf32>
    %517 = vector.extract_strided_slice %512 {offsets = [0, 0], sizes = [8, 32], strides = [1, 1]} : vector<16x32xf32> to vector<8x32xf32>
    %518 = vector.extract_strided_slice %516 {offsets = [0, 0], sizes = [8, 32], strides = [1, 1]} : vector<8x64xf32> to vector<8x32xf32>
    %519 = vector.extract_strided_slice %516 {offsets = [0, 32], sizes = [8, 32], strides = [1, 1]} : vector<8x64xf32> to vector<8x32xf32>
    %520 = vector.extract_strided_slice %34 {offsets = [0, 0], sizes = [1, 8], strides = [1, 1]} : vector<2x8xf32> to vector<1x8xf32>
    %cst_199 = arith.constant 1.000000e+00 : f32
    %521 = vector.broadcast %cst_199 : f32 to vector<1x8xf32>
    %522 = arith.subf %521, %520 : vector<1x8xf32>
    %cst_200 = arith.constant -1.000000e+10 : f32
    %523 = vector.broadcast %cst_200 : f32 to vector<1x8xf32>
    %524 = arith.mulf %522, %523 : vector<1x8xf32>
    %525 = vector.extract_strided_slice %517 {offsets = [0, 0], sizes = [8, 8], strides = [1, 1]} : vector<8x32xf32> to vector<8x8xf32>
    %526 = vector.extract_strided_slice %518 {offsets = [0, 0], sizes = [8, 8], strides = [1, 1]} : vector<8x32xf32> to vector<8x8xf32>
    %cst_201 = arith.constant dense<0.000000e+00> : vector<8x8xf32>
    %527 = tpu.matmul %525, %526, %cst_201 {dimension_numbers = #tpu.dot_dimension_numbers<[1], [1], [0], [0], [0, 0, 1, 0], [], []>} : vector<8x8xf32>, vector<8x8xf32>, vector<8x8xf32> -> vector<8x8xf32>
    %528 = vector.broadcast %520 : vector<1x8xf32> to vector<8x8xf32>
    %529 = arith.mulf %527, %528 : vector<8x8xf32>
    %530 = vector.broadcast %524 : vector<1x8xf32> to vector<8x8xf32>
    %531 = arith.addf %529, %530 : vector<8x8xf32>
    %cst_202 = arith.constant 0.353553385 : f32
    %532 = vector.broadcast %cst_202 : f32 to vector<8x8xf32>
    %533 = arith.mulf %531, %532 : vector<8x8xf32>
    %cst_203 = arith.constant dense<0xFF800000> : vector<8xf32>
    %534 = vector.multi_reduction <maximumf>, %533, %cst_203 [1] : vector<8x8xf32> to vector<8xf32>
    %535 = vector.shape_cast %534 : vector<8xf32> to vector<8x1xf32>
    %536 = vector.broadcast %535 : vector<8x1xf32> to vector<8x8xf32>
    %537 = arith.subf %533, %536 : vector<8x8xf32>
    %538 = math.exp %537 : vector<8x8xf32>
    %cst_204 = arith.constant dense<0.000000e+00> : vector<8xf32>
    %539 = vector.multi_reduction <add>, %538, %cst_204 [1] : vector<8x8xf32> to vector<8xf32>
    %540 = vector.shape_cast %539 : vector<8xf32> to vector<8x1xf32>
    %541 = tpu.reciprocal %540 : vector<8x1xf32> -> vector<8x1xf32>
    %542 = vector.broadcast %541 : vector<8x1xf32> to vector<8x8xf32>
    %543 = arith.mulf %538, %542 : vector<8x8xf32>
    %544 = vector.extract_strided_slice %519 {offsets = [0, 0], sizes = [8, 8], strides = [1, 1]} : vector<8x32xf32> to vector<8x8xf32>
    %cst_205 = arith.constant dense<0.000000e+00> : vector<8x8xf32>
    %545 = tpu.matmul %543, %544, %cst_205 {dimension_numbers = #tpu.dot_dimension_numbers<[1], [0], [0], [1], [0, 0, 1, 1], [], []>} : vector<8x8xf32>, vector<8x8xf32>, vector<8x8xf32> -> vector<8x8xf32>
    %546 = vector.extract_strided_slice %517 {offsets = [0, 8], sizes = [8, 8], strides = [1, 1]} : vector<8x32xf32> to vector<8x8xf32>
    %547 = vector.extract_strided_slice %518 {offsets = [0, 8], sizes = [8, 8], strides = [1, 1]} : vector<8x32xf32> to vector<8x8xf32>
    %cst_206 = arith.constant dense<0.000000e+00> : vector<8x8xf32>
    %548 = tpu.matmul %546, %547, %cst_206 {dimension_numbers = #tpu.dot_dimension_numbers<[1], [1], [0], [0], [0, 0, 1, 0], [], []>} : vector<8x8xf32>, vector<8x8xf32>, vector<8x8xf32> -> vector<8x8xf32>
    %549 = vector.broadcast %520 : vector<1x8xf32> to vector<8x8xf32>
    %550 = arith.mulf %548, %549 : vector<8x8xf32>
    %551 = vector.broadcast %524 : vector<1x8xf32> to vector<8x8xf32>
    %552 = arith.addf %550, %551 : vector<8x8xf32>
    %cst_207 = arith.constant 0.353553385 : f32
    %553 = vector.broadcast %cst_207 : f32 to vector<8x8xf32>
    %554 = arith.mulf %552, %553 : vector<8x8xf32>
    %cst_208 = arith.constant dense<0xFF800000> : vector<8xf32>
    %555 = vector.multi_reduction <maximumf>, %554, %cst_208 [1] : vector<8x8xf32> to vector<8xf32>
    %556 = vector.shape_cast %555 : vector<8xf32> to vector<8x1xf32>
    %557 = vector.broadcast %556 : vector<8x1xf32> to vector<8x8xf32>
    %558 = arith.subf %554, %557 : vector<8x8xf32>
    %559 = math.exp %558 : vector<8x8xf32>
    %cst_209 = arith.constant dense<0.000000e+00> : vector<8xf32>
    %560 = vector.multi_reduction <add>, %559, %cst_209 [1] : vector<8x8xf32> to vector<8xf32>
    %561 = vector.shape_cast %560 : vector<8xf32> to vector<8x1xf32>
    %562 = tpu.reciprocal %561 : vector<8x1xf32> -> vector<8x1xf32>
    %563 = vector.broadcast %562 : vector<8x1xf32> to vector<8x8xf32>
    %564 = arith.mulf %559, %563 : vector<8x8xf32>
    %565 = vector.extract_strided_slice %519 {offsets = [0, 8], sizes = [8, 8], strides = [1, 1]} : vector<8x32xf32> to vector<8x8xf32>
    %cst_210 = arith.constant dense<0.000000e+00> : vector<8x8xf32>
    %566 = tpu.matmul %564, %565, %cst_210 {dimension_numbers = #tpu.dot_dimension_numbers<[1], [0], [0], [1], [0, 0, 1, 1], [], []>} : vector<8x8xf32>, vector<8x8xf32>, vector<8x8xf32> -> vector<8x8xf32>
    %567 = vector.extract_strided_slice %517 {offsets = [0, 16], sizes = [8, 8], strides = [1, 1]} : vector<8x32xf32> to vector<8x8xf32>
    %568 = vector.extract_strided_slice %518 {offsets = [0, 16], sizes = [8, 8], strides = [1, 1]} : vector<8x32xf32> to vector<8x8xf32>
    %cst_211 = arith.constant dense<0.000000e+00> : vector<8x8xf32>
    %569 = tpu.matmul %567, %568, %cst_211 {dimension_numbers = #tpu.dot_dimension_numbers<[1], [1], [0], [0], [0, 0, 1, 0], [], []>} : vector<8x8xf32>, vector<8x8xf32>, vector<8x8xf32> -> vector<8x8xf32>
    %570 = vector.broadcast %520 : vector<1x8xf32> to vector<8x8xf32>
    %571 = arith.mulf %569, %570 : vector<8x8xf32>
    %572 = vector.broadcast %524 : vector<1x8xf32> to vector<8x8xf32>
    %573 = arith.addf %571, %572 : vector<8x8xf32>
    %cst_212 = arith.constant 0.353553385 : f32
    %574 = vector.broadcast %cst_212 : f32 to vector<8x8xf32>
    %575 = arith.mulf %573, %574 : vector<8x8xf32>
    %cst_213 = arith.constant dense<0xFF800000> : vector<8xf32>
    %576 = vector.multi_reduction <maximumf>, %575, %cst_213 [1] : vector<8x8xf32> to vector<8xf32>
    %577 = vector.shape_cast %576 : vector<8xf32> to vector<8x1xf32>
    %578 = vector.broadcast %577 : vector<8x1xf32> to vector<8x8xf32>
    %579 = arith.subf %575, %578 : vector<8x8xf32>
    %580 = math.exp %579 : vector<8x8xf32>
    %cst_214 = arith.constant dense<0.000000e+00> : vector<8xf32>
    %581 = vector.multi_reduction <add>, %580, %cst_214 [1] : vector<8x8xf32> to vector<8xf32>
    %582 = vector.shape_cast %581 : vector<8xf32> to vector<8x1xf32>
    %583 = tpu.reciprocal %582 : vector<8x1xf32> -> vector<8x1xf32>
    %584 = vector.broadcast %583 : vector<8x1xf32> to vector<8x8xf32>
    %585 = arith.mulf %580, %584 : vector<8x8xf32>
    %586 = vector.extract_strided_slice %519 {offsets = [0, 16], sizes = [8, 8], strides = [1, 1]} : vector<8x32xf32> to vector<8x8xf32>
    %cst_215 = arith.constant dense<0.000000e+00> : vector<8x8xf32>
    %587 = tpu.matmul %585, %586, %cst_215 {dimension_numbers = #tpu.dot_dimension_numbers<[1], [0], [0], [1], [0, 0, 1, 1], [], []>} : vector<8x8xf32>, vector<8x8xf32>, vector<8x8xf32> -> vector<8x8xf32>
    %588 = vector.extract_strided_slice %517 {offsets = [0, 24], sizes = [8, 8], strides = [1, 1]} : vector<8x32xf32> to vector<8x8xf32>
    %589 = vector.extract_strided_slice %518 {offsets = [0, 24], sizes = [8, 8], strides = [1, 1]} : vector<8x32xf32> to vector<8x8xf32>
    %cst_216 = arith.constant dense<0.000000e+00> : vector<8x8xf32>
    %590 = tpu.matmul %588, %589, %cst_216 {dimension_numbers = #tpu.dot_dimension_numbers<[1], [1], [0], [0], [0, 0, 1, 0], [], []>} : vector<8x8xf32>, vector<8x8xf32>, vector<8x8xf32> -> vector<8x8xf32>
    %591 = vector.broadcast %520 : vector<1x8xf32> to vector<8x8xf32>
    %592 = arith.mulf %590, %591 : vector<8x8xf32>
    %593 = vector.broadcast %524 : vector<1x8xf32> to vector<8x8xf32>
    %594 = arith.addf %592, %593 : vector<8x8xf32>
    %cst_217 = arith.constant 0.353553385 : f32
    %595 = vector.broadcast %cst_217 : f32 to vector<8x8xf32>
    %596 = arith.mulf %594, %595 : vector<8x8xf32>
    %cst_218 = arith.constant dense<0xFF800000> : vector<8xf32>
    %597 = vector.multi_reduction <maximumf>, %596, %cst_218 [1] : vector<8x8xf32> to vector<8xf32>
    %598 = vector.shape_cast %597 : vector<8xf32> to vector<8x1xf32>
    %599 = vector.broadcast %598 : vector<8x1xf32> to vector<8x8xf32>
    %600 = arith.subf %596, %599 : vector<8x8xf32>
    %601 = math.exp %600 : vector<8x8xf32>
    %cst_219 = arith.constant dense<0.000000e+00> : vector<8xf32>
    %602 = vector.multi_reduction <add>, %601, %cst_219 [1] : vector<8x8xf32> to vector<8xf32>
    %603 = vector.shape_cast %602 : vector<8xf32> to vector<8x1xf32>
    %604 = tpu.reciprocal %603 : vector<8x1xf32> -> vector<8x1xf32>
    %605 = vector.broadcast %604 : vector<8x1xf32> to vector<8x8xf32>
    %606 = arith.mulf %601, %605 : vector<8x8xf32>
    %607 = vector.extract_strided_slice %519 {offsets = [0, 24], sizes = [8, 8], strides = [1, 1]} : vector<8x32xf32> to vector<8x8xf32>
    %cst_220 = arith.constant dense<0.000000e+00> : vector<8x8xf32>
    %608 = tpu.matmul %606, %607, %cst_220 {dimension_numbers = #tpu.dot_dimension_numbers<[1], [0], [0], [1], [0, 0, 1, 1], [], []>} : vector<8x8xf32>, vector<8x8xf32>, vector<8x8xf32> -> vector<8x8xf32>
    %609 = tpu.concatenate %545, %566, %587, %608 in 1 : vector<8x8xf32>, vector<8x8xf32>, vector<8x8xf32>, vector<8x8xf32> -> vector<8x32xf32>
    %610 = vector.extract_strided_slice %515 {offsets = [8, 0], sizes = [8, 64], strides = [1, 1]} : vector<16x64xf32> to vector<8x64xf32>
    %611 = vector.extract_strided_slice %512 {offsets = [8, 0], sizes = [8, 32], strides = [1, 1]} : vector<16x32xf32> to vector<8x32xf32>
    %612 = vector.extract_strided_slice %610 {offsets = [0, 0], sizes = [8, 32], strides = [1, 1]} : vector<8x64xf32> to vector<8x32xf32>
    %613 = vector.extract_strided_slice %610 {offsets = [0, 32], sizes = [8, 32], strides = [1, 1]} : vector<8x64xf32> to vector<8x32xf32>
    %614 = vector.extract_strided_slice %34 {offsets = [1, 0], sizes = [1, 8], strides = [1, 1]} : vector<2x8xf32> to vector<1x8xf32>
    %cst_221 = arith.constant 1.000000e+00 : f32
    %615 = vector.broadcast %cst_221 : f32 to vector<1x8xf32>
    %616 = arith.subf %615, %614 : vector<1x8xf32>
    %cst_222 = arith.constant -1.000000e+10 : f32
    %617 = vector.broadcast %cst_222 : f32 to vector<1x8xf32>
    %618 = arith.mulf %616, %617 : vector<1x8xf32>
    %619 = vector.extract_strided_slice %611 {offsets = [0, 0], sizes = [8, 8], strides = [1, 1]} : vector<8x32xf32> to vector<8x8xf32>
    %620 = vector.extract_strided_slice %612 {offsets = [0, 0], sizes = [8, 8], strides = [1, 1]} : vector<8x32xf32> to vector<8x8xf32>
    %cst_223 = arith.constant dense<0.000000e+00> : vector<8x8xf32>
    %621 = tpu.matmul %619, %620, %cst_223 {dimension_numbers = #tpu.dot_dimension_numbers<[1], [1], [0], [0], [0, 0, 1, 0], [], []>} : vector<8x8xf32>, vector<8x8xf32>, vector<8x8xf32> -> vector<8x8xf32>
    %622 = vector.broadcast %614 : vector<1x8xf32> to vector<8x8xf32>
    %623 = arith.mulf %621, %622 : vector<8x8xf32>
    %624 = vector.broadcast %618 : vector<1x8xf32> to vector<8x8xf32>
    %625 = arith.addf %623, %624 : vector<8x8xf32>
    %cst_224 = arith.constant 0.353553385 : f32
    %626 = vector.broadcast %cst_224 : f32 to vector<8x8xf32>
    %627 = arith.mulf %625, %626 : vector<8x8xf32>
    %cst_225 = arith.constant dense<0xFF800000> : vector<8xf32>
    %628 = vector.multi_reduction <maximumf>, %627, %cst_225 [1] : vector<8x8xf32> to vector<8xf32>
    %629 = vector.shape_cast %628 : vector<8xf32> to vector<8x1xf32>
    %630 = vector.broadcast %629 : vector<8x1xf32> to vector<8x8xf32>
    %631 = arith.subf %627, %630 : vector<8x8xf32>
    %632 = math.exp %631 : vector<8x8xf32>
    %cst_226 = arith.constant dense<0.000000e+00> : vector<8xf32>
    %633 = vector.multi_reduction <add>, %632, %cst_226 [1] : vector<8x8xf32> to vector<8xf32>
    %634 = vector.shape_cast %633 : vector<8xf32> to vector<8x1xf32>
    %635 = tpu.reciprocal %634 : vector<8x1xf32> -> vector<8x1xf32>
    %636 = vector.broadcast %635 : vector<8x1xf32> to vector<8x8xf32>
    %637 = arith.mulf %632, %636 : vector<8x8xf32>
    %638 = vector.extract_strided_slice %613 {offsets = [0, 0], sizes = [8, 8], strides = [1, 1]} : vector<8x32xf32> to vector<8x8xf32>
    %cst_227 = arith.constant dense<0.000000e+00> : vector<8x8xf32>
    %639 = tpu.matmul %637, %638, %cst_227 {dimension_numbers = #tpu.dot_dimension_numbers<[1], [0], [0], [1], [0, 0, 1, 1], [], []>} : vector<8x8xf32>, vector<8x8xf32>, vector<8x8xf32> -> vector<8x8xf32>
    %640 = vector.extract_strided_slice %611 {offsets = [0, 8], sizes = [8, 8], strides = [1, 1]} : vector<8x32xf32> to vector<8x8xf32>
    %641 = vector.extract_strided_slice %612 {offsets = [0, 8], sizes = [8, 8], strides = [1, 1]} : vector<8x32xf32> to vector<8x8xf32>
    %cst_228 = arith.constant dense<0.000000e+00> : vector<8x8xf32>
    %642 = tpu.matmul %640, %641, %cst_228 {dimension_numbers = #tpu.dot_dimension_numbers<[1], [1], [0], [0], [0, 0, 1, 0], [], []>} : vector<8x8xf32>, vector<8x8xf32>, vector<8x8xf32> -> vector<8x8xf32>
    %643 = vector.broadcast %614 : vector<1x8xf32> to vector<8x8xf32>
    %644 = arith.mulf %642, %643 : vector<8x8xf32>
    %645 = vector.broadcast %618 : vector<1x8xf32> to vector<8x8xf32>
    %646 = arith.addf %644, %645 : vector<8x8xf32>
    %cst_229 = arith.constant 0.353553385 : f32
    %647 = vector.broadcast %cst_229 : f32 to vector<8x8xf32>
    %648 = arith.mulf %646, %647 : vector<8x8xf32>
    %cst_230 = arith.constant dense<0xFF800000> : vector<8xf32>
    %649 = vector.multi_reduction <maximumf>, %648, %cst_230 [1] : vector<8x8xf32> to vector<8xf32>
    %650 = vector.shape_cast %649 : vector<8xf32> to vector<8x1xf32>
    %651 = vector.broadcast %650 : vector<8x1xf32> to vector<8x8xf32>
    %652 = arith.subf %648, %651 : vector<8x8xf32>
    %653 = math.exp %652 : vector<8x8xf32>
    %cst_231 = arith.constant dense<0.000000e+00> : vector<8xf32>
    %654 = vector.multi_reduction <add>, %653, %cst_231 [1] : vector<8x8xf32> to vector<8xf32>
    %655 = vector.shape_cast %654 : vector<8xf32> to vector<8x1xf32>
    %656 = tpu.reciprocal %655 : vector<8x1xf32> -> vector<8x1xf32>
    %657 = vector.broadcast %656 : vector<8x1xf32> to vector<8x8xf32>
    %658 = arith.mulf %653, %657 : vector<8x8xf32>
    %659 = vector.extract_strided_slice %613 {offsets = [0, 8], sizes = [8, 8], strides = [1, 1]} : vector<8x32xf32> to vector<8x8xf32>
    %cst_232 = arith.constant dense<0.000000e+00> : vector<8x8xf32>
    %660 = tpu.matmul %658, %659, %cst_232 {dimension_numbers = #tpu.dot_dimension_numbers<[1], [0], [0], [1], [0, 0, 1, 1], [], []>} : vector<8x8xf32>, vector<8x8xf32>, vector<8x8xf32> -> vector<8x8xf32>
    %661 = vector.extract_strided_slice %611 {offsets = [0, 16], sizes = [8, 8], strides = [1, 1]} : vector<8x32xf32> to vector<8x8xf32>
    %662 = vector.extract_strided_slice %612 {offsets = [0, 16], sizes = [8, 8], strides = [1, 1]} : vector<8x32xf32> to vector<8x8xf32>
    %cst_233 = arith.constant dense<0.000000e+00> : vector<8x8xf32>
    %663 = tpu.matmul %661, %662, %cst_233 {dimension_numbers = #tpu.dot_dimension_numbers<[1], [1], [0], [0], [0, 0, 1, 0], [], []>} : vector<8x8xf32>, vector<8x8xf32>, vector<8x8xf32> -> vector<8x8xf32>
    %664 = vector.broadcast %614 : vector<1x8xf32> to vector<8x8xf32>
    %665 = arith.mulf %663, %664 : vector<8x8xf32>
    %666 = vector.broadcast %618 : vector<1x8xf32> to vector<8x8xf32>
    %667 = arith.addf %665, %666 : vector<8x8xf32>
    %cst_234 = arith.constant 0.353553385 : f32
    %668 = vector.broadcast %cst_234 : f32 to vector<8x8xf32>
    %669 = arith.mulf %667, %668 : vector<8x8xf32>
    %cst_235 = arith.constant dense<0xFF800000> : vector<8xf32>
    %670 = vector.multi_reduction <maximumf>, %669, %cst_235 [1] : vector<8x8xf32> to vector<8xf32>
    %671 = vector.shape_cast %670 : vector<8xf32> to vector<8x1xf32>
    %672 = vector.broadcast %671 : vector<8x1xf32> to vector<8x8xf32>
    %673 = arith.subf %669, %672 : vector<8x8xf32>
    %674 = math.exp %673 : vector<8x8xf32>
    %cst_236 = arith.constant dense<0.000000e+00> : vector<8xf32>
    %675 = vector.multi_reduction <add>, %674, %cst_236 [1] : vector<8x8xf32> to vector<8xf32>
    %676 = vector.shape_cast %675 : vector<8xf32> to vector<8x1xf32>
    %677 = tpu.reciprocal %676 : vector<8x1xf32> -> vector<8x1xf32>
    %678 = vector.broadcast %677 : vector<8x1xf32> to vector<8x8xf32>
    %679 = arith.mulf %674, %678 : vector<8x8xf32>
    %680 = vector.extract_strided_slice %613 {offsets = [0, 16], sizes = [8, 8], strides = [1, 1]} : vector<8x32xf32> to vector<8x8xf32>
    %cst_237 = arith.constant dense<0.000000e+00> : vector<8x8xf32>
    %681 = tpu.matmul %679, %680, %cst_237 {dimension_numbers = #tpu.dot_dimension_numbers<[1], [0], [0], [1], [0, 0, 1, 1], [], []>} : vector<8x8xf32>, vector<8x8xf32>, vector<8x8xf32> -> vector<8x8xf32>
    %682 = vector.extract_strided_slice %611 {offsets = [0, 24], sizes = [8, 8], strides = [1, 1]} : vector<8x32xf32> to vector<8x8xf32>
    %683 = vector.extract_strided_slice %612 {offsets = [0, 24], sizes = [8, 8], strides = [1, 1]} : vector<8x32xf32> to vector<8x8xf32>
    %cst_238 = arith.constant dense<0.000000e+00> : vector<8x8xf32>
    %684 = tpu.matmul %682, %683, %cst_238 {dimension_numbers = #tpu.dot_dimension_numbers<[1], [1], [0], [0], [0, 0, 1, 0], [], []>} : vector<8x8xf32>, vector<8x8xf32>, vector<8x8xf32> -> vector<8x8xf32>
    %685 = vector.broadcast %614 : vector<1x8xf32> to vector<8x8xf32>
    %686 = arith.mulf %684, %685 : vector<8x8xf32>
    %687 = vector.broadcast %618 : vector<1x8xf32> to vector<8x8xf32>
    %688 = arith.addf %686, %687 : vector<8x8xf32>
    %cst_239 = arith.constant 0.353553385 : f32
    %689 = vector.broadcast %cst_239 : f32 to vector<8x8xf32>
    %690 = arith.mulf %688, %689 : vector<8x8xf32>
    %cst_240 = arith.constant dense<0xFF800000> : vector<8xf32>
    %691 = vector.multi_reduction <maximumf>, %690, %cst_240 [1] : vector<8x8xf32> to vector<8xf32>
    %692 = vector.shape_cast %691 : vector<8xf32> to vector<8x1xf32>
    %693 = vector.broadcast %692 : vector<8x1xf32> to vector<8x8xf32>
    %694 = arith.subf %690, %693 : vector<8x8xf32>
    %695 = math.exp %694 : vector<8x8xf32>
    %cst_241 = arith.constant dense<0.000000e+00> : vector<8xf32>
    %696 = vector.multi_reduction <add>, %695, %cst_241 [1] : vector<8x8xf32> to vector<8xf32>
    %697 = vector.shape_cast %696 : vector<8xf32> to vector<8x1xf32>
    %698 = tpu.reciprocal %697 : vector<8x1xf32> -> vector<8x1xf32>
    %699 = vector.broadcast %698 : vector<8x1xf32> to vector<8x8xf32>
    %700 = arith.mulf %695, %699 : vector<8x8xf32>
    %701 = vector.extract_strided_slice %613 {offsets = [0, 24], sizes = [8, 8], strides = [1, 1]} : vector<8x32xf32> to vector<8x8xf32>
    %cst_242 = arith.constant dense<0.000000e+00> : vector<8x8xf32>
    %702 = tpu.matmul %700, %701, %cst_242 {dimension_numbers = #tpu.dot_dimension_numbers<[1], [0], [0], [1], [0, 0, 1, 1], [], []>} : vector<8x8xf32>, vector<8x8xf32>, vector<8x8xf32> -> vector<8x8xf32>
    %703 = tpu.concatenate %639, %660, %681, %702 in 1 : vector<8x8xf32>, vector<8x8xf32>, vector<8x8xf32>, vector<8x8xf32> -> vector<8x32xf32>
    %704 = tpu.concatenate %609, %703 in 0 : vector<8x32xf32>, vector<8x32xf32> -> vector<16x32xf32>
    %cst_243 = arith.constant dense<0.000000e+00> : vector<16x32xf32>
    %705 = tpu.matmul %704, %22, %cst_243 {dimension_numbers = #tpu.dot_dimension_numbers<[1], [0], [0], [1], [0, 0, 1, 1], [], []>} : vector<16x32xf32>, vector<32x32xf32>, vector<16x32xf32> -> vector<16x32xf32>
    %706 = vector.broadcast %23 : vector<1x32xf32> to vector<16x32xf32>
    %707 = arith.addf %705, %706 : vector<16x32xf32>
    %708 = arith.addf %707, %509 : vector<16x32xf32>
    %cst_244 = arith.constant dense<0.000000e+00> : vector<16xf32>
    %709 = vector.multi_reduction <add>, %708, %cst_244 [1] : vector<16x32xf32> to vector<16xf32>
    %710 = vector.shape_cast %709 : vector<16xf32> to vector<16x1xf32>
    %cst_245 = arith.constant 3.200000e+01 : f32
    %711 = vector.broadcast %cst_245 : f32 to vector<16x1xf32>
    %712 = arith.divf %710, %711 : vector<16x1xf32>
    %713 = vector.broadcast %712 : vector<16x1xf32> to vector<16x32xf32>
    %714 = arith.subf %708, %713 : vector<16x32xf32>
    %715 = arith.mulf %714, %714 : vector<16x32xf32>
    %cst_246 = arith.constant dense<0.000000e+00> : vector<16xf32>
    %716 = vector.multi_reduction <add>, %715, %cst_246 [1] : vector<16x32xf32> to vector<16xf32>
    %717 = vector.shape_cast %716 : vector<16xf32> to vector<16x1xf32>
    %cst_247 = arith.constant 3.200000e+01 : f32
    %718 = vector.broadcast %cst_247 : f32 to vector<16x1xf32>
    %719 = arith.divf %717, %718 : vector<16x1xf32>
    %720 = vector.broadcast %712 : vector<16x1xf32> to vector<16x32xf32>
    %721 = arith.subf %708, %720 : vector<16x32xf32>
    %cst_248 = arith.constant 9.99999974E-6 : f32
    %722 = vector.broadcast %cst_248 : f32 to vector<16x1xf32>
    %723 = arith.addf %719, %722 : vector<16x1xf32>
    %724 = math.rsqrt %723 : vector<16x1xf32>
    %725 = vector.broadcast %724 : vector<16x1xf32> to vector<16x32xf32>
    %726 = arith.mulf %721, %725 : vector<16x32xf32>
    %727 = vector.broadcast %24 : vector<1x32xf32> to vector<16x32xf32>
    %728 = arith.mulf %726, %727 : vector<16x32xf32>
    %729 = vector.broadcast %25 : vector<1x32xf32> to vector<16x32xf32>
    %730 = arith.addf %728, %729 : vector<16x32xf32>
    %cst_249 = arith.constant dense<0.000000e+00> : vector<16x64xf32>
    %731 = tpu.matmul %730, %26, %cst_249 {dimension_numbers = #tpu.dot_dimension_numbers<[1], [0], [0], [1], [0, 0, 1, 1], [], []>} : vector<16x32xf32>, vector<32x64xf32>, vector<16x64xf32> -> vector<16x64xf32>
    %732 = vector.broadcast %27 : vector<1x64xf32> to vector<16x64xf32>
    %733 = arith.addf %731, %732 : vector<16x64xf32>
    %cst_250 = arith.constant 0.000000e+00 : f32
    %734 = vector.broadcast %cst_250 : f32 to vector<16x64xf32>
    %735 = arith.maximumf %733, %734 : vector<16x64xf32>
    %cst_251 = arith.constant dense<0.000000e+00> : vector<16x32xf32>
    %736 = tpu.matmul %735, %28, %cst_251 {dimension_numbers = #tpu.dot_dimension_numbers<[1], [0], [0], [1], [0, 0, 1, 1], [], []>} : vector<16x64xf32>, vector<64x32xf32>, vector<16x32xf32> -> vector<16x32xf32>
    %737 = vector.broadcast %29 : vector<1x32xf32> to vector<16x32xf32>
    %738 = arith.addf %736, %737 : vector<16x32xf32>
    %739 = arith.addf %738, %730 : vector<16x32xf32>
    %cst_252 = arith.constant dense<0.000000e+00> : vector<16xf32>
    %740 = vector.multi_reduction <add>, %739, %cst_252 [1] : vector<16x32xf32> to vector<16xf32>
    %741 = vector.shape_cast %740 : vector<16xf32> to vector<16x1xf32>
    %cst_253 = arith.constant 3.200000e+01 : f32
    %742 = vector.broadcast %cst_253 : f32 to vector<16x1xf32>
    %743 = arith.divf %741, %742 : vector<16x1xf32>
    %744 = vector.broadcast %743 : vector<16x1xf32> to vector<16x32xf32>
    %745 = arith.subf %739, %744 : vector<16x32xf32>
    %746 = arith.mulf %745, %745 : vector<16x32xf32>
    %cst_254 = arith.constant dense<0.000000e+00> : vector<16xf32>
    %747 = vector.multi_reduction <add>, %746, %cst_254 [1] : vector<16x32xf32> to vector<16xf32>
    %748 = vector.shape_cast %747 : vector<16xf32> to vector<16x1xf32>
    %cst_255 = arith.constant 3.200000e+01 : f32
    %749 = vector.broadcast %cst_255 : f32 to vector<16x1xf32>
    %750 = arith.divf %748, %749 : vector<16x1xf32>
    %751 = vector.broadcast %743 : vector<16x1xf32> to vector<16x32xf32>
    %752 = arith.subf %739, %751 : vector<16x32xf32>
    %cst_256 = arith.constant 9.99999974E-6 : f32
    %753 = vector.broadcast %cst_256 : f32 to vector<16x1xf32>
    %754 = arith.addf %750, %753 : vector<16x1xf32>
    %755 = math.rsqrt %754 : vector<16x1xf32>
    %756 = vector.broadcast %755 : vector<16x1xf32> to vector<16x32xf32>
    %757 = arith.mulf %752, %756 : vector<16x32xf32>
    %758 = vector.broadcast %30 : vector<1x32xf32> to vector<16x32xf32>
    %759 = arith.mulf %757, %758 : vector<16x32xf32>
    %760 = vector.broadcast %31 : vector<1x32xf32> to vector<16x32xf32>
    %761 = arith.addf %759, %760 : vector<16x32xf32>
    %cst_257 = arith.constant dense<0.000000e+00> : vector<16x128xf32>
    %762 = tpu.matmul %761, %32, %cst_257 {dimension_numbers = #tpu.dot_dimension_numbers<[1], [0], [0], [1], [0, 0, 1, 1], [], []>} : vector<16x32xf32>, vector<32x128xf32>, vector<16x128xf32> -> vector<16x128xf32>
    %763 = vector.broadcast %33 : vector<1x128xf32> to vector<16x128xf32>
    %764 = arith.addf %762, %763 : vector<16x128xf32>
    %c0_258 = arith.constant 0 : index
    %c0_259 = arith.constant 0 : index
    %765 = vector.load %arg42[%c0_258, %c0_259] : memref<16x128xf32, #tpu.memory_space<vmem>>, vector<16x128xf32>
    tpu.vector_store %arg42[%c0_258, %c0_259], %764 {strides = array<i32>} : memref<16x128xf32, #tpu.memory_space<vmem>>, vector<16x128xf32>,
    return
  }
}

</mosaic_0001>

<llo_original>
// kernel: custom_transformer.1
$region0: #{custom_transformer.1}
  #allocation0 [shape = 'u32[]', space=smem, size = 0x4, offset = 0x4, fixed_abs, tag = 'smem constant byte address 0x4 - core index']
  #allocation1 [shape = 'u32[144,128]{1,0:T(1,128)}', space=vmem, size = 0x12000, scoped, tag = 'internal scratch']
  %s0 = inlined_call_operand.smem [shape: u32[44], index: -1, kind: input, shape index: {}]
  %s1 = sld [smem:[%s0]]
  %s2 = scalar_lea.smem %s0, 1
  %s3 = sld [smem:[%s2]]
  %s4 = scalar_lea.smem %s0, 2
  %s5 = sld [smem:[%s4]]
  %s6 = scalar_lea.smem %s0, 3
  %s7 = sld [smem:[%s6]]
  %s8 = scalar_lea.smem %s0, 4
  %s9 = sld [smem:[%s8]]
  %s10 = scalar_lea.smem %s0, 5
  %s11 = sld [smem:[%s10]]
  %s12 = scalar_lea.smem %s0, 6
  %s13 = sld [smem:[%s12]]
  %s14 = scalar_lea.smem %s0, 7
  %s15 = sld [smem:[%s14]]
  %s16 = scalar_lea.smem %s0, 8
  %s17 = sld [smem:[%s16]]
  %s18 = scalar_lea.smem %s0, 9
  %s19 = sld [smem:[%s18]]
  %s20 = scalar_lea.smem %s0, 10
  %s21 = sld [smem:[%s20]]
  %s22 = scalar_lea.smem %s0, 11
  %s23 = sld [smem:[%s22]]
  %s24 = scalar_lea.smem %s0, 12
  %s25 = sld [smem:[%s24]]
  %s26 = scalar_lea.smem %s0, 13
  %s27 = sld [smem:[%s26]]
  %s28 = scalar_lea.smem %s0, 14
  %s29 = sld [smem:[%s28]]
  %s30 = scalar_lea.smem %s0, 15
  %s31 = sld [smem:[%s30]]
  %s32 = scalar_lea.smem %s0, 16
  %s33 = sld [smem:[%s32]]
  %s34 = scalar_lea.smem %s0, 17
  %s35 = sld [smem:[%s34]]
  %s36 = scalar_lea.smem %s0, 18
  %s37 = sld [smem:[%s36]]
  %s38 = scalar_lea.smem %s0, 19
  %s39 = sld [smem:[%s38]]
  %s40 = scalar_lea.smem %s0, 20
  %s41 = sld [smem:[%s40]]
  %s42 = scalar_lea.smem %s0, 21
  %s43 = sld [smem:[%s42]]
  %s44 = scalar_lea.smem %s0, 22
  %s45 = sld [smem:[%s44]]
  %s46 = scalar_lea.smem %s0, 23
  %s47 = sld [smem:[%s46]]
  %s48 = scalar_lea.smem %s0, 24
  %s49 = sld [smem:[%s48]]
  %s50 = scalar_lea.smem %s0, 25
  %s51 = sld [smem:[%s50]]
  %s52 = scalar_lea.smem %s0, 26
  %s53 = sld [smem:[%s52]]
  %s54 = scalar_lea.smem %s0, 27
  %s55 = sld [smem:[%s54]]
  %s56 = scalar_lea.smem %s0, 28
  %s57 = sld [smem:[%s56]]
  %s58 = scalar_lea.smem %s0, 29
  %s59 = sld [smem:[%s58]]
  %s60 = scalar_lea.smem %s0, 30
  %s61 = sld [smem:[%s60]]
  %s62 = scalar_lea.smem %s0, 31
  %s63 = sld [smem:[%s62]]
  %s64 = scalar_lea.smem %s0, 32
  %s65 = sld [smem:[%s64]]
  %s66 = scalar_lea.smem %s0, 33
  %s67 = sld [smem:[%s66]]
  %s68 = scalar_lea.smem %s0, 34
  %s69 = sld [smem:[%s68]]
  %s70 = scalar_lea.smem %s0, 35
  %s71 = sld [smem:[%s70]]
  %s72 = scalar_lea.smem %s0, 36
  %s73 = sld [smem:[%s72]]
  %s74 = scalar_lea.smem %s0, 37
  %s75 = sld [smem:[%s74]]
  %s76 = scalar_lea.smem %s0, 38
  %s77 = sld [smem:[%s76]]
  %s78 = scalar_lea.smem %s0, 39
  %s79 = sld [smem:[%s78]]
  %s80 = scalar_lea.smem %s0, 40
  %s81 = sld [smem:[%s80]]
  %s82 = scalar_lea.smem %s0, 41
  %s83 = sld [smem:[%s82]]
  %s84 = scalar_lea.smem %s0, 42
  %s85 = sld [smem:[%s84]]
  %s86 = scalar_lea.smem %s0, 43
  %s87 = sld [smem:[%s86]]
  %88 = xla_tuple %s85, %s87
  %s89 = sld [smem:[#allocation0]]
  $region246: #{custom_transformer.1} parent=0
    _
  %s91 = ssub.s32 1, %s89
  %s92 = scalar_select 0, %s91, %s89
  $region1: #{custom_transformer.1} parent=0
    #allocation2 [shape = 'u8[512]{0}', space=vmem, size = 0x400, scoped, tag = 'input window, operand 15, single buffered']
    #allocation3 [shape = 's32[1]{0}', space=sflag, size = 0x4, scoped, tag = 'scoped memory for custom_transformer.1']
    #allocation4 [shape = 's32[1]{0}', space=sflag, size = 0x4, scoped, tag = 'scoped memory for custom_transformer.1']
    #allocation5 [shape = 'u8[512]{0}', space=vmem, size = 0x400, scoped, tag = 'input window, operand 17, single buffered']
    #allocation6 [shape = 's32[1]{0}', space=sflag, size = 0x4, scoped, tag = 'scoped memory for custom_transformer.1']
    #allocation7 [shape = 'u8[512]{0}', space=vmem, size = 0x400, scoped, tag = 'input window, operand 21, single buffered']
    #allocation8 [shape = 'u8[512]{0}', space=vmem, size = 0x400, scoped, tag = 'input window, operand 23, single buffered']
    #allocation9 [shape = 's32[1]{0}', space=sflag, size = 0x4, scoped, tag = 'scoped memory for custom_transformer.1']
    #allocation10 [shape = 'u8[512]{0}', space=vmem, size = 0x400, scoped, tag = 'input window, operand 24, single buffered']
    #allocation11 [shape = 'u8[512]{0}', space=vmem, size = 0x400, scoped, tag = 'input window, operand 25, single buffered']
    #allocation12 [shape = 's32[1]{0}', space=sflag, size = 0x4, scoped, tag = 'scoped memory for custom_transformer.1']
    #allocation13 [shape = 'u8[512]{0}', space=vmem, size = 0x400, scoped, tag = 'input window, operand 27, single buffered']
    #allocation14 [shape = 'u8[512]{0}', space=vmem, size = 0x400, scoped, tag = 'input window, operand 29, single buffered']
    #allocation15 [shape = 's32[1]{0}', space=sflag, size = 0x4, scoped, tag = 'scoped memory for custom_transformer.1']
    #allocation16 [shape = 'u8[512]{0}', space=vmem, size = 0x400, scoped, tag = 'input window, operand 31, single buffered']
    #allocation17 [shape = 'u8[512]{0}', space=vmem, size = 0x400, scoped, tag = 'input window, operand 32, single buffered']
    #allocation18 [shape = 's32[1]{0}', space=sflag, size = 0x4, scoped, tag = 'scoped memory for custom_transformer.1']
    #allocation19 [shape = 'u8[512]{0}', space=vmem, size = 0x400, scoped, tag = 'input window, operand 33, single buffered']
    #allocation20 [shape = 'u8[512]{0}', space=vmem, size = 0x400, scoped, tag = 'input window, operand 35, single buffered']
    #allocation21 [shape = 's32[1]{0}', space=sflag, size = 0x4, scoped, tag = 'scoped memory for custom_transformer.1']
    #allocation22 [shape = 'u8[512]{0}', space=vmem, size = 0x400, scoped, tag = 'input window, operand 37, single buffered']
    #allocation23 [shape = 'u8[512]{0}', space=vmem, size = 0x400, scoped, tag = 'input window, operand 38, single buffered']
    #allocation24 [shape = 's32[1]{0}', space=sflag, size = 0x4, scoped, tag = 'scoped memory for custom_transformer.1']
    #allocation25 [shape = 'u8[512]{0}', space=vmem, size = 0x400, scoped, tag = 'input window, operand 39, single buffered']
    #allocation26 [shape = 'u8[8192]{0}', space=vmem, size = 0x2000, scoped, tag = 'output window, operand 1, single buffered']
    %93 = vsyncpa [#allocation3], 0
    %94 = vsyncpa [#allocation6], 0
    %95 = vsyncpa [#allocation9], 0
    %96 = vsyncpa [#allocation12], 0
    %97 = vsyncpa [#allocation15], 0
    %98 = vsyncpa [#allocation18], 0
    %99 = vsyncpa [#allocation21], 0
    %100 = vsyncpa [#allocation24], 0
    %101 = vsyncpa [#allocation4], 0
    // Predicated region
    $region2: #{custom_transformer.1} parent=1 // pred_check
      _
    $region3: #{custom_transformer.1} parent=1 // pred_check_branch
      %103 = sbr.rel (0) target = $region5
    $region4: #{custom_transformer.1} parent=1 // pred_region
      _
    $region5: #{custom_transformer.1} parent=1 // pred_fallthru
      _
    // Predicated region
    $region6: #{custom_transformer.1} parent=1 // pred_check
      _
    $region7: #{custom_transformer.1} parent=1 // pred_check_branch
      %105 = sbr.rel (0) target = $region9
    $region8: #{custom_transformer.1} parent=1 // pred_region
      _
    $region9: #{custom_transformer.1} parent=1 // pred_fallthru
      _
    // Predicated region
    $region10: #{custom_transformer.1} parent=1 // pred_check
      _
    $region11: #{custom_transformer.1} parent=1 // pred_check_branch
      %107 = sbr.rel (0) target = $region13
    $region12: #{custom_transformer.1} parent=1 // pred_region
      _
    $region13: #{custom_transformer.1} parent=1 // pred_fallthru
      _
    // Predicated region
    $region14: #{custom_transformer.1} parent=1 // pred_check
      _
    $region15: #{custom_transformer.1} parent=1 // pred_check_branch
      %109 = sbr.rel (0) target = $region17
    $region16: #{custom_transformer.1} parent=1 // pred_region
      _
    $region17: #{custom_transformer.1} parent=1 // pred_fallthru
      _
    // Predicated region
    $region18: #{custom_transformer.1} parent=1 // pred_check
      _
    $region19: #{custom_transformer.1} parent=1 // pred_check_branch
      %111 = sbr.rel (0) target = $region21
    $region20: #{custom_transformer.1} parent=1 // pred_region
      _
    $region21: #{custom_transformer.1} parent=1 // pred_fallthru
      _
    // Predicated region
    $region22: #{custom_transformer.1} parent=1 // pred_check
      _
    $region23: #{custom_transformer.1} parent=1 // pred_check_branch
      %113 = sbr.rel (0) target = $region25
    $region24: #{custom_transformer.1} parent=1 // pred_region
      _
    $region25: #{custom_transformer.1} parent=1 // pred_fallthru
      _
    // Predicated region
    $region26: #{custom_transformer.1} parent=1 // pred_check
      _
    $region27: #{custom_transformer.1} parent=1 // pred_check_branch
      %115 = sbr.rel (0) target = $region29
    $region28: #{custom_transformer.1} parent=1 // pred_region
      _
    $region29: #{custom_transformer.1} parent=1 // pred_fallthru
      _
    // Predicated region
    $region30: #{custom_transformer.1} parent=1 // pred_check
      _
    $region31: #{custom_transformer.1} parent=1 // pred_check_branch
      %117 = sbr.rel (0) target = $region33
    $region32: #{custom_transformer.1} parent=1 // pred_region
      _
    $region33: #{custom_transformer.1} parent=1 // pred_fallthru
      _
    // Predicated region
    $region34: #{custom_transformer.1} parent=1 // pred_check
      _
    $region35: #{custom_transformer.1} parent=1 // pred_check_branch
      %119 = sbr.rel (0) target = $region37
    $region36: #{custom_transformer.1} parent=1 // pred_region
      _
    $region37: #{custom_transformer.1} parent=1 // pred_fallthru
      _
    // Predicated region
    $region38: #{custom_transformer.1} parent=1 // pred_check
      _
    $region39: #{custom_transformer.1} parent=1 // pred_check_branch
      %121 = sbr.rel (0) target = $region41
    $region40: #{custom_transformer.1} parent=1 // pred_region
      _
    $region41: #{custom_transformer.1} parent=1 // pred_fallthru
      _
    // Predicated region
    $region42: #{custom_transformer.1} parent=1 // pred_check
      _
    $region43: #{custom_transformer.1} parent=1 // pred_check_branch
      %123 = sbr.rel (0) target = $region45
    $region44: #{custom_transformer.1} parent=1 // pred_region
      _
    $region45: #{custom_transformer.1} parent=1 // pred_fallthru
      _
    // Predicated region
    $region46: #{custom_transformer.1} parent=1 // pred_check
      _
    $region47: #{custom_transformer.1} parent=1 // pred_check_branch
      %125 = sbr.rel (0) target = $region49
    $region48: #{custom_transformer.1} parent=1 // pred_region
      _
    $region49: #{custom_transformer.1} parent=1 // pred_fallthru
      _
    // Predicated region
    $region50: #{custom_transformer.1} parent=1 // pred_check
      _
    $region51: #{custom_transformer.1} parent=1 // pred_check_branch
      %127 = sbr.rel (0) target = $region53
    $region52: #{custom_transformer.1} parent=1 // pred_region
      _
    $region53: #{custom_transformer.1} parent=1 // pred_fallthru
      _
    // Predicated region
    $region54: #{custom_transformer.1} parent=1 // pred_check
      _
    $region55: #{custom_transformer.1} parent=1 // pred_check_branch
      %129 = sbr.rel (0) target = $region57
    $region56: #{custom_transformer.1} parent=1 // pred_region
      _
    $region57: #{custom_transformer.1} parent=1 // pred_fallthru
      _
    // Predicated region
    $region58: #{custom_transformer.1} parent=1 // pred_check
      _
    $region59: #{custom_transformer.1} parent=1 // pred_check_branch
      %131 = sbr.rel (0) target = $region61
    $region60: #{custom_transformer.1} parent=1 // pred_region
      _
    $region61: #{custom_transformer.1} parent=1 // pred_fallthru
      _
    // Predicated region
    $region62: #{custom_transformer.1} parent=1 // pred_check
      _
    $region63: #{custom_transformer.1} parent=1 // pred_check_branch
      %133 = sbr.rel (0) target = $region65
    $region64: #{custom_transformer.1} parent=1 // pred_region
      %s135 = ssub.s32 16, 16
      %136 = vsyncadd [#allocation3], %s135
      %s138 = sshll.u32 [#allocation2], 4
      %s139 = int_to_ptr.vmem [resolvable:$true] %s138
      %141 = dma.hbm_to_vmem [thread:$0]  %s31, 16, %s139, [#allocation3]
    $region65: #{custom_transformer.1} parent=1 // pred_fallthru
      _
    // Predicated region
    $region66: #{custom_transformer.1} parent=1 // pred_check
      _
    $region67: #{custom_transformer.1} parent=1 // pred_check_branch
      %143 = sbr.rel (0) target = $region69
    $region68: #{custom_transformer.1} parent=1 // pred_region
      _
    $region69: #{custom_transformer.1} parent=1 // pred_fallthru
      _
    // Predicated region
    $region70: #{custom_transformer.1} parent=1 // pred_check
      _
    $region71: #{custom_transformer.1} parent=1 // pred_check_branch
      %145 = sbr.rel (0) target = $region73
    $region72: #{custom_transformer.1} parent=1 // pred_region
      %s147 = ssub.s32 16, 16
      %148 = vsyncadd [#allocation6], %s147
      %s150 = sshll.u32 [#allocation5], 4
      %s151 = int_to_ptr.vmem [resolvable:$true] %s150
      %153 = dma.hbm_to_vmem [thread:$0]  %s35, 16, %s151, [#allocation6]
    $region73: #{custom_transformer.1} parent=1 // pred_fallthru
      _
    // Predicated region
    $region74: #{custom_transformer.1} parent=1 // pred_check
      _
    $region75: #{custom_transformer.1} parent=1 // pred_check_branch
      %155 = sbr.rel (0) target = $region77
    $region76: #{custom_transformer.1} parent=1 // pred_region
      _
    $region77: #{custom_transformer.1} parent=1 // pred_fallthru
      _
    // Predicated region
    $region78: #{custom_transformer.1} parent=1 // pred_check
      _
    $region79: #{custom_transformer.1} parent=1 // pred_check_branch
      %157 = sbr.rel (0) target = $region81
    $region80: #{custom_transformer.1} parent=1 // pred_region
      _
    $region81: #{custom_transformer.1} parent=1 // pred_fallthru
      _
    // Predicated region
    $region82: #{custom_transformer.1} parent=1 // pred_check
      _
    $region83: #{custom_transformer.1} parent=1 // pred_check_branch
      %159 = sbr.rel (0) target = $region85
    $region84: #{custom_transformer.1} parent=1 // pred_region
      _
    $region85: #{custom_transformer.1} parent=1 // pred_fallthru
      _
    // Predicated region
    $region86: #{custom_transformer.1} parent=1 // pred_check
      _
    $region87: #{custom_transformer.1} parent=1 // pred_check_branch
      %161 = sbr.rel (0) target = $region89
    $region88: #{custom_transformer.1} parent=1 // pred_region
      %s163 = ssub.s32 16, 16
      %164 = vsyncadd [#allocation6], %s163
      %s166 = sshll.u32 [#allocation7], 4
      %s167 = int_to_ptr.vmem [resolvable:$true] %s166
      %169 = dma.hbm_to_vmem [thread:$0]  %s43, 16, %s167, [#allocation6]
    $region89: #{custom_transformer.1} parent=1 // pred_fallthru
      _
    // Predicated region
    $region90: #{custom_transformer.1} parent=1 // pred_check
      _
    $region91: #{custom_transformer.1} parent=1 // pred_check_branch
      %171 = sbr.rel (0) target = $region93
    $region92: #{custom_transformer.1} parent=1 // pred_region
      _
    $region93: #{custom_transformer.1} parent=1 // pred_fallthru
      _
    // Predicated region
    $region94: #{custom_transformer.1} parent=1 // pred_check
      _
    $region95: #{custom_transformer.1} parent=1 // pred_check_branch
      %173 = sbr.rel (0) target = $region97
    $region96: #{custom_transformer.1} parent=1 // pred_region
      %s175 = ssub.s32 16, 16
      %176 = vsyncadd [#allocation9], %s175
      %s178 = sshll.u32 [#allocation8], 4
      %s179 = int_to_ptr.vmem [resolvable:$true] %s178
      %181 = dma.hbm_to_vmem [thread:$0]  %s47, 16, %s179, [#allocation9]
    $region97: #{custom_transformer.1} parent=1 // pred_fallthru
      _
    // Predicated region
    $region98: #{custom_transformer.1} parent=1 // pred_check
      _
    $region99: #{custom_transformer.1} parent=1 // pred_check_branch
      %183 = sbr.rel (0) target = $region101
    $region100: #{custom_transformer.1} parent=1 // pred_region
      %s185 = ssub.s32 16, 16
      %186 = vsyncadd [#allocation9], %s185
      %s188 = sshll.u32 [#allocation10], 4
      %s189 = int_to_ptr.vmem [resolvable:$true] %s188
      %191 = dma.hbm_to_vmem [thread:$0]  %s49, 16, %s189, [#allocation9]
    $region101: #{custom_transformer.1} parent=1 // pred_fallthru
      _
    // Predicated region
    $region102: #{custom_transformer.1} parent=1 // pred_check
      _
    $region103: #{custom_transformer.1} parent=1 // pred_check_branch
      %193 = sbr.rel (0) target = $region105
    $region104: #{custom_transformer.1} parent=1 // pred_region
      %s195 = ssub.s32 16, 16
      %196 = vsyncadd [#allocation12], %s195
      %s198 = sshll.u32 [#allocation11], 4
      %s199 = int_to_ptr.vmem [resolvable:$true] %s198
      %201 = dma.hbm_to_vmem [thread:$0]  %s51, 16, %s199, [#allocation12]
    $region105: #{custom_transformer.1} parent=1 // pred_fallthru
      _
    // Predicated region
    $region106: #{custom_transformer.1} parent=1 // pred_check
      _
    $region107: #{custom_transformer.1} parent=1 // pred_check_branch
      %203 = sbr.rel (0) target = $region109
    $region108: #{custom_transformer.1} parent=1 // pred_region
      _
    $region109: #{custom_transformer.1} parent=1 // pred_fallthru
      _
    // Predicated region
    $region110: #{custom_transformer.1} parent=1 // pred_check
      _
    $region111: #{custom_transformer.1} parent=1 // pred_check_branch
      %205 = sbr.rel (0) target = $region113
    $region112: #{custom_transformer.1} parent=1 // pred_region
      %s207 = ssub.s32 16, 16
      %208 = vsyncadd [#allocation12], %s207
      %s210 = sshll.u32 [#allocation13], 4
      %s211 = int_to_ptr.vmem [resolvable:$true] %s210
      %213 = dma.hbm_to_vmem [thread:$0]  %s55, 16, %s211, [#allocation12]
    $region113: #{custom_transformer.1} parent=1 // pred_fallthru
      _
    // Predicated region
    $region114: #{custom_transformer.1} parent=1 // pred_check
      _
    $region115: #{custom_transformer.1} parent=1 // pred_check_branch
      %215 = sbr.rel (0) target = $region117
    $region116: #{custom_transformer.1} parent=1 // pred_region
      _
    $region117: #{custom_transformer.1} parent=1 // pred_fallthru
      _
    // Predicated region
    $region118: #{custom_transformer.1} parent=1 // pred_check
      _
    $region119: #{custom_transformer.1} parent=1 // pred_check_branch
      %217 = sbr.rel (0) target = $region121
    $region120: #{custom_transformer.1} parent=1 // pred_region
      %s219 = ssub.s32 16, 16
      %220 = vsyncadd [#allocation15], %s219
      %s222 = sshll.u32 [#allocation14], 4
      %s223 = int_to_ptr.vmem [resolvable:$true] %s222
      %225 = dma.hbm_to_vmem [thread:$0]  %s59, 16, %s223, [#allocation15]
    $region121: #{custom_transformer.1} parent=1 // pred_fallthru
      _
    // Predicated region
    $region122: #{custom_transformer.1} parent=1 // pred_check
      _
    $region123: #{custom_transformer.1} parent=1 // pred_check_branch
      %227 = sbr.rel (0) target = $region125
    $region124: #{custom_transformer.1} parent=1 // pred_region
      _
    $region125: #{custom_transformer.1} parent=1 // pred_fallthru
      _
    // Predicated region
    $region126: #{custom_transformer.1} parent=1 // pred_check
      _
    $region127: #{custom_transformer.1} parent=1 // pred_check_branch
      %229 = sbr.rel (0) target = $region129
    $region128: #{custom_transformer.1} parent=1 // pred_region
      %s231 = ssub.s32 16, 16
      %232 = vsyncadd [#allocation15], %s231
      %s234 = sshll.u32 [#allocation16], 4
      %s235 = int_to_ptr.vmem [resolvable:$true] %s234
      %237 = dma.hbm_to_vmem [thread:$0]  %s63, 16, %s235, [#allocation15]
    $region129: #{custom_transformer.1} parent=1 // pred_fallthru
      _
    // Predicated region
    $region130: #{custom_transformer.1} parent=1 // pred_check
      _
    $region131: #{custom_transformer.1} parent=1 // pred_check_branch
      %239 = sbr.rel (0) target = $region133
    $region132: #{custom_transformer.1} parent=1 // pred_region
      %s241 = ssub.s32 16, 16
      %242 = vsyncadd [#allocation18], %s241
      %s244 = sshll.u32 [#allocation17], 4
      %s245 = int_to_ptr.vmem [resolvable:$true] %s244
      %247 = dma.hbm_to_vmem [thread:$0]  %s65, 16, %s245, [#allocation18]
    $region133: #{custom_transformer.1} parent=1 // pred_fallthru
      _
    // Predicated region
    $region134: #{custom_transformer.1} parent=1 // pred_check
      _
    $region135: #{custom_transformer.1} parent=1 // pred_check_branch
      %249 = sbr.rel (0) target = $region137
    $region136: #{custom_transformer.1} parent=1 // pred_region
      %s251 = ssub.s32 16, 16
      %252 = vsyncadd [#allocation18], %s251
      %s254 = sshll.u32 [#allocation19], 4
      %s255 = int_to_ptr.vmem [resolvable:$true] %s254
      %257 = dma.hbm_to_vmem [thread:$0]  %s67, 16, %s255, [#allocation18]
    $region137: #{custom_transformer.1} parent=1 // pred_fallthru
      _
    // Predicated region
    $region138: #{custom_transformer.1} parent=1 // pred_check
      _
    $region139: #{custom_transformer.1} parent=1 // pred_check_branch
      %259 = sbr.rel (0) target = $region141
    $region140: #{custom_transformer.1} parent=1 // pred_region
      _
    $region141: #{custom_transformer.1} parent=1 // pred_fallthru
      _
    // Predicated region
    $region142: #{custom_transformer.1} parent=1 // pred_check
      _
    $region143: #{custom_transformer.1} parent=1 // pred_check_branch
      %261 = sbr.rel (0) target = $region145
    $region144: #{custom_transformer.1} parent=1 // pred_region
      %s263 = ssub.s32 16, 16
      %264 = vsyncadd [#allocation21], %s263
      %s266 = sshll.u32 [#allocation20], 4
      %s267 = int_to_ptr.vmem [resolvable:$true] %s266
      %269 = dma.hbm_to_vmem [thread:$0]  %s71, 16, %s267, [#allocation21]
    $region145: #{custom_transformer.1} parent=1 // pred_fallthru
      _
    // Predicated region
    $region146: #{custom_transformer.1} parent=1 // pred_check
      _
    $region147: #{custom_transformer.1} parent=1 // pred_check_branch
      %271 = sbr.rel (0) target = $region149
    $region148: #{custom_transformer.1} parent=1 // pred_region
      _
    $region149: #{custom_transformer.1} parent=1 // pred_fallthru
      _
    // Predicated region
    $region150: #{custom_transformer.1} parent=1 // pred_check
      _
    $region151: #{custom_transformer.1} parent=1 // pred_check_branch
      %273 = sbr.rel (0) target = $region153
    $region152: #{custom_transformer.1} parent=1 // pred_region
      %s275 = ssub.s32 16, 16
      %276 = vsyncadd [#allocation21], %s275
      %s278 = sshll.u32 [#allocation22], 4
      %s279 = int_to_ptr.vmem [resolvable:$true] %s278
      %281 = dma.hbm_to_vmem [thread:$0]  %s75, 16, %s279, [#allocation21]
    $region153: #{custom_transformer.1} parent=1 // pred_fallthru
      _
    // Predicated region
    $region154: #{custom_transformer.1} parent=1 // pred_check
      _
    $region155: #{custom_transformer.1} parent=1 // pred_check_branch
      %283 = sbr.rel (0) target = $region157
    $region156: #{custom_transformer.1} parent=1 // pred_region
      %s285 = ssub.s32 16, 16
      %286 = vsyncadd [#allocation24], %s285
      %s288 = sshll.u32 [#allocation23], 4
      %s289 = int_to_ptr.vmem [resolvable:$true] %s288
      %291 = dma.hbm_to_vmem [thread:$0]  %s77, 16, %s289, [#allocation24]
    $region157: #{custom_transformer.1} parent=1 // pred_fallthru
      _
    // Predicated region
    $region158: #{custom_transformer.1} parent=1 // pred_check
      _
    $region159: #{custom_transformer.1} parent=1 // pred_check_branch
      %293 = sbr.rel (0) target = $region161
    $region160: #{custom_transformer.1} parent=1 // pred_region
      %s295 = ssub.s32 16, 16
      %296 = vsyncadd [#allocation24], %s295
      %s298 = sshll.u32 [#allocation25], 4
      %s299 = int_to_ptr.vmem [resolvable:$true] %s298
      %301 = dma.hbm_to_vmem [thread:$0]  %s79, 16, %s299, [#allocation24]
    $region161: #{custom_transformer.1} parent=1 // pred_fallthru
      _
    // Predicated region
    $region162: #{custom_transformer.1} parent=1 // pred_check
      _
    $region163: #{custom_transformer.1} parent=1 // pred_check_branch
      %303 = sbr.rel (0) target = $region165
    $region164: #{custom_transformer.1} parent=1 // pred_region
      _
    $region165: #{custom_transformer.1} parent=1 // pred_fallthru
      _
    // Predicated region
    $region166: #{custom_transformer.1} parent=1 // pred_check
      _
    $region167: #{custom_transformer.1} parent=1 // pred_check_branch
      %305 = sbr.rel (0) target = $region169
    $region168: #{custom_transformer.1} parent=1 // pred_region
      _
    $region169: #{custom_transformer.1} parent=1 // pred_fallthru
      _
    // Predicated region
    $region170: #{custom_transformer.1} parent=1 // pred_check
      _
    $region171: #{custom_transformer.1} parent=1 // pred_check_branch
      %307 = sbr.rel (0) target = $region173
    $region172: #{custom_transformer.1} parent=1 // pred_region
      %308 = dma.done [#allocation3], 16
    $region173: #{custom_transformer.1} parent=1 // pred_fallthru
      _
    // Predicated region
    $region174: #{custom_transformer.1} parent=1 // pred_check
      _
    $region175: #{custom_transformer.1} parent=1 // pred_check_branch
      %310 = sbr.rel (0) target = $region177
    $region176: #{custom_transformer.1} parent=1 // pred_region
      %311 = dma.done [#allocation6], 16
    $region177: #{custom_transformer.1} parent=1 // pred_fallthru
      _
    // Predicated region
    $region178: #{custom_transformer.1} parent=1 // pred_check
      _
    $region179: #{custom_transformer.1} parent=1 // pred_check_branch
      %313 = sbr.rel (0) target = $region181
    $region180: #{custom_transformer.1} parent=1 // pred_region
      %314 = dma.done [#allocation6], 16
    $region181: #{custom_transformer.1} parent=1 // pred_fallthru
      _
    // Predicated region
    $region182: #{custom_transformer.1} parent=1 // pred_check
      _
    $region183: #{custom_transformer.1} parent=1 // pred_check_branch
      %316 = sbr.rel (0) target = $region185
    $region184: #{custom_transformer.1} parent=1 // pred_region
      %317 = dma.done [#allocation9], 16
    $region185: #{custom_transformer.1} parent=1 // pred_fallthru
      _
    // Predicated region
    $region186: #{custom_transformer.1} parent=1 // pred_check
      _
    $region187: #{custom_transformer.1} parent=1 // pred_check_branch
      %319 = sbr.rel (0) target = $region189
    $region188: #{custom_transformer.1} parent=1 // pred_region
      %320 = dma.done [#allocation9], 16
    $region189: #{custom_transformer.1} parent=1 // pred_fallthru
      _
    // Predicated region
    $region190: #{custom_transformer.1} parent=1 // pred_check
      _
    $region191: #{custom_transformer.1} parent=1 // pred_check_branch
      %322 = sbr.rel (0) target = $region193
    $region192: #{custom_transformer.1} parent=1 // pred_region
      %323 = dma.done [#allocation12], 16
    $region193: #{custom_transformer.1} parent=1 // pred_fallthru
      _
    // Predicated region
    $region194: #{custom_transformer.1} parent=1 // pred_check
      _
    $region195: #{custom_transformer.1} parent=1 // pred_check_branch
      %325 = sbr.rel (0) target = $region197
    $region196: #{custom_transformer.1} parent=1 // pred_region
      %326 = dma.done [#allocation12], 16
    $region197: #{custom_transformer.1} parent=1 // pred_fallthru
      _
    // Predicated region
    $region198: #{custom_transformer.1} parent=1 // pred_check
      _
    $region199: #{custom_transformer.1} parent=1 // pred_check_branch
      %328 = sbr.rel (0) target = $region201
    $region200: #{custom_transformer.1} parent=1 // pred_region
      %329 = dma.done [#allocation15], 16
    $region201: #{custom_transformer.1} parent=1 // pred_fallthru
      _
    // Predicated region
    $region202: #{custom_transformer.1} parent=1 // pred_check
      _
    $region203: #{custom_transformer.1} parent=1 // pred_check_branch
      %331 = sbr.rel (0) target = $region205
    $region204: #{custom_transformer.1} parent=1 // pred_region
      %332 = dma.done [#allocation15], 16
    $region205: #{custom_transformer.1} parent=1 // pred_fallthru
      _
    // Predicated region
    $region206: #{custom_transformer.1} parent=1 // pred_check
      _
    $region207: #{custom_transformer.1} parent=1 // pred_check_branch
      %334 = sbr.rel (0) target = $region209
    $region208: #{custom_transformer.1} parent=1 // pred_region
      %335 = dma.done [#allocation18], 16
    $region209: #{custom_transformer.1} parent=1 // pred_fallthru
      _
    // Predicated region
    $region210: #{custom_transformer.1} parent=1 // pred_check
      _
    $region211: #{custom_transformer.1} parent=1 // pred_check_branch
      %337 = sbr.rel (0) target = $region213
    $region212: #{custom_transformer.1} parent=1 // pred_region
      %338 = dma.done [#allocation18], 16
    $region213: #{custom_transformer.1} parent=1 // pred_fallthru
      _
    // Predicated region
    $region214: #{custom_transformer.1} parent=1 // pred_check
      _
    $region215: #{custom_transformer.1} parent=1 // pred_check_branch
      %340 = sbr.rel (0) target = $region217
    $region216: #{custom_transformer.1} parent=1 // pred_region
      %341 = dma.done [#allocation21], 16
    $region217: #{custom_transformer.1} parent=1 // pred_fallthru
      _
    // Predicated region
    $region218: #{custom_transformer.1} parent=1 // pred_check
      _
    $region219: #{custom_transformer.1} parent=1 // pred_check_branch
      %343 = sbr.rel (0) target = $region221
    $region220: #{custom_transformer.1} parent=1 // pred_region
      %344 = dma.done [#allocation21], 16
    $region221: #{custom_transformer.1} parent=1 // pred_fallthru
      _
    // Predicated region
    $region222: #{custom_transformer.1} parent=1 // pred_check
      _
    $region223: #{custom_transformer.1} parent=1 // pred_check_branch
      %346 = sbr.rel (0) target = $region225
    $region224: #{custom_transformer.1} parent=1 // pred_region
      %347 = dma.done [#allocation24], 16
    $region225: #{custom_transformer.1} parent=1 // pred_fallthru
      _
    // Predicated region
    $region226: #{custom_transformer.1} parent=1 // pred_check
      _
    $region227: #{custom_transformer.1} parent=1 // pred_check_branch
      %349 = sbr.rel (0) target = $region229
    $region228: #{custom_transformer.1} parent=1 // pred_region
      %350 = dma.done [#allocation24], 16
    $region229: #{custom_transformer.1} parent=1 // pred_fallthru
      _
    %v351 = vld [vmem:[%s17] sm:$0xff]
    %v352 = vld [vmem:[%s17 + $0x8] sm:$0xff]
    %v353 = vld [vmem:[%s17 + $0x10] sm:$0xff]
    %v354 = vld [vmem:[%s17 + $0x18] sm:$0xff]
    %v355 = vld [vmem:[%s19] sm:$0x1]
    %v356 = vld [vmem:[%s21] sm:$0xff]
    %v357 = vld [vmem:[%s21 + $0x8] sm:$0xff]
    %v358 = vld [vmem:[%s21 + $0x10] sm:$0xff]
    %v359 = vld [vmem:[%s21 + $0x18] sm:$0xff]
    %v360 = vld [vmem:[%s23] sm:$0x1]
    %v361 = vld [vmem:[%s25] sm:$0x1]
    %v362 = vld [vmem:[%s27] sm:$0x1]
    %v363 = vld [vmem:[%s29] sm:$0xff]
    %v364 = vld [vmem:[%s29 + $0x8] sm:$0xff]
    %v365 = vld [vmem:[%s29 + $0x10] sm:$0xff]
    %v366 = vld [vmem:[%s29 + $0x18] sm:$0xff]
    %v367 = vld [vmem:[#allocation2] sm:$0x1]
    %v368 = vld [vmem:[%s33] sm:$0xff]
    %v369 = vld [vmem:[%s33 + $0x8] sm:$0xff]
    %v370 = vld [vmem:[%s33 + $0x10] sm:$0xff]
    %v371 = vld [vmem:[%s33 + $0x18] sm:$0xff]
    %v372 = vld [vmem:[%s33 + $0x20] sm:$0xff]
    %v373 = vld [vmem:[%s33 + $0x28] sm:$0xff]
    %v374 = vld [vmem:[%s33 + $0x30] sm:$0xff]
    %v375 = vld [vmem:[%s33 + $0x38] sm:$0xff]
    %v376 = vld [vmem:[#allocation5] sm:$0x1]
    %v377 = vld [vmem:[%s37] sm:$0x1]
    %v378 = vld [vmem:[%s39] sm:$0x1]
    %v379 = vld [vmem:[%s41] sm:$0xff]
    %v380 = vld [vmem:[%s41 + $0x8] sm:$0xff]
    %v381 = vld [vmem:[%s41 + $0x10] sm:$0xff]
    %v382 = vld [vmem:[%s41 + $0x18] sm:$0xff]
    %v383 = vld [vmem:[#allocation7] sm:$0x1]
    %v384 = vld [vmem:[%s45] sm:$0xff]
    %v385 = vld [vmem:[%s45 + $0x8] sm:$0xff]
    %v386 = vld [vmem:[%s45 + $0x10] sm:$0xff]
    %v387 = vld [vmem:[%s45 + $0x18] sm:$0xff]
    %v388 = vld [vmem:[#allocation8] sm:$0x1]
    %v389 = vld [vmem:[#allocation10] sm:$0x1]
    %v390 = vld [vmem:[#allocation11] sm:$0x1]
    %v391 = vld [vmem:[%s53] sm:$0xff]
    %v392 = vld [vmem:[%s53 + $0x8] sm:$0xff]
    %v393 = vld [vmem:[%s53 + $0x10] sm:$0xff]
    %v394 = vld [vmem:[%s53 + $0x18] sm:$0xff]
    %v395 = vld [vmem:[#allocation13] sm:$0x1]
    %v396 = vld [vmem:[%s57] sm:$0xff]
    %v397 = vld [vmem:[%s57 + $0x8] sm:$0xff]
    %v398 = vld [vmem:[%s57 + $0x10] sm:$0xff]
    %v399 = vld [vmem:[%s57 + $0x18] sm:$0xff]
    %v400 = vld [vmem:[#allocation14] sm:$0x1]
    %v401 = vld [vmem:[%s61] sm:$0xff]
    %v402 = vld [vmem:[%s61 + $0x8] sm:$0xff]
    %v403 = vld [vmem:[%s61 + $0x10] sm:$0xff]
    %v404 = vld [vmem:[%s61 + $0x18] sm:$0xff]
    %v405 = vld [vmem:[#allocation16] sm:$0x1]
    %v406 = vld [vmem:[#allocation17] sm:$0x1]
    %v407 = vld [vmem:[#allocation19] sm:$0x1]
    %v408 = vld [vmem:[%s69] sm:$0xff]
    %v409 = vld [vmem:[%s69 + $0x8] sm:$0xff]
    %v410 = vld [vmem:[%s69 + $0x10] sm:$0xff]
    %v411 = vld [vmem:[%s69 + $0x18] sm:$0xff]
    %v412 = vld [vmem:[#allocation20] sm:$0x1]
    %v413 = vld [vmem:[%s73] sm:$0xff]
    %v414 = vld [vmem:[%s73 + $0x8] sm:$0xff]
    %v415 = vld [vmem:[%s73 + $0x10] sm:$0xff]
    %v416 = vld [vmem:[%s73 + $0x18] sm:$0xff]
    %v417 = vld [vmem:[%s73 + $0x20] sm:$0xff]
    %v418 = vld [vmem:[%s73 + $0x28] sm:$0xff]
    %v419 = vld [vmem:[%s73 + $0x30] sm:$0xff]
    %v420 = vld [vmem:[%s73 + $0x38] sm:$0xff]
    %v421 = vld [vmem:[#allocation22] sm:$0x1]
    %v422 = vld [vmem:[#allocation23] sm:$0x1]
    %v423 = vld [vmem:[#allocation25] sm:$0x1]
    %v424 = vld [vmem:[%s81] sm:$0xff]
    %v425 = vld [vmem:[%s81 + $0x8] sm:$0xff]
    %v426 = vld [vmem:[%s81 + $0x10] sm:$0xff]
    %v427 = vld [vmem:[%s81 + $0x18] sm:$0xff]
    %v428 = vld [vmem:[%s83] sm:$0x1]
    %v429 = vld [vmem:[%s9] sm:$0x3]
    %v430 = vld [vmem:[%s11] sm:$0xff]
    %v431 = vld [vmem:[%s11 + $0x8] sm:$0xff]
    %v432 = vld [vmem:[%s1] sm:$0xff]
    %v433 = vld [vmem:[%s1 + $0x8] sm:$0xff]
    %v434 = vld [vmem:[%s13] sm:$0xff]
    %v435 = vld [vmem:[%s13 + $0x8] sm:$0xff]
    %v436 = vld [vmem:[%s13 + $0x10] sm:$0xff]
    %v437 = vld [vmem:[%s13 + $0x18] sm:$0xff]
    %v438 = vld [vmem:[%s13 + $0x20] sm:$0xff]
    %v439 = vld [vmem:[%s13 + $0x28] sm:$0xff]
    %v440 = vld [vmem:[%s13 + $0x30] sm:$0x3]
    %v441 = vld [vmem:[%s5] sm:$0xff]
    %v442 = vld [vmem:[%s5 + $0x8] sm:$0xff]
    %v443 = vlaneseq
    %v444 = vand.u32 %v443, 127
    %445 = vset.pattern.permute.xlu0 0
    %446 = vperm.xlu0 %445, %v432
    %v447 = vpop.permute.xlu0 %446
    %448 = vset.pattern.permute.xlu0 0
    %449 = vperm.xlu0 %448, %v433
    %v450 = vpop.permute.xlu0 %449
    %vm451 = vcmp.eq.s32.totalorder %v444, %v447
    %vm452 = vcmp.eq.s32.totalorder %v444, %v450
    %v453 = vsel %vm451, 1, 0
    %v454 = vsel %vm452, 1, 0
    %v455 = vcvt.s32.f32 %v453
    %v456 = vcvt.s32.f32 %v454
    %vm457 = vcmask 408576
    %v459 = vsel %vm457, %v455, 0
    %v462 = vsel %vm457, %v456, 0
    %vm464 = vcmask 1041408
    %v466 = vsel %vm464, %v440, 0
    %468 = vmatprep.subr.mxu0 0.0
    %469 = vmatpush1.msra.mxu0 %v434
    %470 = vmatprep.subr.mxu0 0.0
    %471 = vmatpush1.msra.mxu0 %v435
    %472 = vmatprep.subr.mxu0 0.0
    %473 = vmatpush1.msra.mxu0 %v436
    %474 = vmatprep.subr.mxu0 0.0
    %475 = vmatpush1.msra.mxu0 %v437
    %476 = vmatprep.subr.mxu0 0.0
    %477 = vmatpush1.msra.mxu0 %v438
    %478 = vmatprep.subr.mxu0 0.0
    %479 = vmatpush1.msra.mxu0 %v439
    %480 = vmatprep.subr.mxu0 0.0
    %481 = vmatpush1.msra.mxu0 %v466
    %482 = vmatprep.subr.mxu0 0.0
    %483 = vmatpush1.msra.mxu0 0.0
    %484 = vmatprep.subr.mxu0 0.0
    %485 = vmatpush1.msra.mxu0 0.0
    %486 = vmatprep.subr.mxu0 0.0
    %487 = vmatpush1.msra.mxu0 0.0
    %488 = vmatprep.subr.mxu0 0.0
    %489 = vmatpush1.msra.mxu0 0.0
    %490 = vmatprep.subr.mxu0 0.0
    %491 = vmatpush1.msra.mxu0 0.0
    %492 = vmatprep.subr.mxu0 0.0
    %493 = vmatpush1.msra.mxu0 0.0
    %494 = vmatprep.subr.mxu0 0.0
    %495 = vmatpush1.msra.mxu0 0.0
    %496 = vmatprep.subr.mxu0 0.0
    %497 = vmatpush1.msra.mxu0 0.0
    %498 = vmatprep.subr.mxu0 0.0
    %499 = vmatpush1.msra.mxu0 0.0
    %500 = vmatprep.subr.mxu0 0.0
    %501 = vmatpush1.msra.mxu0 0.0
    %502 = vmatprep.subr.mxu0 0.0
    %503 = vmatpush1.msra.mxu0 0.0
    %504 = vmatprep.subr.mxu0 0.0
    %505 = vmatpush1.msra.mxu0 0.0
    %506 = vmatprep.subr.mxu0 0.0
    %507 = vmatpush1.msra.mxu0 0.0
    %508 = vmatprep.subr.mxu0 0.0
    %509 = vmatpush1.msra.mxu0 0.0
    %510 = vmatprep.subr.mxu0 0.0
    %511 = vmatpush1.msra.mxu0 0.0
    %512 = vmatprep.subr.mxu0 0.0
    %513 = vmatpush1.msra.mxu0 0.0
    %514 = vmatprep.subr.mxu0 0.0
    %515 = vmatpush1.msra.mxu0 0.0
    %516 = vmatprep.subr.mxu0 0.0
    %517 = vmatpush1.msra.mxu0 0.0
    %518 = vmatprep.subr.mxu0 0.0
    %519 = vmatpush1.msra.mxu0 0.0
    %520 = vmatprep.subr.mxu0 0.0
    %521 = vmatpush1.msra.mxu0 0.0
    %522 = vmatprep.subr.mxu0 0.0
    %523 = vmatpush1.msra.mxu0 0.0
    %524 = vmatprep.subr.mxu0 0.0
    %525 = vmatpush1.msra.mxu0 0.0
    %526 = vmatprep.subr.mxu0 0.0
    %527 = vmatpush1.msra.mxu0 0.0
    %528 = vmatprep.subr.mxu0 0.0
    %529 = vmatpush1.msra.mxu0 0.0
    %530 = vmatprep.subr.mxu0 0.0
    %531 = vmatpush1.msra.mxu0 0.0
    %532 = vmatprep.mubr.f32.mxu0 0.0
    %533 = vmatmul.mubr.f32.gmra.mrb[0].mxu0 %v459
    %v534 = vpop.f32.mrb[0].mxu0
    %v535 = vadd.f32 %v441, %v534
    %v536 = vpop.f32.mrb[0].mxu0
    %537 = vmatprep.mubr.f32.mxu0 0.0
    %538 = vmatmul.mubr.f32.gmra.mrb[0].mxu0 %v462
    %v539 = vpop.f32.mrb[0].mxu0
    %v540 = vadd.f32 %v442, %v539
    %v541 = vpop.f32.mrb[0].mxu0
    %542 = vdwg.mxu0
    %v544 = vlaneseq
    %v545 = vshrl.u32 %v544, 7
    %v546 = vsub.s32 0, %v545
    %v547 = vrot.slane %v355, %v546
    %vm549 = vcmask 261120
    %v551 = vsel %vm549, %v535, 0
    %v554 = vsel %vm549, %v540, 0
    %556 = vmatprep.subr.mxu0 0.0
    %557 = vmatpush1.msra.mxu0 %v351
    %558 = vmatprep.subr.mxu0 0.0
    %559 = vmatpush1.msra.mxu0 %v352
    %560 = vmatprep.subr.mxu0 0.0
    %561 = vmatpush1.msra.mxu0 %v353
    %562 = vmatprep.subr.mxu0 0.0
    %563 = vmatpush1.msra.mxu0 %v354
    %564 = vmatprep.subr.mxu0 0.0
    %565 = vmatpush1.msra.mxu0 0.0
    %566 = vmatprep.subr.mxu0 0.0
    %567 = vmatpush1.msra.mxu0 0.0
    %568 = vmatprep.subr.mxu0 0.0
    %569 = vmatpush1.msra.mxu0 0.0
    %570 = vmatprep.subr.mxu0 0.0
    %571 = vmatpush1.msra.mxu0 0.0
    %572 = vmatprep.subr.mxu0 0.0
    %573 = vmatpush1.msra.mxu0 0.0
    %574 = vmatprep.subr.mxu0 0.0
    %575 = vmatpush1.msra.mxu0 0.0
    %576 = vmatprep.subr.mxu0 0.0
    %577 = vmatpush1.msra.mxu0 0.0
    %578 = vmatprep.subr.mxu0 0.0
    %579 = vmatpush1.msra.mxu0 0.0
    %580 = vmatprep.subr.mxu0 0.0
    %581 = vmatpush1.msra.mxu0 0.0
    %582 = vmatprep.subr.mxu0 0.0
    %583 = vmatpush1.msra.mxu0 0.0
    %584 = vmatprep.subr.mxu0 0.0
    %585 = vmatpush1.msra.mxu0 0.0
    %586 = vmatprep.subr.mxu0 0.0
    %587 = vmatpush1.msra.mxu0 0.0
    %588 = vmatprep.subr.mxu0 0.0
    %589 = vmatpush1.msra.mxu0 0.0
    %590 = vmatprep.subr.mxu0 0.0
    %591 = vmatpush1.msra.mxu0 0.0
    %592 = vmatprep.subr.mxu0 0.0
    %593 = vmatpush1.msra.mxu0 0.0
    %594 = vmatprep.subr.mxu0 0.0
    %595 = vmatpush1.msra.mxu0 0.0
    %596 = vmatprep.subr.mxu0 0.0
    %597 = vmatpush1.msra.mxu0 0.0
    %598 = vmatprep.subr.mxu0 0.0
    %599 = vmatpush1.msra.mxu0 0.0
    %600 = vmatprep.subr.mxu0 0.0
    %601 = vmatpush1.msra.mxu0 0.0
    %602 = vmatprep.subr.mxu0 0.0
    %603 = vmatpush1.msra.mxu0 0.0
    %604 = vmatprep.subr.mxu0 0.0
    %605 = vmatpush1.msra.mxu0 0.0
    %606 = vmatprep.subr.mxu0 0.0
    %607 = vmatpush1.msra.mxu0 0.0
    %608 = vmatprep.subr.mxu0 0.0
    %609 = vmatpush1.msra.mxu0 0.0
    %610 = vmatprep.subr.mxu0 0.0
    %611 = vmatpush1.msra.mxu0 0.0
    %612 = vmatprep.subr.mxu0 0.0
    %613 = vmatpush1.msra.mxu0 0.0
    %614 = vmatprep.subr.mxu0 0.0
    %615 = vmatpush1.msra.mxu0 0.0
    %616 = vmatprep.subr.mxu0 0.0
    %617 = vmatpush1.msra.mxu0 0.0
    %618 = vmatprep.subr.mxu0 0.0
    %619 = vmatpush1.msra.mxu0 0.0
    %620 = vmatprep.mubr.f32.mxu0 0.0
    %621 = vmatmul.mubr.f32.gmra.mrb[0].mxu0 %v551
    %v622 = vpop.f32.mrb[0].mxu0
    %v623 = vadd.f32 %v547, %v622
    %v624 = vpop.f32.mrb[0].mxu0
    %625 = vmatprep.mubr.f32.mxu0 0.0
    %626 = vmatmul.mubr.f32.gmra.mrb[0].mxu0 %v554
    %v627 = vpop.f32.mrb[0].mxu0
    %v628 = vadd.f32 %v547, %v627
    %v629 = vpop.f32.mrb[0].mxu0
    %630 = vdwg.mxu0
    %v631 = vsub.f32 1.0, %v429
    %v632 = vmul.f32 %v631, -1e+10
    %634 = vrot.lane.b32.xlu0 %v623, 96
    %v635 = vpop.permute.xlu0 %634
    %vm636 = vcmask 64512
    %v637 = vsel %vm636, %v623, 0
    %v639 = vsel %vm636, %v635, 0
    %641 = vmatprep.subr.mxu0 0.0
    %642 = vmatpush1.xpose.msra.mxu0 %v639
    %643 = vmatprep.subr.mxu0 0.0
    %644 = vmatpush1.xpose.msra.mxu0 0.0
    %645 = vmatprep.subr.mxu0 0.0
    %646 = vmatpush1.xpose.msra.mxu0 0.0
    %647 = vmatprep.subr.mxu0 0.0
    %648 = vmatpush1.xpose.msra.mxu0 0.0
    %649 = vmatprep.subr.mxu0 0.0
    %650 = vmatpush1.xpose.msra.mxu0 0.0
    %651 = vmatprep.subr.mxu0 0.0
    %652 = vmatpush1.xpose.msra.mxu0 0.0
    %653 = vmatprep.subr.mxu0 0.0
    %654 = vmatpush1.xpose.msra.mxu0 0.0
    %655 = vmatprep.subr.mxu0 0.0
    %656 = vmatpush1.xpose.msra.mxu0 0.0
    %657 = vmatprep.subr.mxu0 0.0
    %658 = vmatpush1.xpose.msra.mxu0 0.0
    %659 = vmatprep.subr.mxu0 0.0
    %660 = vmatpush1.xpose.msra.mxu0 0.0
    %661 = vmatprep.subr.mxu0 0.0
    %662 = vmatpush1.xpose.msra.mxu0 0.0
    %663 = vmatprep.subr.mxu0 0.0
    %664 = vmatpush1.xpose.msra.mxu0 0.0
    %665 = vmatprep.subr.mxu0 0.0
    %666 = vmatpush1.xpose.msra.mxu0 0.0
    %667 = vmatprep.subr.mxu0 0.0
    %668 = vmatpush1.xpose.msra.mxu0 0.0
    %669 = vmatprep.subr.mxu0 0.0
    %670 = vmatpush1.xpose.msra.mxu0 0.0
    %671 = vmatprep.subr.mxu0 0.0
    %672 = vmatpush1.xpose.msra.mxu0 0.0
    %673 = vmatprep.subr.mxu0 0.0
    %674 = vmatpush1.xpose.msra.mxu0 0.0
    %675 = vmatprep.subr.mxu0 0.0
    %676 = vmatpush1.xpose.msra.mxu0 0.0
    %677 = vmatprep.subr.mxu0 0.0
    %678 = vmatpush1.xpose.msra.mxu0 0.0
    %679 = vmatprep.subr.mxu0 0.0
    %680 = vmatpush1.xpose.msra.mxu0 0.0
    %681 = vmatprep.subr.mxu0 0.0
    %682 = vmatpush1.xpose.msra.mxu0 0.0
    %683 = vmatprep.subr.mxu0 0.0
    %684 = vmatpush1.xpose.msra.mxu0 0.0
    %685 = vmatprep.subr.mxu0 0.0
    %686 = vmatpush1.xpose.msra.mxu0 0.0
    %687 = vmatprep.subr.mxu0 0.0
    %688 = vmatpush1.xpose.msra.mxu0 0.0
    %689 = vmatprep.subr.mxu0 0.0
    %690 = vmatpush1.xpose.msra.mxu0 0.0
    %691 = vmatprep.subr.mxu0 0.0
    %692 = vmatpush1.xpose.msra.mxu0 0.0
    %693 = vmatprep.subr.mxu0 0.0
    %694 = vmatpush1.xpose.msra.mxu0 0.0
    %695 = vmatprep.subr.mxu0 0.0
    %696 = vmatpush1.xpose.msra.mxu0 0.0
    %697 = vmatprep.subr.mxu0 0.0
    %698 = vmatpush1.xpose.msra.mxu0 0.0
    %699 = vmatprep.subr.mxu0 0.0
    %700 = vmatpush1.xpose.msra.mxu0 0.0
    %701 = vmatprep.subr.mxu0 0.0
    %702 = vmatpush1.xpose.msra.mxu0 0.0
    %703 = vmatprep.subr.mxu0 0.0
    %704 = vmatpush1.xpose.msra.mxu0 0.0
    %705 = vmatprep.mubr.f32.mxu0 0.0
    %706 = vmatmul.mubr.f32.gmra.mrb[0].mxu0 %v637
    %v707 = vpop.f32.mrb[0].mxu0
    %v708 = vadd.f32 0.0, %v707
    %v709 = vpop.f32.mrb[0].mxu0
    %710 = vdwg.mxu0
    %v711 = vlaneseq
    %v712 = vshrl.u32 %v711, 7
    %v713 = vsub.s32 0, %v712
    %v714 = vrot.slane %v429, %v713
    %v715 = vmul.f32 %v708, %v714
    %v716 = vlaneseq
    %v717 = vshrl.u32 %v716, 7
    %v718 = vsub.s32 0, %v717
    %v719 = vrot.slane %v632, %v718
    %v720 = vadd.f32 %v715, %v719
    %v721 = vmul.f32 %v720, 0.35355338
    %v722 = vsel %vm636, %v721, -inf
    %723 = vmax.xlane.f32.xlu0 %v722
    %v724 = vpop.xlane.xlu0 %723
    %v725 = vsub.f32 %v721, %v724
    %v726 = vmul.f32 %v725, 1.442695
    %v727 = vpow.pop %v726
    %v728 = vsel %vm636, %v727, 0.0
    %729 = vadd.xlane.f32.xlu0 %v728
    %v730 = vpop.xlane.xlu0 %729
    %v731 = vrcp.pop %v730
    %v732 = vmul.f32 %v727, %v731
    %733 = vrot.lane.b32.xlu0 %v623, 64
    %v734 = vpop.permute.xlu0 %733
    %v737 = vsel %vm636, %v732, 0
    %739 = vmatprep.subr.mxu0 0.0
    %740 = vmatpush1.msra.mxu0 %v734
    %741 = vmatprep.subr.mxu0 0.0
    %742 = vmatpush1.msra.mxu0 0.0
    %743 = vmatprep.subr.mxu0 0.0
    %744 = vmatpush1.msra.mxu0 0.0
    %745 = vmatprep.subr.mxu0 0.0
    %746 = vmatpush1.msra.mxu0 0.0
    %747 = vmatprep.subr.mxu0 0.0
    %748 = vmatpush1.msra.mxu0 0.0
    %749 = vmatprep.subr.mxu0 0.0
    %750 = vmatpush1.msra.mxu0 0.0
    %751 = vmatprep.subr.mxu0 0.0
    %752 = vmatpush1.msra.mxu0 0.0
    %753 = vmatprep.subr.mxu0 0.0
    %754 = vmatpush1.msra.mxu0 0.0
    %755 = vmatprep.subr.mxu0 0.0
    %756 = vmatpush1.msra.mxu0 0.0
    %757 = vmatprep.subr.mxu0 0.0
    %758 = vmatpush1.msra.mxu0 0.0
    %759 = vmatprep.subr.mxu0 0.0
    %760 = vmatpush1.msra.mxu0 0.0
    %761 = vmatprep.subr.mxu0 0.0
    %762 = vmatpush1.msra.mxu0 0.0
    %763 = vmatprep.subr.mxu0 0.0
    %764 = vmatpush1.msra.mxu0 0.0
    %765 = vmatprep.subr.mxu0 0.0
    %766 = vmatpush1.msra.mxu0 0.0
    %767 = vmatprep.subr.mxu0 0.0
    %768 = vmatpush1.msra.mxu0 0.0
    %769 = vmatprep.subr.mxu0 0.0
    %770 = vmatpush1.msra.mxu0 0.0
    %771 = vmatprep.subr.mxu0 0.0
    %772 = vmatpush1.msra.mxu0 0.0
    %773 = vmatprep.subr.mxu0 0.0
    %774 = vmatpush1.msra.mxu0 0.0
    %775 = vmatprep.subr.mxu0 0.0
    %776 = vmatpush1.msra.mxu0 0.0
    %777 = vmatprep.subr.mxu0 0.0
    %778 = vmatpush1.msra.mxu0 0.0
    %779 = vmatprep.subr.mxu0 0.0
    %780 = vmatpush1.msra.mxu0 0.0
    %781 = vmatprep.subr.mxu0 0.0
    %782 = vmatpush1.msra.mxu0 0.0
    %783 = vmatprep.subr.mxu0 0.0
    %784 = vmatpush1.msra.mxu0 0.0
    %785 = vmatprep.subr.mxu0 0.0
    %786 = vmatpush1.msra.mxu0 0.0
    %787 = vmatprep.subr.mxu0 0.0
    %788 = vmatpush1.msra.mxu0 0.0
    %789 = vmatprep.subr.mxu0 0.0
    %790 = vmatpush1.msra.mxu0 0.0
    %791 = vmatprep.subr.mxu0 0.0
    %792 = vmatpush1.msra.mxu0 0.0
    %793 = vmatprep.subr.mxu0 0.0
    %794 = vmatpush1.msra.mxu0 0.0
    %795 = vmatprep.subr.mxu0 0.0
    %796 = vmatpush1.msra.mxu0 0.0
    %797 = vmatprep.subr.mxu0 0.0
    %798 = vmatpush1.msra.mxu0 0.0
    %799 = vmatprep.subr.mxu0 0.0
    %800 = vmatpush1.msra.mxu0 0.0
    %801 = vmatprep.subr.mxu0 0.0
    %802 = vmatpush1.msra.mxu0 0.0
    %803 = vmatprep.mubr.f32.mxu0 0.0
    %804 = vmatmul.mubr.f32.gmra.mrb[0].mxu0 %v737
    %v805 = vpop.f32.mrb[0].mxu0
    %v806 = vadd.f32 0.0, %v805
    %v807 = vpop.f32.mrb[0].mxu0
    %808 = vdwg.mxu0
    %809 = vrot.lane.b32.xlu0 %v623, 120
    %v810 = vpop.permute.xlu0 %809
    %811 = vrot.lane.b32.xlu0 %v623, 88
    %v812 = vpop.permute.xlu0 %811
    %v813 = vsel %vm636, %v810, 0
    %v815 = vsel %vm636, %v812, 0
    %817 = vmatprep.subr.mxu0 0.0
    %818 = vmatpush1.xpose.msra.mxu0 %v815
    %819 = vmatprep.subr.mxu0 0.0
    %820 = vmatpush1.xpose.msra.mxu0 0.0
    %821 = vmatprep.subr.mxu0 0.0
    %822 = vmatpush1.xpose.msra.mxu0 0.0
    %823 = vmatprep.subr.mxu0 0.0
    %824 = vmatpush1.xpose.msra.mxu0 0.0
    %825 = vmatprep.subr.mxu0 0.0
    %826 = vmatpush1.xpose.msra.mxu0 0.0
    %827 = vmatprep.subr.mxu0 0.0
    %828 = vmatpush1.xpose.msra.mxu0 0.0
    %829 = vmatprep.subr.mxu0 0.0
    %830 = vmatpush1.xpose.msra.mxu0 0.0
    %831 = vmatprep.subr.mxu0 0.0
    %832 = vmatpush1.xpose.msra.mxu0 0.0
    %833 = vmatprep.subr.mxu0 0.0
    %834 = vmatpush1.xpose.msra.mxu0 0.0
    %835 = vmatprep.subr.mxu0 0.0
    %836 = vmatpush1.xpose.msra.mxu0 0.0
    %837 = vmatprep.subr.mxu0 0.0
    %838 = vmatpush1.xpose.msra.mxu0 0.0
    %839 = vmatprep.subr.mxu0 0.0
    %840 = vmatpush1.xpose.msra.mxu0 0.0
    %841 = vmatprep.subr.mxu0 0.0
    %842 = vmatpush1.xpose.msra.mxu0 0.0
    %843 = vmatprep.subr.mxu0 0.0
    %844 = vmatpush1.xpose.msra.mxu0 0.0
    %845 = vmatprep.subr.mxu0 0.0
    %846 = vmatpush1.xpose.msra.mxu0 0.0
    %847 = vmatprep.subr.mxu0 0.0
    %848 = vmatpush1.xpose.msra.mxu0 0.0
    %849 = vmatprep.subr.mxu0 0.0
    %850 = vmatpush1.xpose.msra.mxu0 0.0
    %851 = vmatprep.subr.mxu0 0.0
    %852 = vmatpush1.xpose.msra.mxu0 0.0
    %853 = vmatprep.subr.mxu0 0.0
    %854 = vmatpush1.xpose.msra.mxu0 0.0
    %855 = vmatprep.subr.mxu0 0.0
    %856 = vmatpush1.xpose.msra.mxu0 0.0
    %857 = vmatprep.subr.mxu0 0.0
    %858 = vmatpush1.xpose.msra.mxu0 0.0
    %859 = vmatprep.subr.mxu0 0.0
    %860 = vmatpush1.xpose.msra.mxu0 0.0
    %861 = vmatprep.subr.mxu0 0.0
    %862 = vmatpush1.xpose.msra.mxu0 0.0
    %863 = vmatprep.subr.mxu0 0.0
    %864 = vmatpush1.xpose.msra.mxu0 0.0
    %865 = vmatprep.subr.mxu0 0.0
    %866 = vmatpush1.xpose.msra.mxu0 0.0
    %867 = vmatprep.subr.mxu0 0.0
    %868 = vmatpush1.xpose.msra.mxu0 0.0
    %869 = vmatprep.subr.mxu0 0.0
    %870 = vmatpush1.xpose.msra.mxu0 0.0
    %871 = vmatprep.subr.mxu0 0.0
    %872 = vmatpush1.xpose.msra.mxu0 0.0
    %873 = vmatprep.subr.mxu0 0.0
    %874 = vmatpush1.xpose.msra.mxu0 0.0
    %875 = vmatprep.subr.mxu0 0.0
    %876 = vmatpush1.xpose.msra.mxu0 0.0
    %877 = vmatprep.subr.mxu0 0.0
    %878 = vmatpush1.xpose.msra.mxu0 0.0
    %879 = vmatprep.subr.mxu0 0.0
    %880 = vmatpush1.xpose.msra.mxu0 0.0
    %881 = vmatprep.mubr.f32.mxu0 0.0
    %882 = vmatmul.mubr.f32.gmra.mrb[0].mxu0 %v813
    %v883 = vpop.f32.mrb[0].mxu0
    %v884 = vadd.f32 0.0, %v883
    %v885 = vpop.f32.mrb[0].mxu0
    %886 = vdwg.mxu0
    %v887 = vmul.f32 %v884, %v714
    %v888 = vadd.f32 %v887, %v719
    %v889 = vmul.f32 %v888, 0.35355338
    %v890 = vsel %vm636, %v889, -inf
    %891 = vmax.xlane.f32.xlu0 %v890
    %v892 = vpop.xlane.xlu0 %891
    %v893 = vsub.f32 %v889, %v892
    %v894 = vmul.f32 %v893, 1.442695
    %v895 = vpow.pop %v894
    %v896 = vsel %vm636, %v895, 0.0
    %897 = vadd.xlane.f32.xlu0 %v896
    %v898 = vpop.xlane.xlu0 %897
    %v899 = vrcp.pop %v898
    %v900 = vmul.f32 %v895, %v899
    %901 = vrot.lane.b32.xlu0 %v623, 56
    %v902 = vpop.permute.xlu0 %901
    %v905 = vsel %vm636, %v900, 0
    %907 = vmatprep.subr.mxu0 0.0
    %908 = vmatpush1.msra.mxu0 %v902
    %909 = vmatprep.subr.mxu0 0.0
    %910 = vmatpush1.msra.mxu0 0.0
    %911 = vmatprep.subr.mxu0 0.0
    %912 = vmatpush1.msra.mxu0 0.0
    %913 = vmatprep.subr.mxu0 0.0
    %914 = vmatpush1.msra.mxu0 0.0
    %915 = vmatprep.subr.mxu0 0.0
    %916 = vmatpush1.msra.mxu0 0.0
    %917 = vmatprep.subr.mxu0 0.0
    %918 = vmatpush1.msra.mxu0 0.0
    %919 = vmatprep.subr.mxu0 0.0
    %920 = vmatpush1.msra.mxu0 0.0
    %921 = vmatprep.subr.mxu0 0.0
    %922 = vmatpush1.msra.mxu0 0.0
    %923 = vmatprep.subr.mxu0 0.0
    %924 = vmatpush1.msra.mxu0 0.0
    %925 = vmatprep.subr.mxu0 0.0
    %926 = vmatpush1.msra.mxu0 0.0
    %927 = vmatprep.subr.mxu0 0.0
    %928 = vmatpush1.msra.mxu0 0.0
    %929 = vmatprep.subr.mxu0 0.0
    %930 = vmatpush1.msra.mxu0 0.0
    %931 = vmatprep.subr.mxu0 0.0
    %932 = vmatpush1.msra.mxu0 0.0
    %933 = vmatprep.subr.mxu0 0.0
    %934 = vmatpush1.msra.mxu0 0.0
    %935 = vmatprep.subr.mxu0 0.0
    %936 = vmatpush1.msra.mxu0 0.0
    %937 = vmatprep.subr.mxu0 0.0
    %938 = vmatpush1.msra.mxu0 0.0
    %939 = vmatprep.subr.mxu0 0.0
    %940 = vmatpush1.msra.mxu0 0.0
    %941 = vmatprep.subr.mxu0 0.0
    %942 = vmatpush1.msra.mxu0 0.0
    %943 = vmatprep.subr.mxu0 0.0
    %944 = vmatpush1.msra.mxu0 0.0
    %945 = vmatprep.subr.mxu0 0.0
    %946 = vmatpush1.msra.mxu0 0.0
    %947 = vmatprep.subr.mxu0 0.0
    %948 = vmatpush1.msra.mxu0 0.0
    %949 = vmatprep.subr.mxu0 0.0
    %950 = vmatpush1.msra.mxu0 0.0
    %951 = vmatprep.subr.mxu0 0.0
    %952 = vmatpush1.msra.mxu0 0.0
    %953 = vmatprep.subr.mxu0 0.0
    %954 = vmatpush1.msra.mxu0 0.0
    %955 = vmatprep.subr.mxu0 0.0
    %956 = vmatpush1.msra.mxu0 0.0
    %957 = vmatprep.subr.mxu0 0.0
    %958 = vmatpush1.msra.mxu0 0.0
    %959 = vmatprep.subr.mxu0 0.0
    %960 = vmatpush1.msra.mxu0 0.0
    %961 = vmatprep.subr.mxu0 0.0
    %962 = vmatpush1.msra.mxu0 0.0
    %963 = vmatprep.subr.mxu0 0.0
    %964 = vmatpush1.msra.mxu0 0.0
    %965 = vmatprep.subr.mxu0 0.0
    %966 = vmatpush1.msra.mxu0 0.0
    %967 = vmatprep.subr.mxu0 0.0
    %968 = vmatpush1.msra.mxu0 0.0
    %969 = vmatprep.subr.mxu0 0.0
    %970 = vmatpush1.msra.mxu0 0.0
    %971 = vmatprep.mubr.f32.mxu0 0.0
    %972 = vmatmul.mubr.f32.gmra.mrb[0].mxu0 %v905
    %v973 = vpop.f32.mrb[0].mxu0
    %v974 = vadd.f32 0.0, %v973
    %v975 = vpop.f32.mrb[0].mxu0
    %976 = vdwg.mxu0
    %977 = vrot.lane.b32.xlu0 %v623, 112
    %v978 = vpop.permute.xlu0 %977
    %979 = vrot.lane.b32.xlu0 %v623, 80
    %v980 = vpop.permute.xlu0 %979
    %v981 = vsel %vm636, %v978, 0
    %v983 = vsel %vm636, %v980, 0
    %985 = vmatprep.subr.mxu0 0.0
    %986 = vmatpush1.xpose.msra.mxu0 %v983
    %987 = vmatprep.subr.mxu0 0.0
    %988 = vmatpush1.xpose.msra.mxu0 0.0
    %989 = vmatprep.subr.mxu0 0.0
    %990 = vmatpush1.xpose.msra.mxu0 0.0
    %991 = vmatprep.subr.mxu0 0.0
    %992 = vmatpush1.xpose.msra.mxu0 0.0
    %993 = vmatprep.subr.mxu0 0.0
    %994 = vmatpush1.xpose.msra.mxu0 0.0
    %995 = vmatprep.subr.mxu0 0.0
    %996 = vmatpush1.xpose.msra.mxu0 0.0
    %997 = vmatprep.subr.mxu0 0.0
    %998 = vmatpush1.xpose.msra.mxu0 0.0
    %999 = vmatprep.subr.mxu0 0.0
    %1000 = vmatpush1.xpose.msra.mxu0 0.0
    %1001 = vmatprep.subr.mxu0 0.0
    %1002 = vmatpush1.xpose.msra.mxu0 0.0
    %1003 = vmatprep.subr.mxu0 0.0
    %1004 = vmatpush1.xpose.msra.mxu0 0.0
    %1005 = vmatprep.subr.mxu0 0.0
    %1006 = vmatpush1.xpose.msra.mxu0 0.0
    %1007 = vmatprep.subr.mxu0 0.0
    %1008 = vmatpush1.xpose.msra.mxu0 0.0
    %1009 = vmatprep.subr.mxu0 0.0
    %1010 = vmatpush1.xpose.msra.mxu0 0.0
    %1011 = vmatprep.subr.mxu0 0.0
    %1012 = vmatpush1.xpose.msra.mxu0 0.0
    %1013 = vmatprep.subr.mxu0 0.0
    %1014 = vmatpush1.xpose.msra.mxu0 0.0
    %1015 = vmatprep.subr.mxu0 0.0
    %1016 = vmatpush1.xpose.msra.mxu0 0.0
    %1017 = vmatprep.subr.mxu0 0.0
    %1018 = vmatpush1.xpose.msra.mxu0 0.0
    %1019 = vmatprep.subr.mxu0 0.0
    %1020 = vmatpush1.xpose.msra.mxu0 0.0
    %1021 = vmatprep.subr.mxu0 0.0
    %1022 = vmatpush1.xpose.msra.mxu0 0.0
    %1023 = vmatprep.subr.mxu0 0.0
    %1024 = vmatpush1.xpose.msra.mxu0 0.0
    %1025 = vmatprep.subr.mxu0 0.0
    %1026 = vmatpush1.xpose.msra.mxu0 0.0
    %1027 = vmatprep.subr.mxu0 0.0
    %1028 = vmatpush1.xpose.msra.mxu0 0.0
    %1029 = vmatprep.subr.mxu0 0.0
    %1030 = vmatpush1.xpose.msra.mxu0 0.0
    %1031 = vmatprep.subr.mxu0 0.0
    %1032 = vmatpush1.xpose.msra.mxu0 0.0
    %1033 = vmatprep.subr.mxu0 0.0
    %1034 = vmatpush1.xpose.msra.mxu0 0.0
    %1035 = vmatprep.subr.mxu0 0.0
    %1036 = vmatpush1.xpose.msra.mxu0 0.0
    %1037 = vmatprep.subr.mxu0 0.0
    %1038 = vmatpush1.xpose.msra.mxu0 0.0
    %1039 = vmatprep.subr.mxu0 0.0
    %1040 = vmatpush1.xpose.msra.mxu0 0.0
    %1041 = vmatprep.subr.mxu0 0.0
    %1042 = vmatpush1.xpose.msra.mxu0 0.0
    %1043 = vmatprep.subr.mxu0 0.0
    %1044 = vmatpush1.xpose.msra.mxu0 0.0
    %1045 = vmatprep.subr.mxu0 0.0
    %1046 = vmatpush1.xpose.msra.mxu0 0.0
    %1047 = vmatprep.subr.mxu0 0.0
    %1048 = vmatpush1.xpose.msra.mxu0 0.0
    %1049 = vmatprep.mubr.f32.mxu0 0.0
    %1050 = vmatmul.mubr.f32.gmra.mrb[0].mxu0 %v981
    %v1051 = vpop.f32.mrb[0].mxu0
    %v1052 = vadd.f32 0.0, %v1051
    %v1053 = vpop.f32.mrb[0].mxu0
    %1054 = vdwg.mxu0
    %v1055 = vmul.f32 %v1052, %v714
    %v1056 = vadd.f32 %v1055, %v719
    %v1057 = vmul.f32 %v1056, 0.35355338
    %v1058 = vsel %vm636, %v1057, -inf
    %1059 = vmax.xlane.f32.xlu0 %v1058
    %v1060 = vpop.xlane.xlu0 %1059
    %v1061 = vsub.f32 %v1057, %v1060
    %v1062 = vmul.f32 %v1061, 1.442695
    %v1063 = vpow.pop %v1062
    %v1064 = vsel %vm636, %v1063, 0.0
    %1065 = vadd.xlane.f32.xlu0 %v1064
    %v1066 = vpop.xlane.xlu0 %1065
    %v1067 = vrcp.pop %v1066
    %v1068 = vmul.f32 %v1063, %v1067
    %1069 = vrot.lane.b32.xlu0 %v623, 48
    %v1070 = vpop.permute.xlu0 %1069
    %v1073 = vsel %vm636, %v1068, 0
    %1075 = vmatprep.subr.mxu0 0.0
    %1076 = vmatpush1.msra.mxu0 %v1070
    %1077 = vmatprep.subr.mxu0 0.0
    %1078 = vmatpush1.msra.mxu0 0.0
    %1079 = vmatprep.subr.mxu0 0.0
    %1080 = vmatpush1.msra.mxu0 0.0
    %1081 = vmatprep.subr.mxu0 0.0
    %1082 = vmatpush1.msra.mxu0 0.0
    %1083 = vmatprep.subr.mxu0 0.0
    %1084 = vmatpush1.msra.mxu0 0.0
    %1085 = vmatprep.subr.mxu0 0.0
    %1086 = vmatpush1.msra.mxu0 0.0
    %1087 = vmatprep.subr.mxu0 0.0
    %1088 = vmatpush1.msra.mxu0 0.0
    %1089 = vmatprep.subr.mxu0 0.0
    %1090 = vmatpush1.msra.mxu0 0.0
    %1091 = vmatprep.subr.mxu0 0.0
    %1092 = vmatpush1.msra.mxu0 0.0
    %1093 = vmatprep.subr.mxu0 0.0
    %1094 = vmatpush1.msra.mxu0 0.0
    %1095 = vmatprep.subr.mxu0 0.0
    %1096 = vmatpush1.msra.mxu0 0.0
    %1097 = vmatprep.subr.mxu0 0.0
    %1098 = vmatpush1.msra.mxu0 0.0
    %1099 = vmatprep.subr.mxu0 0.0
    %1100 = vmatpush1.msra.mxu0 0.0
    %1101 = vmatprep.subr.mxu0 0.0
    %1102 = vmatpush1.msra.mxu0 0.0
    %1103 = vmatprep.subr.mxu0 0.0
    %1104 = vmatpush1.msra.mxu0 0.0
    %1105 = vmatprep.subr.mxu0 0.0
    %1106 = vmatpush1.msra.mxu0 0.0
    %1107 = vmatprep.subr.mxu0 0.0
    %1108 = vmatpush1.msra.mxu0 0.0
    %1109 = vmatprep.subr.mxu0 0.0
    %1110 = vmatpush1.msra.mxu0 0.0
    %1111 = vmatprep.subr.mxu0 0.0
    %1112 = vmatpush1.msra.mxu0 0.0
    %1113 = vmatprep.subr.mxu0 0.0
    %1114 = vmatpush1.msra.mxu0 0.0
    %1115 = vmatprep.subr.mxu0 0.0
    %1116 = vmatpush1.msra.mxu0 0.0
    %1117 = vmatprep.subr.mxu0 0.0
    %1118 = vmatpush1.msra.mxu0 0.0
    %1119 = vmatprep.subr.mxu0 0.0
    %1120 = vmatpush1.msra.mxu0 0.0
    %1121 = vmatprep.subr.mxu0 0.0
    %1122 = vmatpush1.msra.mxu0 0.0
    %1123 = vmatprep.subr.mxu0 0.0
    %1124 = vmatpush1.msra.mxu0 0.0
    %1125 = vmatprep.subr.mxu0 0.0
    %1126 = vmatpush1.msra.mxu0 0.0
    %1127 = vmatprep.subr.mxu0 0.0
    %1128 = vmatpush1.msra.mxu0 0.0
    %1129 = vmatprep.subr.mxu0 0.0
    %1130 = vmatpush1.msra.mxu0 0.0
    %1131 = vmatprep.subr.mxu0 0.0
    %1132 = vmatpush1.msra.mxu0 0.0
    %1133 = vmatprep.subr.mxu0 0.0
    %1134 = vmatpush1.msra.mxu0 0.0
    %1135 = vmatprep.subr.mxu0 0.0
    %1136 = vmatpush1.msra.mxu0 0.0
    %1137 = vmatprep.subr.mxu0 0.0
    %1138 = vmatpush1.msra.mxu0 0.0
    %1139 = vmatprep.mubr.f32.mxu0 0.0
    %1140 = vmatmul.mubr.f32.gmra.mrb[0].mxu0 %v1073
    %v1141 = vpop.f32.mrb[0].mxu0
    %v1142 = vadd.f32 0.0, %v1141
    %v1143 = vpop.f32.mrb[0].mxu0
    %1144 = vdwg.mxu0
    %1145 = vrot.lane.b32.xlu0 %v623, 104
    %v1146 = vpop.permute.xlu0 %1145
    %1147 = vrot.lane.b32.xlu0 %v623, 72
    %v1148 = vpop.permute.xlu0 %1147
    %v1149 = vsel %vm636, %v1146, 0
    %v1151 = vsel %vm636, %v1148, 0
    %1153 = vmatprep.subr.mxu0 0.0
    %1154 = vmatpush1.xpose.msra.mxu0 %v1151
    %1155 = vmatprep.subr.mxu0 0.0
    %1156 = vmatpush1.xpose.msra.mxu0 0.0
    %1157 = vmatprep.subr.mxu0 0.0
    %1158 = vmatpush1.xpose.msra.mxu0 0.0
    %1159 = vmatprep.subr.mxu0 0.0
    %1160 = vmatpush1.xpose.msra.mxu0 0.0
    %1161 = vmatprep.subr.mxu0 0.0
    %1162 = vmatpush1.xpose.msra.mxu0 0.0
    %1163 = vmatprep.subr.mxu0 0.0
    %1164 = vmatpush1.xpose.msra.mxu0 0.0
    %1165 = vmatprep.subr.mxu0 0.0
    %1166 = vmatpush1.xpose.msra.mxu0 0.0
    %1167 = vmatprep.subr.mxu0 0.0
    %1168 = vmatpush1.xpose.msra.mxu0 0.0
    %1169 = vmatprep.subr.mxu0 0.0
    %1170 = vmatpush1.xpose.msra.mxu0 0.0
    %1171 = vmatprep.subr.mxu0 0.0
    %1172 = vmatpush1.xpose.msra.mxu0 0.0
    %1173 = vmatprep.subr.mxu0 0.0
    %1174 = vmatpush1.xpose.msra.mxu0 0.0
    %1175 = vmatprep.subr.mxu0 0.0
    %1176 = vmatpush1.xpose.msra.mxu0 0.0
    %1177 = vmatprep.subr.mxu0 0.0
    %1178 = vmatpush1.xpose.msra.mxu0 0.0
    %1179 = vmatprep.subr.mxu0 0.0
    %1180 = vmatpush1.xpose.msra.mxu0 0.0
    %1181 = vmatprep.subr.mxu0 0.0
    %1182 = vmatpush1.xpose.msra.mxu0 0.0
    %1183 = vmatprep.subr.mxu0 0.0
    %1184 = vmatpush1.xpose.msra.mxu0 0.0
    %1185 = vmatprep.subr.mxu0 0.0
    %1186 = vmatpush1.xpose.msra.mxu0 0.0
    %1187 = vmatprep.subr.mxu0 0.0
    %1188 = vmatpush1.xpose.msra.mxu0 0.0
    %1189 = vmatprep.subr.mxu0 0.0
    %1190 = vmatpush1.xpose.msra.mxu0 0.0
    %1191 = vmatprep.subr.mxu0 0.0
    %1192 = vmatpush1.xpose.msra.mxu0 0.0
    %1193 = vmatprep.subr.mxu0 0.0
    %1194 = vmatpush1.xpose.msra.mxu0 0.0
    %1195 = vmatprep.subr.mxu0 0.0
    %1196 = vmatpush1.xpose.msra.mxu0 0.0
    %1197 = vmatprep.subr.mxu0 0.0
    %1198 = vmatpush1.xpose.msra.mxu0 0.0
    %1199 = vmatprep.subr.mxu0 0.0
    %1200 = vmatpush1.xpose.msra.mxu0 0.0
    %1201 = vmatprep.subr.mxu0 0.0
    %1202 = vmatpush1.xpose.msra.mxu0 0.0
    %1203 = vmatprep.subr.mxu0 0.0
    %1204 = vmatpush1.xpose.msra.mxu0 0.0
    %1205 = vmatprep.subr.mxu0 0.0
    %1206 = vmatpush1.xpose.msra.mxu0 0.0
    %1207 = vmatprep.subr.mxu0 0.0
    %1208 = vmatpush1.xpose.msra.mxu0 0.0
    %1209 = vmatprep.subr.mxu0 0.0
    %1210 = vmatpush1.xpose.msra.mxu0 0.0
    %1211 = vmatprep.subr.mxu0 0.0
    %1212 = vmatpush1.xpose.msra.mxu0 0.0
    %1213 = vmatprep.subr.mxu0 0.0
    %1214 = vmatpush1.xpose.msra.mxu0 0.0
    %1215 = vmatprep.subr.mxu0 0.0
    %1216 = vmatpush1.xpose.msra.mxu0 0.0
    %1217 = vmatprep.mubr.f32.mxu0 0.0
    %1218 = vmatmul.mubr.f32.gmra.mrb[0].mxu0 %v1149
    %v1219 = vpop.f32.mrb[0].mxu0
    %v1220 = vadd.f32 0.0, %v1219
    %v1221 = vpop.f32.mrb[0].mxu0
    %1222 = vdwg.mxu0
    %v1223 = vmul.f32 %v1220, %v714
    %v1224 = vadd.f32 %v1223, %v719
    %v1225 = vmul.f32 %v1224, 0.35355338
    %v1226 = vsel %vm636, %v1225, -inf
    %1227 = vmax.xlane.f32.xlu0 %v1226
    %v1228 = vpop.xlane.xlu0 %1227
    %v1229 = vsub.f32 %v1225, %v1228
    %v1230 = vmul.f32 %v1229, 1.442695
    %v1231 = vpow.pop %v1230
    %v1232 = vsel %vm636, %v1231, 0.0
    %1233 = vadd.xlane.f32.xlu0 %v1232
    %v1234 = vpop.xlane.xlu0 %1233
    %v1235 = vrcp.pop %v1234
    %v1236 = vmul.f32 %v1231, %v1235
    %1237 = vrot.lane.b32.xlu0 %v623, 40
    %v1238 = vpop.permute.xlu0 %1237
    %v1241 = vsel %vm636, %v1236, 0
    %1243 = vmatprep.subr.mxu0 0.0
    %1244 = vmatpush1.msra.mxu0 %v1238
    %1245 = vmatprep.subr.mxu0 0.0
    %1246 = vmatpush1.msra.mxu0 0.0
    %1247 = vmatprep.subr.mxu0 0.0
    %1248 = vmatpush1.msra.mxu0 0.0
    %1249 = vmatprep.subr.mxu0 0.0
    %1250 = vmatpush1.msra.mxu0 0.0
    %1251 = vmatprep.subr.mxu0 0.0
    %1252 = vmatpush1.msra.mxu0 0.0
    %1253 = vmatprep.subr.mxu0 0.0
    %1254 = vmatpush1.msra.mxu0 0.0
    %1255 = vmatprep.subr.mxu0 0.0
    %1256 = vmatpush1.msra.mxu0 0.0
    %1257 = vmatprep.subr.mxu0 0.0
    %1258 = vmatpush1.msra.mxu0 0.0
    %1259 = vmatprep.subr.mxu0 0.0
    %1260 = vmatpush1.msra.mxu0 0.0
    %1261 = vmatprep.subr.mxu0 0.0
    %1262 = vmatpush1.msra.mxu0 0.0
    %1263 = vmatprep.subr.mxu0 0.0
    %1264 = vmatpush1.msra.mxu0 0.0
    %1265 = vmatprep.subr.mxu0 0.0
    %1266 = vmatpush1.msra.mxu0 0.0
    %1267 = vmatprep.subr.mxu0 0.0
    %1268 = vmatpush1.msra.mxu0 0.0
    %1269 = vmatprep.subr.mxu0 0.0
    %1270 = vmatpush1.msra.mxu0 0.0
    %1271 = vmatprep.subr.mxu0 0.0
    %1272 = vmatpush1.msra.mxu0 0.0
    %1273 = vmatprep.subr.mxu0 0.0
    %1274 = vmatpush1.msra.mxu0 0.0
    %1275 = vmatprep.subr.mxu0 0.0
    %1276 = vmatpush1.msra.mxu0 0.0
    %1277 = vmatprep.subr.mxu0 0.0
    %1278 = vmatpush1.msra.mxu0 0.0
    %1279 = vmatprep.subr.mxu0 0.0
    %1280 = vmatpush1.msra.mxu0 0.0
    %1281 = vmatprep.subr.mxu0 0.0
    %1282 = vmatpush1.msra.mxu0 0.0
    %1283 = vmatprep.subr.mxu0 0.0
    %1284 = vmatpush1.msra.mxu0 0.0
    %1285 = vmatprep.subr.mxu0 0.0
    %1286 = vmatpush1.msra.mxu0 0.0
    %1287 = vmatprep.subr.mxu0 0.0
    %1288 = vmatpush1.msra.mxu0 0.0
    %1289 = vmatprep.subr.mxu0 0.0
    %1290 = vmatpush1.msra.mxu0 0.0
    %1291 = vmatprep.subr.mxu0 0.0
    %1292 = vmatpush1.msra.mxu0 0.0
    %1293 = vmatprep.subr.mxu0 0.0
    %1294 = vmatpush1.msra.mxu0 0.0
    %1295 = vmatprep.subr.mxu0 0.0
    %1296 = vmatpush1.msra.mxu0 0.0
    %1297 = vmatprep.subr.mxu0 0.0
    %1298 = vmatpush1.msra.mxu0 0.0
    %1299 = vmatprep.subr.mxu0 0.0
    %1300 = vmatpush1.msra.mxu0 0.0
    %1301 = vmatprep.subr.mxu0 0.0
    %1302 = vmatpush1.msra.mxu0 0.0
    %1303 = vmatprep.subr.mxu0 0.0
    %1304 = vmatpush1.msra.mxu0 0.0
    %1305 = vmatprep.subr.mxu0 0.0
    %1306 = vmatpush1.msra.mxu0 0.0
    %1307 = vmatprep.mubr.f32.mxu0 0.0
    %1308 = vmatmul.mubr.f32.gmra.mrb[0].mxu0 %v1241
    %v1309 = vpop.f32.mrb[0].mxu0
    %v1310 = vadd.f32 0.0, %v1309
    %v1311 = vpop.f32.mrb[0].mxu0
    %1312 = vdwg.mxu0
    %1314 = vrot.lane.b32.xlu0 %v974, 8
    %v1315 = vpop.permute.xlu0 %1314
    %1318 = vrot.lane.b32.xlu0 %v1142, 16
    %v1319 = vpop.permute.xlu0 %1318
    %1322 = vrot.lane.b32.xlu0 %v1310, 24
    %v1323 = vpop.permute.xlu0 %1322
    %v1325 = vsel %vm636, %v806, %v1315
    %vm1326 = vcmask 130048
    %v1327 = vsel %vm1326, %v1325, %v1319
    %vm1328 = vcmask 195584
    %v1329 = vsel %vm1328, %v1327, %v1323
    %1331 = vrot.lane.b32.xlu0 %v628, 96
    %v1332 = vpop.permute.xlu0 %1331
    %v1333 = vsel %vm636, %v628, 0
    %v1335 = vsel %vm636, %v1332, 0
    %1337 = vmatprep.subr.mxu0 0.0
    %1338 = vmatpush1.xpose.msra.mxu0 %v1335
    %1339 = vmatprep.subr.mxu0 0.0
    %1340 = vmatpush1.xpose.msra.mxu0 0.0
    %1341 = vmatprep.subr.mxu0 0.0
    %1342 = vmatpush1.xpose.msra.mxu0 0.0
    %1343 = vmatprep.subr.mxu0 0.0
    %1344 = vmatpush1.xpose.msra.mxu0 0.0
    %1345 = vmatprep.subr.mxu0 0.0
    %1346 = vmatpush1.xpose.msra.mxu0 0.0
    %1347 = vmatprep.subr.mxu0 0.0
    %1348 = vmatpush1.xpose.msra.mxu0 0.0
    %1349 = vmatprep.subr.mxu0 0.0
    %1350 = vmatpush1.xpose.msra.mxu0 0.0
    %1351 = vmatprep.subr.mxu0 0.0
    %1352 = vmatpush1.xpose.msra.mxu0 0.0
    %1353 = vmatprep.subr.mxu0 0.0
    %1354 = vmatpush1.xpose.msra.mxu0 0.0
    %1355 = vmatprep.subr.mxu0 0.0
    %1356 = vmatpush1.xpose.msra.mxu0 0.0
    %1357 = vmatprep.subr.mxu0 0.0
    %1358 = vmatpush1.xpose.msra.mxu0 0.0
    %1359 = vmatprep.subr.mxu0 0.0
    %1360 = vmatpush1.xpose.msra.mxu0 0.0
    %1361 = vmatprep.subr.mxu0 0.0
    %1362 = vmatpush1.xpose.msra.mxu0 0.0
    %1363 = vmatprep.subr.mxu0 0.0
    %1364 = vmatpush1.xpose.msra.mxu0 0.0
    %1365 = vmatprep.subr.mxu0 0.0
    %1366 = vmatpush1.xpose.msra.mxu0 0.0
    %1367 = vmatprep.subr.mxu0 0.0
    %1368 = vmatpush1.xpose.msra.mxu0 0.0
    %1369 = vmatprep.subr.mxu0 0.0
    %1370 = vmatpush1.xpose.msra.mxu0 0.0
    %1371 = vmatprep.subr.mxu0 0.0
    %1372 = vmatpush1.xpose.msra.mxu0 0.0
    %1373 = vmatprep.subr.mxu0 0.0
    %1374 = vmatpush1.xpose.msra.mxu0 0.0
    %1375 = vmatprep.subr.mxu0 0.0
    %1376 = vmatpush1.xpose.msra.mxu0 0.0
    %1377 = vmatprep.subr.mxu0 0.0
    %1378 = vmatpush1.xpose.msra.mxu0 0.0
    %1379 = vmatprep.subr.mxu0 0.0
    %1380 = vmatpush1.xpose.msra.mxu0 0.0
    %1381 = vmatprep.subr.mxu0 0.0
    %1382 = vmatpush1.xpose.msra.mxu0 0.0
    %1383 = vmatprep.subr.mxu0 0.0
    %1384 = vmatpush1.xpose.msra.mxu0 0.0
    %1385 = vmatprep.subr.mxu0 0.0
    %1386 = vmatpush1.xpose.msra.mxu0 0.0
    %1387 = vmatprep.subr.mxu0 0.0
    %1388 = vmatpush1.xpose.msra.mxu0 0.0
    %1389 = vmatprep.subr.mxu0 0.0
    %1390 = vmatpush1.xpose.msra.mxu0 0.0
    %1391 = vmatprep.subr.mxu0 0.0
    %1392 = vmatpush1.xpose.msra.mxu0 0.0
    %1393 = vmatprep.subr.mxu0 0.0
    %1394 = vmatpush1.xpose.msra.mxu0 0.0
    %1395 = vmatprep.subr.mxu0 0.0
    %1396 = vmatpush1.xpose.msra.mxu0 0.0
    %1397 = vmatprep.subr.mxu0 0.0
    %1398 = vmatpush1.xpose.msra.mxu0 0.0
    %1399 = vmatprep.subr.mxu0 0.0
    %1400 = vmatpush1.xpose.msra.mxu0 0.0
    %1401 = vmatprep.mubr.f32.mxu0 0.0
    %1402 = vmatmul.mubr.f32.gmra.mrb[0].mxu0 %v1333
    %v1403 = vpop.f32.mrb[0].mxu0
    %v1404 = vadd.f32 0.0, %v1403
    %v1405 = vpop.f32.mrb[0].mxu0
    %1406 = vdwg.mxu0
    %v1407 = vlaneseq
    %v1408 = vshrl.u32 %v1407, 7
    %v1409 = vsub.s32 1, %v1408
    %v1410 = vrot.slane %v429, %v1409
    %v1411 = vmul.f32 %v1404, %v1410
    %v1412 = vlaneseq
    %v1413 = vshrl.u32 %v1412, 7
    %v1414 = vsub.s32 1, %v1413
    %v1415 = vrot.slane %v632, %v1414
    %v1416 = vadd.f32 %v1411, %v1415
    %v1417 = vmul.f32 %v1416, 0.35355338
    %v1418 = vsel %vm636, %v1417, -inf
    %1419 = vmax.xlane.f32.xlu0 %v1418
    %v1420 = vpop.xlane.xlu0 %1419
    %v1421 = vsub.f32 %v1417, %v1420
    %v1422 = vmul.f32 %v1421, 1.442695
    %v1423 = vpow.pop %v1422
    %v1424 = vsel %vm636, %v1423, 0.0
    %1425 = vadd.xlane.f32.xlu0 %v1424
    %v1426 = vpop.xlane.xlu0 %1425
    %v1427 = vrcp.pop %v1426
    %v1428 = vmul.f32 %v1423, %v1427
    %1429 = vrot.lane.b32.xlu0 %v628, 64
    %v1430 = vpop.permute.xlu0 %1429
    %v1433 = vsel %vm636, %v1428, 0
    %1435 = vmatprep.subr.mxu0 0.0
    %1436 = vmatpush1.msra.mxu0 %v1430
    %1437 = vmatprep.subr.mxu0 0.0
    %1438 = vmatpush1.msra.mxu0 0.0
    %1439 = vmatprep.subr.mxu0 0.0
    %1440 = vmatpush1.msra.mxu0 0.0
    %1441 = vmatprep.subr.mxu0 0.0
    %1442 = vmatpush1.msra.mxu0 0.0
    %1443 = vmatprep.subr.mxu0 0.0
    %1444 = vmatpush1.msra.mxu0 0.0
    %1445 = vmatprep.subr.mxu0 0.0
    %1446 = vmatpush1.msra.mxu0 0.0
    %1447 = vmatprep.subr.mxu0 0.0
    %1448 = vmatpush1.msra.mxu0 0.0
    %1449 = vmatprep.subr.mxu0 0.0
    %1450 = vmatpush1.msra.mxu0 0.0
    %1451 = vmatprep.subr.mxu0 0.0
    %1452 = vmatpush1.msra.mxu0 0.0
    %1453 = vmatprep.subr.mxu0 0.0
    %1454 = vmatpush1.msra.mxu0 0.0
    %1455 = vmatprep.subr.mxu0 0.0
    %1456 = vmatpush1.msra.mxu0 0.0
    %1457 = vmatprep.subr.mxu0 0.0
    %1458 = vmatpush1.msra.mxu0 0.0
    %1459 = vmatprep.subr.mxu0 0.0
    %1460 = vmatpush1.msra.mxu0 0.0
    %1461 = vmatprep.subr.mxu0 0.0
    %1462 = vmatpush1.msra.mxu0 0.0
    %1463 = vmatprep.subr.mxu0 0.0
    %1464 = vmatpush1.msra.mxu0 0.0
    %1465 = vmatprep.subr.mxu0 0.0
    %1466 = vmatpush1.msra.mxu0 0.0
    %1467 = vmatprep.subr.mxu0 0.0
    %1468 = vmatpush1.msra.mxu0 0.0
    %1469 = vmatprep.subr.mxu0 0.0
    %1470 = vmatpush1.msra.mxu0 0.0
    %1471 = vmatprep.subr.mxu0 0.0
    %1472 = vmatpush1.msra.mxu0 0.0
    %1473 = vmatprep.subr.mxu0 0.0
    %1474 = vmatpush1.msra.mxu0 0.0
    %1475 = vmatprep.subr.mxu0 0.0
    %1476 = vmatpush1.msra.mxu0 0.0
    %1477 = vmatprep.subr.mxu0 0.0
    %1478 = vmatpush1.msra.mxu0 0.0
    %1479 = vmatprep.subr.mxu0 0.0
    %1480 = vmatpush1.msra.mxu0 0.0
    %1481 = vmatprep.subr.mxu0 0.0
    %1482 = vmatpush1.msra.mxu0 0.0
    %1483 = vmatprep.subr.mxu0 0.0
    %1484 = vmatpush1.msra.mxu0 0.0
    %1485 = vmatprep.subr.mxu0 0.0
    %1486 = vmatpush1.msra.mxu0 0.0
    %1487 = vmatprep.subr.mxu0 0.0
    %1488 = vmatpush1.msra.mxu0 0.0
    %1489 = vmatprep.subr.mxu0 0.0
    %1490 = vmatpush1.msra.mxu0 0.0
    %1491 = vmatprep.subr.mxu0 0.0
    %1492 = vmatpush1.msra.mxu0 0.0
    %1493 = vmatprep.subr.mxu0 0.0
    %1494 = vmatpush1.msra.mxu0 0.0
    %1495 = vmatprep.subr.mxu0 0.0
    %1496 = vmatpush1.msra.mxu0 0.0
    %1497 = vmatprep.subr.mxu0 0.0
    %1498 = vmatpush1.msra.mxu0 0.0
    %1499 = vmatprep.mubr.f32.mxu0 0.0
    %1500 = vmatmul.mubr.f32.gmra.mrb[0].mxu0 %v1433
    %v1501 = vpop.f32.mrb[0].mxu0
    %v1502 = vadd.f32 0.0, %v1501
    %v1503 = vpop.f32.mrb[0].mxu0
    %1504 = vdwg.mxu0
    %1505 = vrot.lane.b32.xlu0 %v628, 120
    %v1506 = vpop.permute.xlu0 %1505
    %1507 = vrot.lane.b32.xlu0 %v628, 88
    %v1508 = vpop.permute.xlu0 %1507
    %v1509 = vsel %vm636, %v1506, 0
    %v1511 = vsel %vm636, %v1508, 0
    %1513 = vmatprep.subr.mxu0 0.0
    %1514 = vmatpush1.xpose.msra.mxu0 %v1511
    %1515 = vmatprep.subr.mxu0 0.0
    %1516 = vmatpush1.xpose.msra.mxu0 0.0
    %1517 = vmatprep.subr.mxu0 0.0
    %1518 = vmatpush1.xpose.msra.mxu0 0.0
    %1519 = vmatprep.subr.mxu0 0.0
    %1520 = vmatpush1.xpose.msra.mxu0 0.0
    %1521 = vmatprep.subr.mxu0 0.0
    %1522 = vmatpush1.xpose.msra.mxu0 0.0
    %1523 = vmatprep.subr.mxu0 0.0
    %1524 = vmatpush1.xpose.msra.mxu0 0.0
    %1525 = vmatprep.subr.mxu0 0.0
    %1526 = vmatpush1.xpose.msra.mxu0 0.0
    %1527 = vmatprep.subr.mxu0 0.0
    %1528 = vmatpush1.xpose.msra.mxu0 0.0
    %1529 = vmatprep.subr.mxu0 0.0
    %1530 = vmatpush1.xpose.msra.mxu0 0.0
    %1531 = vmatprep.subr.mxu0 0.0
    %1532 = vmatpush1.xpose.msra.mxu0 0.0
    %1533 = vmatprep.subr.mxu0 0.0
    %1534 = vmatpush1.xpose.msra.mxu0 0.0
    %1535 = vmatprep.subr.mxu0 0.0
    %1536 = vmatpush1.xpose.msra.mxu0 0.0
    %1537 = vmatprep.subr.mxu0 0.0
    %1538 = vmatpush1.xpose.msra.mxu0 0.0
    %1539 = vmatprep.subr.mxu0 0.0
    %1540 = vmatpush1.xpose.msra.mxu0 0.0
    %1541 = vmatprep.subr.mxu0 0.0
    %1542 = vmatpush1.xpose.msra.mxu0 0.0
    %1543 = vmatprep.subr.mxu0 0.0
    %1544 = vmatpush1.xpose.msra.mxu0 0.0
    %1545 = vmatprep.subr.mxu0 0.0
    %1546 = vmatpush1.xpose.msra.mxu0 0.0
    %1547 = vmatprep.subr.mxu0 0.0
    %1548 = vmatpush1.xpose.msra.mxu0 0.0
    %1549 = vmatprep.subr.mxu0 0.0
    %1550 = vmatpush1.xpose.msra.mxu0 0.0
    %1551 = vmatprep.subr.mxu0 0.0
    %1552 = vmatpush1.xpose.msra.mxu0 0.0
    %1553 = vmatprep.subr.mxu0 0.0
    %1554 = vmatpush1.xpose.msra.mxu0 0.0
    %1555 = vmatprep.subr.mxu0 0.0
    %1556 = vmatpush1.xpose.msra.mxu0 0.0
    %1557 = vmatprep.subr.mxu0 0.0
    %1558 = vmatpush1.xpose.msra.mxu0 0.0
    %1559 = vmatprep.subr.mxu0 0.0
    %1560 = vmatpush1.xpose.msra.mxu0 0.0
    %1561 = vmatprep.subr.mxu0 0.0
    %1562 = vmatpush1.xpose.msra.mxu0 0.0
    %1563 = vmatprep.subr.mxu0 0.0
    %1564 = vmatpush1.xpose.msra.mxu0 0.0
    %1565 = vmatprep.subr.mxu0 0.0
    %1566 = vmatpush1.xpose.msra.mxu0 0.0
    %1567 = vmatprep.subr.mxu0 0.0
    %1568 = vmatpush1.xpose.msra.mxu0 0.0
    %1569 = vmatprep.subr.mxu0 0.0
    %1570 = vmatpush1.xpose.msra.mxu0 0.0
    %1571 = vmatprep.subr.mxu0 0.0
    %1572 = vmatpush1.xpose.msra.mxu0 0.0
    %1573 = vmatprep.subr.mxu0 0.0
    %1574 = vmatpush1.xpose.msra.mxu0 0.0
    %1575 = vmatprep.subr.mxu0 0.0
    %1576 = vmatpush1.xpose.msra.mxu0 0.0
    %1577 = vmatprep.mubr.f32.mxu0 0.0
    %1578 = vmatmul.mubr.f32.gmra.mrb[0].mxu0 %v1509
    %v1579 = vpop.f32.mrb[0].mxu0
    %v1580 = vadd.f32 0.0, %v1579
    %v1581 = vpop.f32.mrb[0].mxu0
    %1582 = vdwg.mxu0
    %v1583 = vmul.f32 %v1580, %v1410
    %v1584 = vadd.f32 %v1583, %v1415
    %v1585 = vmul.f32 %v1584, 0.35355338
    %v1586 = vsel %vm636, %v1585, -inf
    %1587 = vmax.xlane.f32.xlu0 %v1586
    %v1588 = vpop.xlane.xlu0 %1587
    %v1589 = vsub.f32 %v1585, %v1588
    %v1590 = vmul.f32 %v1589, 1.442695
    %v1591 = vpow.pop %v1590
    %v1592 = vsel %vm636, %v1591, 0.0
    %1593 = vadd.xlane.f32.xlu0 %v1592
    %v1594 = vpop.xlane.xlu0 %1593
    %v1595 = vrcp.pop %v1594
    %v1596 = vmul.f32 %v1591, %v1595
    %1597 = vrot.lane.b32.xlu0 %v628, 56
    %v1598 = vpop.permute.xlu0 %1597
    %v1601 = vsel %vm636, %v1596, 0
    %1603 = vmatprep.subr.mxu0 0.0
    %1604 = vmatpush1.msra.mxu0 %v1598
    %1605 = vmatprep.subr.mxu0 0.0
    %1606 = vmatpush1.msra.mxu0 0.0
    %1607 = vmatprep.subr.mxu0 0.0
    %1608 = vmatpush1.msra.mxu0 0.0
    %1609 = vmatprep.subr.mxu0 0.0
    %1610 = vmatpush1.msra.mxu0 0.0
    %1611 = vmatprep.subr.mxu0 0.0
    %1612 = vmatpush1.msra.mxu0 0.0
    %1613 = vmatprep.subr.mxu0 0.0
    %1614 = vmatpush1.msra.mxu0 0.0
    %1615 = vmatprep.subr.mxu0 0.0
    %1616 = vmatpush1.msra.mxu0 0.0
    %1617 = vmatprep.subr.mxu0 0.0
    %1618 = vmatpush1.msra.mxu0 0.0
    %1619 = vmatprep.subr.mxu0 0.0
    %1620 = vmatpush1.msra.mxu0 0.0
    %1621 = vmatprep.subr.mxu0 0.0
    %1622 = vmatpush1.msra.mxu0 0.0
    %1623 = vmatprep.subr.mxu0 0.0
    %1624 = vmatpush1.msra.mxu0 0.0
    %1625 = vmatprep.subr.mxu0 0.0
    %1626 = vmatpush1.msra.mxu0 0.0
    %1627 = vmatprep.subr.mxu0 0.0
    %1628 = vmatpush1.msra.mxu0 0.0
    %1629 = vmatprep.subr.mxu0 0.0
    %1630 = vmatpush1.msra.mxu0 0.0
    %1631 = vmatprep.subr.mxu0 0.0
    %1632 = vmatpush1.msra.mxu0 0.0
    %1633 = vmatprep.subr.mxu0 0.0
    %1634 = vmatpush1.msra.mxu0 0.0
    %1635 = vmatprep.subr.mxu0 0.0
    %1636 = vmatpush1.msra.mxu0 0.0
    %1637 = vmatprep.subr.mxu0 0.0
    %1638 = vmatpush1.msra.mxu0 0.0
    %1639 = vmatprep.subr.mxu0 0.0
    %1640 = vmatpush1.msra.mxu0 0.0
    %1641 = vmatprep.subr.mxu0 0.0
    %1642 = vmatpush1.msra.mxu0 0.0
    %1643 = vmatprep.subr.mxu0 0.0
    %1644 = vmatpush1.msra.mxu0 0.0
    %1645 = vmatprep.subr.mxu0 0.0
    %1646 = vmatpush1.msra.mxu0 0.0
    %1647 = vmatprep.subr.mxu0 0.0
    %1648 = vmatpush1.msra.mxu0 0.0
    %1649 = vmatprep.subr.mxu0 0.0
    %1650 = vmatpush1.msra.mxu0 0.0
    %1651 = vmatprep.subr.mxu0 0.0
    %1652 = vmatpush1.msra.mxu0 0.0
    %1653 = vmatprep.subr.mxu0 0.0
    %1654 = vmatpush1.msra.mxu0 0.0
    %1655 = vmatprep.subr.mxu0 0.0
    %1656 = vmatpush1.msra.mxu0 0.0
    %1657 = vmatprep.subr.mxu0 0.0
    %1658 = vmatpush1.msra.mxu0 0.0
    %1659 = vmatprep.subr.mxu0 0.0
    %1660 = vmatpush1.msra.mxu0 0.0
    %1661 = vmatprep.subr.mxu0 0.0
    %1662 = vmatpush1.msra.mxu0 0.0
    %1663 = vmatprep.subr.mxu0 0.0
    %1664 = vmatpush1.msra.mxu0 0.0
    %1665 = vmatprep.subr.mxu0 0.0
    %1666 = vmatpush1.msra.mxu0 0.0
    %1667 = vmatprep.mubr.f32.mxu0 0.0
    %1668 = vmatmul.mubr.f32.gmra.mrb[0].mxu0 %v1601
    %v1669 = vpop.f32.mrb[0].mxu0
    %v1670 = vadd.f32 0.0, %v1669
    %v1671 = vpop.f32.mrb[0].mxu0
    %1672 = vdwg.mxu0
    %1673 = vrot.lane.b32.xlu0 %v628, 112
    %v1674 = vpop.permute.xlu0 %1673
    %1675 = vrot.lane.b32.xlu0 %v628, 80
    %v1676 = vpop.permute.xlu0 %1675
    %v1677 = vsel %vm636, %v1674, 0
    %v1679 = vsel %vm636, %v1676, 0
    %1681 = vmatprep.subr.mxu0 0.0
    %1682 = vmatpush1.xpose.msra.mxu0 %v1679
    %1683 = vmatprep.subr.mxu0 0.0
    %1684 = vmatpush1.xpose.msra.mxu0 0.0
    %1685 = vmatprep.subr.mxu0 0.0
    %1686 = vmatpush1.xpose.msra.mxu0 0.0
    %1687 = vmatprep.subr.mxu0 0.0
    %1688 = vmatpush1.xpose.msra.mxu0 0.0
    %1689 = vmatprep.subr.mxu0 0.0
    %1690 = vmatpush1.xpose.msra.mxu0 0.0
    %1691 = vmatprep.subr.mxu0 0.0
    %1692 = vmatpush1.xpose.msra.mxu0 0.0
    %1693 = vmatprep.subr.mxu0 0.0
    %1694 = vmatpush1.xpose.msra.mxu0 0.0
    %1695 = vmatprep.subr.mxu0 0.0
    %1696 = vmatpush1.xpose.msra.mxu0 0.0
    %1697 = vmatprep.subr.mxu0 0.0
    %1698 = vmatpush1.xpose.msra.mxu0 0.0
    %1699 = vmatprep.subr.mxu0 0.0
    %1700 = vmatpush1.xpose.msra.mxu0 0.0
    %1701 = vmatprep.subr.mxu0 0.0
    %1702 = vmatpush1.xpose.msra.mxu0 0.0
    %1703 = vmatprep.subr.mxu0 0.0
    %1704 = vmatpush1.xpose.msra.mxu0 0.0
    %1705 = vmatprep.subr.mxu0 0.0
    %1706 = vmatpush1.xpose.msra.mxu0 0.0
    %1707 = vmatprep.subr.mxu0 0.0
    %1708 = vmatpush1.xpose.msra.mxu0 0.0
    %1709 = vmatprep.subr.mxu0 0.0
    %1710 = vmatpush1.xpose.msra.mxu0 0.0
    %1711 = vmatprep.subr.mxu0 0.0
    %1712 = vmatpush1.xpose.msra.mxu0 0.0
    %1713 = vmatprep.subr.mxu0 0.0
    %1714 = vmatpush1.xpose.msra.mxu0 0.0
    %1715 = vmatprep.subr.mxu0 0.0
    %1716 = vmatpush1.xpose.msra.mxu0 0.0
    %1717 = vmatprep.subr.mxu0 0.0
    %1718 = vmatpush1.xpose.msra.mxu0 0.0
    %1719 = vmatprep.subr.mxu0 0.0
    %1720 = vmatpush1.xpose.msra.mxu0 0.0
    %1721 = vmatprep.subr.mxu0 0.0
    %1722 = vmatpush1.xpose.msra.mxu0 0.0
    %1723 = vmatprep.subr.mxu0 0.0
    %1724 = vmatpush1.xpose.msra.mxu0 0.0
    %1725 = vmatprep.subr.mxu0 0.0
    %1726 = vmatpush1.xpose.msra.mxu0 0.0
    %1727 = vmatprep.subr.mxu0 0.0
    %1728 = vmatpush1.xpose.msra.mxu0 0.0
    %1729 = vmatprep.subr.mxu0 0.0
    %1730 = vmatpush1.xpose.msra.mxu0 0.0
    %1731 = vmatprep.subr.mxu0 0.0
    %1732 = vmatpush1.xpose.msra.mxu0 0.0
    %1733 = vmatprep.subr.mxu0 0.0
    %1734 = vmatpush1.xpose.msra.mxu0 0.0
    %1735 = vmatprep.subr.mxu0 0.0
    %1736 = vmatpush1.xpose.msra.mxu0 0.0
    %1737 = vmatprep.subr.mxu0 0.0
    %1738 = vmatpush1.xpose.msra.mxu0 0.0
    %1739 = vmatprep.subr.mxu0 0.0
    %1740 = vmatpush1.xpose.msra.mxu0 0.0
    %1741 = vmatprep.subr.mxu0 0.0
    %1742 = vmatpush1.xpose.msra.mxu0 0.0
    %1743 = vmatprep.subr.mxu0 0.0
    %1744 = vmatpush1.xpose.msra.mxu0 0.0
    %1745 = vmatprep.mubr.f32.mxu0 0.0
    %1746 = vmatmul.mubr.f32.gmra.mrb[0].mxu0 %v1677
    %v1747 = vpop.f32.mrb[0].mxu0
    %v1748 = vadd.f32 0.0, %v1747
    %v1749 = vpop.f32.mrb[0].mxu0
    %1750 = vdwg.mxu0
    %v1751 = vmul.f32 %v1748, %v1410
    %v1752 = vadd.f32 %v1751, %v1415
    %v1753 = vmul.f32 %v1752, 0.35355338
    %v1754 = vsel %vm636, %v1753, -inf
    %1755 = vmax.xlane.f32.xlu0 %v1754
    %v1756 = vpop.xlane.xlu0 %1755
    %v1757 = vsub.f32 %v1753, %v1756
    %v1758 = vmul.f32 %v1757, 1.442695
    %v1759 = vpow.pop %v1758
    %v1760 = vsel %vm636, %v1759, 0.0
    %1761 = vadd.xlane.f32.xlu0 %v1760
    %v1762 = vpop.xlane.xlu0 %1761
    %v1763 = vrcp.pop %v1762
    %v1764 = vmul.f32 %v1759, %v1763
    %1765 = vrot.lane.b32.xlu0 %v628, 48
    %v1766 = vpop.permute.xlu0 %1765
    %v1769 = vsel %vm636, %v1764, 0
    %1771 = vmatprep.subr.mxu0 0.0
    %1772 = vmatpush1.msra.mxu0 %v1766
    %1773 = vmatprep.subr.mxu0 0.0
    %1774 = vmatpush1.msra.mxu0 0.0
    %1775 = vmatprep.subr.mxu0 0.0
    %1776 = vmatpush1.msra.mxu0 0.0
    %1777 = vmatprep.subr.mxu0 0.0
    %1778 = vmatpush1.msra.mxu0 0.0
    %1779 = vmatprep.subr.mxu0 0.0
    %1780 = vmatpush1.msra.mxu0 0.0
    %1781 = vmatprep.subr.mxu0 0.0
    %1782 = vmatpush1.msra.mxu0 0.0
    %1783 = vmatprep.subr.mxu0 0.0
    %1784 = vmatpush1.msra.mxu0 0.0
    %1785 = vmatprep.subr.mxu0 0.0
    %1786 = vmatpush1.msra.mxu0 0.0
    %1787 = vmatprep.subr.mxu0 0.0
    %1788 = vmatpush1.msra.mxu0 0.0
    %1789 = vmatprep.subr.mxu0 0.0
    %1790 = vmatpush1.msra.mxu0 0.0
    %1791 = vmatprep.subr.mxu0 0.0
    %1792 = vmatpush1.msra.mxu0 0.0
    %1793 = vmatprep.subr.mxu0 0.0
    %1794 = vmatpush1.msra.mxu0 0.0
    %1795 = vmatprep.subr.mxu0 0.0
    %1796 = vmatpush1.msra.mxu0 0.0
    %1797 = vmatprep.subr.mxu0 0.0
    %1798 = vmatpush1.msra.mxu0 0.0
    %1799 = vmatprep.subr.mxu0 0.0
    %1800 = vmatpush1.msra.mxu0 0.0
    %1801 = vmatprep.subr.mxu0 0.0
    %1802 = vmatpush1.msra.mxu0 0.0
    %1803 = vmatprep.subr.mxu0 0.0
    %1804 = vmatpush1.msra.mxu0 0.0
    %1805 = vmatprep.subr.mxu0 0.0
    %1806 = vmatpush1.msra.mxu0 0.0
    %1807 = vmatprep.subr.mxu0 0.0
    %1808 = vmatpush1.msra.mxu0 0.0
    %1809 = vmatprep.subr.mxu0 0.0
    %1810 = vmatpush1.msra.mxu0 0.0
    %1811 = vmatprep.subr.mxu0 0.0
    %1812 = vmatpush1.msra.mxu0 0.0
    %1813 = vmatprep.subr.mxu0 0.0
    %1814 = vmatpush1.msra.mxu0 0.0
    %1815 = vmatprep.subr.mxu0 0.0
    %1816 = vmatpush1.msra.mxu0 0.0
    %1817 = vmatprep.subr.mxu0 0.0
    %1818 = vmatpush1.msra.mxu0 0.0
    %1819 = vmatprep.subr.mxu0 0.0
    %1820 = vmatpush1.msra.mxu0 0.0
    %1821 = vmatprep.subr.mxu0 0.0
    %1822 = vmatpush1.msra.mxu0 0.0
    %1823 = vmatprep.subr.mxu0 0.0
    %1824 = vmatpush1.msra.mxu0 0.0
    %1825 = vmatprep.subr.mxu0 0.0
    %1826 = vmatpush1.msra.mxu0 0.0
    %1827 = vmatprep.subr.mxu0 0.0
    %1828 = vmatpush1.msra.mxu0 0.0
    %1829 = vmatprep.subr.mxu0 0.0
    %1830 = vmatpush1.msra.mxu0 0.0
    %1831 = vmatprep.subr.mxu0 0.0
    %1832 = vmatpush1.msra.mxu0 0.0
    %1833 = vmatprep.subr.mxu0 0.0
    %1834 = vmatpush1.msra.mxu0 0.0
    %1835 = vmatprep.mubr.f32.mxu0 0.0
    %1836 = vmatmul.mubr.f32.gmra.mrb[0].mxu0 %v1769
    %v1837 = vpop.f32.mrb[0].mxu0
    %v1838 = vadd.f32 0.0, %v1837
    %v1839 = vpop.f32.mrb[0].mxu0
    %1840 = vdwg.mxu0
    %1841 = vrot.lane.b32.xlu0 %v628, 104
    %v1842 = vpop.permute.xlu0 %1841
    %1843 = vrot.lane.b32.xlu0 %v628, 72
    %v1844 = vpop.permute.xlu0 %1843
    %v1845 = vsel %vm636, %v1842, 0
    %v1847 = vsel %vm636, %v1844, 0
    %1849 = vmatprep.subr.mxu0 0.0
    %1850 = vmatpush1.xpose.msra.mxu0 %v1847
    %1851 = vmatprep.subr.mxu0 0.0
    %1852 = vmatpush1.xpose.msra.mxu0 0.0
    %1853 = vmatprep.subr.mxu0 0.0
    %1854 = vmatpush1.xpose.msra.mxu0 0.0
    %1855 = vmatprep.subr.mxu0 0.0
    %1856 = vmatpush1.xpose.msra.mxu0 0.0
    %1857 = vmatprep.subr.mxu0 0.0
    %1858 = vmatpush1.xpose.msra.mxu0 0.0
    %1859 = vmatprep.subr.mxu0 0.0
    %1860 = vmatpush1.xpose.msra.mxu0 0.0
    %1861 = vmatprep.subr.mxu0 0.0
    %1862 = vmatpush1.xpose.msra.mxu0 0.0
    %1863 = vmatprep.subr.mxu0 0.0
    %1864 = vmatpush1.xpose.msra.mxu0 0.0
    %1865 = vmatprep.subr.mxu0 0.0
    %1866 = vmatpush1.xpose.msra.mxu0 0.0
    %1867 = vmatprep.subr.mxu0 0.0
    %1868 = vmatpush1.xpose.msra.mxu0 0.0
    %1869 = vmatprep.subr.mxu0 0.0
    %1870 = vmatpush1.xpose.msra.mxu0 0.0
    %1871 = vmatprep.subr.mxu0 0.0
    %1872 = vmatpush1.xpose.msra.mxu0 0.0
    %1873 = vmatprep.subr.mxu0 0.0
    %1874 = vmatpush1.xpose.msra.mxu0 0.0
    %1875 = vmatprep.subr.mxu0 0.0
    %1876 = vmatpush1.xpose.msra.mxu0 0.0
    %1877 = vmatprep.subr.mxu0 0.0
    %1878 = vmatpush1.xpose.msra.mxu0 0.0
    %1879 = vmatprep.subr.mxu0 0.0
    %1880 = vmatpush1.xpose.msra.mxu0 0.0
    %1881 = vmatprep.subr.mxu0 0.0
    %1882 = vmatpush1.xpose.msra.mxu0 0.0
    %1883 = vmatprep.subr.mxu0 0.0
    %1884 = vmatpush1.xpose.msra.mxu0 0.0
    %1885 = vmatprep.subr.mxu0 0.0
    %1886 = vmatpush1.xpose.msra.mxu0 0.0
    %1887 = vmatprep.subr.mxu0 0.0
    %1888 = vmatpush1.xpose.msra.mxu0 0.0
    %1889 = vmatprep.subr.mxu0 0.0
    %1890 = vmatpush1.xpose.msra.mxu0 0.0
    %1891 = vmatprep.subr.mxu0 0.0
    %1892 = vmatpush1.xpose.msra.mxu0 0.0
    %1893 = vmatprep.subr.mxu0 0.0
    %1894 = vmatpush1.xpose.msra.mxu0 0.0
    %1895 = vmatprep.subr.mxu0 0.0
    %1896 = vmatpush1.xpose.msra.mxu0 0.0
    %1897 = vmatprep.subr.mxu0 0.0
    %1898 = vmatpush1.xpose.msra.mxu0 0.0
    %1899 = vmatprep.subr.mxu0 0.0
    %1900 = vmatpush1.xpose.msra.mxu0 0.0
    %1901 = vmatprep.subr.mxu0 0.0
    %1902 = vmatpush1.xpose.msra.mxu0 0.0
    %1903 = vmatprep.subr.mxu0 0.0
    %1904 = vmatpush1.xpose.msra.mxu0 0.0
    %1905 = vmatprep.subr.mxu0 0.0
    %1906 = vmatpush1.xpose.msra.mxu0 0.0
    %1907 = vmatprep.subr.mxu0 0.0
    %1908 = vmatpush1.xpose.msra.mxu0 0.0
    %1909 = vmatprep.subr.mxu0 0.0
    %1910 = vmatpush1.xpose.msra.mxu0 0.0
    %1911 = vmatprep.subr.mxu0 0.0
    %1912 = vmatpush1.xpose.msra.mxu0 0.0
    %1913 = vmatprep.mubr.f32.mxu0 0.0
    %1914 = vmatmul.mubr.f32.gmra.mrb[0].mxu0 %v1845
    %v1915 = vpop.f32.mrb[0].mxu0
    %v1916 = vadd.f32 0.0, %v1915
    %v1917 = vpop.f32.mrb[0].mxu0
    %1918 = vdwg.mxu0
    %v1919 = vmul.f32 %v1916, %v1410
    %v1920 = vadd.f32 %v1919, %v1415
    %v1921 = vmul.f32 %v1920, 0.35355338
    %v1922 = vsel %vm636, %v1921, -inf
    %1923 = vmax.xlane.f32.xlu0 %v1922
    %v1924 = vpop.xlane.xlu0 %1923
    %v1925 = vsub.f32 %v1921, %v1924
    %v1926 = vmul.f32 %v1925, 1.442695
    %v1927 = vpow.pop %v1926
    %v1928 = vsel %vm636, %v1927, 0.0
    %1929 = vadd.xlane.f32.xlu0 %v1928
    %v1930 = vpop.xlane.xlu0 %1929
    %v1931 = vrcp.pop %v1930
    %v1932 = vmul.f32 %v1927, %v1931
    %1933 = vrot.lane.b32.xlu0 %v628, 40
    %v1934 = vpop.permute.xlu0 %1933
    %v1937 = vsel %vm636, %v1932, 0
    %1939 = vmatprep.subr.mxu0 0.0
    %1940 = vmatpush1.msra.mxu0 %v1934
    %1941 = vmatprep.subr.mxu0 0.0
    %1942 = vmatpush1.msra.mxu0 0.0
    %1943 = vmatprep.subr.mxu0 0.0
    %1944 = vmatpush1.msra.mxu0 0.0
    %1945 = vmatprep.subr.mxu0 0.0
    %1946 = vmatpush1.msra.mxu0 0.0
    %1947 = vmatprep.subr.mxu0 0.0
    %1948 = vmatpush1.msra.mxu0 0.0
    %1949 = vmatprep.subr.mxu0 0.0
    %1950 = vmatpush1.msra.mxu0 0.0
    %1951 = vmatprep.subr.mxu0 0.0
    %1952 = vmatpush1.msra.mxu0 0.0
    %1953 = vmatprep.subr.mxu0 0.0
    %1954 = vmatpush1.msra.mxu0 0.0
    %1955 = vmatprep.subr.mxu0 0.0
    %1956 = vmatpush1.msra.mxu0 0.0
    %1957 = vmatprep.subr.mxu0 0.0
    %1958 = vmatpush1.msra.mxu0 0.0
    %1959 = vmatprep.subr.mxu0 0.0
    %1960 = vmatpush1.msra.mxu0 0.0
    %1961 = vmatprep.subr.mxu0 0.0
    %1962 = vmatpush1.msra.mxu0 0.0
    %1963 = vmatprep.subr.mxu0 0.0
    %1964 = vmatpush1.msra.mxu0 0.0
    %1965 = vmatprep.subr.mxu0 0.0
    %1966 = vmatpush1.msra.mxu0 0.0
    %1967 = vmatprep.subr.mxu0 0.0
    %1968 = vmatpush1.msra.mxu0 0.0
    %1969 = vmatprep.subr.mxu0 0.0
    %1970 = vmatpush1.msra.mxu0 0.0
    %1971 = vmatprep.subr.mxu0 0.0
    %1972 = vmatpush1.msra.mxu0 0.0
    %1973 = vmatprep.subr.mxu0 0.0
    %1974 = vmatpush1.msra.mxu0 0.0
    %1975 = vmatprep.subr.mxu0 0.0
    %1976 = vmatpush1.msra.mxu0 0.0
    %1977 = vmatprep.subr.mxu0 0.0
    %1978 = vmatpush1.msra.mxu0 0.0
    %1979 = vmatprep.subr.mxu0 0.0
    %1980 = vmatpush1.msra.mxu0 0.0
    %1981 = vmatprep.subr.mxu0 0.0
    %1982 = vmatpush1.msra.mxu0 0.0
    %1983 = vmatprep.subr.mxu0 0.0
    %1984 = vmatpush1.msra.mxu0 0.0
    %1985 = vmatprep.subr.mxu0 0.0
    %1986 = vmatpush1.msra.mxu0 0.0
    %1987 = vmatprep.subr.mxu0 0.0
    %1988 = vmatpush1.msra.mxu0 0.0
    %1989 = vmatprep.subr.mxu0 0.0
    %1990 = vmatpush1.msra.mxu0 0.0
    %1991 = vmatprep.subr.mxu0 0.0
    %1992 = vmatpush1.msra.mxu0 0.0
    %1993 = vmatprep.subr.mxu0 0.0
    %1994 = vmatpush1.msra.mxu0 0.0
    %1995 = vmatprep.subr.mxu0 0.0
    %1996 = vmatpush1.msra.mxu0 0.0
    %1997 = vmatprep.subr.mxu0 0.0
    %1998 = vmatpush1.msra.mxu0 0.0
    %1999 = vmatprep.subr.mxu0 0.0
    %2000 = vmatpush1.msra.mxu0 0.0
    %2001 = vmatprep.subr.mxu0 0.0
    %2002 = vmatpush1.msra.mxu0 0.0
    %2003 = vmatprep.mubr.f32.mxu0 0.0
    %2004 = vmatmul.mubr.f32.gmra.mrb[0].mxu0 %v1937
    %v2005 = vpop.f32.mrb[0].mxu0
    %v2006 = vadd.f32 0.0, %v2005
    %v2007 = vpop.f32.mrb[0].mxu0
    %2008 = vdwg.mxu0
    %2010 = vrot.lane.b32.xlu0 %v1670, 8
    %v2011 = vpop.permute.xlu0 %2010
    %2014 = vrot.lane.b32.xlu0 %v1838, 16
    %v2015 = vpop.permute.xlu0 %2014
    %2018 = vrot.lane.b32.xlu0 %v2006, 24
    %v2019 = vpop.permute.xlu0 %2018
    %v2021 = vsel %vm636, %v1502, %v2011
    %v2022 = vsel %vm1326, %v2021, %v2015
    %v2023 = vsel %vm1328, %v2022, %v2019
    %v2025 = vlaneseq
    %v2026 = vshrl.u32 %v2025, 7
    %v2027 = vsub.s32 0, %v2026
    %v2028 = vrot.slane %v360, %v2027
    %v2031 = vsel %vm549, %v1329, 0
    %v2034 = vsel %vm549, %v2023, 0
    %2036 = vmatprep.subr.mxu0 0.0
    %2037 = vmatpush1.msra.mxu0 %v356
    %2038 = vmatprep.subr.mxu0 0.0
    %2039 = vmatpush1.msra.mxu0 %v357
    %2040 = vmatprep.subr.mxu0 0.0
    %2041 = vmatpush1.msra.mxu0 %v358
    %2042 = vmatprep.subr.mxu0 0.0
    %2043 = vmatpush1.msra.mxu0 %v359
    %2044 = vmatprep.subr.mxu0 0.0
    %2045 = vmatpush1.msra.mxu0 0.0
    %2046 = vmatprep.subr.mxu0 0.0
    %2047 = vmatpush1.msra.mxu0 0.0
    %2048 = vmatprep.subr.mxu0 0.0
    %2049 = vmatpush1.msra.mxu0 0.0
    %2050 = vmatprep.subr.mxu0 0.0
    %2051 = vmatpush1.msra.mxu0 0.0
    %2052 = vmatprep.subr.mxu0 0.0
    %2053 = vmatpush1.msra.mxu0 0.0
    %2054 = vmatprep.subr.mxu0 0.0
    %2055 = vmatpush1.msra.mxu0 0.0
    %2056 = vmatprep.subr.mxu0 0.0
    %2057 = vmatpush1.msra.mxu0 0.0
    %2058 = vmatprep.subr.mxu0 0.0
    %2059 = vmatpush1.msra.mxu0 0.0
    %2060 = vmatprep.subr.mxu0 0.0
    %2061 = vmatpush1.msra.mxu0 0.0
    %2062 = vmatprep.subr.mxu0 0.0
    %2063 = vmatpush1.msra.mxu0 0.0
    %2064 = vmatprep.subr.mxu0 0.0
    %2065 = vmatpush1.msra.mxu0 0.0
    %2066 = vmatprep.subr.mxu0 0.0
    %2067 = vmatpush1.msra.mxu0 0.0
    %2068 = vmatprep.subr.mxu0 0.0
    %2069 = vmatpush1.msra.mxu0 0.0
    %2070 = vmatprep.subr.mxu0 0.0
    %2071 = vmatpush1.msra.mxu0 0.0
    %2072 = vmatprep.subr.mxu0 0.0
    %2073 = vmatpush1.msra.mxu0 0.0
    %2074 = vmatprep.subr.mxu0 0.0
    %2075 = vmatpush1.msra.mxu0 0.0
    %2076 = vmatprep.subr.mxu0 0.0
    %2077 = vmatpush1.msra.mxu0 0.0
    %2078 = vmatprep.subr.mxu0 0.0
    %2079 = vmatpush1.msra.mxu0 0.0
    %2080 = vmatprep.subr.mxu0 0.0
    %2081 = vmatpush1.msra.mxu0 0.0
    %2082 = vmatprep.subr.mxu0 0.0
    %2083 = vmatpush1.msra.mxu0 0.0
    %2084 = vmatprep.subr.mxu0 0.0
    %2085 = vmatpush1.msra.mxu0 0.0
    %2086 = vmatprep.subr.mxu0 0.0
    %2087 = vmatpush1.msra.mxu0 0.0
    %2088 = vmatprep.subr.mxu0 0.0
    %2089 = vmatpush1.msra.mxu0 0.0
    %2090 = vmatprep.subr.mxu0 0.0
    %2091 = vmatpush1.msra.mxu0 0.0
    %2092 = vmatprep.subr.mxu0 0.0
    %2093 = vmatpush1.msra.mxu0 0.0
    %2094 = vmatprep.subr.mxu0 0.0
    %2095 = vmatpush1.msra.mxu0 0.0
    %2096 = vmatprep.subr.mxu0 0.0
    %2097 = vmatpush1.msra.mxu0 0.0
    %2098 = vmatprep.subr.mxu0 0.0
    %2099 = vmatpush1.msra.mxu0 0.0
    %2100 = vmatprep.mubr.f32.mxu0 0.0
    %2101 = vmatmul.mubr.f32.gmra.mrb[0].mxu0 %v2031
    %v2102 = vpop.f32.mrb[0].mxu0
    %v2103 = vadd.f32 %v2028, %v2102
    %v2104 = vpop.f32.mrb[0].mxu0
    %2105 = vmatprep.mubr.f32.mxu0 0.0
    %2106 = vmatmul.mubr.f32.gmra.mrb[0].mxu0 %v2034
    %v2107 = vpop.f32.mrb[0].mxu0
    %v2108 = vadd.f32 %v2028, %v2107
    %v2109 = vpop.f32.mrb[0].mxu0
    %2110 = vdwg.mxu0
    %v2111 = vadd.f32 %v2103, %v535
    %v2112 = vadd.f32 %v2108, %v540
    %v2113 = vsel %vm549, %v2111, 0.0
    %2114 = vadd.xlane.f32.xlu0 %v2113
    %v2115 = vpop.xlane.xlu0 %2114
    %v2116 = vsel %vm549, %v2112, 0.0
    %2117 = vadd.xlane.f32.xlu0 %v2116
    %v2118 = vpop.xlane.xlu0 %2117
    %v2119 = vrcp.pop 32.0
    %v2120 = vmul.f32 %v2115, %v2119
    %v2121 = vmul.f32 %v2118, %v2119
    %v2122 = vsub.f32 %v2111, %v2120
    %v2123 = vsub.f32 %v2112, %v2121
    %v2124 = vmul.f32 %v2122, %v2122
    %v2125 = vmul.f32 %v2123, %v2123
    %v2126 = vsel %vm549, %v2124, 0.0
    %2127 = vadd.xlane.f32.xlu0 %v2126
    %v2128 = vpop.xlane.xlu0 %2127
    %v2129 = vsel %vm549, %v2125, 0.0
    %2130 = vadd.xlane.f32.xlu0 %v2129
    %v2131 = vpop.xlane.xlu0 %2130
    %v2132 = vmul.f32 %v2128, %v2119
    %v2133 = vmul.f32 %v2131, %v2119
    %v2134 = vadd.f32 %v2132, 1e-05
    %v2135 = vadd.f32 %v2133, 1e-05
    %v2136 = vrsqrt.pop %v2134
    %v2137 = vrsqrt.pop %v2135
    %v2138 = vmul.f32 %v2122, %v2136
    %v2139 = vmul.f32 %v2123, %v2137
    %v2141 = vlaneseq
    %v2142 = vshrl.u32 %v2141, 7
    %v2143 = vsub.s32 0, %v2142
    %v2144 = vrot.slane %v361, %v2143
    %v2146 = vmul.f32 %v2138, %v2144
    %v2147 = vmul.f32 %v2139, %v2144
    %v2149 = vlaneseq
    %v2150 = vshrl.u32 %v2149, 7
    %v2151 = vsub.s32 0, %v2150
    %v2152 = vrot.slane %v362, %v2151
    %v2154 = vadd.f32 %v2146, %v2152
    %v2155 = vadd.f32 %v2147, %v2152
    %v2157 = vlaneseq
    %v2158 = vshrl.u32 %v2157, 7
    %v2159 = vsub.s32 0, %v2158
    %v2160 = vrot.slane %v367, %v2159
    %v2163 = vsel %vm549, %v2154, 0
    %v2166 = vsel %vm549, %v2155, 0
    %2168 = vmatprep.subr.mxu0 0.0
    %2169 = vmatpush1.msra.mxu0 %v363
    %2170 = vmatprep.subr.mxu0 0.0
    %2171 = vmatpush1.msra.mxu0 %v364
    %2172 = vmatprep.subr.mxu0 0.0
    %2173 = vmatpush1.msra.mxu0 %v365
    %2174 = vmatprep.subr.mxu0 0.0
    %2175 = vmatpush1.msra.mxu0 %v366
    %2176 = vmatprep.subr.mxu0 0.0
    %2177 = vmatpush1.msra.mxu0 0.0
    %2178 = vmatprep.subr.mxu0 0.0
    %2179 = vmatpush1.msra.mxu0 0.0
    %2180 = vmatprep.subr.mxu0 0.0
    %2181 = vmatpush1.msra.mxu0 0.0
    %2182 = vmatprep.subr.mxu0 0.0
    %2183 = vmatpush1.msra.mxu0 0.0
    %2184 = vmatprep.subr.mxu0 0.0
    %2185 = vmatpush1.msra.mxu0 0.0
    %2186 = vmatprep.subr.mxu0 0.0
    %2187 = vmatpush1.msra.mxu0 0.0
    %2188 = vmatprep.subr.mxu0 0.0
    %2189 = vmatpush1.msra.mxu0 0.0
    %2190 = vmatprep.subr.mxu0 0.0
    %2191 = vmatpush1.msra.mxu0 0.0
    %2192 = vmatprep.subr.mxu0 0.0
    %2193 = vmatpush1.msra.mxu0 0.0
    %2194 = vmatprep.subr.mxu0 0.0
    %2195 = vmatpush1.msra.mxu0 0.0
    %2196 = vmatprep.subr.mxu0 0.0
    %2197 = vmatpush1.msra.mxu0 0.0
    %2198 = vmatprep.subr.mxu0 0.0
    %2199 = vmatpush1.msra.mxu0 0.0
    %2200 = vmatprep.subr.mxu0 0.0
    %2201 = vmatpush1.msra.mxu0 0.0
    %2202 = vmatprep.subr.mxu0 0.0
    %2203 = vmatpush1.msra.mxu0 0.0
    %2204 = vmatprep.subr.mxu0 0.0
    %2205 = vmatpush1.msra.mxu0 0.0
    %2206 = vmatprep.subr.mxu0 0.0
    %2207 = vmatpush1.msra.mxu0 0.0
    %2208 = vmatprep.subr.mxu0 0.0
    %2209 = vmatpush1.msra.mxu0 0.0
    %2210 = vmatprep.subr.mxu0 0.0
    %2211 = vmatpush1.msra.mxu0 0.0
    %2212 = vmatprep.subr.mxu0 0.0
    %2213 = vmatpush1.msra.mxu0 0.0
    %2214 = vmatprep.subr.mxu0 0.0
    %2215 = vmatpush1.msra.mxu0 0.0
    %2216 = vmatprep.subr.mxu0 0.0
    %2217 = vmatpush1.msra.mxu0 0.0
    %2218 = vmatprep.subr.mxu0 0.0
    %2219 = vmatpush1.msra.mxu0 0.0
    %2220 = vmatprep.subr.mxu0 0.0
    %2221 = vmatpush1.msra.mxu0 0.0
    %2222 = vmatprep.subr.mxu0 0.0
    %2223 = vmatpush1.msra.mxu0 0.0
    %2224 = vmatprep.subr.mxu0 0.0
    %2225 = vmatpush1.msra.mxu0 0.0
    %2226 = vmatprep.subr.mxu0 0.0
    %2227 = vmatpush1.msra.mxu0 0.0
    %2228 = vmatprep.subr.mxu0 0.0
    %2229 = vmatpush1.msra.mxu0 0.0
    %2230 = vmatprep.subr.mxu0 0.0
    %2231 = vmatpush1.msra.mxu0 0.0
    %2232 = vmatprep.mubr.f32.mxu0 0.0
    %2233 = vmatmul.mubr.f32.gmra.mrb[0].mxu0 %v2163
    %v2234 = vpop.f32.mrb[0].mxu0
    %v2235 = vadd.f32 %v2160, %v2234
    %v2236 = vpop.f32.mrb[0].mxu0
    %2237 = vmatprep.mubr.f32.mxu0 0.0
    %2238 = vmatmul.mubr.f32.gmra.mrb[0].mxu0 %v2166
    %v2239 = vpop.f32.mrb[0].mxu0
    %v2240 = vadd.f32 %v2160, %v2239
    %v2241 = vpop.f32.mrb[0].mxu0
    %2242 = vdwg.mxu0
    %v2243 = vmax.f32 %v2235, 0.0
    %v2244 = vmax.f32 %v2240, 0.0
    %v2246 = vlaneseq
    %v2247 = vshrl.u32 %v2246, 7
    %v2248 = vsub.s32 0, %v2247
    %v2249 = vrot.slane %v376, %v2248
    %vm2251 = vcmask 523264
    %v2253 = vsel %vm2251, %v2243, 0
    %v2256 = vsel %vm2251, %v2244, 0
    %2258 = vmatprep.subr.mxu0 0.0
    %2259 = vmatpush1.msra.mxu0 %v368
    %2260 = vmatprep.subr.mxu0 0.0
    %2261 = vmatpush1.msra.mxu0 %v369
    %2262 = vmatprep.subr.mxu0 0.0
    %2263 = vmatpush1.msra.mxu0 %v370
    %2264 = vmatprep.subr.mxu0 0.0
    %2265 = vmatpush1.msra.mxu0 %v371
    %2266 = vmatprep.subr.mxu0 0.0
    %2267 = vmatpush1.msra.mxu0 %v372
    %2268 = vmatprep.subr.mxu0 0.0
    %2269 = vmatpush1.msra.mxu0 %v373
    %2270 = vmatprep.subr.mxu0 0.0
    %2271 = vmatpush1.msra.mxu0 %v374
    %2272 = vmatprep.subr.mxu0 0.0
    %2273 = vmatpush1.msra.mxu0 %v375
    %2274 = vmatprep.subr.mxu0 0.0
    %2275 = vmatpush1.msra.mxu0 0.0
    %2276 = vmatprep.subr.mxu0 0.0
    %2277 = vmatpush1.msra.mxu0 0.0
    %2278 = vmatprep.subr.mxu0 0.0
    %2279 = vmatpush1.msra.mxu0 0.0
    %2280 = vmatprep.subr.mxu0 0.0
    %2281 = vmatpush1.msra.mxu0 0.0
    %2282 = vmatprep.subr.mxu0 0.0
    %2283 = vmatpush1.msra.mxu0 0.0
    %2284 = vmatprep.subr.mxu0 0.0
    %2285 = vmatpush1.msra.mxu0 0.0
    %2286 = vmatprep.subr.mxu0 0.0
    %2287 = vmatpush1.msra.mxu0 0.0
    %2288 = vmatprep.subr.mxu0 0.0
    %2289 = vmatpush1.msra.mxu0 0.0
    %2290 = vmatprep.subr.mxu0 0.0
    %2291 = vmatpush1.msra.mxu0 0.0
    %2292 = vmatprep.subr.mxu0 0.0
    %2293 = vmatpush1.msra.mxu0 0.0
    %2294 = vmatprep.subr.mxu0 0.0
    %2295 = vmatpush1.msra.mxu0 0.0
    %2296 = vmatprep.subr.mxu0 0.0
    %2297 = vmatpush1.msra.mxu0 0.0
    %2298 = vmatprep.subr.mxu0 0.0
    %2299 = vmatpush1.msra.mxu0 0.0
    %2300 = vmatprep.subr.mxu0 0.0
    %2301 = vmatpush1.msra.mxu0 0.0
    %2302 = vmatprep.subr.mxu0 0.0
    %2303 = vmatpush1.msra.mxu0 0.0
    %2304 = vmatprep.subr.mxu0 0.0
    %2305 = vmatpush1.msra.mxu0 0.0
    %2306 = vmatprep.subr.mxu0 0.0
    %2307 = vmatpush1.msra.mxu0 0.0
    %2308 = vmatprep.subr.mxu0 0.0
    %2309 = vmatpush1.msra.mxu0 0.0
    %2310 = vmatprep.subr.mxu0 0.0
    %2311 = vmatpush1.msra.mxu0 0.0
    %2312 = vmatprep.subr.mxu0 0.0
    %2313 = vmatpush1.msra.mxu0 0.0
    %2314 = vmatprep.subr.mxu0 0.0
    %2315 = vmatpush1.msra.mxu0 0.0
    %2316 = vmatprep.subr.mxu0 0.0
    %2317 = vmatpush1.msra.mxu0 0.0
    %2318 = vmatprep.subr.mxu0 0.0
    %2319 = vmatpush1.msra.mxu0 0.0
    %2320 = vmatprep.subr.mxu0 0.0
    %2321 = vmatpush1.msra.mxu0 0.0
    %2322 = vmatprep.mubr.f32.mxu0 0.0
    %2323 = vmatmul.mubr.f32.gmra.mrb[0].mxu0 %v2253
    %v2324 = vpop.f32.mrb[0].mxu0
    %v2325 = vadd.f32 %v2249, %v2324
    %v2326 = vpop.f32.mrb[0].mxu0
    %2327 = vmatprep.mubr.f32.mxu0 0.0
    %2328 = vmatmul.mubr.f32.gmra.mrb[0].mxu0 %v2256
    %v2329 = vpop.f32.mrb[0].mxu0
    %v2330 = vadd.f32 %v2249, %v2329
    %v2331 = vpop.f32.mrb[0].mxu0
    %2332 = vdwg.mxu0
    %v2333 = vadd.f32 %v2325, %v2154
    %v2334 = vadd.f32 %v2330, %v2155
    %v2335 = vsel %vm549, %v2333, 0.0
    %2336 = vadd.xlane.f32.xlu0 %v2335
    %v2337 = vpop.xlane.xlu0 %2336
    %v2338 = vsel %vm549, %v2334, 0.0
    %2339 = vadd.xlane.f32.xlu0 %v2338
    %v2340 = vpop.xlane.xlu0 %2339
    %v2341 = vmul.f32 %v2337, %v2119
    %v2342 = vmul.f32 %v2340, %v2119
    %v2343 = vsub.f32 %v2333, %v2341
    %v2344 = vsub.f32 %v2334, %v2342
    %v2345 = vmul.f32 %v2343, %v2343
    %v2346 = vmul.f32 %v2344, %v2344
    %v2347 = vsel %vm549, %v2345, 0.0
    %2348 = vadd.xlane.f32.xlu0 %v2347
    %v2349 = vpop.xlane.xlu0 %2348
    %v2350 = vsel %vm549, %v2346, 0.0
    %2351 = vadd.xlane.f32.xlu0 %v2350
    %v2352 = vpop.xlane.xlu0 %2351
    %v2353 = vmul.f32 %v2349, %v2119
    %v2354 = vmul.f32 %v2352, %v2119
    %v2355 = vadd.f32 %v2353, 1e-05
    %v2356 = vadd.f32 %v2354, 1e-05
    %v2357 = vrsqrt.pop %v2355
    %v2358 = vrsqrt.pop %v2356
    %v2359 = vmul.f32 %v2343, %v2357
    %v2360 = vmul.f32 %v2344, %v2358
    %v2362 = vlaneseq
    %v2363 = vshrl.u32 %v2362, 7
    %v2364 = vsub.s32 0, %v2363
    %v2365 = vrot.slane %v377, %v2364
    %v2367 = vmul.f32 %v2359, %v2365
    %v2368 = vmul.f32 %v2360, %v2365
    %v2370 = vlaneseq
    %v2371 = vshrl.u32 %v2370, 7
    %v2372 = vsub.s32 0, %v2371
    %v2373 = vrot.slane %v378, %v2372
    %v2375 = vadd.f32 %v2367, %v2373
    %v2376 = vadd.f32 %v2368, %v2373
    %2377 = vst.msk [vmem:[#allocation26] sm:$0xff] %vm549, %v2375
    %2378 = vst.msk [vmem:[#allocation26 + $0x8] sm:$0xff] %vm549, %v2376
    %v2379 = vld [vmem:[%s3] sm:$0xff]
    %v2380 = vld [vmem:[%s3 + $0x8] sm:$0xff]
    %v2381 = vld [vmem:[%s15] sm:$0xff]
    %v2382 = vld [vmem:[%s15 + $0x8] sm:$0xff]
    %v2383 = vld [vmem:[%s15 + $0x10] sm:$0xff]
    %v2384 = vld [vmem:[%s15 + $0x18] sm:$0xff]
    %v2385 = vld [vmem:[%s15 + $0x20] sm:$0xff]
    %v2386 = vld [vmem:[%s15 + $0x28] sm:$0xff]
    %v2387 = vld [vmem:[%s15 + $0x30] sm:$0xff]
    %v2388 = vld [vmem:[%s15 + $0x38] sm:$0xf]
    %v2389 = vld [vmem:[%s7] sm:$0xff]
    %v2390 = vld [vmem:[%s7 + $0x8] sm:$0xff]
    %2391 = vset.pattern.permute.xlu0 0
    %2392 = vperm.xlu0 %2391, %v2379
    %v2393 = vpop.permute.xlu0 %2392
    %2394 = vset.pattern.permute.xlu0 0
    %2395 = vperm.xlu0 %2394, %v2380
    %v2396 = vpop.permute.xlu0 %2395
    %vm2397 = vcmp.eq.s32.totalorder %v444, %v2393
    %vm2398 = vcmp.eq.s32.totalorder %v444, %v2396
    %v2399 = vsel %vm2397, 1, 0
    %v2400 = vsel %vm2398, 1, 0
    %v2401 = vcvt.s32.f32 %v2399
    %v2402 = vcvt.s32.f32 %v2400
    %vm2403 = vcmask 490496
    %v2405 = vsel %vm2403, %v2401, 0
    %v2408 = vsel %vm2403, %v2402, 0
    %vm2410 = vcmask 1043456
    %v2412 = vsel %vm2410, %v2388, 0
    %2414 = vmatprep.subr.mxu0 0.0
    %2415 = vmatpush1.msra.mxu0 %v2381
    %2416 = vmatprep.subr.mxu0 0.0
    %2417 = vmatpush1.msra.mxu0 %v2382
    %2418 = vmatprep.subr.mxu0 0.0
    %2419 = vmatpush1.msra.mxu0 %v2383
    %2420 = vmatprep.subr.mxu0 0.0
    %2421 = vmatpush1.msra.mxu0 %v2384
    %2422 = vmatprep.subr.mxu0 0.0
    %2423 = vmatpush1.msra.mxu0 %v2385
    %2424 = vmatprep.subr.mxu0 0.0
    %2425 = vmatpush1.msra.mxu0 %v2386
    %2426 = vmatprep.subr.mxu0 0.0
    %2427 = vmatpush1.msra.mxu0 %v2387
    %2428 = vmatprep.subr.mxu0 0.0
    %2429 = vmatpush1.msra.mxu0 %v2412
    %2430 = vmatprep.subr.mxu0 0.0
    %2431 = vmatpush1.msra.mxu0 0.0
    %2432 = vmatprep.subr.mxu0 0.0
    %2433 = vmatpush1.msra.mxu0 0.0
    %2434 = vmatprep.subr.mxu0 0.0
    %2435 = vmatpush1.msra.mxu0 0.0
    %2436 = vmatprep.subr.mxu0 0.0
    %2437 = vmatpush1.msra.mxu0 0.0
    %2438 = vmatprep.subr.mxu0 0.0
    %2439 = vmatpush1.msra.mxu0 0.0
    %2440 = vmatprep.subr.mxu0 0.0
    %2441 = vmatpush1.msra.mxu0 0.0
    %2442 = vmatprep.subr.mxu0 0.0
    %2443 = vmatpush1.msra.mxu0 0.0
    %2444 = vmatprep.subr.mxu0 0.0
    %2445 = vmatpush1.msra.mxu0 0.0
    %2446 = vmatprep.subr.mxu0 0.0
    %2447 = vmatpush1.msra.mxu0 0.0
    %2448 = vmatprep.subr.mxu0 0.0
    %2449 = vmatpush1.msra.mxu0 0.0
    %2450 = vmatprep.subr.mxu0 0.0
    %2451 = vmatpush1.msra.mxu0 0.0
    %2452 = vmatprep.subr.mxu0 0.0
    %2453 = vmatpush1.msra.mxu0 0.0
    %2454 = vmatprep.subr.mxu0 0.0
    %2455 = vmatpush1.msra.mxu0 0.0
    %2456 = vmatprep.subr.mxu0 0.0
    %2457 = vmatpush1.msra.mxu0 0.0
    %2458 = vmatprep.subr.mxu0 0.0
    %2459 = vmatpush1.msra.mxu0 0.0
    %2460 = vmatprep.subr.mxu0 0.0
    %2461 = vmatpush1.msra.mxu0 0.0
    %2462 = vmatprep.subr.mxu0 0.0
    %2463 = vmatpush1.msra.mxu0 0.0
    %2464 = vmatprep.subr.mxu0 0.0
    %2465 = vmatpush1.msra.mxu0 0.0
    %2466 = vmatprep.subr.mxu0 0.0
    %2467 = vmatpush1.msra.mxu0 0.0
    %2468 = vmatprep.subr.mxu0 0.0
    %2469 = vmatpush1.msra.mxu0 0.0
    %2470 = vmatprep.subr.mxu0 0.0
    %2471 = vmatpush1.msra.mxu0 0.0
    %2472 = vmatprep.subr.mxu0 0.0
    %2473 = vmatpush1.msra.mxu0 0.0
    %2474 = vmatprep.subr.mxu0 0.0
    %2475 = vmatpush1.msra.mxu0 0.0
    %2476 = vmatprep.subr.mxu0 0.0
    %2477 = vmatpush1.msra.mxu0 0.0
    %2478 = vmatprep.mubr.f32.mxu0 0.0
    %2479 = vmatmul.mubr.f32.gmra.mrb[0].mxu0 %v2405
    %v2480 = vpop.f32.mrb[0].mxu0
    %v2481 = vadd.f32 %v2389, %v2480
    %v2482 = vpop.f32.mrb[0].mxu0
    %2483 = vmatprep.mubr.f32.mxu0 0.0
    %2484 = vmatmul.mubr.f32.gmra.mrb[0].mxu0 %v2408
    %v2485 = vpop.f32.mrb[0].mxu0
    %v2486 = vadd.f32 %v2390, %v2485
    %v2487 = vpop.f32.mrb[0].mxu0
    %2488 = vdwg.mxu0
    %v2490 = vlaneseq
    %v2491 = vshrl.u32 %v2490, 7
    %v2492 = vsub.s32 0, %v2491
    %v2493 = vrot.slane %v383, %v2492
    %v2496 = vsel %vm549, %v2481, 0
    %v2499 = vsel %vm549, %v2486, 0
    %2501 = vmatprep.subr.mxu0 0.0
    %2502 = vmatpush1.msra.mxu0 %v379
    %2503 = vmatprep.subr.mxu0 0.0
    %2504 = vmatpush1.msra.mxu0 %v380
    %2505 = vmatprep.subr.mxu0 0.0
    %2506 = vmatpush1.msra.mxu0 %v381
    %2507 = vmatprep.subr.mxu0 0.0
    %2508 = vmatpush1.msra.mxu0 %v382
    %2509 = vmatprep.subr.mxu0 0.0
    %2510 = vmatpush1.msra.mxu0 0.0
    %2511 = vmatprep.subr.mxu0 0.0
    %2512 = vmatpush1.msra.mxu0 0.0
    %2513 = vmatprep.subr.mxu0 0.0
    %2514 = vmatpush1.msra.mxu0 0.0
    %2515 = vmatprep.subr.mxu0 0.0
    %2516 = vmatpush1.msra.mxu0 0.0
    %2517 = vmatprep.subr.mxu0 0.0
    %2518 = vmatpush1.msra.mxu0 0.0
    %2519 = vmatprep.subr.mxu0 0.0
    %2520 = vmatpush1.msra.mxu0 0.0
    %2521 = vmatprep.subr.mxu0 0.0
    %2522 = vmatpush1.msra.mxu0 0.0
    %2523 = vmatprep.subr.mxu0 0.0
    %2524 = vmatpush1.msra.mxu0 0.0
    %2525 = vmatprep.subr.mxu0 0.0
    %2526 = vmatpush1.msra.mxu0 0.0
    %2527 = vmatprep.subr.mxu0 0.0
    %2528 = vmatpush1.msra.mxu0 0.0
    %2529 = vmatprep.subr.mxu0 0.0
    %2530 = vmatpush1.msra.mxu0 0.0
    %2531 = vmatprep.subr.mxu0 0.0
    %2532 = vmatpush1.msra.mxu0 0.0
    %2533 = vmatprep.subr.mxu0 0.0
    %2534 = vmatpush1.msra.mxu0 0.0
    %2535 = vmatprep.subr.mxu0 0.0
    %2536 = vmatpush1.msra.mxu0 0.0
    %2537 = vmatprep.subr.mxu0 0.0
    %2538 = vmatpush1.msra.mxu0 0.0
    %2539 = vmatprep.subr.mxu0 0.0
    %2540 = vmatpush1.msra.mxu0 0.0
    %2541 = vmatprep.subr.mxu0 0.0
    %2542 = vmatpush1.msra.mxu0 0.0
    %2543 = vmatprep.subr.mxu0 0.0
    %2544 = vmatpush1.msra.mxu0 0.0
    %2545 = vmatprep.subr.mxu0 0.0
    %2546 = vmatpush1.msra.mxu0 0.0
    %2547 = vmatprep.subr.mxu0 0.0
    %2548 = vmatpush1.msra.mxu0 0.0
    %2549 = vmatprep.subr.mxu0 0.0
    %2550 = vmatpush1.msra.mxu0 0.0
    %2551 = vmatprep.subr.mxu0 0.0
    %2552 = vmatpush1.msra.mxu0 0.0
    %2553 = vmatprep.subr.mxu0 0.0
    %2554 = vmatpush1.msra.mxu0 0.0
    %2555 = vmatprep.subr.mxu0 0.0
    %2556 = vmatpush1.msra.mxu0 0.0
    %2557 = vmatprep.subr.mxu0 0.0
    %2558 = vmatpush1.msra.mxu0 0.0
    %2559 = vmatprep.subr.mxu0 0.0
    %2560 = vmatpush1.msra.mxu0 0.0
    %2561 = vmatprep.subr.mxu0 0.0
    %2562 = vmatpush1.msra.mxu0 0.0
    %2563 = vmatprep.subr.mxu0 0.0
    %2564 = vmatpush1.msra.mxu0 0.0
    %2565 = vmatprep.mubr.f32.mxu0 0.0
    %2566 = vmatmul.mubr.f32.gmra.mrb[0].mxu0 %v2496
    %v2567 = vpop.f32.mrb[0].mxu0
    %v2568 = vadd.f32 %v2493, %v2567
    %v2569 = vpop.f32.mrb[0].mxu0
    %2570 = vmatprep.mubr.f32.mxu0 0.0
    %2571 = vmatmul.mubr.f32.gmra.mrb[0].mxu0 %v2499
    %v2572 = vpop.f32.mrb[0].mxu0
    %v2573 = vadd.f32 %v2493, %v2572
    %v2574 = vpop.f32.mrb[0].mxu0
    %2575 = vdwg.mxu0
    %v2576 = vsub.f32 1.0, %v430
    %v2577 = vmul.f32 %v2576, -1e+10
    %2579 = vrot.lane.b32.xlu0 %v2568, 96
    %v2580 = vpop.permute.xlu0 %2579
    %v2581 = vsel %vm636, %v2568, 0
    %v2583 = vsel %vm636, %v2580, 0
    %2585 = vmatprep.subr.mxu0 0.0
    %2586 = vmatpush1.xpose.msra.mxu0 %v2583
    %2587 = vmatprep.subr.mxu0 0.0
    %2588 = vmatpush1.xpose.msra.mxu0 0.0
    %2589 = vmatprep.subr.mxu0 0.0
    %2590 = vmatpush1.xpose.msra.mxu0 0.0
    %2591 = vmatprep.subr.mxu0 0.0
    %2592 = vmatpush1.xpose.msra.mxu0 0.0
    %2593 = vmatprep.subr.mxu0 0.0
    %2594 = vmatpush1.xpose.msra.mxu0 0.0
    %2595 = vmatprep.subr.mxu0 0.0
    %2596 = vmatpush1.xpose.msra.mxu0 0.0
    %2597 = vmatprep.subr.mxu0 0.0
    %2598 = vmatpush1.xpose.msra.mxu0 0.0
    %2599 = vmatprep.subr.mxu0 0.0
    %2600 = vmatpush1.xpose.msra.mxu0 0.0
    %2601 = vmatprep.subr.mxu0 0.0
    %2602 = vmatpush1.xpose.msra.mxu0 0.0
    %2603 = vmatprep.subr.mxu0 0.0
    %2604 = vmatpush1.xpose.msra.mxu0 0.0
    %2605 = vmatprep.subr.mxu0 0.0
    %2606 = vmatpush1.xpose.msra.mxu0 0.0
    %2607 = vmatprep.subr.mxu0 0.0
    %2608 = vmatpush1.xpose.msra.mxu0 0.0
    %2609 = vmatprep.subr.mxu0 0.0
    %2610 = vmatpush1.xpose.msra.mxu0 0.0
    %2611 = vmatprep.subr.mxu0 0.0
    %2612 = vmatpush1.xpose.msra.mxu0 0.0
    %2613 = vmatprep.subr.mxu0 0.0
    %2614 = vmatpush1.xpose.msra.mxu0 0.0
    %2615 = vmatprep.subr.mxu0 0.0
    %2616 = vmatpush1.xpose.msra.mxu0 0.0
    %2617 = vmatprep.subr.mxu0 0.0
    %2618 = vmatpush1.xpose.msra.mxu0 0.0
    %2619 = vmatprep.subr.mxu0 0.0
    %2620 = vmatpush1.xpose.msra.mxu0 0.0
    %2621 = vmatprep.subr.mxu0 0.0
    %2622 = vmatpush1.xpose.msra.mxu0 0.0
    %2623 = vmatprep.subr.mxu0 0.0
    %2624 = vmatpush1.xpose.msra.mxu0 0.0
    %2625 = vmatprep.subr.mxu0 0.0
    %2626 = vmatpush1.xpose.msra.mxu0 0.0
    %2627 = vmatprep.subr.mxu0 0.0
    %2628 = vmatpush1.xpose.msra.mxu0 0.0
    %2629 = vmatprep.subr.mxu0 0.0
    %2630 = vmatpush1.xpose.msra.mxu0 0.0
    %2631 = vmatprep.subr.mxu0 0.0
    %2632 = vmatpush1.xpose.msra.mxu0 0.0
    %2633 = vmatprep.subr.mxu0 0.0
    %2634 = vmatpush1.xpose.msra.mxu0 0.0
    %2635 = vmatprep.subr.mxu0 0.0
    %2636 = vmatpush1.xpose.msra.mxu0 0.0
    %2637 = vmatprep.subr.mxu0 0.0
    %2638 = vmatpush1.xpose.msra.mxu0 0.0
    %2639 = vmatprep.subr.mxu0 0.0
    %2640 = vmatpush1.xpose.msra.mxu0 0.0
    %2641 = vmatprep.subr.mxu0 0.0
    %2642 = vmatpush1.xpose.msra.mxu0 0.0
    %2643 = vmatprep.subr.mxu0 0.0
    %2644 = vmatpush1.xpose.msra.mxu0 0.0
    %2645 = vmatprep.subr.mxu0 0.0
    %2646 = vmatpush1.xpose.msra.mxu0 0.0
    %2647 = vmatprep.subr.mxu0 0.0
    %2648 = vmatpush1.xpose.msra.mxu0 0.0
    %2649 = vmatprep.mubr.f32.mxu0 0.0
    %2650 = vmatmul.mubr.f32.gmra.mrb[0].mxu0 %v2581
    %v2651 = vpop.f32.mrb[0].mxu0
    %v2652 = vadd.f32 0.0, %v2651
    %v2653 = vpop.f32.mrb[0].mxu0
    %2654 = vdwg.mxu0
    %v2655 = vmul.f32 %v2652, %v430
    %v2656 = vadd.f32 %v2655, %v2577
    %v2657 = vmul.f32 %v2656, 0.35355338
    %v2658 = vsel %vm636, %v2657, -inf
    %2659 = vmax.xlane.f32.xlu0 %v2658
    %v2660 = vpop.xlane.xlu0 %2659
    %v2661 = vsub.f32 %v2657, %v2660
    %v2662 = vmul.f32 %v2661, 1.442695
    %v2663 = vpow.pop %v2662
    %v2664 = vsel %vm636, %v2663, 0.0
    %2665 = vadd.xlane.f32.xlu0 %v2664
    %v2666 = vpop.xlane.xlu0 %2665
    %v2667 = vrcp.pop %v2666
    %v2668 = vmul.f32 %v2663, %v2667
    %2669 = vrot.lane.b32.xlu0 %v2568, 64
    %v2670 = vpop.permute.xlu0 %2669
    %v2673 = vsel %vm636, %v2668, 0
    %2675 = vmatprep.subr.mxu0 0.0
    %2676 = vmatpush1.msra.mxu0 %v2670
    %2677 = vmatprep.subr.mxu0 0.0
    %2678 = vmatpush1.msra.mxu0 0.0
    %2679 = vmatprep.subr.mxu0 0.0
    %2680 = vmatpush1.msra.mxu0 0.0
    %2681 = vmatprep.subr.mxu0 0.0
    %2682 = vmatpush1.msra.mxu0 0.0
    %2683 = vmatprep.subr.mxu0 0.0
    %2684 = vmatpush1.msra.mxu0 0.0
    %2685 = vmatprep.subr.mxu0 0.0
    %2686 = vmatpush1.msra.mxu0 0.0
    %2687 = vmatprep.subr.mxu0 0.0
    %2688 = vmatpush1.msra.mxu0 0.0
    %2689 = vmatprep.subr.mxu0 0.0
    %2690 = vmatpush1.msra.mxu0 0.0
    %2691 = vmatprep.subr.mxu0 0.0
    %2692 = vmatpush1.msra.mxu0 0.0
    %2693 = vmatprep.subr.mxu0 0.0
    %2694 = vmatpush1.msra.mxu0 0.0
    %2695 = vmatprep.subr.mxu0 0.0
    %2696 = vmatpush1.msra.mxu0 0.0
    %2697 = vmatprep.subr.mxu0 0.0
    %2698 = vmatpush1.msra.mxu0 0.0
    %2699 = vmatprep.subr.mxu0 0.0
    %2700 = vmatpush1.msra.mxu0 0.0
    %2701 = vmatprep.subr.mxu0 0.0
    %2702 = vmatpush1.msra.mxu0 0.0
    %2703 = vmatprep.subr.mxu0 0.0
    %2704 = vmatpush1.msra.mxu0 0.0
    %2705 = vmatprep.subr.mxu0 0.0
    %2706 = vmatpush1.msra.mxu0 0.0
    %2707 = vmatprep.subr.mxu0 0.0
    %2708 = vmatpush1.msra.mxu0 0.0
    %2709 = vmatprep.subr.mxu0 0.0
    %2710 = vmatpush1.msra.mxu0 0.0
    %2711 = vmatprep.subr.mxu0 0.0
    %2712 = vmatpush1.msra.mxu0 0.0
    %2713 = vmatprep.subr.mxu0 0.0
    %2714 = vmatpush1.msra.mxu0 0.0
    %2715 = vmatprep.subr.mxu0 0.0
    %2716 = vmatpush1.msra.mxu0 0.0
    %2717 = vmatprep.subr.mxu0 0.0
    %2718 = vmatpush1.msra.mxu0 0.0
    %2719 = vmatprep.subr.mxu0 0.0
    %2720 = vmatpush1.msra.mxu0 0.0
    %2721 = vmatprep.subr.mxu0 0.0
    %2722 = vmatpush1.msra.mxu0 0.0
    %2723 = vmatprep.subr.mxu0 0.0
    %2724 = vmatpush1.msra.mxu0 0.0
    %2725 = vmatprep.subr.mxu0 0.0
    %2726 = vmatpush1.msra.mxu0 0.0
    %2727 = vmatprep.subr.mxu0 0.0
    %2728 = vmatpush1.msra.mxu0 0.0
    %2729 = vmatprep.subr.mxu0 0.0
    %2730 = vmatpush1.msra.mxu0 0.0
    %2731 = vmatprep.subr.mxu0 0.0
    %2732 = vmatpush1.msra.mxu0 0.0
    %2733 = vmatprep.subr.mxu0 0.0
    %2734 = vmatpush1.msra.mxu0 0.0
    %2735 = vmatprep.subr.mxu0 0.0
    %2736 = vmatpush1.msra.mxu0 0.0
    %2737 = vmatprep.subr.mxu0 0.0
    %2738 = vmatpush1.msra.mxu0 0.0
    %2739 = vmatprep.mubr.f32.mxu0 0.0
    %2740 = vmatmul.mubr.f32.gmra.mrb[0].mxu0 %v2673
    %v2741 = vpop.f32.mrb[0].mxu0
    %v2742 = vadd.f32 0.0, %v2741
    %v2743 = vpop.f32.mrb[0].mxu0
    %2744 = vdwg.mxu0
    %2745 = vrot.lane.b32.xlu0 %v2568, 120
    %v2746 = vpop.permute.xlu0 %2745
    %2747 = vrot.lane.b32.xlu0 %v2568, 88
    %v2748 = vpop.permute.xlu0 %2747
    %v2749 = vsel %vm636, %v2746, 0
    %v2751 = vsel %vm636, %v2748, 0
    %2753 = vmatprep.subr.mxu0 0.0
    %2754 = vmatpush1.xpose.msra.mxu0 %v2751
    %2755 = vmatprep.subr.mxu0 0.0
    %2756 = vmatpush1.xpose.msra.mxu0 0.0
    %2757 = vmatprep.subr.mxu0 0.0
    %2758 = vmatpush1.xpose.msra.mxu0 0.0
    %2759 = vmatprep.subr.mxu0 0.0
    %2760 = vmatpush1.xpose.msra.mxu0 0.0
    %2761 = vmatprep.subr.mxu0 0.0
    %2762 = vmatpush1.xpose.msra.mxu0 0.0
    %2763 = vmatprep.subr.mxu0 0.0
    %2764 = vmatpush1.xpose.msra.mxu0 0.0
    %2765 = vmatprep.subr.mxu0 0.0
    %2766 = vmatpush1.xpose.msra.mxu0 0.0
    %2767 = vmatprep.subr.mxu0 0.0
    %2768 = vmatpush1.xpose.msra.mxu0 0.0
    %2769 = vmatprep.subr.mxu0 0.0
    %2770 = vmatpush1.xpose.msra.mxu0 0.0
    %2771 = vmatprep.subr.mxu0 0.0
    %2772 = vmatpush1.xpose.msra.mxu0 0.0
    %2773 = vmatprep.subr.mxu0 0.0
    %2774 = vmatpush1.xpose.msra.mxu0 0.0
    %2775 = vmatprep.subr.mxu0 0.0
    %2776 = vmatpush1.xpose.msra.mxu0 0.0
    %2777 = vmatprep.subr.mxu0 0.0
    %2778 = vmatpush1.xpose.msra.mxu0 0.0
    %2779 = vmatprep.subr.mxu0 0.0
    %2780 = vmatpush1.xpose.msra.mxu0 0.0
    %2781 = vmatprep.subr.mxu0 0.0
    %2782 = vmatpush1.xpose.msra.mxu0 0.0
    %2783 = vmatprep.subr.mxu0 0.0
    %2784 = vmatpush1.xpose.msra.mxu0 0.0
    %2785 = vmatprep.subr.mxu0 0.0
    %2786 = vmatpush1.xpose.msra.mxu0 0.0
    %2787 = vmatprep.subr.mxu0 0.0
    %2788 = vmatpush1.xpose.msra.mxu0 0.0
    %2789 = vmatprep.subr.mxu0 0.0
    %2790 = vmatpush1.xpose.msra.mxu0 0.0
    %2791 = vmatprep.subr.mxu0 0.0
    %2792 = vmatpush1.xpose.msra.mxu0 0.0
    %2793 = vmatprep.subr.mxu0 0.0
    %2794 = vmatpush1.xpose.msra.mxu0 0.0
    %2795 = vmatprep.subr.mxu0 0.0
    %2796 = vmatpush1.xpose.msra.mxu0 0.0
    %2797 = vmatprep.subr.mxu0 0.0
    %2798 = vmatpush1.xpose.msra.mxu0 0.0
    %2799 = vmatprep.subr.mxu0 0.0
    %2800 = vmatpush1.xpose.msra.mxu0 0.0
    %2801 = vmatprep.subr.mxu0 0.0
    %2802 = vmatpush1.xpose.msra.mxu0 0.0
    %2803 = vmatprep.subr.mxu0 0.0
    %2804 = vmatpush1.xpose.msra.mxu0 0.0
    %2805 = vmatprep.subr.mxu0 0.0
    %2806 = vmatpush1.xpose.msra.mxu0 0.0
    %2807 = vmatprep.subr.mxu0 0.0
    %2808 = vmatpush1.xpose.msra.mxu0 0.0
    %2809 = vmatprep.subr.mxu0 0.0
    %2810 = vmatpush1.xpose.msra.mxu0 0.0
    %2811 = vmatprep.subr.mxu0 0.0
    %2812 = vmatpush1.xpose.msra.mxu0 0.0
    %2813 = vmatprep.subr.mxu0 0.0
    %2814 = vmatpush1.xpose.msra.mxu0 0.0
    %2815 = vmatprep.subr.mxu0 0.0
    %2816 = vmatpush1.xpose.msra.mxu0 0.0
    %2817 = vmatprep.mubr.f32.mxu0 0.0
    %2818 = vmatmul.mubr.f32.gmra.mrb[0].mxu0 %v2749
    %v2819 = vpop.f32.mrb[0].mxu0
    %v2820 = vadd.f32 0.0, %v2819
    %v2821 = vpop.f32.mrb[0].mxu0
    %2822 = vdwg.mxu0
    %v2823 = vmul.f32 %v2820, %v430
    %v2824 = vadd.f32 %v2823, %v2577
    %v2825 = vmul.f32 %v2824, 0.35355338
    %v2826 = vsel %vm636, %v2825, -inf
    %2827 = vmax.xlane.f32.xlu0 %v2826
    %v2828 = vpop.xlane.xlu0 %2827
    %v2829 = vsub.f32 %v2825, %v2828
    %v2830 = vmul.f32 %v2829, 1.442695
    %v2831 = vpow.pop %v2830
    %v2832 = vsel %vm636, %v2831, 0.0
    %2833 = vadd.xlane.f32.xlu0 %v2832
    %v2834 = vpop.xlane.xlu0 %2833
    %v2835 = vrcp.pop %v2834
    %v2836 = vmul.f32 %v2831, %v2835
    %2837 = vrot.lane.b32.xlu0 %v2568, 56
    %v2838 = vpop.permute.xlu0 %2837
    %v2841 = vsel %vm636, %v2836, 0
    %2843 = vmatprep.subr.mxu0 0.0
    %2844 = vmatpush1.msra.mxu0 %v2838
    %2845 = vmatprep.subr.mxu0 0.0
    %2846 = vmatpush1.msra.mxu0 0.0
    %2847 = vmatprep.subr.mxu0 0.0
    %2848 = vmatpush1.msra.mxu0 0.0
    %2849 = vmatprep.subr.mxu0 0.0
    %2850 = vmatpush1.msra.mxu0 0.0
    %2851 = vmatprep.subr.mxu0 0.0
    %2852 = vmatpush1.msra.mxu0 0.0
    %2853 = vmatprep.subr.mxu0 0.0
    %2854 = vmatpush1.msra.mxu0 0.0
    %2855 = vmatprep.subr.mxu0 0.0
    %2856 = vmatpush1.msra.mxu0 0.0
    %2857 = vmatprep.subr.mxu0 0.0
    %2858 = vmatpush1.msra.mxu0 0.0
    %2859 = vmatprep.subr.mxu0 0.0
    %2860 = vmatpush1.msra.mxu0 0.0
    %2861 = vmatprep.subr.mxu0 0.0
    %2862 = vmatpush1.msra.mxu0 0.0
    %2863 = vmatprep.subr.mxu0 0.0
    %2864 = vmatpush1.msra.mxu0 0.0
    %2865 = vmatprep.subr.mxu0 0.0
    %2866 = vmatpush1.msra.mxu0 0.0
    %2867 = vmatprep.subr.mxu0 0.0
    %2868 = vmatpush1.msra.mxu0 0.0
    %2869 = vmatprep.subr.mxu0 0.0
    %2870 = vmatpush1.msra.mxu0 0.0
    %2871 = vmatprep.subr.mxu0 0.0
    %2872 = vmatpush1.msra.mxu0 0.0
    %2873 = vmatprep.subr.mxu0 0.0
    %2874 = vmatpush1.msra.mxu0 0.0
    %2875 = vmatprep.subr.mxu0 0.0
    %2876 = vmatpush1.msra.mxu0 0.0
    %2877 = vmatprep.subr.mxu0 0.0
    %2878 = vmatpush1.msra.mxu0 0.0
    %2879 = vmatprep.subr.mxu0 0.0
    %2880 = vmatpush1.msra.mxu0 0.0
    %2881 = vmatprep.subr.mxu0 0.0
    %2882 = vmatpush1.msra.mxu0 0.0
    %2883 = vmatprep.subr.mxu0 0.0
    %2884 = vmatpush1.msra.mxu0 0.0
    %2885 = vmatprep.subr.mxu0 0.0
    %2886 = vmatpush1.msra.mxu0 0.0
    %2887 = vmatprep.subr.mxu0 0.0
    %2888 = vmatpush1.msra.mxu0 0.0
    %2889 = vmatprep.subr.mxu0 0.0
    %2890 = vmatpush1.msra.mxu0 0.0
    %2891 = vmatprep.subr.mxu0 0.0
    %2892 = vmatpush1.msra.mxu0 0.0
    %2893 = vmatprep.subr.mxu0 0.0
    %2894 = vmatpush1.msra.mxu0 0.0
    %2895 = vmatprep.subr.mxu0 0.0
    %2896 = vmatpush1.msra.mxu0 0.0
    %2897 = vmatprep.subr.mxu0 0.0
    %2898 = vmatpush1.msra.mxu0 0.0
    %2899 = vmatprep.subr.mxu0 0.0
    %2900 = vmatpush1.msra.mxu0 0.0
    %2901 = vmatprep.subr.mxu0 0.0
    %2902 = vmatpush1.msra.mxu0 0.0
    %2903 = vmatprep.subr.mxu0 0.0
    %2904 = vmatpush1.msra.mxu0 0.0
    %2905 = vmatprep.subr.mxu0 0.0
    %2906 = vmatpush1.msra.mxu0 0.0
    %2907 = vmatprep.mubr.f32.mxu0 0.0
    %2908 = vmatmul.mubr.f32.gmra.mrb[0].mxu0 %v2841
    %v2909 = vpop.f32.mrb[0].mxu0
    %v2910 = vadd.f32 0.0, %v2909
    %v2911 = vpop.f32.mrb[0].mxu0
    %2912 = vdwg.mxu0
    %2913 = vrot.lane.b32.xlu0 %v2568, 112
    %v2914 = vpop.permute.xlu0 %2913
    %2915 = vrot.lane.b32.xlu0 %v2568, 80
    %v2916 = vpop.permute.xlu0 %2915
    %v2917 = vsel %vm636, %v2914, 0
    %v2919 = vsel %vm636, %v2916, 0
    %2921 = vmatprep.subr.mxu0 0.0
    %2922 = vmatpush1.xpose.msra.mxu0 %v2919
    %2923 = vmatprep.subr.mxu0 0.0
    %2924 = vmatpush1.xpose.msra.mxu0 0.0
    %2925 = vmatprep.subr.mxu0 0.0
    %2926 = vmatpush1.xpose.msra.mxu0 0.0
    %2927 = vmatprep.subr.mxu0 0.0
    %2928 = vmatpush1.xpose.msra.mxu0 0.0
    %2929 = vmatprep.subr.mxu0 0.0
    %2930 = vmatpush1.xpose.msra.mxu0 0.0
    %2931 = vmatprep.subr.mxu0 0.0
    %2932 = vmatpush1.xpose.msra.mxu0 0.0
    %2933 = vmatprep.subr.mxu0 0.0
    %2934 = vmatpush1.xpose.msra.mxu0 0.0
    %2935 = vmatprep.subr.mxu0 0.0
    %2936 = vmatpush1.xpose.msra.mxu0 0.0
    %2937 = vmatprep.subr.mxu0 0.0
    %2938 = vmatpush1.xpose.msra.mxu0 0.0
    %2939 = vmatprep.subr.mxu0 0.0
    %2940 = vmatpush1.xpose.msra.mxu0 0.0
    %2941 = vmatprep.subr.mxu0 0.0
    %2942 = vmatpush1.xpose.msra.mxu0 0.0
    %2943 = vmatprep.subr.mxu0 0.0
    %2944 = vmatpush1.xpose.msra.mxu0 0.0
    %2945 = vmatprep.subr.mxu0 0.0
    %2946 = vmatpush1.xpose.msra.mxu0 0.0
    %2947 = vmatprep.subr.mxu0 0.0
    %2948 = vmatpush1.xpose.msra.mxu0 0.0
    %2949 = vmatprep.subr.mxu0 0.0
    %2950 = vmatpush1.xpose.msra.mxu0 0.0
    %2951 = vmatprep.subr.mxu0 0.0
    %2952 = vmatpush1.xpose.msra.mxu0 0.0
    %2953 = vmatprep.subr.mxu0 0.0
    %2954 = vmatpush1.xpose.msra.mxu0 0.0
    %2955 = vmatprep.subr.mxu0 0.0
    %2956 = vmatpush1.xpose.msra.mxu0 0.0
    %2957 = vmatprep.subr.mxu0 0.0
    %2958 = vmatpush1.xpose.msra.mxu0 0.0
    %2959 = vmatprep.subr.mxu0 0.0
    %2960 = vmatpush1.xpose.msra.mxu0 0.0
    %2961 = vmatprep.subr.mxu0 0.0
    %2962 = vmatpush1.xpose.msra.mxu0 0.0
    %2963 = vmatprep.subr.mxu0 0.0
    %2964 = vmatpush1.xpose.msra.mxu0 0.0
    %2965 = vmatprep.subr.mxu0 0.0
    %2966 = vmatpush1.xpose.msra.mxu0 0.0
    %2967 = vmatprep.subr.mxu0 0.0
    %2968 = vmatpush1.xpose.msra.mxu0 0.0
    %2969 = vmatprep.subr.mxu0 0.0
    %2970 = vmatpush1.xpose.msra.mxu0 0.0
    %2971 = vmatprep.subr.mxu0 0.0
    %2972 = vmatpush1.xpose.msra.mxu0 0.0
    %2973 = vmatprep.subr.mxu0 0.0
    %2974 = vmatpush1.xpose.msra.mxu0 0.0
    %2975 = vmatprep.subr.mxu0 0.0
    %2976 = vmatpush1.xpose.msra.mxu0 0.0
    %2977 = vmatprep.subr.mxu0 0.0
    %2978 = vmatpush1.xpose.msra.mxu0 0.0
    %2979 = vmatprep.subr.mxu0 0.0
    %2980 = vmatpush1.xpose.msra.mxu0 0.0
    %2981 = vmatprep.subr.mxu0 0.0
    %2982 = vmatpush1.xpose.msra.mxu0 0.0
    %2983 = vmatprep.subr.mxu0 0.0
    %2984 = vmatpush1.xpose.msra.mxu0 0.0
    %2985 = vmatprep.mubr.f32.mxu0 0.0
    %2986 = vmatmul.mubr.f32.gmra.mrb[0].mxu0 %v2917
    %v2987 = vpop.f32.mrb[0].mxu0
    %v2988 = vadd.f32 0.0, %v2987
    %v2989 = vpop.f32.mrb[0].mxu0
    %2990 = vdwg.mxu0
    %v2991 = vmul.f32 %v2988, %v430
    %v2992 = vadd.f32 %v2991, %v2577
    %v2993 = vmul.f32 %v2992, 0.35355338
    %v2994 = vsel %vm636, %v2993, -inf
    %2995 = vmax.xlane.f32.xlu0 %v2994
    %v2996 = vpop.xlane.xlu0 %2995
    %v2997 = vsub.f32 %v2993, %v2996
    %v2998 = vmul.f32 %v2997, 1.442695
    %v2999 = vpow.pop %v2998
    %v3000 = vsel %vm636, %v2999, 0.0
    %3001 = vadd.xlane.f32.xlu0 %v3000
    %v3002 = vpop.xlane.xlu0 %3001
    %v3003 = vrcp.pop %v3002
    %v3004 = vmul.f32 %v2999, %v3003
    %3005 = vrot.lane.b32.xlu0 %v2568, 48
    %v3006 = vpop.permute.xlu0 %3005
    %v3009 = vsel %vm636, %v3004, 0
    %3011 = vmatprep.subr.mxu0 0.0
    %3012 = vmatpush1.msra.mxu0 %v3006
    %3013 = vmatprep.subr.mxu0 0.0
    %3014 = vmatpush1.msra.mxu0 0.0
    %3015 = vmatprep.subr.mxu0 0.0
    %3016 = vmatpush1.msra.mxu0 0.0
    %3017 = vmatprep.subr.mxu0 0.0
    %3018 = vmatpush1.msra.mxu0 0.0
    %3019 = vmatprep.subr.mxu0 0.0
    %3020 = vmatpush1.msra.mxu0 0.0
    %3021 = vmatprep.subr.mxu0 0.0
    %3022 = vmatpush1.msra.mxu0 0.0
    %3023 = vmatprep.subr.mxu0 0.0
    %3024 = vmatpush1.msra.mxu0 0.0
    %3025 = vmatprep.subr.mxu0 0.0
    %3026 = vmatpush1.msra.mxu0 0.0
    %3027 = vmatprep.subr.mxu0 0.0
    %3028 = vmatpush1.msra.mxu0 0.0
    %3029 = vmatprep.subr.mxu0 0.0
    %3030 = vmatpush1.msra.mxu0 0.0
    %3031 = vmatprep.subr.mxu0 0.0
    %3032 = vmatpush1.msra.mxu0 0.0
    %3033 = vmatprep.subr.mxu0 0.0
    %3034 = vmatpush1.msra.mxu0 0.0
    %3035 = vmatprep.subr.mxu0 0.0
    %3036 = vmatpush1.msra.mxu0 0.0
    %3037 = vmatprep.subr.mxu0 0.0
    %3038 = vmatpush1.msra.mxu0 0.0
    %3039 = vmatprep.subr.mxu0 0.0
    %3040 = vmatpush1.msra.mxu0 0.0
    %3041 = vmatprep.subr.mxu0 0.0
    %3042 = vmatpush1.msra.mxu0 0.0
    %3043 = vmatprep.subr.mxu0 0.0
    %3044 = vmatpush1.msra.mxu0 0.0
    %3045 = vmatprep.subr.mxu0 0.0
    %3046 = vmatpush1.msra.mxu0 0.0
    %3047 = vmatprep.subr.mxu0 0.0
    %3048 = vmatpush1.msra.mxu0 0.0
    %3049 = vmatprep.subr.mxu0 0.0
    %3050 = vmatpush1.msra.mxu0 0.0
    %3051 = vmatprep.subr.mxu0 0.0
    %3052 = vmatpush1.msra.mxu0 0.0
    %3053 = vmatprep.subr.mxu0 0.0
    %3054 = vmatpush1.msra.mxu0 0.0
    %3055 = vmatprep.subr.mxu0 0.0
    %3056 = vmatpush1.msra.mxu0 0.0
    %3057 = vmatprep.subr.mxu0 0.0
    %3058 = vmatpush1.msra.mxu0 0.0
    %3059 = vmatprep.subr.mxu0 0.0
    %3060 = vmatpush1.msra.mxu0 0.0
    %3061 = vmatprep.subr.mxu0 0.0
    %3062 = vmatpush1.msra.mxu0 0.0
    %3063 = vmatprep.subr.mxu0 0.0
    %3064 = vmatpush1.msra.mxu0 0.0
    %3065 = vmatprep.subr.mxu0 0.0
    %3066 = vmatpush1.msra.mxu0 0.0
    %3067 = vmatprep.subr.mxu0 0.0
    %3068 = vmatpush1.msra.mxu0 0.0
    %3069 = vmatprep.subr.mxu0 0.0
    %3070 = vmatpush1.msra.mxu0 0.0
    %3071 = vmatprep.subr.mxu0 0.0
    %3072 = vmatpush1.msra.mxu0 0.0
    %3073 = vmatprep.subr.mxu0 0.0
    %3074 = vmatpush1.msra.mxu0 0.0
    %3075 = vmatprep.mubr.f32.mxu0 0.0
    %3076 = vmatmul.mubr.f32.gmra.mrb[0].mxu0 %v3009
    %v3077 = vpop.f32.mrb[0].mxu0
    %v3078 = vadd.f32 0.0, %v3077
    %v3079 = vpop.f32.mrb[0].mxu0
    %3080 = vdwg.mxu0
    %3081 = vrot.lane.b32.xlu0 %v2568, 104
    %v3082 = vpop.permute.xlu0 %3081
    %3083 = vrot.lane.b32.xlu0 %v2568, 72
    %v3084 = vpop.permute.xlu0 %3083
    %v3085 = vsel %vm636, %v3082, 0
    %v3087 = vsel %vm636, %v3084, 0
    %3089 = vmatprep.subr.mxu0 0.0
    %3090 = vmatpush1.xpose.msra.mxu0 %v3087
    %3091 = vmatprep.subr.mxu0 0.0
    %3092 = vmatpush1.xpose.msra.mxu0 0.0
    %3093 = vmatprep.subr.mxu0 0.0
    %3094 = vmatpush1.xpose.msra.mxu0 0.0
    %3095 = vmatprep.subr.mxu0 0.0
    %3096 = vmatpush1.xpose.msra.mxu0 0.0
    %3097 = vmatprep.subr.mxu0 0.0
    %3098 = vmatpush1.xpose.msra.mxu0 0.0
    %3099 = vmatprep.subr.mxu0 0.0
    %3100 = vmatpush1.xpose.msra.mxu0 0.0
    %3101 = vmatprep.subr.mxu0 0.0
    %3102 = vmatpush1.xpose.msra.mxu0 0.0
    %3103 = vmatprep.subr.mxu0 0.0
    %3104 = vmatpush1.xpose.msra.mxu0 0.0
    %3105 = vmatprep.subr.mxu0 0.0
    %3106 = vmatpush1.xpose.msra.mxu0 0.0
    %3107 = vmatprep.subr.mxu0 0.0
    %3108 = vmatpush1.xpose.msra.mxu0 0.0
    %3109 = vmatprep.subr.mxu0 0.0
    %3110 = vmatpush1.xpose.msra.mxu0 0.0
    %3111 = vmatprep.subr.mxu0 0.0
    %3112 = vmatpush1.xpose.msra.mxu0 0.0
    %3113 = vmatprep.subr.mxu0 0.0
    %3114 = vmatpush1.xpose.msra.mxu0 0.0
    %3115 = vmatprep.subr.mxu0 0.0
    %3116 = vmatpush1.xpose.msra.mxu0 0.0
    %3117 = vmatprep.subr.mxu0 0.0
    %3118 = vmatpush1.xpose.msra.mxu0 0.0
    %3119 = vmatprep.subr.mxu0 0.0
    %3120 = vmatpush1.xpose.msra.mxu0 0.0
    %3121 = vmatprep.subr.mxu0 0.0
    %3122 = vmatpush1.xpose.msra.mxu0 0.0
    %3123 = vmatprep.subr.mxu0 0.0
    %3124 = vmatpush1.xpose.msra.mxu0 0.0
    %3125 = vmatprep.subr.mxu0 0.0
    %3126 = vmatpush1.xpose.msra.mxu0 0.0
    %3127 = vmatprep.subr.mxu0 0.0
    %3128 = vmatpush1.xpose.msra.mxu0 0.0
    %3129 = vmatprep.subr.mxu0 0.0
    %3130 = vmatpush1.xpose.msra.mxu0 0.0
    %3131 = vmatprep.subr.mxu0 0.0
    %3132 = vmatpush1.xpose.msra.mxu0 0.0
    %3133 = vmatprep.subr.mxu0 0.0
    %3134 = vmatpush1.xpose.msra.mxu0 0.0
    %3135 = vmatprep.subr.mxu0 0.0
    %3136 = vmatpush1.xpose.msra.mxu0 0.0
    %3137 = vmatprep.subr.mxu0 0.0
    %3138 = vmatpush1.xpose.msra.mxu0 0.0
    %3139 = vmatprep.subr.mxu0 0.0
    %3140 = vmatpush1.xpose.msra.mxu0 0.0
    %3141 = vmatprep.subr.mxu0 0.0
    %3142 = vmatpush1.xpose.msra.mxu0 0.0
    %3143 = vmatprep.subr.mxu0 0.0
    %3144 = vmatpush1.xpose.msra.mxu0 0.0
    %3145 = vmatprep.subr.mxu0 0.0
    %3146 = vmatpush1.xpose.msra.mxu0 0.0
    %3147 = vmatprep.subr.mxu0 0.0
    %3148 = vmatpush1.xpose.msra.mxu0 0.0
    %3149 = vmatprep.subr.mxu0 0.0
    %3150 = vmatpush1.xpose.msra.mxu0 0.0
    %3151 = vmatprep.subr.mxu0 0.0
    %3152 = vmatpush1.xpose.msra.mxu0 0.0
    %3153 = vmatprep.mubr.f32.mxu0 0.0
    %3154 = vmatmul.mubr.f32.gmra.mrb[0].mxu0 %v3085
    %v3155 = vpop.f32.mrb[0].mxu0
    %v3156 = vadd.f32 0.0, %v3155
    %v3157 = vpop.f32.mrb[0].mxu0
    %3158 = vdwg.mxu0
    %v3159 = vmul.f32 %v3156, %v430
    %v3160 = vadd.f32 %v3159, %v2577
    %v3161 = vmul.f32 %v3160, 0.35355338
    %v3162 = vsel %vm636, %v3161, -inf
    %3163 = vmax.xlane.f32.xlu0 %v3162
    %v3164 = vpop.xlane.xlu0 %3163
    %v3165 = vsub.f32 %v3161, %v3164
    %v3166 = vmul.f32 %v3165, 1.442695
    %v3167 = vpow.pop %v3166
    %v3168 = vsel %vm636, %v3167, 0.0
    %3169 = vadd.xlane.f32.xlu0 %v3168
    %v3170 = vpop.xlane.xlu0 %3169
    %v3171 = vrcp.pop %v3170
    %v3172 = vmul.f32 %v3167, %v3171
    %3173 = vrot.lane.b32.xlu0 %v2568, 40
    %v3174 = vpop.permute.xlu0 %3173
    %v3177 = vsel %vm636, %v3172, 0
    %3179 = vmatprep.subr.mxu0 0.0
    %3180 = vmatpush1.msra.mxu0 %v3174
    %3181 = vmatprep.subr.mxu0 0.0
    %3182 = vmatpush1.msra.mxu0 0.0
    %3183 = vmatprep.subr.mxu0 0.0
    %3184 = vmatpush1.msra.mxu0 0.0
    %3185 = vmatprep.subr.mxu0 0.0
    %3186 = vmatpush1.msra.mxu0 0.0
    %3187 = vmatprep.subr.mxu0 0.0
    %3188 = vmatpush1.msra.mxu0 0.0
    %3189 = vmatprep.subr.mxu0 0.0
    %3190 = vmatpush1.msra.mxu0 0.0
    %3191 = vmatprep.subr.mxu0 0.0
    %3192 = vmatpush1.msra.mxu0 0.0
    %3193 = vmatprep.subr.mxu0 0.0
    %3194 = vmatpush1.msra.mxu0 0.0
    %3195 = vmatprep.subr.mxu0 0.0
    %3196 = vmatpush1.msra.mxu0 0.0
    %3197 = vmatprep.subr.mxu0 0.0
    %3198 = vmatpush1.msra.mxu0 0.0
    %3199 = vmatprep.subr.mxu0 0.0
    %3200 = vmatpush1.msra.mxu0 0.0
    %3201 = vmatprep.subr.mxu0 0.0
    %3202 = vmatpush1.msra.mxu0 0.0
    %3203 = vmatprep.subr.mxu0 0.0
    %3204 = vmatpush1.msra.mxu0 0.0
    %3205 = vmatprep.subr.mxu0 0.0
    %3206 = vmatpush1.msra.mxu0 0.0
    %3207 = vmatprep.subr.mxu0 0.0
    %3208 = vmatpush1.msra.mxu0 0.0
    %3209 = vmatprep.subr.mxu0 0.0
    %3210 = vmatpush1.msra.mxu0 0.0
    %3211 = vmatprep.subr.mxu0 0.0
    %3212 = vmatpush1.msra.mxu0 0.0
    %3213 = vmatprep.subr.mxu0 0.0
    %3214 = vmatpush1.msra.mxu0 0.0
    %3215 = vmatprep.subr.mxu0 0.0
    %3216 = vmatpush1.msra.mxu0 0.0
    %3217 = vmatprep.subr.mxu0 0.0
    %3218 = vmatpush1.msra.mxu0 0.0
    %3219 = vmatprep.subr.mxu0 0.0
    %3220 = vmatpush1.msra.mxu0 0.0
    %3221 = vmatprep.subr.mxu0 0.0
    %3222 = vmatpush1.msra.mxu0 0.0
    %3223 = vmatprep.subr.mxu0 0.0
    %3224 = vmatpush1.msra.mxu0 0.0
    %3225 = vmatprep.subr.mxu0 0.0
    %3226 = vmatpush1.msra.mxu0 0.0
    %3227 = vmatprep.subr.mxu0 0.0
    %3228 = vmatpush1.msra.mxu0 0.0
    %3229 = vmatprep.subr.mxu0 0.0
    %3230 = vmatpush1.msra.mxu0 0.0
    %3231 = vmatprep.subr.mxu0 0.0
    %3232 = vmatpush1.msra.mxu0 0.0
    %3233 = vmatprep.subr.mxu0 0.0
    %3234 = vmatpush1.msra.mxu0 0.0
    %3235 = vmatprep.subr.mxu0 0.0
    %3236 = vmatpush1.msra.mxu0 0.0
    %3237 = vmatprep.subr.mxu0 0.0
    %3238 = vmatpush1.msra.mxu0 0.0
    %3239 = vmatprep.subr.mxu0 0.0
    %3240 = vmatpush1.msra.mxu0 0.0
    %3241 = vmatprep.subr.mxu0 0.0
    %3242 = vmatpush1.msra.mxu0 0.0
    %3243 = vmatprep.mubr.f32.mxu0 0.0
    %3244 = vmatmul.mubr.f32.gmra.mrb[0].mxu0 %v3177
    %v3245 = vpop.f32.mrb[0].mxu0
    %v3246 = vadd.f32 0.0, %v3245
    %v3247 = vpop.f32.mrb[0].mxu0
    %3248 = vdwg.mxu0
    %3250 = vrot.lane.b32.xlu0 %v2910, 8
    %v3251 = vpop.permute.xlu0 %3250
    %3254 = vrot.lane.b32.xlu0 %v3078, 16
    %v3255 = vpop.permute.xlu0 %3254
    %3258 = vrot.lane.b32.xlu0 %v3246, 24
    %v3259 = vpop.permute.xlu0 %3258
    %v3261 = vsel %vm636, %v2742, %v3251
    %v3262 = vsel %vm1326, %v3261, %v3255
    %v3263 = vsel %vm1328, %v3262, %v3259
    %v3264 = vsub.f32 1.0, %v431
    %v3265 = vmul.f32 %v3264, -1e+10
    %3267 = vrot.lane.b32.xlu0 %v2573, 96
    %v3268 = vpop.permute.xlu0 %3267
    %v3269 = vsel %vm636, %v2573, 0
    %v3271 = vsel %vm636, %v3268, 0
    %3273 = vmatprep.subr.mxu0 0.0
    %3274 = vmatpush1.xpose.msra.mxu0 %v3271
    %3275 = vmatprep.subr.mxu0 0.0
    %3276 = vmatpush1.xpose.msra.mxu0 0.0
    %3277 = vmatprep.subr.mxu0 0.0
    %3278 = vmatpush1.xpose.msra.mxu0 0.0
    %3279 = vmatprep.subr.mxu0 0.0
    %3280 = vmatpush1.xpose.msra.mxu0 0.0
    %3281 = vmatprep.subr.mxu0 0.0
    %3282 = vmatpush1.xpose.msra.mxu0 0.0
    %3283 = vmatprep.subr.mxu0 0.0
    %3284 = vmatpush1.xpose.msra.mxu0 0.0
    %3285 = vmatprep.subr.mxu0 0.0
    %3286 = vmatpush1.xpose.msra.mxu0 0.0
    %3287 = vmatprep.subr.mxu0 0.0
    %3288 = vmatpush1.xpose.msra.mxu0 0.0
    %3289 = vmatprep.subr.mxu0 0.0
    %3290 = vmatpush1.xpose.msra.mxu0 0.0
    %3291 = vmatprep.subr.mxu0 0.0
    %3292 = vmatpush1.xpose.msra.mxu0 0.0
    %3293 = vmatprep.subr.mxu0 0.0
    %3294 = vmatpush1.xpose.msra.mxu0 0.0
    %3295 = vmatprep.subr.mxu0 0.0
    %3296 = vmatpush1.xpose.msra.mxu0 0.0
    %3297 = vmatprep.subr.mxu0 0.0
    %3298 = vmatpush1.xpose.msra.mxu0 0.0
    %3299 = vmatprep.subr.mxu0 0.0
    %3300 = vmatpush1.xpose.msra.mxu0 0.0
    %3301 = vmatprep.subr.mxu0 0.0
    %3302 = vmatpush1.xpose.msra.mxu0 0.0
    %3303 = vmatprep.subr.mxu0 0.0
    %3304 = vmatpush1.xpose.msra.mxu0 0.0
    %3305 = vmatprep.subr.mxu0 0.0
    %3306 = vmatpush1.xpose.msra.mxu0 0.0
    %3307 = vmatprep.subr.mxu0 0.0
    %3308 = vmatpush1.xpose.msra.mxu0 0.0
    %3309 = vmatprep.subr.mxu0 0.0
    %3310 = vmatpush1.xpose.msra.mxu0 0.0
    %3311 = vmatprep.subr.mxu0 0.0
    %3312 = vmatpush1.xpose.msra.mxu0 0.0
    %3313 = vmatprep.subr.mxu0 0.0
    %3314 = vmatpush1.xpose.msra.mxu0 0.0
    %3315 = vmatprep.subr.mxu0 0.0
    %3316 = vmatpush1.xpose.msra.mxu0 0.0
    %3317 = vmatprep.subr.mxu0 0.0
    %3318 = vmatpush1.xpose.msra.mxu0 0.0
    %3319 = vmatprep.subr.mxu0 0.0
    %3320 = vmatpush1.xpose.msra.mxu0 0.0
    %3321 = vmatprep.subr.mxu0 0.0
    %3322 = vmatpush1.xpose.msra.mxu0 0.0
    %3323 = vmatprep.subr.mxu0 0.0
    %3324 = vmatpush1.xpose.msra.mxu0 0.0
    %3325 = vmatprep.subr.mxu0 0.0
    %3326 = vmatpush1.xpose.msra.mxu0 0.0
    %3327 = vmatprep.subr.mxu0 0.0
    %3328 = vmatpush1.xpose.msra.mxu0 0.0
    %3329 = vmatprep.subr.mxu0 0.0
    %3330 = vmatpush1.xpose.msra.mxu0 0.0
    %3331 = vmatprep.subr.mxu0 0.0
    %3332 = vmatpush1.xpose.msra.mxu0 0.0
    %3333 = vmatprep.subr.mxu0 0.0
    %3334 = vmatpush1.xpose.msra.mxu0 0.0
    %3335 = vmatprep.subr.mxu0 0.0
    %3336 = vmatpush1.xpose.msra.mxu0 0.0
    %3337 = vmatprep.mubr.f32.mxu0 0.0
    %3338 = vmatmul.mubr.f32.gmra.mrb[0].mxu0 %v3269
    %v3339 = vpop.f32.mrb[0].mxu0
    %v3340 = vadd.f32 0.0, %v3339
    %v3341 = vpop.f32.mrb[0].mxu0
    %3342 = vdwg.mxu0
    %v3343 = vmul.f32 %v3340, %v431
    %v3344 = vadd.f32 %v3343, %v3265
    %v3345 = vmul.f32 %v3344, 0.35355338
    %v3346 = vsel %vm636, %v3345, -inf
    %3347 = vmax.xlane.f32.xlu0 %v3346
    %v3348 = vpop.xlane.xlu0 %3347
    %v3349 = vsub.f32 %v3345, %v3348
    %v3350 = vmul.f32 %v3349, 1.442695
    %v3351 = vpow.pop %v3350
    %v3352 = vsel %vm636, %v3351, 0.0
    %3353 = vadd.xlane.f32.xlu0 %v3352
    %v3354 = vpop.xlane.xlu0 %3353
    %v3355 = vrcp.pop %v3354
    %v3356 = vmul.f32 %v3351, %v3355
    %3357 = vrot.lane.b32.xlu0 %v2573, 64
    %v3358 = vpop.permute.xlu0 %3357
    %v3361 = vsel %vm636, %v3356, 0
    %3363 = vmatprep.subr.mxu0 0.0
    %3364 = vmatpush1.msra.mxu0 %v3358
    %3365 = vmatprep.subr.mxu0 0.0
    %3366 = vmatpush1.msra.mxu0 0.0
    %3367 = vmatprep.subr.mxu0 0.0
    %3368 = vmatpush1.msra.mxu0 0.0
    %3369 = vmatprep.subr.mxu0 0.0
    %3370 = vmatpush1.msra.mxu0 0.0
    %3371 = vmatprep.subr.mxu0 0.0
    %3372 = vmatpush1.msra.mxu0 0.0
    %3373 = vmatprep.subr.mxu0 0.0
    %3374 = vmatpush1.msra.mxu0 0.0
    %3375 = vmatprep.subr.mxu0 0.0
    %3376 = vmatpush1.msra.mxu0 0.0
    %3377 = vmatprep.subr.mxu0 0.0
    %3378 = vmatpush1.msra.mxu0 0.0
    %3379 = vmatprep.subr.mxu0 0.0
    %3380 = vmatpush1.msra.mxu0 0.0
    %3381 = vmatprep.subr.mxu0 0.0
    %3382 = vmatpush1.msra.mxu0 0.0
    %3383 = vmatprep.subr.mxu0 0.0
    %3384 = vmatpush1.msra.mxu0 0.0
    %3385 = vmatprep.subr.mxu0 0.0
    %3386 = vmatpush1.msra.mxu0 0.0
    %3387 = vmatprep.subr.mxu0 0.0
    %3388 = vmatpush1.msra.mxu0 0.0
    %3389 = vmatprep.subr.mxu0 0.0
    %3390 = vmatpush1.msra.mxu0 0.0
    %3391 = vmatprep.subr.mxu0 0.0
    %3392 = vmatpush1.msra.mxu0 0.0
    %3393 = vmatprep.subr.mxu0 0.0
    %3394 = vmatpush1.msra.mxu0 0.0
    %3395 = vmatprep.subr.mxu0 0.0
    %3396 = vmatpush1.msra.mxu0 0.0
    %3397 = vmatprep.subr.mxu0 0.0
    %3398 = vmatpush1.msra.mxu0 0.0
    %3399 = vmatprep.subr.mxu0 0.0
    %3400 = vmatpush1.msra.mxu0 0.0
    %3401 = vmatprep.subr.mxu0 0.0
    %3402 = vmatpush1.msra.mxu0 0.0
    %3403 = vmatprep.subr.mxu0 0.0
    %3404 = vmatpush1.msra.mxu0 0.0
    %3405 = vmatprep.subr.mxu0 0.0
    %3406 = vmatpush1.msra.mxu0 0.0
    %3407 = vmatprep.subr.mxu0 0.0
    %3408 = vmatpush1.msra.mxu0 0.0
    %3409 = vmatprep.subr.mxu0 0.0
    %3410 = vmatpush1.msra.mxu0 0.0
    %3411 = vmatprep.subr.mxu0 0.0
    %3412 = vmatpush1.msra.mxu0 0.0
    %3413 = vmatprep.subr.mxu0 0.0
    %3414 = vmatpush1.msra.mxu0 0.0
    %3415 = vmatprep.subr.mxu0 0.0
    %3416 = vmatpush1.msra.mxu0 0.0
    %3417 = vmatprep.subr.mxu0 0.0
    %3418 = vmatpush1.msra.mxu0 0.0
    %3419 = vmatprep.subr.mxu0 0.0
    %3420 = vmatpush1.msra.mxu0 0.0
    %3421 = vmatprep.subr.mxu0 0.0
    %3422 = vmatpush1.msra.mxu0 0.0
    %3423 = vmatprep.subr.mxu0 0.0
    %3424 = vmatpush1.msra.mxu0 0.0
    %3425 = vmatprep.subr.mxu0 0.0
    %3426 = vmatpush1.msra.mxu0 0.0
    %3427 = vmatprep.mubr.f32.mxu0 0.0
    %3428 = vmatmul.mubr.f32.gmra.mrb[0].mxu0 %v3361
    %v3429 = vpop.f32.mrb[0].mxu0
    %v3430 = vadd.f32 0.0, %v3429
    %v3431 = vpop.f32.mrb[0].mxu0
    %3432 = vdwg.mxu0
    %3433 = vrot.lane.b32.xlu0 %v2573, 120
    %v3434 = vpop.permute.xlu0 %3433
    %3435 = vrot.lane.b32.xlu0 %v2573, 88
    %v3436 = vpop.permute.xlu0 %3435
    %v3437 = vsel %vm636, %v3434, 0
    %v3439 = vsel %vm636, %v3436, 0
    %3441 = vmatprep.subr.mxu0 0.0
    %3442 = vmatpush1.xpose.msra.mxu0 %v3439
    %3443 = vmatprep.subr.mxu0 0.0
    %3444 = vmatpush1.xpose.msra.mxu0 0.0
    %3445 = vmatprep.subr.mxu0 0.0
    %3446 = vmatpush1.xpose.msra.mxu0 0.0
    %3447 = vmatprep.subr.mxu0 0.0
    %3448 = vmatpush1.xpose.msra.mxu0 0.0
    %3449 = vmatprep.subr.mxu0 0.0
    %3450 = vmatpush1.xpose.msra.mxu0 0.0
    %3451 = vmatprep.subr.mxu0 0.0
    %3452 = vmatpush1.xpose.msra.mxu0 0.0
    %3453 = vmatprep.subr.mxu0 0.0
    %3454 = vmatpush1.xpose.msra.mxu0 0.0
    %3455 = vmatprep.subr.mxu0 0.0
    %3456 = vmatpush1.xpose.msra.mxu0 0.0
    %3457 = vmatprep.subr.mxu0 0.0
    %3458 = vmatpush1.xpose.msra.mxu0 0.0
    %3459 = vmatprep.subr.mxu0 0.0
    %3460 = vmatpush1.xpose.msra.mxu0 0.0
    %3461 = vmatprep.subr.mxu0 0.0
    %3462 = vmatpush1.xpose.msra.mxu0 0.0
    %3463 = vmatprep.subr.mxu0 0.0
    %3464 = vmatpush1.xpose.msra.mxu0 0.0
    %3465 = vmatprep.subr.mxu0 0.0
    %3466 = vmatpush1.xpose.msra.mxu0 0.0
    %3467 = vmatprep.subr.mxu0 0.0
    %3468 = vmatpush1.xpose.msra.mxu0 0.0
    %3469 = vmatprep.subr.mxu0 0.0
    %3470 = vmatpush1.xpose.msra.mxu0 0.0
    %3471 = vmatprep.subr.mxu0 0.0
    %3472 = vmatpush1.xpose.msra.mxu0 0.0
    %3473 = vmatprep.subr.mxu0 0.0
    %3474 = vmatpush1.xpose.msra.mxu0 0.0
    %3475 = vmatprep.subr.mxu0 0.0
    %3476 = vmatpush1.xpose.msra.mxu0 0.0
    %3477 = vmatprep.subr.mxu0 0.0
    %3478 = vmatpush1.xpose.msra.mxu0 0.0
    %3479 = vmatprep.subr.mxu0 0.0
    %3480 = vmatpush1.xpose.msra.mxu0 0.0
    %3481 = vmatprep.subr.mxu0 0.0
    %3482 = vmatpush1.xpose.msra.mxu0 0.0
    %3483 = vmatprep.subr.mxu0 0.0
    %3484 = vmatpush1.xpose.msra.mxu0 0.0
    %3485 = vmatprep.subr.mxu0 0.0
    %3486 = vmatpush1.xpose.msra.mxu0 0.0
    %3487 = vmatprep.subr.mxu0 0.0
    %3488 = vmatpush1.xpose.msra.mxu0 0.0
    %3489 = vmatprep.subr.mxu0 0.0
    %3490 = vmatpush1.xpose.msra.mxu0 0.0
    %3491 = vmatprep.subr.mxu0 0.0
    %3492 = vmatpush1.xpose.msra.mxu0 0.0
    %3493 = vmatprep.subr.mxu0 0.0
    %3494 = vmatpush1.xpose.msra.mxu0 0.0
    %3495 = vmatprep.subr.mxu0 0.0
    %3496 = vmatpush1.xpose.msra.mxu0 0.0
    %3497 = vmatprep.subr.mxu0 0.0
    %3498 = vmatpush1.xpose.msra.mxu0 0.0
    %3499 = vmatprep.subr.mxu0 0.0
    %3500 = vmatpush1.xpose.msra.mxu0 0.0
    %3501 = vmatprep.subr.mxu0 0.0
    %3502 = vmatpush1.xpose.msra.mxu0 0.0
    %3503 = vmatprep.subr.mxu0 0.0
    %3504 = vmatpush1.xpose.msra.mxu0 0.0
    %3505 = vmatprep.mubr.f32.mxu0 0.0
    %3506 = vmatmul.mubr.f32.gmra.mrb[0].mxu0 %v3437
    %v3507 = vpop.f32.mrb[0].mxu0
    %v3508 = vadd.f32 0.0, %v3507
    %v3509 = vpop.f32.mrb[0].mxu0
    %3510 = vdwg.mxu0
    %v3511 = vmul.f32 %v3508, %v431
    %v3512 = vadd.f32 %v3511, %v3265
    %v3513 = vmul.f32 %v3512, 0.35355338
    %v3514 = vsel %vm636, %v3513, -inf
    %3515 = vmax.xlane.f32.xlu0 %v3514
    %v3516 = vpop.xlane.xlu0 %3515
    %v3517 = vsub.f32 %v3513, %v3516
    %v3518 = vmul.f32 %v3517, 1.442695
    %v3519 = vpow.pop %v3518
    %v3520 = vsel %vm636, %v3519, 0.0
    %3521 = vadd.xlane.f32.xlu0 %v3520
    %v3522 = vpop.xlane.xlu0 %3521
    %v3523 = vrcp.pop %v3522
    %v3524 = vmul.f32 %v3519, %v3523
    %3525 = vrot.lane.b32.xlu0 %v2573, 56
    %v3526 = vpop.permute.xlu0 %3525
    %v3529 = vsel %vm636, %v3524, 0
    %3531 = vmatprep.subr.mxu0 0.0
    %3532 = vmatpush1.msra.mxu0 %v3526
    %3533 = vmatprep.subr.mxu0 0.0
    %3534 = vmatpush1.msra.mxu0 0.0
    %3535 = vmatprep.subr.mxu0 0.0
    %3536 = vmatpush1.msra.mxu0 0.0
    %3537 = vmatprep.subr.mxu0 0.0
    %3538 = vmatpush1.msra.mxu0 0.0
    %3539 = vmatprep.subr.mxu0 0.0
    %3540 = vmatpush1.msra.mxu0 0.0
    %3541 = vmatprep.subr.mxu0 0.0
    %3542 = vmatpush1.msra.mxu0 0.0
    %3543 = vmatprep.subr.mxu0 0.0
    %3544 = vmatpush1.msra.mxu0 0.0
    %3545 = vmatprep.subr.mxu0 0.0
    %3546 = vmatpush1.msra.mxu0 0.0
    %3547 = vmatprep.subr.mxu0 0.0
    %3548 = vmatpush1.msra.mxu0 0.0
    %3549 = vmatprep.subr.mxu0 0.0
    %3550 = vmatpush1.msra.mxu0 0.0
    %3551 = vmatprep.subr.mxu0 0.0
    %3552 = vmatpush1.msra.mxu0 0.0
    %3553 = vmatprep.subr.mxu0 0.0
    %3554 = vmatpush1.msra.mxu0 0.0
    %3555 = vmatprep.subr.mxu0 0.0
    %3556 = vmatpush1.msra.mxu0 0.0
    %3557 = vmatprep.subr.mxu0 0.0
    %3558 = vmatpush1.msra.mxu0 0.0
    %3559 = vmatprep.subr.mxu0 0.0
    %3560 = vmatpush1.msra.mxu0 0.0
    %3561 = vmatprep.subr.mxu0 0.0
    %3562 = vmatpush1.msra.mxu0 0.0
    %3563 = vmatprep.subr.mxu0 0.0
    %3564 = vmatpush1.msra.mxu0 0.0
    %3565 = vmatprep.subr.mxu0 0.0
    %3566 = vmatpush1.msra.mxu0 0.0
    %3567 = vmatprep.subr.mxu0 0.0
    %3568 = vmatpush1.msra.mxu0 0.0
    %3569 = vmatprep.subr.mxu0 0.0
    %3570 = vmatpush1.msra.mxu0 0.0
    %3571 = vmatprep.subr.mxu0 0.0
    %3572 = vmatpush1.msra.mxu0 0.0
    %3573 = vmatprep.subr.mxu0 0.0
    %3574 = vmatpush1.msra.mxu0 0.0
    %3575 = vmatprep.subr.mxu0 0.0
    %3576 = vmatpush1.msra.mxu0 0.0
    %3577 = vmatprep.subr.mxu0 0.0
    %3578 = vmatpush1.msra.mxu0 0.0
    %3579 = vmatprep.subr.mxu0 0.0
    %3580 = vmatpush1.msra.mxu0 0.0
    %3581 = vmatprep.subr.mxu0 0.0
    %3582 = vmatpush1.msra.mxu0 0.0
    %3583 = vmatprep.subr.mxu0 0.0
    %3584 = vmatpush1.msra.mxu0 0.0
    %3585 = vmatprep.subr.mxu0 0.0
    %3586 = vmatpush1.msra.mxu0 0.0
    %3587 = vmatprep.subr.mxu0 0.0
    %3588 = vmatpush1.msra.mxu0 0.0
    %3589 = vmatprep.subr.mxu0 0.0
    %3590 = vmatpush1.msra.mxu0 0.0
    %3591 = vmatprep.subr.mxu0 0.0
    %3592 = vmatpush1.msra.mxu0 0.0
    %3593 = vmatprep.subr.mxu0 0.0
    %3594 = vmatpush1.msra.mxu0 0.0
    %3595 = vmatprep.mubr.f32.mxu0 0.0
    %3596 = vmatmul.mubr.f32.gmra.mrb[0].mxu0 %v3529
    %v3597 = vpop.f32.mrb[0].mxu0
    %v3598 = vadd.f32 0.0, %v3597
    %v3599 = vpop.f32.mrb[0].mxu0
    %3600 = vdwg.mxu0
    %3601 = vrot.lane.b32.xlu0 %v2573, 112
    %v3602 = vpop.permute.xlu0 %3601
    %3603 = vrot.lane.b32.xlu0 %v2573, 80
    %v3604 = vpop.permute.xlu0 %3603
    %v3605 = vsel %vm636, %v3602, 0
    %v3607 = vsel %vm636, %v3604, 0
    %3609 = vmatprep.subr.mxu0 0.0
    %3610 = vmatpush1.xpose.msra.mxu0 %v3607
    %3611 = vmatprep.subr.mxu0 0.0
    %3612 = vmatpush1.xpose.msra.mxu0 0.0
    %3613 = vmatprep.subr.mxu0 0.0
    %3614 = vmatpush1.xpose.msra.mxu0 0.0
    %3615 = vmatprep.subr.mxu0 0.0
    %3616 = vmatpush1.xpose.msra.mxu0 0.0
    %3617 = vmatprep.subr.mxu0 0.0
    %3618 = vmatpush1.xpose.msra.mxu0 0.0
    %3619 = vmatprep.subr.mxu0 0.0
    %3620 = vmatpush1.xpose.msra.mxu0 0.0
    %3621 = vmatprep.subr.mxu0 0.0
    %3622 = vmatpush1.xpose.msra.mxu0 0.0
    %3623 = vmatprep.subr.mxu0 0.0
    %3624 = vmatpush1.xpose.msra.mxu0 0.0
    %3625 = vmatprep.subr.mxu0 0.0
    %3626 = vmatpush1.xpose.msra.mxu0 0.0
    %3627 = vmatprep.subr.mxu0 0.0
    %3628 = vmatpush1.xpose.msra.mxu0 0.0
    %3629 = vmatprep.subr.mxu0 0.0
    %3630 = vmatpush1.xpose.msra.mxu0 0.0
    %3631 = vmatprep.subr.mxu0 0.0
    %3632 = vmatpush1.xpose.msra.mxu0 0.0
    %3633 = vmatprep.subr.mxu0 0.0
    %3634 = vmatpush1.xpose.msra.mxu0 0.0
    %3635 = vmatprep.subr.mxu0 0.0
    %3636 = vmatpush1.xpose.msra.mxu0 0.0
    %3637 = vmatprep.subr.mxu0 0.0
    %3638 = vmatpush1.xpose.msra.mxu0 0.0
    %3639 = vmatprep.subr.mxu0 0.0
    %3640 = vmatpush1.xpose.msra.mxu0 0.0
    %3641 = vmatprep.subr.mxu0 0.0
    %3642 = vmatpush1.xpose.msra.mxu0 0.0
    %3643 = vmatprep.subr.mxu0 0.0
    %3644 = vmatpush1.xpose.msra.mxu0 0.0
    %3645 = vmatprep.subr.mxu0 0.0
    %3646 = vmatpush1.xpose.msra.mxu0 0.0
    %3647 = vmatprep.subr.mxu0 0.0
    %3648 = vmatpush1.xpose.msra.mxu0 0.0
    %3649 = vmatprep.subr.mxu0 0.0
    %3650 = vmatpush1.xpose.msra.mxu0 0.0
    %3651 = vmatprep.subr.mxu0 0.0
    %3652 = vmatpush1.xpose.msra.mxu0 0.0
    %3653 = vmatprep.subr.mxu0 0.0
    %3654 = vmatpush1.xpose.msra.mxu0 0.0
    %3655 = vmatprep.subr.mxu0 0.0
    %3656 = vmatpush1.xpose.msra.mxu0 0.0
    %3657 = vmatprep.subr.mxu0 0.0
    %3658 = vmatpush1.xpose.msra.mxu0 0.0
    %3659 = vmatprep.subr.mxu0 0.0
    %3660 = vmatpush1.xpose.msra.mxu0 0.0
    %3661 = vmatprep.subr.mxu0 0.0
    %3662 = vmatpush1.xpose.msra.mxu0 0.0
    %3663 = vmatprep.subr.mxu0 0.0
    %3664 = vmatpush1.xpose.msra.mxu0 0.0
    %3665 = vmatprep.subr.mxu0 0.0
    %3666 = vmatpush1.xpose.msra.mxu0 0.0
    %3667 = vmatprep.subr.mxu0 0.0
    %3668 = vmatpush1.xpose.msra.mxu0 0.0
    %3669 = vmatprep.subr.mxu0 0.0
    %3670 = vmatpush1.xpose.msra.mxu0 0.0
    %3671 = vmatprep.subr.mxu0 0.0
    %3672 = vmatpush1.xpose.msra.mxu0 0.0
    %3673 = vmatprep.mubr.f32.mxu0 0.0
    %3674 = vmatmul.mubr.f32.gmra.mrb[0].mxu0 %v3605
    %v3675 = vpop.f32.mrb[0].mxu0
    %v3676 = vadd.f32 0.0, %v3675
    %v3677 = vpop.f32.mrb[0].mxu0
    %3678 = vdwg.mxu0
    %v3679 = vmul.f32 %v3676, %v431
    %v3680 = vadd.f32 %v3679, %v3265
    %v3681 = vmul.f32 %v3680, 0.35355338
    %v3682 = vsel %vm636, %v3681, -inf
    %3683 = vmax.xlane.f32.xlu0 %v3682
    %v3684 = vpop.xlane.xlu0 %3683
    %v3685 = vsub.f32 %v3681, %v3684
    %v3686 = vmul.f32 %v3685, 1.442695
    %v3687 = vpow.pop %v3686
    %v3688 = vsel %vm636, %v3687, 0.0
    %3689 = vadd.xlane.f32.xlu0 %v3688
    %v3690 = vpop.xlane.xlu0 %3689
    %v3691 = vrcp.pop %v3690
    %v3692 = vmul.f32 %v3687, %v3691
    %3693 = vrot.lane.b32.xlu0 %v2573, 48
    %v3694 = vpop.permute.xlu0 %3693
    %v3697 = vsel %vm636, %v3692, 0
    %3699 = vmatprep.subr.mxu0 0.0
    %3700 = vmatpush1.msra.mxu0 %v3694
    %3701 = vmatprep.subr.mxu0 0.0
    %3702 = vmatpush1.msra.mxu0 0.0
    %3703 = vmatprep.subr.mxu0 0.0
    %3704 = vmatpush1.msra.mxu0 0.0
    %3705 = vmatprep.subr.mxu0 0.0
    %3706 = vmatpush1.msra.mxu0 0.0
    %3707 = vmatprep.subr.mxu0 0.0
    %3708 = vmatpush1.msra.mxu0 0.0
    %3709 = vmatprep.subr.mxu0 0.0
    %3710 = vmatpush1.msra.mxu0 0.0
    %3711 = vmatprep.subr.mxu0 0.0
    %3712 = vmatpush1.msra.mxu0 0.0
    %3713 = vmatprep.subr.mxu0 0.0
    %3714 = vmatpush1.msra.mxu0 0.0
    %3715 = vmatprep.subr.mxu0 0.0
    %3716 = vmatpush1.msra.mxu0 0.0
    %3717 = vmatprep.subr.mxu0 0.0
    %3718 = vmatpush1.msra.mxu0 0.0
    %3719 = vmatprep.subr.mxu0 0.0
    %3720 = vmatpush1.msra.mxu0 0.0
    %3721 = vmatprep.subr.mxu0 0.0
    %3722 = vmatpush1.msra.mxu0 0.0
    %3723 = vmatprep.subr.mxu0 0.0
    %3724 = vmatpush1.msra.mxu0 0.0
    %3725 = vmatprep.subr.mxu0 0.0
    %3726 = vmatpush1.msra.mxu0 0.0
    %3727 = vmatprep.subr.mxu0 0.0
    %3728 = vmatpush1.msra.mxu0 0.0
    %3729 = vmatprep.subr.mxu0 0.0
    %3730 = vmatpush1.msra.mxu0 0.0
    %3731 = vmatprep.subr.mxu0 0.0
    %3732 = vmatpush1.msra.mxu0 0.0
    %3733 = vmatprep.subr.mxu0 0.0
    %3734 = vmatpush1.msra.mxu0 0.0
    %3735 = vmatprep.subr.mxu0 0.0
    %3736 = vmatpush1.msra.mxu0 0.0
    %3737 = vmatprep.subr.mxu0 0.0
    %3738 = vmatpush1.msra.mxu0 0.0
    %3739 = vmatprep.subr.mxu0 0.0
    %3740 = vmatpush1.msra.mxu0 0.0
    %3741 = vmatprep.subr.mxu0 0.0
    %3742 = vmatpush1.msra.mxu0 0.0
    %3743 = vmatprep.subr.mxu0 0.0
    %3744 = vmatpush1.msra.mxu0 0.0
    %3745 = vmatprep.subr.mxu0 0.0
    %3746 = vmatpush1.msra.mxu0 0.0
    %3747 = vmatprep.subr.mxu0 0.0
    %3748 = vmatpush1.msra.mxu0 0.0
    %3749 = vmatprep.subr.mxu0 0.0
    %3750 = vmatpush1.msra.mxu0 0.0
    %3751 = vmatprep.subr.mxu0 0.0
    %3752 = vmatpush1.msra.mxu0 0.0
    %3753 = vmatprep.subr.mxu0 0.0
    %3754 = vmatpush1.msra.mxu0 0.0
    %3755 = vmatprep.subr.mxu0 0.0
    %3756 = vmatpush1.msra.mxu0 0.0
    %3757 = vmatprep.subr.mxu0 0.0
    %3758 = vmatpush1.msra.mxu0 0.0
    %3759 = vmatprep.subr.mxu0 0.0
    %3760 = vmatpush1.msra.mxu0 0.0
    %3761 = vmatprep.subr.mxu0 0.0
    %3762 = vmatpush1.msra.mxu0 0.0
    %3763 = vmatprep.mubr.f32.mxu0 0.0
    %3764 = vmatmul.mubr.f32.gmra.mrb[0].mxu0 %v3697
    %v3765 = vpop.f32.mrb[0].mxu0
    %v3766 = vadd.f32 0.0, %v3765
    %v3767 = vpop.f32.mrb[0].mxu0
    %3768 = vdwg.mxu0
    %3769 = vrot.lane.b32.xlu0 %v2573, 104
    %v3770 = vpop.permute.xlu0 %3769
    %3771 = vrot.lane.b32.xlu0 %v2573, 72
    %v3772 = vpop.permute.xlu0 %3771
    %v3773 = vsel %vm636, %v3770, 0
    %v3775 = vsel %vm636, %v3772, 0
    %3777 = vmatprep.subr.mxu0 0.0
    %3778 = vmatpush1.xpose.msra.mxu0 %v3775
    %3779 = vmatprep.subr.mxu0 0.0
    %3780 = vmatpush1.xpose.msra.mxu0 0.0
    %3781 = vmatprep.subr.mxu0 0.0
    %3782 = vmatpush1.xpose.msra.mxu0 0.0
    %3783 = vmatprep.subr.mxu0 0.0
    %3784 = vmatpush1.xpose.msra.mxu0 0.0
    %3785 = vmatprep.subr.mxu0 0.0
    %3786 = vmatpush1.xpose.msra.mxu0 0.0
    %3787 = vmatprep.subr.mxu0 0.0
    %3788 = vmatpush1.xpose.msra.mxu0 0.0
    %3789 = vmatprep.subr.mxu0 0.0
    %3790 = vmatpush1.xpose.msra.mxu0 0.0
    %3791 = vmatprep.subr.mxu0 0.0
    %3792 = vmatpush1.xpose.msra.mxu0 0.0
    %3793 = vmatprep.subr.mxu0 0.0
    %3794 = vmatpush1.xpose.msra.mxu0 0.0
    %3795 = vmatprep.subr.mxu0 0.0
    %3796 = vmatpush1.xpose.msra.mxu0 0.0
    %3797 = vmatprep.subr.mxu0 0.0
    %3798 = vmatpush1.xpose.msra.mxu0 0.0
    %3799 = vmatprep.subr.mxu0 0.0
    %3800 = vmatpush1.xpose.msra.mxu0 0.0
    %3801 = vmatprep.subr.mxu0 0.0
    %3802 = vmatpush1.xpose.msra.mxu0 0.0
    %3803 = vmatprep.subr.mxu0 0.0
    %3804 = vmatpush1.xpose.msra.mxu0 0.0
    %3805 = vmatprep.subr.mxu0 0.0
    %3806 = vmatpush1.xpose.msra.mxu0 0.0
    %3807 = vmatprep.subr.mxu0 0.0
    %3808 = vmatpush1.xpose.msra.mxu0 0.0
    %3809 = vmatprep.subr.mxu0 0.0
    %3810 = vmatpush1.xpose.msra.mxu0 0.0
    %3811 = vmatprep.subr.mxu0 0.0
    %3812 = vmatpush1.xpose.msra.mxu0 0.0
    %3813 = vmatprep.subr.mxu0 0.0
    %3814 = vmatpush1.xpose.msra.mxu0 0.0
    %3815 = vmatprep.subr.mxu0 0.0
    %3816 = vmatpush1.xpose.msra.mxu0 0.0
    %3817 = vmatprep.subr.mxu0 0.0
    %3818 = vmatpush1.xpose.msra.mxu0 0.0
    %3819 = vmatprep.subr.mxu0 0.0
    %3820 = vmatpush1.xpose.msra.mxu0 0.0
    %3821 = vmatprep.subr.mxu0 0.0
    %3822 = vmatpush1.xpose.msra.mxu0 0.0
    %3823 = vmatprep.subr.mxu0 0.0
    %3824 = vmatpush1.xpose.msra.mxu0 0.0
    %3825 = vmatprep.subr.mxu0 0.0
    %3826 = vmatpush1.xpose.msra.mxu0 0.0
    %3827 = vmatprep.subr.mxu0 0.0
    %3828 = vmatpush1.xpose.msra.mxu0 0.0
    %3829 = vmatprep.subr.mxu0 0.0
    %3830 = vmatpush1.xpose.msra.mxu0 0.0
    %3831 = vmatprep.subr.mxu0 0.0
    %3832 = vmatpush1.xpose.msra.mxu0 0.0
    %3833 = vmatprep.subr.mxu0 0.0
    %3834 = vmatpush1.xpose.msra.mxu0 0.0
    %3835 = vmatprep.subr.mxu0 0.0
    %3836 = vmatpush1.xpose.msra.mxu0 0.0
    %3837 = vmatprep.subr.mxu0 0.0
    %3838 = vmatpush1.xpose.msra.mxu0 0.0
    %3839 = vmatprep.subr.mxu0 0.0
    %3840 = vmatpush1.xpose.msra.mxu0 0.0
    %3841 = vmatprep.mubr.f32.mxu0 0.0
    %3842 = vmatmul.mubr.f32.gmra.mrb[0].mxu0 %v3773
    %v3843 = vpop.f32.mrb[0].mxu0
    %v3844 = vadd.f32 0.0, %v3843
    %v3845 = vpop.f32.mrb[0].mxu0
    %3846 = vdwg.mxu0
    %v3847 = vmul.f32 %v3844, %v431
    %v3848 = vadd.f32 %v3847, %v3265
    %v3849 = vmul.f32 %v3848, 0.35355338
    %v3850 = vsel %vm636, %v3849, -inf
    %3851 = vmax.xlane.f32.xlu0 %v3850
    %v3852 = vpop.xlane.xlu0 %3851
    %v3853 = vsub.f32 %v3849, %v3852
    %v3854 = vmul.f32 %v3853, 1.442695
    %v3855 = vpow.pop %v3854
    %v3856 = vsel %vm636, %v3855, 0.0
    %3857 = vadd.xlane.f32.xlu0 %v3856
    %v3858 = vpop.xlane.xlu0 %3857
    %v3859 = vrcp.pop %v3858
    %v3860 = vmul.f32 %v3855, %v3859
    %3861 = vrot.lane.b32.xlu0 %v2573, 40
    %v3862 = vpop.permute.xlu0 %3861
    %v3865 = vsel %vm636, %v3860, 0
    %3867 = vmatprep.subr.mxu0 0.0
    %3868 = vmatpush1.msra.mxu0 %v3862
    %3869 = vmatprep.subr.mxu0 0.0
    %3870 = vmatpush1.msra.mxu0 0.0
    %3871 = vmatprep.subr.mxu0 0.0
    %3872 = vmatpush1.msra.mxu0 0.0
    %3873 = vmatprep.subr.mxu0 0.0
    %3874 = vmatpush1.msra.mxu0 0.0
    %3875 = vmatprep.subr.mxu0 0.0
    %3876 = vmatpush1.msra.mxu0 0.0
    %3877 = vmatprep.subr.mxu0 0.0
    %3878 = vmatpush1.msra.mxu0 0.0
    %3879 = vmatprep.subr.mxu0 0.0
    %3880 = vmatpush1.msra.mxu0 0.0
    %3881 = vmatprep.subr.mxu0 0.0
    %3882 = vmatpush1.msra.mxu0 0.0
    %3883 = vmatprep.subr.mxu0 0.0
    %3884 = vmatpush1.msra.mxu0 0.0
    %3885 = vmatprep.subr.mxu0 0.0
    %3886 = vmatpush1.msra.mxu0 0.0
    %3887 = vmatprep.subr.mxu0 0.0
    %3888 = vmatpush1.msra.mxu0 0.0
    %3889 = vmatprep.subr.mxu0 0.0
    %3890 = vmatpush1.msra.mxu0 0.0
    %3891 = vmatprep.subr.mxu0 0.0
    %3892 = vmatpush1.msra.mxu0 0.0
    %3893 = vmatprep.subr.mxu0 0.0
    %3894 = vmatpush1.msra.mxu0 0.0
    %3895 = vmatprep.subr.mxu0 0.0
    %3896 = vmatpush1.msra.mxu0 0.0
    %3897 = vmatprep.subr.mxu0 0.0
    %3898 = vmatpush1.msra.mxu0 0.0
    %3899 = vmatprep.subr.mxu0 0.0
    %3900 = vmatpush1.msra.mxu0 0.0
    %3901 = vmatprep.subr.mxu0 0.0
    %3902 = vmatpush1.msra.mxu0 0.0
    %3903 = vmatprep.subr.mxu0 0.0
    %3904 = vmatpush1.msra.mxu0 0.0
    %3905 = vmatprep.subr.mxu0 0.0
    %3906 = vmatpush1.msra.mxu0 0.0
    %3907 = vmatprep.subr.mxu0 0.0
    %3908 = vmatpush1.msra.mxu0 0.0
    %3909 = vmatprep.subr.mxu0 0.0
    %3910 = vmatpush1.msra.mxu0 0.0
    %3911 = vmatprep.subr.mxu0 0.0
    %3912 = vmatpush1.msra.mxu0 0.0
    %3913 = vmatprep.subr.mxu0 0.0
    %3914 = vmatpush1.msra.mxu0 0.0
    %3915 = vmatprep.subr.mxu0 0.0
    %3916 = vmatpush1.msra.mxu0 0.0
    %3917 = vmatprep.subr.mxu0 0.0
    %3918 = vmatpush1.msra.mxu0 0.0
    %3919 = vmatprep.subr.mxu0 0.0
    %3920 = vmatpush1.msra.mxu0 0.0
    %3921 = vmatprep.subr.mxu0 0.0
    %3922 = vmatpush1.msra.mxu0 0.0
    %3923 = vmatprep.subr.mxu0 0.0
    %3924 = vmatpush1.msra.mxu0 0.0
    %3925 = vmatprep.subr.mxu0 0.0
    %3926 = vmatpush1.msra.mxu0 0.0
    %3927 = vmatprep.subr.mxu0 0.0
    %3928 = vmatpush1.msra.mxu0 0.0
    %3929 = vmatprep.subr.mxu0 0.0
    %3930 = vmatpush1.msra.mxu0 0.0
    %3931 = vmatprep.mubr.f32.mxu0 0.0
    %3932 = vmatmul.mubr.f32.gmra.mrb[0].mxu0 %v3865
    %v3933 = vpop.f32.mrb[0].mxu0
    %v3934 = vadd.f32 0.0, %v3933
    %v3935 = vpop.f32.mrb[0].mxu0
    %3936 = vdwg.mxu0
    %3938 = vrot.lane.b32.xlu0 %v3598, 8
    %v3939 = vpop.permute.xlu0 %3938
    %3942 = vrot.lane.b32.xlu0 %v3766, 16
    %v3943 = vpop.permute.xlu0 %3942
    %3946 = vrot.lane.b32.xlu0 %v3934, 24
    %v3947 = vpop.permute.xlu0 %3946
    %v3949 = vsel %vm636, %v3430, %v3939
    %v3950 = vsel %vm1326, %v3949, %v3943
    %v3951 = vsel %vm1328, %v3950, %v3947
    %v3953 = vlaneseq
    %v3954 = vshrl.u32 %v3953, 7
    %v3955 = vsub.s32 0, %v3954
    %v3956 = vrot.slane %v388, %v3955
    %v3959 = vsel %vm549, %v3263, 0
    %v3962 = vsel %vm549, %v3951, 0
    %3964 = vmatprep.subr.mxu0 0.0
    %3965 = vmatpush1.msra.mxu0 %v384
    %3966 = vmatprep.subr.mxu0 0.0
    %3967 = vmatpush1.msra.mxu0 %v385
    %3968 = vmatprep.subr.mxu0 0.0
    %3969 = vmatpush1.msra.mxu0 %v386
    %3970 = vmatprep.subr.mxu0 0.0
    %3971 = vmatpush1.msra.mxu0 %v387
    %3972 = vmatprep.subr.mxu0 0.0
    %3973 = vmatpush1.msra.mxu0 0.0
    %3974 = vmatprep.subr.mxu0 0.0
    %3975 = vmatpush1.msra.mxu0 0.0
    %3976 = vmatprep.subr.mxu0 0.0
    %3977 = vmatpush1.msra.mxu0 0.0
    %3978 = vmatprep.subr.mxu0 0.0
    %3979 = vmatpush1.msra.mxu0 0.0
    %3980 = vmatprep.subr.mxu0 0.0
    %3981 = vmatpush1.msra.mxu0 0.0
    %3982 = vmatprep.subr.mxu0 0.0
    %3983 = vmatpush1.msra.mxu0 0.0
    %3984 = vmatprep.subr.mxu0 0.0
    %3985 = vmatpush1.msra.mxu0 0.0
    %3986 = vmatprep.subr.mxu0 0.0
    %3987 = vmatpush1.msra.mxu0 0.0
    %3988 = vmatprep.subr.mxu0 0.0
    %3989 = vmatpush1.msra.mxu0 0.0
    %3990 = vmatprep.subr.mxu0 0.0
    %3991 = vmatpush1.msra.mxu0 0.0
    %3992 = vmatprep.subr.mxu0 0.0
    %3993 = vmatpush1.msra.mxu0 0.0
    %3994 = vmatprep.subr.mxu0 0.0
    %3995 = vmatpush1.msra.mxu0 0.0
    %3996 = vmatprep.subr.mxu0 0.0
    %3997 = vmatpush1.msra.mxu0 0.0
    %3998 = vmatprep.subr.mxu0 0.0
    %3999 = vmatpush1.msra.mxu0 0.0
    %4000 = vmatprep.subr.mxu0 0.0
    %4001 = vmatpush1.msra.mxu0 0.0
    %4002 = vmatprep.subr.mxu0 0.0
    %4003 = vmatpush1.msra.mxu0 0.0
    %4004 = vmatprep.subr.mxu0 0.0
    %4005 = vmatpush1.msra.mxu0 0.0
    %4006 = vmatprep.subr.mxu0 0.0
    %4007 = vmatpush1.msra.mxu0 0.0
    %4008 = vmatprep.subr.mxu0 0.0
    %4009 = vmatpush1.msra.mxu0 0.0
    %4010 = vmatprep.subr.mxu0 0.0
    %4011 = vmatpush1.msra.mxu0 0.0
    %4012 = vmatprep.subr.mxu0 0.0
    %4013 = vmatpush1.msra.mxu0 0.0
    %4014 = vmatprep.subr.mxu0 0.0
    %4015 = vmatpush1.msra.mxu0 0.0
    %4016 = vmatprep.subr.mxu0 0.0
    %4017 = vmatpush1.msra.mxu0 0.0
    %4018 = vmatprep.subr.mxu0 0.0
    %4019 = vmatpush1.msra.mxu0 0.0
    %4020 = vmatprep.subr.mxu0 0.0
    %4021 = vmatpush1.msra.mxu0 0.0
    %4022 = vmatprep.subr.mxu0 0.0
    %4023 = vmatpush1.msra.mxu0 0.0
    %4024 = vmatprep.subr.mxu0 0.0
    %4025 = vmatpush1.msra.mxu0 0.0
    %4026 = vmatprep.subr.mxu0 0.0
    %4027 = vmatpush1.msra.mxu0 0.0
    %4028 = vmatprep.mubr.f32.mxu0 0.0
    %4029 = vmatmul.mubr.f32.gmra.mrb[0].mxu0 %v3959
    %v4030 = vpop.f32.mrb[0].mxu0
    %v4031 = vadd.f32 %v3956, %v4030
    %v4032 = vpop.f32.mrb[0].mxu0
    %4033 = vmatprep.mubr.f32.mxu0 0.0
    %4034 = vmatmul.mubr.f32.gmra.mrb[0].mxu0 %v3962
    %v4035 = vpop.f32.mrb[0].mxu0
    %v4036 = vadd.f32 %v3956, %v4035
    %v4037 = vpop.f32.mrb[0].mxu0
    %4038 = vdwg.mxu0
    %v4039 = vadd.f32 %v4031, %v2481
    %v4040 = vadd.f32 %v4036, %v2486
    %v4041 = vsel %vm549, %v4039, 0.0
    %4042 = vadd.xlane.f32.xlu0 %v4041
    %v4043 = vpop.xlane.xlu0 %4042
    %v4044 = vsel %vm549, %v4040, 0.0
    %4045 = vadd.xlane.f32.xlu0 %v4044
    %v4046 = vpop.xlane.xlu0 %4045
    %v4047 = vmul.f32 %v4043, %v2119
    %v4048 = vmul.f32 %v4046, %v2119
    %v4049 = vsub.f32 %v4039, %v4047
    %v4050 = vsub.f32 %v4040, %v4048
    %v4051 = vmul.f32 %v4049, %v4049
    %v4052 = vmul.f32 %v4050, %v4050
    %v4053 = vsel %vm549, %v4051, 0.0
    %4054 = vadd.xlane.f32.xlu0 %v4053
    %v4055 = vpop.xlane.xlu0 %4054
    %v4056 = vsel %vm549, %v4052, 0.0
    %4057 = vadd.xlane.f32.xlu0 %v4056
    %v4058 = vpop.xlane.xlu0 %4057
    %v4059 = vmul.f32 %v4055, %v2119
    %v4060 = vmul.f32 %v4058, %v2119
    %v4061 = vadd.f32 %v4059, 1e-05
    %v4062 = vadd.f32 %v4060, 1e-05
    %v4063 = vrsqrt.pop %v4061
    %v4064 = vrsqrt.pop %v4062
    %v4065 = vmul.f32 %v4049, %v4063
    %v4066 = vmul.f32 %v4050, %v4064
    %v4068 = vlaneseq
    %v4069 = vshrl.u32 %v4068, 7
    %v4070 = vsub.s32 0, %v4069
    %v4071 = vrot.slane %v389, %v4070
    %v4073 = vmul.f32 %v4065, %v4071
    %v4074 = vmul.f32 %v4066, %v4071
    %v4076 = vlaneseq
    %v4077 = vshrl.u32 %v4076, 7
    %v4078 = vsub.s32 0, %v4077
    %v4079 = vrot.slane %v390, %v4078
    %v4081 = vadd.f32 %v4073, %v4079
    %v4082 = vadd.f32 %v4074, %v4079
    %v4084 = vlaneseq
    %v4085 = vshrl.u32 %v4084, 7
    %v4086 = vsub.s32 0, %v4085
    %v4087 = vrot.slane %v395, %v4086
    %v4090 = vsel %vm549, %v4081, 0
    %v4093 = vsel %vm549, %v4082, 0
    %4095 = vmatprep.subr.mxu0 0.0
    %4096 = vmatpush1.msra.mxu0 %v391
    %4097 = vmatprep.subr.mxu0 0.0
    %4098 = vmatpush1.msra.mxu0 %v392
    %4099 = vmatprep.subr.mxu0 0.0
    %4100 = vmatpush1.msra.mxu0 %v393
    %4101 = vmatprep.subr.mxu0 0.0
    %4102 = vmatpush1.msra.mxu0 %v394
    %4103 = vmatprep.subr.mxu0 0.0
    %4104 = vmatpush1.msra.mxu0 0.0
    %4105 = vmatprep.subr.mxu0 0.0
    %4106 = vmatpush1.msra.mxu0 0.0
    %4107 = vmatprep.subr.mxu0 0.0
    %4108 = vmatpush1.msra.mxu0 0.0
    %4109 = vmatprep.subr.mxu0 0.0
    %4110 = vmatpush1.msra.mxu0 0.0
    %4111 = vmatprep.subr.mxu0 0.0
    %4112 = vmatpush1.msra.mxu0 0.0
    %4113 = vmatprep.subr.mxu0 0.0
    %4114 = vmatpush1.msra.mxu0 0.0
    %4115 = vmatprep.subr.mxu0 0.0
    %4116 = vmatpush1.msra.mxu0 0.0
    %4117 = vmatprep.subr.mxu0 0.0
    %4118 = vmatpush1.msra.mxu0 0.0
    %4119 = vmatprep.subr.mxu0 0.0
    %4120 = vmatpush1.msra.mxu0 0.0
    %4121 = vmatprep.subr.mxu0 0.0
    %4122 = vmatpush1.msra.mxu0 0.0
    %4123 = vmatprep.subr.mxu0 0.0
    %4124 = vmatpush1.msra.mxu0 0.0
    %4125 = vmatprep.subr.mxu0 0.0
    %4126 = vmatpush1.msra.mxu0 0.0
    %4127 = vmatprep.subr.mxu0 0.0
    %4128 = vmatpush1.msra.mxu0 0.0
    %4129 = vmatprep.subr.mxu0 0.0
    %4130 = vmatpush1.msra.mxu0 0.0
    %4131 = vmatprep.subr.mxu0 0.0
    %4132 = vmatpush1.msra.mxu0 0.0
    %4133 = vmatprep.subr.mxu0 0.0
    %4134 = vmatpush1.msra.mxu0 0.0
    %4135 = vmatprep.subr.mxu0 0.0
    %4136 = vmatpush1.msra.mxu0 0.0
    %4137 = vmatprep.subr.mxu0 0.0
    %4138 = vmatpush1.msra.mxu0 0.0
    %4139 = vmatprep.subr.mxu0 0.0
    %4140 = vmatpush1.msra.mxu0 0.0
    %4141 = vmatprep.subr.mxu0 0.0
    %4142 = vmatpush1.msra.mxu0 0.0
    %4143 = vmatprep.subr.mxu0 0.0
    %4144 = vmatpush1.msra.mxu0 0.0
    %4145 = vmatprep.subr.mxu0 0.0
    %4146 = vmatpush1.msra.mxu0 0.0
    %4147 = vmatprep.subr.mxu0 0.0
    %4148 = vmatpush1.msra.mxu0 0.0
    %4149 = vmatprep.subr.mxu0 0.0
    %4150 = vmatpush1.msra.mxu0 0.0
    %4151 = vmatprep.subr.mxu0 0.0
    %4152 = vmatpush1.msra.mxu0 0.0
    %4153 = vmatprep.subr.mxu0 0.0
    %4154 = vmatpush1.msra.mxu0 0.0
    %4155 = vmatprep.subr.mxu0 0.0
    %4156 = vmatpush1.msra.mxu0 0.0
    %4157 = vmatprep.subr.mxu0 0.0
    %4158 = vmatpush1.msra.mxu0 0.0
    %4159 = vmatprep.mubr.f32.mxu0 0.0
    %4160 = vmatmul.mubr.f32.gmra.mrb[0].mxu0 %v4090
    %v4161 = vpop.f32.mrb[0].mxu0
    %v4162 = vadd.f32 %v4087, %v4161
    %v4163 = vpop.f32.mrb[0].mxu0
    %4164 = vmatprep.mubr.f32.mxu0 0.0
    %4165 = vmatmul.mubr.f32.gmra.mrb[0].mxu0 %v4093
    %v4166 = vpop.f32.mrb[0].mxu0
    %v4167 = vadd.f32 %v4087, %v4166
    %v4168 = vpop.f32.mrb[0].mxu0
    %4169 = vdwg.mxu0
    %v4171 = vlaneseq
    %v4172 = vshrl.u32 %v4171, 7
    %v4173 = vsub.s32 0, %v4172
    %v4174 = vrot.slane %v400, %v4173
    %v4177 = vsel %vm549, %v2375, 0
    %v4180 = vsel %vm549, %v2376, 0
    %4182 = vmatprep.subr.mxu0 0.0
    %4183 = vmatpush1.msra.mxu0 %v396
    %4184 = vmatprep.subr.mxu0 0.0
    %4185 = vmatpush1.msra.mxu0 %v397
    %4186 = vmatprep.subr.mxu0 0.0
    %4187 = vmatpush1.msra.mxu0 %v398
    %4188 = vmatprep.subr.mxu0 0.0
    %4189 = vmatpush1.msra.mxu0 %v399
    %4190 = vmatprep.subr.mxu0 0.0
    %4191 = vmatpush1.msra.mxu0 0.0
    %4192 = vmatprep.subr.mxu0 0.0
    %4193 = vmatpush1.msra.mxu0 0.0
    %4194 = vmatprep.subr.mxu0 0.0
    %4195 = vmatpush1.msra.mxu0 0.0
    %4196 = vmatprep.subr.mxu0 0.0
    %4197 = vmatpush1.msra.mxu0 0.0
    %4198 = vmatprep.subr.mxu0 0.0
    %4199 = vmatpush1.msra.mxu0 0.0
    %4200 = vmatprep.subr.mxu0 0.0
    %4201 = vmatpush1.msra.mxu0 0.0
    %4202 = vmatprep.subr.mxu0 0.0
    %4203 = vmatpush1.msra.mxu0 0.0
    %4204 = vmatprep.subr.mxu0 0.0
    %4205 = vmatpush1.msra.mxu0 0.0
    %4206 = vmatprep.subr.mxu0 0.0
    %4207 = vmatpush1.msra.mxu0 0.0
    %4208 = vmatprep.subr.mxu0 0.0
    %4209 = vmatpush1.msra.mxu0 0.0
    %4210 = vmatprep.subr.mxu0 0.0
    %4211 = vmatpush1.msra.mxu0 0.0
    %4212 = vmatprep.subr.mxu0 0.0
    %4213 = vmatpush1.msra.mxu0 0.0
    %4214 = vmatprep.subr.mxu0 0.0
    %4215 = vmatpush1.msra.mxu0 0.0
    %4216 = vmatprep.subr.mxu0 0.0
    %4217 = vmatpush1.msra.mxu0 0.0
    %4218 = vmatprep.subr.mxu0 0.0
    %4219 = vmatpush1.msra.mxu0 0.0
    %4220 = vmatprep.subr.mxu0 0.0
    %4221 = vmatpush1.msra.mxu0 0.0
    %4222 = vmatprep.subr.mxu0 0.0
    %4223 = vmatpush1.msra.mxu0 0.0
    %4224 = vmatprep.subr.mxu0 0.0
    %4225 = vmatpush1.msra.mxu0 0.0
    %4226 = vmatprep.subr.mxu0 0.0
    %4227 = vmatpush1.msra.mxu0 0.0
    %4228 = vmatprep.subr.mxu0 0.0
    %4229 = vmatpush1.msra.mxu0 0.0
    %4230 = vmatprep.subr.mxu0 0.0
    %4231 = vmatpush1.msra.mxu0 0.0
    %4232 = vmatprep.subr.mxu0 0.0
    %4233 = vmatpush1.msra.mxu0 0.0
    %4234 = vmatprep.subr.mxu0 0.0
    %4235 = vmatpush1.msra.mxu0 0.0
    %4236 = vmatprep.subr.mxu0 0.0
    %4237 = vmatpush1.msra.mxu0 0.0
    %4238 = vmatprep.subr.mxu0 0.0
    %4239 = vmatpush1.msra.mxu0 0.0
    %4240 = vmatprep.subr.mxu0 0.0
    %4241 = vmatpush1.msra.mxu0 0.0
    %4242 = vmatprep.subr.mxu0 0.0
    %4243 = vmatpush1.msra.mxu0 0.0
    %4244 = vmatprep.subr.mxu0 0.0
    %4245 = vmatpush1.msra.mxu0 0.0
    %4246 = vmatprep.mubr.f32.mxu0 0.0
    %4247 = vmatmul.mubr.f32.gmra.mrb[0].mxu0 %v4177
    %v4248 = vpop.f32.mrb[0].mxu0
    %v4249 = vadd.f32 %v4174, %v4248
    %v4250 = vpop.f32.mrb[0].mxu0
    %4251 = vmatprep.mubr.f32.mxu0 0.0
    %4252 = vmatmul.mubr.f32.gmra.mrb[0].mxu0 %v4180
    %v4253 = vpop.f32.mrb[0].mxu0
    %v4254 = vadd.f32 %v4174, %v4253
    %v4255 = vpop.f32.mrb[0].mxu0
    %4256 = vdwg.mxu0
    %v4258 = vsel %vm636, %v4162, 0
    %v4261 = vsel %vm636, %v4249, 0
    %4263 = vmatprep.subr.mxu0 0.0
    %4264 = vmatpush1.xpose.msra.mxu0 %v4261
    %4265 = vmatprep.subr.mxu0 0.0
    %4266 = vmatpush1.xpose.msra.mxu0 0.0
    %4267 = vmatprep.subr.mxu0 0.0
    %4268 = vmatpush1.xpose.msra.mxu0 0.0
    %4269 = vmatprep.subr.mxu0 0.0
    %4270 = vmatpush1.xpose.msra.mxu0 0.0
    %4271 = vmatprep.subr.mxu0 0.0
    %4272 = vmatpush1.xpose.msra.mxu0 0.0
    %4273 = vmatprep.subr.mxu0 0.0
    %4274 = vmatpush1.xpose.msra.mxu0 0.0
    %4275 = vmatprep.subr.mxu0 0.0
    %4276 = vmatpush1.xpose.msra.mxu0 0.0
    %4277 = vmatprep.subr.mxu0 0.0
    %4278 = vmatpush1.xpose.msra.mxu0 0.0
    %4279 = vmatprep.subr.mxu0 0.0
    %4280 = vmatpush1.xpose.msra.mxu0 0.0
    %4281 = vmatprep.subr.mxu0 0.0
    %4282 = vmatpush1.xpose.msra.mxu0 0.0
    %4283 = vmatprep.subr.mxu0 0.0
    %4284 = vmatpush1.xpose.msra.mxu0 0.0
    %4285 = vmatprep.subr.mxu0 0.0
    %4286 = vmatpush1.xpose.msra.mxu0 0.0
    %4287 = vmatprep.subr.mxu0 0.0
    %4288 = vmatpush1.xpose.msra.mxu0 0.0
    %4289 = vmatprep.subr.mxu0 0.0
    %4290 = vmatpush1.xpose.msra.mxu0 0.0
    %4291 = vmatprep.subr.mxu0 0.0
    %4292 = vmatpush1.xpose.msra.mxu0 0.0
    %4293 = vmatprep.subr.mxu0 0.0
    %4294 = vmatpush1.xpose.msra.mxu0 0.0
    %4295 = vmatprep.subr.mxu0 0.0
    %4296 = vmatpush1.xpose.msra.mxu0 0.0
    %4297 = vmatprep.subr.mxu0 0.0
    %4298 = vmatpush1.xpose.msra.mxu0 0.0
    %4299 = vmatprep.subr.mxu0 0.0
    %4300 = vmatpush1.xpose.msra.mxu0 0.0
    %4301 = vmatprep.subr.mxu0 0.0
    %4302 = vmatpush1.xpose.msra.mxu0 0.0
    %4303 = vmatprep.subr.mxu0 0.0
    %4304 = vmatpush1.xpose.msra.mxu0 0.0
    %4305 = vmatprep.subr.mxu0 0.0
    %4306 = vmatpush1.xpose.msra.mxu0 0.0
    %4307 = vmatprep.subr.mxu0 0.0
    %4308 = vmatpush1.xpose.msra.mxu0 0.0
    %4309 = vmatprep.subr.mxu0 0.0
    %4310 = vmatpush1.xpose.msra.mxu0 0.0
    %4311 = vmatprep.subr.mxu0 0.0
    %4312 = vmatpush1.xpose.msra.mxu0 0.0
    %4313 = vmatprep.subr.mxu0 0.0
    %4314 = vmatpush1.xpose.msra.mxu0 0.0
    %4315 = vmatprep.subr.mxu0 0.0
    %4316 = vmatpush1.xpose.msra.mxu0 0.0
    %4317 = vmatprep.subr.mxu0 0.0
    %4318 = vmatpush1.xpose.msra.mxu0 0.0
    %4319 = vmatprep.subr.mxu0 0.0
    %4320 = vmatpush1.xpose.msra.mxu0 0.0
    %4321 = vmatprep.subr.mxu0 0.0
    %4322 = vmatpush1.xpose.msra.mxu0 0.0
    %4323 = vmatprep.subr.mxu0 0.0
    %4324 = vmatpush1.xpose.msra.mxu0 0.0
    %4325 = vmatprep.subr.mxu0 0.0
    %4326 = vmatpush1.xpose.msra.mxu0 0.0
    %4327 = vmatprep.mubr.f32.mxu0 0.0
    %4328 = vmatmul.mubr.f32.gmra.mrb[0].mxu0 %v4258
    %v4329 = vpop.f32.mrb[0].mxu0
    %v4330 = vadd.f32 0.0, %v4329
    %v4331 = vpop.f32.mrb[0].mxu0
    %4332 = vdwg.mxu0
    %v4333 = vmul.f32 %v4330, %v714
    %v4334 = vadd.f32 %v4333, %v719
    %v4335 = vmul.f32 %v4334, 0.35355338
    %v4336 = vsel %vm636, %v4335, -inf
    %4337 = vmax.xlane.f32.xlu0 %v4336
    %v4338 = vpop.xlane.xlu0 %4337
    %v4339 = vsub.f32 %v4335, %v4338
    %v4340 = vmul.f32 %v4339, 1.442695
    %v4341 = vpow.pop %v4340
    %v4342 = vsel %vm636, %v4341, 0.0
    %4343 = vadd.xlane.f32.xlu0 %v4342
    %v4344 = vpop.xlane.xlu0 %4343
    %v4345 = vrcp.pop %v4344
    %v4346 = vmul.f32 %v4341, %v4345
    %4347 = vrot.lane.b32.xlu0 %v4249, 96
    %v4348 = vpop.permute.xlu0 %4347
    %v4351 = vsel %vm636, %v4346, 0
    %4353 = vmatprep.subr.mxu0 0.0
    %4354 = vmatpush1.msra.mxu0 %v4348
    %4355 = vmatprep.subr.mxu0 0.0
    %4356 = vmatpush1.msra.mxu0 0.0
    %4357 = vmatprep.subr.mxu0 0.0
    %4358 = vmatpush1.msra.mxu0 0.0
    %4359 = vmatprep.subr.mxu0 0.0
    %4360 = vmatpush1.msra.mxu0 0.0
    %4361 = vmatprep.subr.mxu0 0.0
    %4362 = vmatpush1.msra.mxu0 0.0
    %4363 = vmatprep.subr.mxu0 0.0
    %4364 = vmatpush1.msra.mxu0 0.0
    %4365 = vmatprep.subr.mxu0 0.0
    %4366 = vmatpush1.msra.mxu0 0.0
    %4367 = vmatprep.subr.mxu0 0.0
    %4368 = vmatpush1.msra.mxu0 0.0
    %4369 = vmatprep.subr.mxu0 0.0
    %4370 = vmatpush1.msra.mxu0 0.0
    %4371 = vmatprep.subr.mxu0 0.0
    %4372 = vmatpush1.msra.mxu0 0.0
    %4373 = vmatprep.subr.mxu0 0.0
    %4374 = vmatpush1.msra.mxu0 0.0
    %4375 = vmatprep.subr.mxu0 0.0
    %4376 = vmatpush1.msra.mxu0 0.0
    %4377 = vmatprep.subr.mxu0 0.0
    %4378 = vmatpush1.msra.mxu0 0.0
    %4379 = vmatprep.subr.mxu0 0.0
    %4380 = vmatpush1.msra.mxu0 0.0
    %4381 = vmatprep.subr.mxu0 0.0
    %4382 = vmatpush1.msra.mxu0 0.0
    %4383 = vmatprep.subr.mxu0 0.0
    %4384 = vmatpush1.msra.mxu0 0.0
    %4385 = vmatprep.subr.mxu0 0.0
    %4386 = vmatpush1.msra.mxu0 0.0
    %4387 = vmatprep.subr.mxu0 0.0
    %4388 = vmatpush1.msra.mxu0 0.0
    %4389 = vmatprep.subr.mxu0 0.0
    %4390 = vmatpush1.msra.mxu0 0.0
    %4391 = vmatprep.subr.mxu0 0.0
    %4392 = vmatpush1.msra.mxu0 0.0
    %4393 = vmatprep.subr.mxu0 0.0
    %4394 = vmatpush1.msra.mxu0 0.0
    %4395 = vmatprep.subr.mxu0 0.0
    %4396 = vmatpush1.msra.mxu0 0.0
    %4397 = vmatprep.subr.mxu0 0.0
    %4398 = vmatpush1.msra.mxu0 0.0
    %4399 = vmatprep.subr.mxu0 0.0
    %4400 = vmatpush1.msra.mxu0 0.0
    %4401 = vmatprep.subr.mxu0 0.0
    %4402 = vmatpush1.msra.mxu0 0.0
    %4403 = vmatprep.subr.mxu0 0.0
    %4404 = vmatpush1.msra.mxu0 0.0
    %4405 = vmatprep.subr.mxu0 0.0
    %4406 = vmatpush1.msra.mxu0 0.0
    %4407 = vmatprep.subr.mxu0 0.0
    %4408 = vmatpush1.msra.mxu0 0.0
    %4409 = vmatprep.subr.mxu0 0.0
    %4410 = vmatpush1.msra.mxu0 0.0
    %4411 = vmatprep.subr.mxu0 0.0
    %4412 = vmatpush1.msra.mxu0 0.0
    %4413 = vmatprep.subr.mxu0 0.0
    %4414 = vmatpush1.msra.mxu0 0.0
    %4415 = vmatprep.subr.mxu0 0.0
    %4416 = vmatpush1.msra.mxu0 0.0
    %4417 = vmatprep.mubr.f32.mxu0 0.0
    %4418 = vmatmul.mubr.f32.gmra.mrb[0].mxu0 %v4351
    %v4419 = vpop.f32.mrb[0].mxu0
    %v4420 = vadd.f32 0.0, %v4419
    %v4421 = vpop.f32.mrb[0].mxu0
    %4422 = vdwg.mxu0
    %4423 = vrot.lane.b32.xlu0 %v4162, 120
    %v4424 = vpop.permute.xlu0 %4423
    %4425 = vrot.lane.b32.xlu0 %v4249, 120
    %v4426 = vpop.permute.xlu0 %4425
    %v4427 = vsel %vm636, %v4424, 0
    %v4429 = vsel %vm636, %v4426, 0
    %4431 = vmatprep.subr.mxu0 0.0
    %4432 = vmatpush1.xpose.msra.mxu0 %v4429
    %4433 = vmatprep.subr.mxu0 0.0
    %4434 = vmatpush1.xpose.msra.mxu0 0.0
    %4435 = vmatprep.subr.mxu0 0.0
    %4436 = vmatpush1.xpose.msra.mxu0 0.0
    %4437 = vmatprep.subr.mxu0 0.0
    %4438 = vmatpush1.xpose.msra.mxu0 0.0
    %4439 = vmatprep.subr.mxu0 0.0
    %4440 = vmatpush1.xpose.msra.mxu0 0.0
    %4441 = vmatprep.subr.mxu0 0.0
    %4442 = vmatpush1.xpose.msra.mxu0 0.0
    %4443 = vmatprep.subr.mxu0 0.0
    %4444 = vmatpush1.xpose.msra.mxu0 0.0
    %4445 = vmatprep.subr.mxu0 0.0
    %4446 = vmatpush1.xpose.msra.mxu0 0.0
    %4447 = vmatprep.subr.mxu0 0.0
    %4448 = vmatpush1.xpose.msra.mxu0 0.0
    %4449 = vmatprep.subr.mxu0 0.0
    %4450 = vmatpush1.xpose.msra.mxu0 0.0
    %4451 = vmatprep.subr.mxu0 0.0
    %4452 = vmatpush1.xpose.msra.mxu0 0.0
    %4453 = vmatprep.subr.mxu0 0.0
    %4454 = vmatpush1.xpose.msra.mxu0 0.0
    %4455 = vmatprep.subr.mxu0 0.0
    %4456 = vmatpush1.xpose.msra.mxu0 0.0
    %4457 = vmatprep.subr.mxu0 0.0
    %4458 = vmatpush1.xpose.msra.mxu0 0.0
    %4459 = vmatprep.subr.mxu0 0.0
    %4460 = vmatpush1.xpose.msra.mxu0 0.0
    %4461 = vmatprep.subr.mxu0 0.0
    %4462 = vmatpush1.xpose.msra.mxu0 0.0
    %4463 = vmatprep.subr.mxu0 0.0
    %4464 = vmatpush1.xpose.msra.mxu0 0.0
    %4465 = vmatprep.subr.mxu0 0.0
    %4466 = vmatpush1.xpose.msra.mxu0 0.0
    %4467 = vmatprep.subr.mxu0 0.0
    %4468 = vmatpush1.xpose.msra.mxu0 0.0
    %4469 = vmatprep.subr.mxu0 0.0
    %4470 = vmatpush1.xpose.msra.mxu0 0.0
    %4471 = vmatprep.subr.mxu0 0.0
    %4472 = vmatpush1.xpose.msra.mxu0 0.0
    %4473 = vmatprep.subr.mxu0 0.0
    %4474 = vmatpush1.xpose.msra.mxu0 0.0
    %4475 = vmatprep.subr.mxu0 0.0
    %4476 = vmatpush1.xpose.msra.mxu0 0.0
    %4477 = vmatprep.subr.mxu0 0.0
    %4478 = vmatpush1.xpose.msra.mxu0 0.0
    %4479 = vmatprep.subr.mxu0 0.0
    %4480 = vmatpush1.xpose.msra.mxu0 0.0
    %4481 = vmatprep.subr.mxu0 0.0
    %4482 = vmatpush1.xpose.msra.mxu0 0.0
    %4483 = vmatprep.subr.mxu0 0.0
    %4484 = vmatpush1.xpose.msra.mxu0 0.0
    %4485 = vmatprep.subr.mxu0 0.0
    %4486 = vmatpush1.xpose.msra.mxu0 0.0
    %4487 = vmatprep.subr.mxu0 0.0
    %4488 = vmatpush1.xpose.msra.mxu0 0.0
    %4489 = vmatprep.subr.mxu0 0.0
    %4490 = vmatpush1.xpose.msra.mxu0 0.0
    %4491 = vmatprep.subr.mxu0 0.0
    %4492 = vmatpush1.xpose.msra.mxu0 0.0
    %4493 = vmatprep.subr.mxu0 0.0
    %4494 = vmatpush1.xpose.msra.mxu0 0.0
    %4495 = vmatprep.mubr.f32.mxu0 0.0
    %4496 = vmatmul.mubr.f32.gmra.mrb[0].mxu0 %v4427
    %v4497 = vpop.f32.mrb[0].mxu0
    %v4498 = vadd.f32 0.0, %v4497
    %v4499 = vpop.f32.mrb[0].mxu0
    %4500 = vdwg.mxu0
    %v4501 = vmul.f32 %v4498, %v714
    %v4502 = vadd.f32 %v4501, %v719
    %v4503 = vmul.f32 %v4502, 0.35355338
    %v4504 = vsel %vm636, %v4503, -inf
    %4505 = vmax.xlane.f32.xlu0 %v4504
    %v4506 = vpop.xlane.xlu0 %4505
    %v4507 = vsub.f32 %v4503, %v4506
    %v4508 = vmul.f32 %v4507, 1.442695
    %v4509 = vpow.pop %v4508
    %v4510 = vsel %vm636, %v4509, 0.0
    %4511 = vadd.xlane.f32.xlu0 %v4510
    %v4512 = vpop.xlane.xlu0 %4511
    %v4513 = vrcp.pop %v4512
    %v4514 = vmul.f32 %v4509, %v4513
    %4515 = vrot.lane.b32.xlu0 %v4249, 88
    %v4516 = vpop.permute.xlu0 %4515
    %v4519 = vsel %vm636, %v4514, 0
    %4521 = vmatprep.subr.mxu0 0.0
    %4522 = vmatpush1.msra.mxu0 %v4516
    %4523 = vmatprep.subr.mxu0 0.0
    %4524 = vmatpush1.msra.mxu0 0.0
    %4525 = vmatprep.subr.mxu0 0.0
    %4526 = vmatpush1.msra.mxu0 0.0
    %4527 = vmatprep.subr.mxu0 0.0
    %4528 = vmatpush1.msra.mxu0 0.0
    %4529 = vmatprep.subr.mxu0 0.0
    %4530 = vmatpush1.msra.mxu0 0.0
    %4531 = vmatprep.subr.mxu0 0.0
    %4532 = vmatpush1.msra.mxu0 0.0
    %4533 = vmatprep.subr.mxu0 0.0
    %4534 = vmatpush1.msra.mxu0 0.0
    %4535 = vmatprep.subr.mxu0 0.0
    %4536 = vmatpush1.msra.mxu0 0.0
    %4537 = vmatprep.subr.mxu0 0.0
    %4538 = vmatpush1.msra.mxu0 0.0
    %4539 = vmatprep.subr.mxu0 0.0
    %4540 = vmatpush1.msra.mxu0 0.0
    %4541 = vmatprep.subr.mxu0 0.0
    %4542 = vmatpush1.msra.mxu0 0.0
    %4543 = vmatprep.subr.mxu0 0.0
    %4544 = vmatpush1.msra.mxu0 0.0
    %4545 = vmatprep.subr.mxu0 0.0
    %4546 = vmatpush1.msra.mxu0 0.0
    %4547 = vmatprep.subr.mxu0 0.0
    %4548 = vmatpush1.msra.mxu0 0.0
    %4549 = vmatprep.subr.mxu0 0.0
    %4550 = vmatpush1.msra.mxu0 0.0
    %4551 = vmatprep.subr.mxu0 0.0
    %4552 = vmatpush1.msra.mxu0 0.0
    %4553 = vmatprep.subr.mxu0 0.0
    %4554 = vmatpush1.msra.mxu0 0.0
    %4555 = vmatprep.subr.mxu0 0.0
    %4556 = vmatpush1.msra.mxu0 0.0
    %4557 = vmatprep.subr.mxu0 0.0
    %4558 = vmatpush1.msra.mxu0 0.0
    %4559 = vmatprep.subr.mxu0 0.0
    %4560 = vmatpush1.msra.mxu0 0.0
    %4561 = vmatprep.subr.mxu0 0.0
    %4562 = vmatpush1.msra.mxu0 0.0
    %4563 = vmatprep.subr.mxu0 0.0
    %4564 = vmatpush1.msra.mxu0 0.0
    %4565 = vmatprep.subr.mxu0 0.0
    %4566 = vmatpush1.msra.mxu0 0.0
    %4567 = vmatprep.subr.mxu0 0.0
    %4568 = vmatpush1.msra.mxu0 0.0
    %4569 = vmatprep.subr.mxu0 0.0
    %4570 = vmatpush1.msra.mxu0 0.0
    %4571 = vmatprep.subr.mxu0 0.0
    %4572 = vmatpush1.msra.mxu0 0.0
    %4573 = vmatprep.subr.mxu0 0.0
    %4574 = vmatpush1.msra.mxu0 0.0
    %4575 = vmatprep.subr.mxu0 0.0
    %4576 = vmatpush1.msra.mxu0 0.0
    %4577 = vmatprep.subr.mxu0 0.0
    %4578 = vmatpush1.msra.mxu0 0.0
    %4579 = vmatprep.subr.mxu0 0.0
    %4580 = vmatpush1.msra.mxu0 0.0
    %4581 = vmatprep.subr.mxu0 0.0
    %4582 = vmatpush1.msra.mxu0 0.0
    %4583 = vmatprep.subr.mxu0 0.0
    %4584 = vmatpush1.msra.mxu0 0.0
    %4585 = vmatprep.mubr.f32.mxu0 0.0
    %4586 = vmatmul.mubr.f32.gmra.mrb[0].mxu0 %v4519
    %v4587 = vpop.f32.mrb[0].mxu0
    %v4588 = vadd.f32 0.0, %v4587
    %v4589 = vpop.f32.mrb[0].mxu0
    %4590 = vdwg.mxu0
    %4591 = vrot.lane.b32.xlu0 %v4162, 112
    %v4592 = vpop.permute.xlu0 %4591
    %4593 = vrot.lane.b32.xlu0 %v4249, 112
    %v4594 = vpop.permute.xlu0 %4593
    %v4595 = vsel %vm636, %v4592, 0
    %v4597 = vsel %vm636, %v4594, 0
    %4599 = vmatprep.subr.mxu0 0.0
    %4600 = vmatpush1.xpose.msra.mxu0 %v4597
    %4601 = vmatprep.subr.mxu0 0.0
    %4602 = vmatpush1.xpose.msra.mxu0 0.0
    %4603 = vmatprep.subr.mxu0 0.0
    %4604 = vmatpush1.xpose.msra.mxu0 0.0
    %4605 = vmatprep.subr.mxu0 0.0
    %4606 = vmatpush1.xpose.msra.mxu0 0.0
    %4607 = vmatprep.subr.mxu0 0.0
    %4608 = vmatpush1.xpose.msra.mxu0 0.0
    %4609 = vmatprep.subr.mxu0 0.0
    %4610 = vmatpush1.xpose.msra.mxu0 0.0
    %4611 = vmatprep.subr.mxu0 0.0
    %4612 = vmatpush1.xpose.msra.mxu0 0.0
    %4613 = vmatprep.subr.mxu0 0.0
    %4614 = vmatpush1.xpose.msra.mxu0 0.0
    %4615 = vmatprep.subr.mxu0 0.0
    %4616 = vmatpush1.xpose.msra.mxu0 0.0
    %4617 = vmatprep.subr.mxu0 0.0
    %4618 = vmatpush1.xpose.msra.mxu0 0.0
    %4619 = vmatprep.subr.mxu0 0.0
    %4620 = vmatpush1.xpose.msra.mxu0 0.0
    %4621 = vmatprep.subr.mxu0 0.0
    %4622 = vmatpush1.xpose.msra.mxu0 0.0
    %4623 = vmatprep.subr.mxu0 0.0
    %4624 = vmatpush1.xpose.msra.mxu0 0.0
    %4625 = vmatprep.subr.mxu0 0.0
    %4626 = vmatpush1.xpose.msra.mxu0 0.0
    %4627 = vmatprep.subr.mxu0 0.0
    %4628 = vmatpush1.xpose.msra.mxu0 0.0
    %4629 = vmatprep.subr.mxu0 0.0
    %4630 = vmatpush1.xpose.msra.mxu0 0.0
    %4631 = vmatprep.subr.mxu0 0.0
    %4632 = vmatpush1.xpose.msra.mxu0 0.0
    %4633 = vmatprep.subr.mxu0 0.0
    %4634 = vmatpush1.xpose.msra.mxu0 0.0
    %4635 = vmatprep.subr.mxu0 0.0
    %4636 = vmatpush1.xpose.msra.mxu0 0.0
    %4637 = vmatprep.subr.mxu0 0.0
    %4638 = vmatpush1.xpose.msra.mxu0 0.0
    %4639 = vmatprep.subr.mxu0 0.0
    %4640 = vmatpush1.xpose.msra.mxu0 0.0
    %4641 = vmatprep.subr.mxu0 0.0
    %4642 = vmatpush1.xpose.msra.mxu0 0.0
    %4643 = vmatprep.subr.mxu0 0.0
    %4644 = vmatpush1.xpose.msra.mxu0 0.0
    %4645 = vmatprep.subr.mxu0 0.0
    %4646 = vmatpush1.xpose.msra.mxu0 0.0
    %4647 = vmatprep.subr.mxu0 0.0
    %4648 = vmatpush1.xpose.msra.mxu0 0.0
    %4649 = vmatprep.subr.mxu0 0.0
    %4650 = vmatpush1.xpose.msra.mxu0 0.0
    %4651 = vmatprep.subr.mxu0 0.0
    %4652 = vmatpush1.xpose.msra.mxu0 0.0
    %4653 = vmatprep.subr.mxu0 0.0
    %4654 = vmatpush1.xpose.msra.mxu0 0.0
    %4655 = vmatprep.subr.mxu0 0.0
    %4656 = vmatpush1.xpose.msra.mxu0 0.0
    %4657 = vmatprep.subr.mxu0 0.0
    %4658 = vmatpush1.xpose.msra.mxu0 0.0
    %4659 = vmatprep.subr.mxu0 0.0
    %4660 = vmatpush1.xpose.msra.mxu0 0.0
    %4661 = vmatprep.subr.mxu0 0.0
    %4662 = vmatpush1.xpose.msra.mxu0 0.0
    %4663 = vmatprep.mubr.f32.mxu0 0.0
    %4664 = vmatmul.mubr.f32.gmra.mrb[0].mxu0 %v4595
    %v4665 = vpop.f32.mrb[0].mxu0
    %v4666 = vadd.f32 0.0, %v4665
    %v4667 = vpop.f32.mrb[0].mxu0
    %4668 = vdwg.mxu0
    %v4669 = vmul.f32 %v4666, %v714
    %v4670 = vadd.f32 %v4669, %v719
    %v4671 = vmul.f32 %v4670, 0.35355338
    %v4672 = vsel %vm636, %v4671, -inf
    %4673 = vmax.xlane.f32.xlu0 %v4672
    %v4674 = vpop.xlane.xlu0 %4673
    %v4675 = vsub.f32 %v4671, %v4674
    %v4676 = vmul.f32 %v4675, 1.442695
    %v4677 = vpow.pop %v4676
    %v4678 = vsel %vm636, %v4677, 0.0
    %4679 = vadd.xlane.f32.xlu0 %v4678
    %v4680 = vpop.xlane.xlu0 %4679
    %v4681 = vrcp.pop %v4680
    %v4682 = vmul.f32 %v4677, %v4681
    %4683 = vrot.lane.b32.xlu0 %v4249, 80
    %v4684 = vpop.permute.xlu0 %4683
    %v4687 = vsel %vm636, %v4682, 0
    %4689 = vmatprep.subr.mxu0 0.0
    %4690 = vmatpush1.msra.mxu0 %v4684
    %4691 = vmatprep.subr.mxu0 0.0
    %4692 = vmatpush1.msra.mxu0 0.0
    %4693 = vmatprep.subr.mxu0 0.0
    %4694 = vmatpush1.msra.mxu0 0.0
    %4695 = vmatprep.subr.mxu0 0.0
    %4696 = vmatpush1.msra.mxu0 0.0
    %4697 = vmatprep.subr.mxu0 0.0
    %4698 = vmatpush1.msra.mxu0 0.0
    %4699 = vmatprep.subr.mxu0 0.0
    %4700 = vmatpush1.msra.mxu0 0.0
    %4701 = vmatprep.subr.mxu0 0.0
    %4702 = vmatpush1.msra.mxu0 0.0
    %4703 = vmatprep.subr.mxu0 0.0
    %4704 = vmatpush1.msra.mxu0 0.0
    %4705 = vmatprep.subr.mxu0 0.0
    %4706 = vmatpush1.msra.mxu0 0.0
    %4707 = vmatprep.subr.mxu0 0.0
    %4708 = vmatpush1.msra.mxu0 0.0
    %4709 = vmatprep.subr.mxu0 0.0
    %4710 = vmatpush1.msra.mxu0 0.0
    %4711 = vmatprep.subr.mxu0 0.0
    %4712 = vmatpush1.msra.mxu0 0.0
    %4713 = vmatprep.subr.mxu0 0.0
    %4714 = vmatpush1.msra.mxu0 0.0
    %4715 = vmatprep.subr.mxu0 0.0
    %4716 = vmatpush1.msra.mxu0 0.0
    %4717 = vmatprep.subr.mxu0 0.0
    %4718 = vmatpush1.msra.mxu0 0.0
    %4719 = vmatprep.subr.mxu0 0.0
    %4720 = vmatpush1.msra.mxu0 0.0
    %4721 = vmatprep.subr.mxu0 0.0
    %4722 = vmatpush1.msra.mxu0 0.0
    %4723 = vmatprep.subr.mxu0 0.0
    %4724 = vmatpush1.msra.mxu0 0.0
    %4725 = vmatprep.subr.mxu0 0.0
    %4726 = vmatpush1.msra.mxu0 0.0
    %4727 = vmatprep.subr.mxu0 0.0
    %4728 = vmatpush1.msra.mxu0 0.0
    %4729 = vmatprep.subr.mxu0 0.0
    %4730 = vmatpush1.msra.mxu0 0.0
    %4731 = vmatprep.subr.mxu0 0.0
    %4732 = vmatpush1.msra.mxu0 0.0
    %4733 = vmatprep.subr.mxu0 0.0
    %4734 = vmatpush1.msra.mxu0 0.0
    %4735 = vmatprep.subr.mxu0 0.0
    %4736 = vmatpush1.msra.mxu0 0.0
    %4737 = vmatprep.subr.mxu0 0.0
    %4738 = vmatpush1.msra.mxu0 0.0
    %4739 = vmatprep.subr.mxu0 0.0
    %4740 = vmatpush1.msra.mxu0 0.0
    %4741 = vmatprep.subr.mxu0 0.0
    %4742 = vmatpush1.msra.mxu0 0.0
    %4743 = vmatprep.subr.mxu0 0.0
    %4744 = vmatpush1.msra.mxu0 0.0
    %4745 = vmatprep.subr.mxu0 0.0
    %4746 = vmatpush1.msra.mxu0 0.0
    %4747 = vmatprep.subr.mxu0 0.0
    %4748 = vmatpush1.msra.mxu0 0.0
    %4749 = vmatprep.subr.mxu0 0.0
    %4750 = vmatpush1.msra.mxu0 0.0
    %4751 = vmatprep.subr.mxu0 0.0
    %4752 = vmatpush1.msra.mxu0 0.0
    %4753 = vmatprep.mubr.f32.mxu0 0.0
    %4754 = vmatmul.mubr.f32.gmra.mrb[0].mxu0 %v4687
    %v4755 = vpop.f32.mrb[0].mxu0
    %v4756 = vadd.f32 0.0, %v4755
    %v4757 = vpop.f32.mrb[0].mxu0
    %4758 = vdwg.mxu0
    %4759 = vrot.lane.b32.xlu0 %v4162, 104
    %v4760 = vpop.permute.xlu0 %4759
    %4761 = vrot.lane.b32.xlu0 %v4249, 104
    %v4762 = vpop.permute.xlu0 %4761
    %v4763 = vsel %vm636, %v4760, 0
    %v4765 = vsel %vm636, %v4762, 0
    %4767 = vmatprep.subr.mxu0 0.0
    %4768 = vmatpush1.xpose.msra.mxu0 %v4765
    %4769 = vmatprep.subr.mxu0 0.0
    %4770 = vmatpush1.xpose.msra.mxu0 0.0
    %4771 = vmatprep.subr.mxu0 0.0
    %4772 = vmatpush1.xpose.msra.mxu0 0.0
    %4773 = vmatprep.subr.mxu0 0.0
    %4774 = vmatpush1.xpose.msra.mxu0 0.0
    %4775 = vmatprep.subr.mxu0 0.0
    %4776 = vmatpush1.xpose.msra.mxu0 0.0
    %4777 = vmatprep.subr.mxu0 0.0
    %4778 = vmatpush1.xpose.msra.mxu0 0.0
    %4779 = vmatprep.subr.mxu0 0.0
    %4780 = vmatpush1.xpose.msra.mxu0 0.0
    %4781 = vmatprep.subr.mxu0 0.0
    %4782 = vmatpush1.xpose.msra.mxu0 0.0
    %4783 = vmatprep.subr.mxu0 0.0
    %4784 = vmatpush1.xpose.msra.mxu0 0.0
    %4785 = vmatprep.subr.mxu0 0.0
    %4786 = vmatpush1.xpose.msra.mxu0 0.0
    %4787 = vmatprep.subr.mxu0 0.0
    %4788 = vmatpush1.xpose.msra.mxu0 0.0
    %4789 = vmatprep.subr.mxu0 0.0
    %4790 = vmatpush1.xpose.msra.mxu0 0.0
    %4791 = vmatprep.subr.mxu0 0.0
    %4792 = vmatpush1.xpose.msra.mxu0 0.0
    %4793 = vmatprep.subr.mxu0 0.0
    %4794 = vmatpush1.xpose.msra.mxu0 0.0
    %4795 = vmatprep.subr.mxu0 0.0
    %4796 = vmatpush1.xpose.msra.mxu0 0.0
    %4797 = vmatprep.subr.mxu0 0.0
    %4798 = vmatpush1.xpose.msra.mxu0 0.0
    %4799 = vmatprep.subr.mxu0 0.0
    %4800 = vmatpush1.xpose.msra.mxu0 0.0
    %4801 = vmatprep.subr.mxu0 0.0
    %4802 = vmatpush1.xpose.msra.mxu0 0.0
    %4803 = vmatprep.subr.mxu0 0.0
    %4804 = vmatpush1.xpose.msra.mxu0 0.0
    %4805 = vmatprep.subr.mxu0 0.0
    %4806 = vmatpush1.xpose.msra.mxu0 0.0
    %4807 = vmatprep.subr.mxu0 0.0
    %4808 = vmatpush1.xpose.msra.mxu0 0.0
    %4809 = vmatprep.subr.mxu0 0.0
    %4810 = vmatpush1.xpose.msra.mxu0 0.0
    %4811 = vmatprep.subr.mxu0 0.0
    %4812 = vmatpush1.xpose.msra.mxu0 0.0
    %4813 = vmatprep.subr.mxu0 0.0
    %4814 = vmatpush1.xpose.msra.mxu0 0.0
    %4815 = vmatprep.subr.mxu0 0.0
    %4816 = vmatpush1.xpose.msra.mxu0 0.0
    %4817 = vmatprep.subr.mxu0 0.0
    %4818 = vmatpush1.xpose.msra.mxu0 0.0
    %4819 = vmatprep.subr.mxu0 0.0
    %4820 = vmatpush1.xpose.msra.mxu0 0.0
    %4821 = vmatprep.subr.mxu0 0.0
    %4822 = vmatpush1.xpose.msra.mxu0 0.0
    %4823 = vmatprep.subr.mxu0 0.0
    %4824 = vmatpush1.xpose.msra.mxu0 0.0
    %4825 = vmatprep.subr.mxu0 0.0
    %4826 = vmatpush1.xpose.msra.mxu0 0.0
    %4827 = vmatprep.subr.mxu0 0.0
    %4828 = vmatpush1.xpose.msra.mxu0 0.0
    %4829 = vmatprep.subr.mxu0 0.0
    %4830 = vmatpush1.xpose.msra.mxu0 0.0
    %4831 = vmatprep.mubr.f32.mxu0 0.0
    %4832 = vmatmul.mubr.f32.gmra.mrb[0].mxu0 %v4763
    %v4833 = vpop.f32.mrb[0].mxu0
    %v4834 = vadd.f32 0.0, %v4833
    %v4835 = vpop.f32.mrb[0].mxu0
    %4836 = vdwg.mxu0
    %v4837 = vmul.f32 %v4834, %v714
    %v4838 = vadd.f32 %v4837, %v719
    %v4839 = vmul.f32 %v4838, 0.35355338
    %v4840 = vsel %vm636, %v4839, -inf
    %4841 = vmax.xlane.f32.xlu0 %v4840
    %v4842 = vpop.xlane.xlu0 %4841
    %v4843 = vsub.f32 %v4839, %v4842
    %v4844 = vmul.f32 %v4843, 1.442695
    %v4845 = vpow.pop %v4844
    %v4846 = vsel %vm636, %v4845, 0.0
    %4847 = vadd.xlane.f32.xlu0 %v4846
    %v4848 = vpop.xlane.xlu0 %4847
    %v4849 = vrcp.pop %v4848
    %v4850 = vmul.f32 %v4845, %v4849
    %4851 = vrot.lane.b32.xlu0 %v4249, 72
    %v4852 = vpop.permute.xlu0 %4851
    %v4855 = vsel %vm636, %v4850, 0
    %4857 = vmatprep.subr.mxu0 0.0
    %4858 = vmatpush1.msra.mxu0 %v4852
    %4859 = vmatprep.subr.mxu0 0.0
    %4860 = vmatpush1.msra.mxu0 0.0
    %4861 = vmatprep.subr.mxu0 0.0
    %4862 = vmatpush1.msra.mxu0 0.0
    %4863 = vmatprep.subr.mxu0 0.0
    %4864 = vmatpush1.msra.mxu0 0.0
    %4865 = vmatprep.subr.mxu0 0.0
    %4866 = vmatpush1.msra.mxu0 0.0
    %4867 = vmatprep.subr.mxu0 0.0
    %4868 = vmatpush1.msra.mxu0 0.0
    %4869 = vmatprep.subr.mxu0 0.0
    %4870 = vmatpush1.msra.mxu0 0.0
    %4871 = vmatprep.subr.mxu0 0.0
    %4872 = vmatpush1.msra.mxu0 0.0
    %4873 = vmatprep.subr.mxu0 0.0
    %4874 = vmatpush1.msra.mxu0 0.0
    %4875 = vmatprep.subr.mxu0 0.0
    %4876 = vmatpush1.msra.mxu0 0.0
    %4877 = vmatprep.subr.mxu0 0.0
    %4878 = vmatpush1.msra.mxu0 0.0
    %4879 = vmatprep.subr.mxu0 0.0
    %4880 = vmatpush1.msra.mxu0 0.0
    %4881 = vmatprep.subr.mxu0 0.0
    %4882 = vmatpush1.msra.mxu0 0.0
    %4883 = vmatprep.subr.mxu0 0.0
    %4884 = vmatpush1.msra.mxu0 0.0
    %4885 = vmatprep.subr.mxu0 0.0
    %4886 = vmatpush1.msra.mxu0 0.0
    %4887 = vmatprep.subr.mxu0 0.0
    %4888 = vmatpush1.msra.mxu0 0.0
    %4889 = vmatprep.subr.mxu0 0.0
    %4890 = vmatpush1.msra.mxu0 0.0
    %4891 = vmatprep.subr.mxu0 0.0
    %4892 = vmatpush1.msra.mxu0 0.0
    %4893 = vmatprep.subr.mxu0 0.0
    %4894 = vmatpush1.msra.mxu0 0.0
    %4895 = vmatprep.subr.mxu0 0.0
    %4896 = vmatpush1.msra.mxu0 0.0
    %4897 = vmatprep.subr.mxu0 0.0
    %4898 = vmatpush1.msra.mxu0 0.0
    %4899 = vmatprep.subr.mxu0 0.0
    %4900 = vmatpush1.msra.mxu0 0.0
    %4901 = vmatprep.subr.mxu0 0.0
    %4902 = vmatpush1.msra.mxu0 0.0
    %4903 = vmatprep.subr.mxu0 0.0
    %4904 = vmatpush1.msra.mxu0 0.0
    %4905 = vmatprep.subr.mxu0 0.0
    %4906 = vmatpush1.msra.mxu0 0.0
    %4907 = vmatprep.subr.mxu0 0.0
    %4908 = vmatpush1.msra.mxu0 0.0
    %4909 = vmatprep.subr.mxu0 0.0
    %4910 = vmatpush1.msra.mxu0 0.0
    %4911 = vmatprep.subr.mxu0 0.0
    %4912 = vmatpush1.msra.mxu0 0.0
    %4913 = vmatprep.subr.mxu0 0.0
    %4914 = vmatpush1.msra.mxu0 0.0
    %4915 = vmatprep.subr.mxu0 0.0
    %4916 = vmatpush1.msra.mxu0 0.0
    %4917 = vmatprep.subr.mxu0 0.0
    %4918 = vmatpush1.msra.mxu0 0.0
    %4919 = vmatprep.subr.mxu0 0.0
    %4920 = vmatpush1.msra.mxu0 0.0
    %4921 = vmatprep.mubr.f32.mxu0 0.0
    %4922 = vmatmul.mubr.f32.gmra.mrb[0].mxu0 %v4855
    %v4923 = vpop.f32.mrb[0].mxu0
    %v4924 = vadd.f32 0.0, %v4923
    %v4925 = vpop.f32.mrb[0].mxu0
    %4926 = vdwg.mxu0
    %4928 = vrot.lane.b32.xlu0 %v4588, 8
    %v4929 = vpop.permute.xlu0 %4928
    %4932 = vrot.lane.b32.xlu0 %v4756, 16
    %v4933 = vpop.permute.xlu0 %4932
    %4936 = vrot.lane.b32.xlu0 %v4924, 24
    %v4937 = vpop.permute.xlu0 %4936
    %v4939 = vsel %vm636, %v4420, %v4929
    %v4940 = vsel %vm1326, %v4939, %v4933
    %v4941 = vsel %vm1328, %v4940, %v4937
    %v4943 = vsel %vm636, %v4167, 0
    %v4946 = vsel %vm636, %v4254, 0
    %4948 = vmatprep.subr.mxu0 0.0
    %4949 = vmatpush1.xpose.msra.mxu0 %v4946
    %4950 = vmatprep.subr.mxu0 0.0
    %4951 = vmatpush1.xpose.msra.mxu0 0.0
    %4952 = vmatprep.subr.mxu0 0.0
    %4953 = vmatpush1.xpose.msra.mxu0 0.0
    %4954 = vmatprep.subr.mxu0 0.0
    %4955 = vmatpush1.xpose.msra.mxu0 0.0
    %4956 = vmatprep.subr.mxu0 0.0
    %4957 = vmatpush1.xpose.msra.mxu0 0.0
    %4958 = vmatprep.subr.mxu0 0.0
    %4959 = vmatpush1.xpose.msra.mxu0 0.0
    %4960 = vmatprep.subr.mxu0 0.0
    %4961 = vmatpush1.xpose.msra.mxu0 0.0
    %4962 = vmatprep.subr.mxu0 0.0
    %4963 = vmatpush1.xpose.msra.mxu0 0.0
    %4964 = vmatprep.subr.mxu0 0.0
    %4965 = vmatpush1.xpose.msra.mxu0 0.0
    %4966 = vmatprep.subr.mxu0 0.0
    %4967 = vmatpush1.xpose.msra.mxu0 0.0
    %4968 = vmatprep.subr.mxu0 0.0
    %4969 = vmatpush1.xpose.msra.mxu0 0.0
    %4970 = vmatprep.subr.mxu0 0.0
    %4971 = vmatpush1.xpose.msra.mxu0 0.0
    %4972 = vmatprep.subr.mxu0 0.0
    %4973 = vmatpush1.xpose.msra.mxu0 0.0
    %4974 = vmatprep.subr.mxu0 0.0
    %4975 = vmatpush1.xpose.msra.mxu0 0.0
    %4976 = vmatprep.subr.mxu0 0.0
    %4977 = vmatpush1.xpose.msra.mxu0 0.0
    %4978 = vmatprep.subr.mxu0 0.0
    %4979 = vmatpush1.xpose.msra.mxu0 0.0
    %4980 = vmatprep.subr.mxu0 0.0
    %4981 = vmatpush1.xpose.msra.mxu0 0.0
    %4982 = vmatprep.subr.mxu0 0.0
    %4983 = vmatpush1.xpose.msra.mxu0 0.0
    %4984 = vmatprep.subr.mxu0 0.0
    %4985 = vmatpush1.xpose.msra.mxu0 0.0
    %4986 = vmatprep.subr.mxu0 0.0
    %4987 = vmatpush1.xpose.msra.mxu0 0.0
    %4988 = vmatprep.subr.mxu0 0.0
    %4989 = vmatpush1.xpose.msra.mxu0 0.0
    %4990 = vmatprep.subr.mxu0 0.0
    %4991 = vmatpush1.xpose.msra.mxu0 0.0
    %4992 = vmatprep.subr.mxu0 0.0
    %4993 = vmatpush1.xpose.msra.mxu0 0.0
    %4994 = vmatprep.subr.mxu0 0.0
    %4995 = vmatpush1.xpose.msra.mxu0 0.0
    %4996 = vmatprep.subr.mxu0 0.0
    %4997 = vmatpush1.xpose.msra.mxu0 0.0
    %4998 = vmatprep.subr.mxu0 0.0
    %4999 = vmatpush1.xpose.msra.mxu0 0.0
    %5000 = vmatprep.subr.mxu0 0.0
    %5001 = vmatpush1.xpose.msra.mxu0 0.0
    %5002 = vmatprep.subr.mxu0 0.0
    %5003 = vmatpush1.xpose.msra.mxu0 0.0
    %5004 = vmatprep.subr.mxu0 0.0
    %5005 = vmatpush1.xpose.msra.mxu0 0.0
    %5006 = vmatprep.subr.mxu0 0.0
    %5007 = vmatpush1.xpose.msra.mxu0 0.0
    %5008 = vmatprep.subr.mxu0 0.0
    %5009 = vmatpush1.xpose.msra.mxu0 0.0
    %5010 = vmatprep.subr.mxu0 0.0
    %5011 = vmatpush1.xpose.msra.mxu0 0.0
    %5012 = vmatprep.mubr.f32.mxu0 0.0
    %5013 = vmatmul.mubr.f32.gmra.mrb[0].mxu0 %v4943
    %v5014 = vpop.f32.mrb[0].mxu0
    %v5015 = vadd.f32 0.0, %v5014
    %v5016 = vpop.f32.mrb[0].mxu0
    %5017 = vdwg.mxu0
    %v5018 = vmul.f32 %v5015, %v1410
    %v5019 = vadd.f32 %v5018, %v1415
    %v5020 = vmul.f32 %v5019, 0.35355338
    %v5021 = vsel %vm636, %v5020, -inf
    %5022 = vmax.xlane.f32.xlu0 %v5021
    %v5023 = vpop.xlane.xlu0 %5022
    %v5024 = vsub.f32 %v5020, %v5023
    %v5025 = vmul.f32 %v5024, 1.442695
    %v5026 = vpow.pop %v5025
    %v5027 = vsel %vm636, %v5026, 0.0
    %5028 = vadd.xlane.f32.xlu0 %v5027
    %v5029 = vpop.xlane.xlu0 %5028
    %v5030 = vrcp.pop %v5029
    %v5031 = vmul.f32 %v5026, %v5030
    %5032 = vrot.lane.b32.xlu0 %v4254, 96
    %v5033 = vpop.permute.xlu0 %5032
    %v5036 = vsel %vm636, %v5031, 0
    %5038 = vmatprep.subr.mxu0 0.0
    %5039 = vmatpush1.msra.mxu0 %v5033
    %5040 = vmatprep.subr.mxu0 0.0
    %5041 = vmatpush1.msra.mxu0 0.0
    %5042 = vmatprep.subr.mxu0 0.0
    %5043 = vmatpush1.msra.mxu0 0.0
    %5044 = vmatprep.subr.mxu0 0.0
    %5045 = vmatpush1.msra.mxu0 0.0
    %5046 = vmatprep.subr.mxu0 0.0
    %5047 = vmatpush1.msra.mxu0 0.0
    %5048 = vmatprep.subr.mxu0 0.0
    %5049 = vmatpush1.msra.mxu0 0.0
    %5050 = vmatprep.subr.mxu0 0.0
    %5051 = vmatpush1.msra.mxu0 0.0
    %5052 = vmatprep.subr.mxu0 0.0
    %5053 = vmatpush1.msra.mxu0 0.0
    %5054 = vmatprep.subr.mxu0 0.0
    %5055 = vmatpush1.msra.mxu0 0.0
    %5056 = vmatprep.subr.mxu0 0.0
    %5057 = vmatpush1.msra.mxu0 0.0
    %5058 = vmatprep.subr.mxu0 0.0
    %5059 = vmatpush1.msra.mxu0 0.0
    %5060 = vmatprep.subr.mxu0 0.0
    %5061 = vmatpush1.msra.mxu0 0.0
    %5062 = vmatprep.subr.mxu0 0.0
    %5063 = vmatpush1.msra.mxu0 0.0
    %5064 = vmatprep.subr.mxu0 0.0
    %5065 = vmatpush1.msra.mxu0 0.0
    %5066 = vmatprep.subr.mxu0 0.0
    %5067 = vmatpush1.msra.mxu0 0.0
    %5068 = vmatprep.subr.mxu0 0.0
    %5069 = vmatpush1.msra.mxu0 0.0
    %5070 = vmatprep.subr.mxu0 0.0
    %5071 = vmatpush1.msra.mxu0 0.0
    %5072 = vmatprep.subr.mxu0 0.0
    %5073 = vmatpush1.msra.mxu0 0.0
    %5074 = vmatprep.subr.mxu0 0.0
    %5075 = vmatpush1.msra.mxu0 0.0
    %5076 = vmatprep.subr.mxu0 0.0
    %5077 = vmatpush1.msra.mxu0 0.0
    %5078 = vmatprep.subr.mxu0 0.0
    %5079 = vmatpush1.msra.mxu0 0.0
    %5080 = vmatprep.subr.mxu0 0.0
    %5081 = vmatpush1.msra.mxu0 0.0
    %5082 = vmatprep.subr.mxu0 0.0
    %5083 = vmatpush1.msra.mxu0 0.0
    %5084 = vmatprep.subr.mxu0 0.0
    %5085 = vmatpush1.msra.mxu0 0.0
    %5086 = vmatprep.subr.mxu0 0.0
    %5087 = vmatpush1.msra.mxu0 0.0
    %5088 = vmatprep.subr.mxu0 0.0
    %5089 = vmatpush1.msra.mxu0 0.0
    %5090 = vmatprep.subr.mxu0 0.0
    %5091 = vmatpush1.msra.mxu0 0.0
    %5092 = vmatprep.subr.mxu0 0.0
    %5093 = vmatpush1.msra.mxu0 0.0
    %5094 = vmatprep.subr.mxu0 0.0
    %5095 = vmatpush1.msra.mxu0 0.0
    %5096 = vmatprep.subr.mxu0 0.0
    %5097 = vmatpush1.msra.mxu0 0.0
    %5098 = vmatprep.subr.mxu0 0.0
    %5099 = vmatpush1.msra.mxu0 0.0
    %5100 = vmatprep.subr.mxu0 0.0
    %5101 = vmatpush1.msra.mxu0 0.0
    %5102 = vmatprep.mubr.f32.mxu0 0.0
    %5103 = vmatmul.mubr.f32.gmra.mrb[0].mxu0 %v5036
    %v5104 = vpop.f32.mrb[0].mxu0
    %v5105 = vadd.f32 0.0, %v5104
    %v5106 = vpop.f32.mrb[0].mxu0
    %5107 = vdwg.mxu0
    %5108 = vrot.lane.b32.xlu0 %v4167, 120
    %v5109 = vpop.permute.xlu0 %5108
    %5110 = vrot.lane.b32.xlu0 %v4254, 120
    %v5111 = vpop.permute.xlu0 %5110
    %v5112 = vsel %vm636, %v5109, 0
    %v5114 = vsel %vm636, %v5111, 0
    %5116 = vmatprep.subr.mxu0 0.0
    %5117 = vmatpush1.xpose.msra.mxu0 %v5114
    %5118 = vmatprep.subr.mxu0 0.0
    %5119 = vmatpush1.xpose.msra.mxu0 0.0
    %5120 = vmatprep.subr.mxu0 0.0
    %5121 = vmatpush1.xpose.msra.mxu0 0.0
    %5122 = vmatprep.subr.mxu0 0.0
    %5123 = vmatpush1.xpose.msra.mxu0 0.0
    %5124 = vmatprep.subr.mxu0 0.0
    %5125 = vmatpush1.xpose.msra.mxu0 0.0
    %5126 = vmatprep.subr.mxu0 0.0
    %5127 = vmatpush1.xpose.msra.mxu0 0.0
    %5128 = vmatprep.subr.mxu0 0.0
    %5129 = vmatpush1.xpose.msra.mxu0 0.0
    %5130 = vmatprep.subr.mxu0 0.0
    %5131 = vmatpush1.xpose.msra.mxu0 0.0
    %5132 = vmatprep.subr.mxu0 0.0
    %5133 = vmatpush1.xpose.msra.mxu0 0.0
    %5134 = vmatprep.subr.mxu0 0.0
    %5135 = vmatpush1.xpose.msra.mxu0 0.0
    %5136 = vmatprep.subr.mxu0 0.0
    %5137 = vmatpush1.xpose.msra.mxu0 0.0
    %5138 = vmatprep.subr.mxu0 0.0
    %5139 = vmatpush1.xpose.msra.mxu0 0.0
    %5140 = vmatprep.subr.mxu0 0.0
    %5141 = vmatpush1.xpose.msra.mxu0 0.0
    %5142 = vmatprep.subr.mxu0 0.0
    %5143 = vmatpush1.xpose.msra.mxu0 0.0
    %5144 = vmatprep.subr.mxu0 0.0
    %5145 = vmatpush1.xpose.msra.mxu0 0.0
    %5146 = vmatprep.subr.mxu0 0.0
    %5147 = vmatpush1.xpose.msra.mxu0 0.0
    %5148 = vmatprep.subr.mxu0 0.0
    %5149 = vmatpush1.xpose.msra.mxu0 0.0
    %5150 = vmatprep.subr.mxu0 0.0
    %5151 = vmatpush1.xpose.msra.mxu0 0.0
    %5152 = vmatprep.subr.mxu0 0.0
    %5153 = vmatpush1.xpose.msra.mxu0 0.0
    %5154 = vmatprep.subr.mxu0 0.0
    %5155 = vmatpush1.xpose.msra.mxu0 0.0
    %5156 = vmatprep.subr.mxu0 0.0
    %5157 = vmatpush1.xpose.msra.mxu0 0.0
    %5158 = vmatprep.subr.mxu0 0.0
    %5159 = vmatpush1.xpose.msra.mxu0 0.0
    %5160 = vmatprep.subr.mxu0 0.0
    %5161 = vmatpush1.xpose.msra.mxu0 0.0
    %5162 = vmatprep.subr.mxu0 0.0
    %5163 = vmatpush1.xpose.msra.mxu0 0.0
    %5164 = vmatprep.subr.mxu0 0.0
    %5165 = vmatpush1.xpose.msra.mxu0 0.0
    %5166 = vmatprep.subr.mxu0 0.0
    %5167 = vmatpush1.xpose.msra.mxu0 0.0
    %5168 = vmatprep.subr.mxu0 0.0
    %5169 = vmatpush1.xpose.msra.mxu0 0.0
    %5170 = vmatprep.subr.mxu0 0.0
    %5171 = vmatpush1.xpose.msra.mxu0 0.0
    %5172 = vmatprep.subr.mxu0 0.0
    %5173 = vmatpush1.xpose.msra.mxu0 0.0
    %5174 = vmatprep.subr.mxu0 0.0
    %5175 = vmatpush1.xpose.msra.mxu0 0.0
    %5176 = vmatprep.subr.mxu0 0.0
    %5177 = vmatpush1.xpose.msra.mxu0 0.0
    %5178 = vmatprep.subr.mxu0 0.0
    %5179 = vmatpush1.xpose.msra.mxu0 0.0
    %5180 = vmatprep.mubr.f32.mxu0 0.0
    %5181 = vmatmul.mubr.f32.gmra.mrb[0].mxu0 %v5112
    %v5182 = vpop.f32.mrb[0].mxu0
    %v5183 = vadd.f32 0.0, %v5182
    %v5184 = vpop.f32.mrb[0].mxu0
    %5185 = vdwg.mxu0
    %v5186 = vmul.f32 %v5183, %v1410
    %v5187 = vadd.f32 %v5186, %v1415
    %v5188 = vmul.f32 %v5187, 0.35355338
    %v5189 = vsel %vm636, %v5188, -inf
    %5190 = vmax.xlane.f32.xlu0 %v5189
    %v5191 = vpop.xlane.xlu0 %5190
    %v5192 = vsub.f32 %v5188, %v5191
    %v5193 = vmul.f32 %v5192, 1.442695
    %v5194 = vpow.pop %v5193
    %v5195 = vsel %vm636, %v5194, 0.0
    %5196 = vadd.xlane.f32.xlu0 %v5195
    %v5197 = vpop.xlane.xlu0 %5196
    %v5198 = vrcp.pop %v5197
    %v5199 = vmul.f32 %v5194, %v5198
    %5200 = vrot.lane.b32.xlu0 %v4254, 88
    %v5201 = vpop.permute.xlu0 %5200
    %v5204 = vsel %vm636, %v5199, 0
    %5206 = vmatprep.subr.mxu0 0.0
    %5207 = vmatpush1.msra.mxu0 %v5201
    %5208 = vmatprep.subr.mxu0 0.0
    %5209 = vmatpush1.msra.mxu0 0.0
    %5210 = vmatprep.subr.mxu0 0.0
    %5211 = vmatpush1.msra.mxu0 0.0
    %5212 = vmatprep.subr.mxu0 0.0
    %5213 = vmatpush1.msra.mxu0 0.0
    %5214 = vmatprep.subr.mxu0 0.0
    %5215 = vmatpush1.msra.mxu0 0.0
    %5216 = vmatprep.subr.mxu0 0.0
    %5217 = vmatpush1.msra.mxu0 0.0
    %5218 = vmatprep.subr.mxu0 0.0
    %5219 = vmatpush1.msra.mxu0 0.0
    %5220 = vmatprep.subr.mxu0 0.0
    %5221 = vmatpush1.msra.mxu0 0.0
    %5222 = vmatprep.subr.mxu0 0.0
    %5223 = vmatpush1.msra.mxu0 0.0
    %5224 = vmatprep.subr.mxu0 0.0
    %5225 = vmatpush1.msra.mxu0 0.0
    %5226 = vmatprep.subr.mxu0 0.0
    %5227 = vmatpush1.msra.mxu0 0.0
    %5228 = vmatprep.subr.mxu0 0.0
    %5229 = vmatpush1.msra.mxu0 0.0
    %5230 = vmatprep.subr.mxu0 0.0
    %5231 = vmatpush1.msra.mxu0 0.0
    %5232 = vmatprep.subr.mxu0 0.0
    %5233 = vmatpush1.msra.mxu0 0.0
    %5234 = vmatprep.subr.mxu0 0.0
    %5235 = vmatpush1.msra.mxu0 0.0
    %5236 = vmatprep.subr.mxu0 0.0
    %5237 = vmatpush1.msra.mxu0 0.0
    %5238 = vmatprep.subr.mxu0 0.0
    %5239 = vmatpush1.msra.mxu0 0.0
    %5240 = vmatprep.subr.mxu0 0.0
    %5241 = vmatpush1.msra.mxu0 0.0
    %5242 = vmatprep.subr.mxu0 0.0
    %5243 = vmatpush1.msra.mxu0 0.0
    %5244 = vmatprep.subr.mxu0 0.0
    %5245 = vmatpush1.msra.mxu0 0.0
    %5246 = vmatprep.subr.mxu0 0.0
    %5247 = vmatpush1.msra.mxu0 0.0
    %5248 = vmatprep.subr.mxu0 0.0
    %5249 = vmatpush1.msra.mxu0 0.0
    %5250 = vmatprep.subr.mxu0 0.0
    %5251 = vmatpush1.msra.mxu0 0.0
    %5252 = vmatprep.subr.mxu0 0.0
    %5253 = vmatpush1.msra.mxu0 0.0
    %5254 = vmatprep.subr.mxu0 0.0
    %5255 = vmatpush1.msra.mxu0 0.0
    %5256 = vmatprep.subr.mxu0 0.0
    %5257 = vmatpush1.msra.mxu0 0.0
    %5258 = vmatprep.subr.mxu0 0.0
    %5259 = vmatpush1.msra.mxu0 0.0
    %5260 = vmatprep.subr.mxu0 0.0
    %5261 = vmatpush1.msra.mxu0 0.0
    %5262 = vmatprep.subr.mxu0 0.0
    %5263 = vmatpush1.msra.mxu0 0.0
    %5264 = vmatprep.subr.mxu0 0.0
    %5265 = vmatpush1.msra.mxu0 0.0
    %5266 = vmatprep.subr.mxu0 0.0
    %5267 = vmatpush1.msra.mxu0 0.0
    %5268 = vmatprep.subr.mxu0 0.0
    %5269 = vmatpush1.msra.mxu0 0.0
    %5270 = vmatprep.mubr.f32.mxu0 0.0
    %5271 = vmatmul.mubr.f32.gmra.mrb[0].mxu0 %v5204
    %v5272 = vpop.f32.mrb[0].mxu0
    %v5273 = vadd.f32 0.0, %v5272
    %v5274 = vpop.f32.mrb[0].mxu0
    %5275 = vdwg.mxu0
    %5276 = vrot.lane.b32.xlu0 %v4167, 112
    %v5277 = vpop.permute.xlu0 %5276
    %5278 = vrot.lane.b32.xlu0 %v4254, 112
    %v5279 = vpop.permute.xlu0 %5278
    %v5280 = vsel %vm636, %v5277, 0
    %v5282 = vsel %vm636, %v5279, 0
    %5284 = vmatprep.subr.mxu0 0.0
    %5285 = vmatpush1.xpose.msra.mxu0 %v5282
    %5286 = vmatprep.subr.mxu0 0.0
    %5287 = vmatpush1.xpose.msra.mxu0 0.0
    %5288 = vmatprep.subr.mxu0 0.0
    %5289 = vmatpush1.xpose.msra.mxu0 0.0
    %5290 = vmatprep.subr.mxu0 0.0
    %5291 = vmatpush1.xpose.msra.mxu0 0.0
    %5292 = vmatprep.subr.mxu0 0.0
    %5293 = vmatpush1.xpose.msra.mxu0 0.0
    %5294 = vmatprep.subr.mxu0 0.0
    %5295 = vmatpush1.xpose.msra.mxu0 0.0
    %5296 = vmatprep.subr.mxu0 0.0
    %5297 = vmatpush1.xpose.msra.mxu0 0.0
    %5298 = vmatprep.subr.mxu0 0.0
    %5299 = vmatpush1.xpose.msra.mxu0 0.0
    %5300 = vmatprep.subr.mxu0 0.0
    %5301 = vmatpush1.xpose.msra.mxu0 0.0
    %5302 = vmatprep.subr.mxu0 0.0
    %5303 = vmatpush1.xpose.msra.mxu0 0.0
    %5304 = vmatprep.subr.mxu0 0.0
    %5305 = vmatpush1.xpose.msra.mxu0 0.0
    %5306 = vmatprep.subr.mxu0 0.0
    %5307 = vmatpush1.xpose.msra.mxu0 0.0
    %5308 = vmatprep.subr.mxu0 0.0
    %5309 = vmatpush1.xpose.msra.mxu0 0.0
    %5310 = vmatprep.subr.mxu0 0.0
    %5311 = vmatpush1.xpose.msra.mxu0 0.0
    %5312 = vmatprep.subr.mxu0 0.0
    %5313 = vmatpush1.xpose.msra.mxu0 0.0
    %5314 = vmatprep.subr.mxu0 0.0
    %5315 = vmatpush1.xpose.msra.mxu0 0.0
    %5316 = vmatprep.subr.mxu0 0.0
    %5317 = vmatpush1.xpose.msra.mxu0 0.0
    %5318 = vmatprep.subr.mxu0 0.0
    %5319 = vmatpush1.xpose.msra.mxu0 0.0
    %5320 = vmatprep.subr.mxu0 0.0
    %5321 = vmatpush1.xpose.msra.mxu0 0.0
    %5322 = vmatprep.subr.mxu0 0.0
    %5323 = vmatpush1.xpose.msra.mxu0 0.0
    %5324 = vmatprep.subr.mxu0 0.0
    %5325 = vmatpush1.xpose.msra.mxu0 0.0
    %5326 = vmatprep.subr.mxu0 0.0
    %5327 = vmatpush1.xpose.msra.mxu0 0.0
    %5328 = vmatprep.subr.mxu0 0.0
    %5329 = vmatpush1.xpose.msra.mxu0 0.0
    %5330 = vmatprep.subr.mxu0 0.0
    %5331 = vmatpush1.xpose.msra.mxu0 0.0
    %5332 = vmatprep.subr.mxu0 0.0
    %5333 = vmatpush1.xpose.msra.mxu0 0.0
    %5334 = vmatprep.subr.mxu0 0.0
    %5335 = vmatpush1.xpose.msra.mxu0 0.0
    %5336 = vmatprep.subr.mxu0 0.0
    %5337 = vmatpush1.xpose.msra.mxu0 0.0
    %5338 = vmatprep.subr.mxu0 0.0
    %5339 = vmatpush1.xpose.msra.mxu0 0.0
    %5340 = vmatprep.subr.mxu0 0.0
    %5341 = vmatpush1.xpose.msra.mxu0 0.0
    %5342 = vmatprep.subr.mxu0 0.0
    %5343 = vmatpush1.xpose.msra.mxu0 0.0
    %5344 = vmatprep.subr.mxu0 0.0
    %5345 = vmatpush1.xpose.msra.mxu0 0.0
    %5346 = vmatprep.subr.mxu0 0.0
    %5347 = vmatpush1.xpose.msra.mxu0 0.0
    %5348 = vmatprep.mubr.f32.mxu0 0.0
    %5349 = vmatmul.mubr.f32.gmra.mrb[0].mxu0 %v5280
    %v5350 = vpop.f32.mrb[0].mxu0
    %v5351 = vadd.f32 0.0, %v5350
    %v5352 = vpop.f32.mrb[0].mxu0
    %5353 = vdwg.mxu0
    %v5354 = vmul.f32 %v5351, %v1410
    %v5355 = vadd.f32 %v5354, %v1415
    %v5356 = vmul.f32 %v5355, 0.35355338
    %v5357 = vsel %vm636, %v5356, -inf
    %5358 = vmax.xlane.f32.xlu0 %v5357
    %v5359 = vpop.xlane.xlu0 %5358
    %v5360 = vsub.f32 %v5356, %v5359
    %v5361 = vmul.f32 %v5360, 1.442695
    %v5362 = vpow.pop %v5361
    %v5363 = vsel %vm636, %v5362, 0.0
    %5364 = vadd.xlane.f32.xlu0 %v5363
    %v5365 = vpop.xlane.xlu0 %5364
    %v5366 = vrcp.pop %v5365
    %v5367 = vmul.f32 %v5362, %v5366
    %5368 = vrot.lane.b32.xlu0 %v4254, 80
    %v5369 = vpop.permute.xlu0 %5368
    %v5372 = vsel %vm636, %v5367, 0
    %5374 = vmatprep.subr.mxu0 0.0
    %5375 = vmatpush1.msra.mxu0 %v5369
    %5376 = vmatprep.subr.mxu0 0.0
    %5377 = vmatpush1.msra.mxu0 0.0
    %5378 = vmatprep.subr.mxu0 0.0
    %5379 = vmatpush1.msra.mxu0 0.0
    %5380 = vmatprep.subr.mxu0 0.0
    %5381 = vmatpush1.msra.mxu0 0.0
    %5382 = vmatprep.subr.mxu0 0.0
    %5383 = vmatpush1.msra.mxu0 0.0
    %5384 = vmatprep.subr.mxu0 0.0
    %5385 = vmatpush1.msra.mxu0 0.0
    %5386 = vmatprep.subr.mxu0 0.0
    %5387 = vmatpush1.msra.mxu0 0.0
    %5388 = vmatprep.subr.mxu0 0.0
    %5389 = vmatpush1.msra.mxu0 0.0
    %5390 = vmatprep.subr.mxu0 0.0
    %5391 = vmatpush1.msra.mxu0 0.0
    %5392 = vmatprep.subr.mxu0 0.0
    %5393 = vmatpush1.msra.mxu0 0.0
    %5394 = vmatprep.subr.mxu0 0.0
    %5395 = vmatpush1.msra.mxu0 0.0
    %5396 = vmatprep.subr.mxu0 0.0
    %5397 = vmatpush1.msra.mxu0 0.0
    %5398 = vmatprep.subr.mxu0 0.0
    %5399 = vmatpush1.msra.mxu0 0.0
    %5400 = vmatprep.subr.mxu0 0.0
    %5401 = vmatpush1.msra.mxu0 0.0
    %5402 = vmatprep.subr.mxu0 0.0
    %5403 = vmatpush1.msra.mxu0 0.0
    %5404 = vmatprep.subr.mxu0 0.0
    %5405 = vmatpush1.msra.mxu0 0.0
    %5406 = vmatprep.subr.mxu0 0.0
    %5407 = vmatpush1.msra.mxu0 0.0
    %5408 = vmatprep.subr.mxu0 0.0
    %5409 = vmatpush1.msra.mxu0 0.0
    %5410 = vmatprep.subr.mxu0 0.0
    %5411 = vmatpush1.msra.mxu0 0.0
    %5412 = vmatprep.subr.mxu0 0.0
    %5413 = vmatpush1.msra.mxu0 0.0
    %5414 = vmatprep.subr.mxu0 0.0
    %5415 = vmatpush1.msra.mxu0 0.0
    %5416 = vmatprep.subr.mxu0 0.0
    %5417 = vmatpush1.msra.mxu0 0.0
    %5418 = vmatprep.subr.mxu0 0.0
    %5419 = vmatpush1.msra.mxu0 0.0
    %5420 = vmatprep.subr.mxu0 0.0
    %5421 = vmatpush1.msra.mxu0 0.0
    %5422 = vmatprep.subr.mxu0 0.0
    %5423 = vmatpush1.msra.mxu0 0.0
    %5424 = vmatprep.subr.mxu0 0.0
    %5425 = vmatpush1.msra.mxu0 0.0
    %5426 = vmatprep.subr.mxu0 0.0
    %5427 = vmatpush1.msra.mxu0 0.0
    %5428 = vmatprep.subr.mxu0 0.0
    %5429 = vmatpush1.msra.mxu0 0.0
    %5430 = vmatprep.subr.mxu0 0.0
    %5431 = vmatpush1.msra.mxu0 0.0
    %5432 = vmatprep.subr.mxu0 0.0
    %5433 = vmatpush1.msra.mxu0 0.0
    %5434 = vmatprep.subr.mxu0 0.0
    %5435 = vmatpush1.msra.mxu0 0.0
    %5436 = vmatprep.subr.mxu0 0.0
    %5437 = vmatpush1.msra.mxu0 0.0
    %5438 = vmatprep.mubr.f32.mxu0 0.0
    %5439 = vmatmul.mubr.f32.gmra.mrb[0].mxu0 %v5372
    %v5440 = vpop.f32.mrb[0].mxu0
    %v5441 = vadd.f32 0.0, %v5440
    %v5442 = vpop.f32.mrb[0].mxu0
    %5443 = vdwg.mxu0
    %5444 = vrot.lane.b32.xlu0 %v4167, 104
    %v5445 = vpop.permute.xlu0 %5444
    %5446 = vrot.lane.b32.xlu0 %v4254, 104
    %v5447 = vpop.permute.xlu0 %5446
    %v5448 = vsel %vm636, %v5445, 0
    %v5450 = vsel %vm636, %v5447, 0
    %5452 = vmatprep.subr.mxu0 0.0
    %5453 = vmatpush1.xpose.msra.mxu0 %v5450
    %5454 = vmatprep.subr.mxu0 0.0
    %5455 = vmatpush1.xpose.msra.mxu0 0.0
    %5456 = vmatprep.subr.mxu0 0.0
    %5457 = vmatpush1.xpose.msra.mxu0 0.0
    %5458 = vmatprep.subr.mxu0 0.0
    %5459 = vmatpush1.xpose.msra.mxu0 0.0
    %5460 = vmatprep.subr.mxu0 0.0
    %5461 = vmatpush1.xpose.msra.mxu0 0.0
    %5462 = vmatprep.subr.mxu0 0.0
    %5463 = vmatpush1.xpose.msra.mxu0 0.0
    %5464 = vmatprep.subr.mxu0 0.0
    %5465 = vmatpush1.xpose.msra.mxu0 0.0
    %5466 = vmatprep.subr.mxu0 0.0
    %5467 = vmatpush1.xpose.msra.mxu0 0.0
    %5468 = vmatprep.subr.mxu0 0.0
    %5469 = vmatpush1.xpose.msra.mxu0 0.0
    %5470 = vmatprep.subr.mxu0 0.0
    %5471 = vmatpush1.xpose.msra.mxu0 0.0
    %5472 = vmatprep.subr.mxu0 0.0
    %5473 = vmatpush1.xpose.msra.mxu0 0.0
    %5474 = vmatprep.subr.mxu0 0.0
    %5475 = vmatpush1.xpose.msra.mxu0 0.0
    %5476 = vmatprep.subr.mxu0 0.0
    %5477 = vmatpush1.xpose.msra.mxu0 0.0
    %5478 = vmatprep.subr.mxu0 0.0
    %5479 = vmatpush1.xpose.msra.mxu0 0.0
    %5480 = vmatprep.subr.mxu0 0.0
    %5481 = vmatpush1.xpose.msra.mxu0 0.0
    %5482 = vmatprep.subr.mxu0 0.0
    %5483 = vmatpush1.xpose.msra.mxu0 0.0
    %5484 = vmatprep.subr.mxu0 0.0
    %5485 = vmatpush1.xpose.msra.mxu0 0.0
    %5486 = vmatprep.subr.mxu0 0.0
    %5487 = vmatpush1.xpose.msra.mxu0 0.0
    %5488 = vmatprep.subr.mxu0 0.0
    %5489 = vmatpush1.xpose.msra.mxu0 0.0
    %5490 = vmatprep.subr.mxu0 0.0
    %5491 = vmatpush1.xpose.msra.mxu0 0.0
    %5492 = vmatprep.subr.mxu0 0.0
    %5493 = vmatpush1.xpose.msra.mxu0 0.0
    %5494 = vmatprep.subr.mxu0 0.0
    %5495 = vmatpush1.xpose.msra.mxu0 0.0
    %5496 = vmatprep.subr.mxu0 0.0
    %5497 = vmatpush1.xpose.msra.mxu0 0.0
    %5498 = vmatprep.subr.mxu0 0.0
    %5499 = vmatpush1.xpose.msra.mxu0 0.0
    %5500 = vmatprep.subr.mxu0 0.0
    %5501 = vmatpush1.xpose.msra.mxu0 0.0
    %5502 = vmatprep.subr.mxu0 0.0
    %5503 = vmatpush1.xpose.msra.mxu0 0.0
    %5504 = vmatprep.subr.mxu0 0.0
    %5505 = vmatpush1.xpose.msra.mxu0 0.0
    %5506 = vmatprep.subr.mxu0 0.0
    %5507 = vmatpush1.xpose.msra.mxu0 0.0
    %5508 = vmatprep.subr.mxu0 0.0
    %5509 = vmatpush1.xpose.msra.mxu0 0.0
    %5510 = vmatprep.subr.mxu0 0.0
    %5511 = vmatpush1.xpose.msra.mxu0 0.0
    %5512 = vmatprep.subr.mxu0 0.0
    %5513 = vmatpush1.xpose.msra.mxu0 0.0
    %5514 = vmatprep.subr.mxu0 0.0
    %5515 = vmatpush1.xpose.msra.mxu0 0.0
    %5516 = vmatprep.mubr.f32.mxu0 0.0
    %5517 = vmatmul.mubr.f32.gmra.mrb[0].mxu0 %v5448
    %v5518 = vpop.f32.mrb[0].mxu0
    %v5519 = vadd.f32 0.0, %v5518
    %v5520 = vpop.f32.mrb[0].mxu0
    %5521 = vdwg.mxu0
    %v5522 = vmul.f32 %v5519, %v1410
    %v5523 = vadd.f32 %v5522, %v1415
    %v5524 = vmul.f32 %v5523, 0.35355338
    %v5525 = vsel %vm636, %v5524, -inf
    %5526 = vmax.xlane.f32.xlu0 %v5525
    %v5527 = vpop.xlane.xlu0 %5526
    %v5528 = vsub.f32 %v5524, %v5527
    %v5529 = vmul.f32 %v5528, 1.442695
    %v5530 = vpow.pop %v5529
    %v5531 = vsel %vm636, %v5530, 0.0
    %5532 = vadd.xlane.f32.xlu0 %v5531
    %v5533 = vpop.xlane.xlu0 %5532
    %v5534 = vrcp.pop %v5533
    %v5535 = vmul.f32 %v5530, %v5534
    %5536 = vrot.lane.b32.xlu0 %v4254, 72
    %v5537 = vpop.permute.xlu0 %5536
    %v5540 = vsel %vm636, %v5535, 0
    %5542 = vmatprep.subr.mxu0 0.0
    %5543 = vmatpush1.msra.mxu0 %v5537
    %5544 = vmatprep.subr.mxu0 0.0
    %5545 = vmatpush1.msra.mxu0 0.0
    %5546 = vmatprep.subr.mxu0 0.0
    %5547 = vmatpush1.msra.mxu0 0.0
    %5548 = vmatprep.subr.mxu0 0.0
    %5549 = vmatpush1.msra.mxu0 0.0
    %5550 = vmatprep.subr.mxu0 0.0
    %5551 = vmatpush1.msra.mxu0 0.0
    %5552 = vmatprep.subr.mxu0 0.0
    %5553 = vmatpush1.msra.mxu0 0.0
    %5554 = vmatprep.subr.mxu0 0.0
    %5555 = vmatpush1.msra.mxu0 0.0
    %5556 = vmatprep.subr.mxu0 0.0
    %5557 = vmatpush1.msra.mxu0 0.0
    %5558 = vmatprep.subr.mxu0 0.0
    %5559 = vmatpush1.msra.mxu0 0.0
    %5560 = vmatprep.subr.mxu0 0.0
    %5561 = vmatpush1.msra.mxu0 0.0
    %5562 = vmatprep.subr.mxu0 0.0
    %5563 = vmatpush1.msra.mxu0 0.0
    %5564 = vmatprep.subr.mxu0 0.0
    %5565 = vmatpush1.msra.mxu0 0.0
    %5566 = vmatprep.subr.mxu0 0.0
    %5567 = vmatpush1.msra.mxu0 0.0
    %5568 = vmatprep.subr.mxu0 0.0
    %5569 = vmatpush1.msra.mxu0 0.0
    %5570 = vmatprep.subr.mxu0 0.0
    %5571 = vmatpush1.msra.mxu0 0.0
    %5572 = vmatprep.subr.mxu0 0.0
    %5573 = vmatpush1.msra.mxu0 0.0
    %5574 = vmatprep.subr.mxu0 0.0
    %5575 = vmatpush1.msra.mxu0 0.0
    %5576 = vmatprep.subr.mxu0 0.0
    %5577 = vmatpush1.msra.mxu0 0.0
    %5578 = vmatprep.subr.mxu0 0.0
    %5579 = vmatpush1.msra.mxu0 0.0
    %5580 = vmatprep.subr.mxu0 0.0
    %5581 = vmatpush1.msra.mxu0 0.0
    %5582 = vmatprep.subr.mxu0 0.0
    %5583 = vmatpush1.msra.mxu0 0.0
    %5584 = vmatprep.subr.mxu0 0.0
    %5585 = vmatpush1.msra.mxu0 0.0
    %5586 = vmatprep.subr.mxu0 0.0
    %5587 = vmatpush1.msra.mxu0 0.0
    %5588 = vmatprep.subr.mxu0 0.0
    %5589 = vmatpush1.msra.mxu0 0.0
    %5590 = vmatprep.subr.mxu0 0.0
    %5591 = vmatpush1.msra.mxu0 0.0
    %5592 = vmatprep.subr.mxu0 0.0
    %5593 = vmatpush1.msra.mxu0 0.0
    %5594 = vmatprep.subr.mxu0 0.0
    %5595 = vmatpush1.msra.mxu0 0.0
    %5596 = vmatprep.subr.mxu0 0.0
    %5597 = vmatpush1.msra.mxu0 0.0
    %5598 = vmatprep.subr.mxu0 0.0
    %5599 = vmatpush1.msra.mxu0 0.0
    %5600 = vmatprep.subr.mxu0 0.0
    %5601 = vmatpush1.msra.mxu0 0.0
    %5602 = vmatprep.subr.mxu0 0.0
    %5603 = vmatpush1.msra.mxu0 0.0
    %5604 = vmatprep.subr.mxu0 0.0
    %5605 = vmatpush1.msra.mxu0 0.0
    %5606 = vmatprep.mubr.f32.mxu0 0.0
    %5607 = vmatmul.mubr.f32.gmra.mrb[0].mxu0 %v5540
    %v5608 = vpop.f32.mrb[0].mxu0
    %v5609 = vadd.f32 0.0, %v5608
    %v5610 = vpop.f32.mrb[0].mxu0
    %5611 = vdwg.mxu0
    %5613 = vrot.lane.b32.xlu0 %v5273, 8
    %v5614 = vpop.permute.xlu0 %5613
    %5617 = vrot.lane.b32.xlu0 %v5441, 16
    %v5618 = vpop.permute.xlu0 %5617
    %5621 = vrot.lane.b32.xlu0 %v5609, 24
    %v5622 = vpop.permute.xlu0 %5621
    %v5624 = vsel %vm636, %v5105, %v5614
    %v5625 = vsel %vm1326, %v5624, %v5618
    %v5626 = vsel %vm1328, %v5625, %v5622
    %v5628 = vlaneseq
    %v5629 = vshrl.u32 %v5628, 7
    %v5630 = vsub.s32 0, %v5629
    %v5631 = vrot.slane %v405, %v5630
    %v5634 = vsel %vm549, %v4941, 0
    %v5637 = vsel %vm549, %v5626, 0
    %5639 = vmatprep.subr.mxu0 0.0
    %5640 = vmatpush1.msra.mxu0 %v401
    %5641 = vmatprep.subr.mxu0 0.0
    %5642 = vmatpush1.msra.mxu0 %v402
    %5643 = vmatprep.subr.mxu0 0.0
    %5644 = vmatpush1.msra.mxu0 %v403
    %5645 = vmatprep.subr.mxu0 0.0
    %5646 = vmatpush1.msra.mxu0 %v404
    %5647 = vmatprep.subr.mxu0 0.0
    %5648 = vmatpush1.msra.mxu0 0.0
    %5649 = vmatprep.subr.mxu0 0.0
    %5650 = vmatpush1.msra.mxu0 0.0
    %5651 = vmatprep.subr.mxu0 0.0
    %5652 = vmatpush1.msra.mxu0 0.0
    %5653 = vmatprep.subr.mxu0 0.0
    %5654 = vmatpush1.msra.mxu0 0.0
    %5655 = vmatprep.subr.mxu0 0.0
    %5656 = vmatpush1.msra.mxu0 0.0
    %5657 = vmatprep.subr.mxu0 0.0
    %5658 = vmatpush1.msra.mxu0 0.0
    %5659 = vmatprep.subr.mxu0 0.0
    %5660 = vmatpush1.msra.mxu0 0.0
    %5661 = vmatprep.subr.mxu0 0.0
    %5662 = vmatpush1.msra.mxu0 0.0
    %5663 = vmatprep.subr.mxu0 0.0
    %5664 = vmatpush1.msra.mxu0 0.0
    %5665 = vmatprep.subr.mxu0 0.0
    %5666 = vmatpush1.msra.mxu0 0.0
    %5667 = vmatprep.subr.mxu0 0.0
    %5668 = vmatpush1.msra.mxu0 0.0
    %5669 = vmatprep.subr.mxu0 0.0
    %5670 = vmatpush1.msra.mxu0 0.0
    %5671 = vmatprep.subr.mxu0 0.0
    %5672 = vmatpush1.msra.mxu0 0.0
    %5673 = vmatprep.subr.mxu0 0.0
    %5674 = vmatpush1.msra.mxu0 0.0
    %5675 = vmatprep.subr.mxu0 0.0
    %5676 = vmatpush1.msra.mxu0 0.0
    %5677 = vmatprep.subr.mxu0 0.0
    %5678 = vmatpush1.msra.mxu0 0.0
    %5679 = vmatprep.subr.mxu0 0.0
    %5680 = vmatpush1.msra.mxu0 0.0
    %5681 = vmatprep.subr.mxu0 0.0
    %5682 = vmatpush1.msra.mxu0 0.0
    %5683 = vmatprep.subr.mxu0 0.0
    %5684 = vmatpush1.msra.mxu0 0.0
    %5685 = vmatprep.subr.mxu0 0.0
    %5686 = vmatpush1.msra.mxu0 0.0
    %5687 = vmatprep.subr.mxu0 0.0
    %5688 = vmatpush1.msra.mxu0 0.0
    %5689 = vmatprep.subr.mxu0 0.0
    %5690 = vmatpush1.msra.mxu0 0.0
    %5691 = vmatprep.subr.mxu0 0.0
    %5692 = vmatpush1.msra.mxu0 0.0
    %5693 = vmatprep.subr.mxu0 0.0
    %5694 = vmatpush1.msra.mxu0 0.0
    %5695 = vmatprep.subr.mxu0 0.0
    %5696 = vmatpush1.msra.mxu0 0.0
    %5697 = vmatprep.subr.mxu0 0.0
    %5698 = vmatpush1.msra.mxu0 0.0
    %5699 = vmatprep.subr.mxu0 0.0
    %5700 = vmatpush1.msra.mxu0 0.0
    %5701 = vmatprep.subr.mxu0 0.0
    %5702 = vmatpush1.msra.mxu0 0.0
    %5703 = vmatprep.mubr.f32.mxu0 0.0
    %5704 = vmatmul.mubr.f32.gmra.mrb[0].mxu0 %v5634
    %v5705 = vpop.f32.mrb[0].mxu0
    %v5706 = vadd.f32 %v5631, %v5705
    %v5707 = vpop.f32.mrb[0].mxu0
    %5708 = vmatprep.mubr.f32.mxu0 0.0
    %5709 = vmatmul.mubr.f32.gmra.mrb[0].mxu0 %v5637
    %v5710 = vpop.f32.mrb[0].mxu0
    %v5711 = vadd.f32 %v5631, %v5710
    %v5712 = vpop.f32.mrb[0].mxu0
    %5713 = vdwg.mxu0
    %v5714 = vadd.f32 %v5706, %v4081
    %v5715 = vadd.f32 %v5711, %v4082
    %v5716 = vsel %vm549, %v5714, 0.0
    %5717 = vadd.xlane.f32.xlu0 %v5716
    %v5718 = vpop.xlane.xlu0 %5717
    %v5719 = vsel %vm549, %v5715, 0.0
    %5720 = vadd.xlane.f32.xlu0 %v5719
    %v5721 = vpop.xlane.xlu0 %5720
    %v5722 = vmul.f32 %v5718, %v2119
    %v5723 = vmul.f32 %v5721, %v2119
    %v5724 = vsub.f32 %v5714, %v5722
    %v5725 = vsub.f32 %v5715, %v5723
    %v5726 = vmul.f32 %v5724, %v5724
    %v5727 = vmul.f32 %v5725, %v5725
    %v5728 = vsel %vm549, %v5726, 0.0
    %5729 = vadd.xlane.f32.xlu0 %v5728
    %v5730 = vpop.xlane.xlu0 %5729
    %v5731 = vsel %vm549, %v5727, 0.0
    %5732 = vadd.xlane.f32.xlu0 %v5731
    %v5733 = vpop.xlane.xlu0 %5732
    %v5734 = vmul.f32 %v5730, %v2119
    %v5735 = vmul.f32 %v5733, %v2119
    %v5736 = vadd.f32 %v5734, 1e-05
    %v5737 = vadd.f32 %v5735, 1e-05
    %v5738 = vrsqrt.pop %v5736
    %v5739 = vrsqrt.pop %v5737
    %v5740 = vmul.f32 %v5724, %v5738
    %v5741 = vmul.f32 %v5725, %v5739
    %v5743 = vlaneseq
    %v5744 = vshrl.u32 %v5743, 7
    %v5745 = vsub.s32 0, %v5744
    %v5746 = vrot.slane %v406, %v5745
    %v5748 = vmul.f32 %v5740, %v5746
    %v5749 = vmul.f32 %v5741, %v5746
    %v5751 = vlaneseq
    %v5752 = vshrl.u32 %v5751, 7
    %v5753 = vsub.s32 0, %v5752
    %v5754 = vrot.slane %v407, %v5753
    %v5756 = vadd.f32 %v5748, %v5754
    %v5757 = vadd.f32 %v5749, %v5754
    %v5759 = vlaneseq
    %v5760 = vshrl.u32 %v5759, 7
    %v5761 = vsub.s32 0, %v5760
    %v5762 = vrot.slane %v412, %v5761
    %v5765 = vsel %vm549, %v5756, 0
    %v5768 = vsel %vm549, %v5757, 0
    %5770 = vmatprep.subr.mxu0 0.0
    %5771 = vmatpush1.msra.mxu0 %v408
    %5772 = vmatprep.subr.mxu0 0.0
    %5773 = vmatpush1.msra.mxu0 %v409
    %5774 = vmatprep.subr.mxu0 0.0
    %5775 = vmatpush1.msra.mxu0 %v410
    %5776 = vmatprep.subr.mxu0 0.0
    %5777 = vmatpush1.msra.mxu0 %v411
    %5778 = vmatprep.subr.mxu0 0.0
    %5779 = vmatpush1.msra.mxu0 0.0
    %5780 = vmatprep.subr.mxu0 0.0
    %5781 = vmatpush1.msra.mxu0 0.0
    %5782 = vmatprep.subr.mxu0 0.0
    %5783 = vmatpush1.msra.mxu0 0.0
    %5784 = vmatprep.subr.mxu0 0.0
    %5785 = vmatpush1.msra.mxu0 0.0
    %5786 = vmatprep.subr.mxu0 0.0
    %5787 = vmatpush1.msra.mxu0 0.0
    %5788 = vmatprep.subr.mxu0 0.0
    %5789 = vmatpush1.msra.mxu0 0.0
    %5790 = vmatprep.subr.mxu0 0.0
    %5791 = vmatpush1.msra.mxu0 0.0
    %5792 = vmatprep.subr.mxu0 0.0
    %5793 = vmatpush1.msra.mxu0 0.0
    %5794 = vmatprep.subr.mxu0 0.0
    %5795 = vmatpush1.msra.mxu0 0.0
    %5796 = vmatprep.subr.mxu0 0.0
    %5797 = vmatpush1.msra.mxu0 0.0
    %5798 = vmatprep.subr.mxu0 0.0
    %5799 = vmatpush1.msra.mxu0 0.0
    %5800 = vmatprep.subr.mxu0 0.0
    %5801 = vmatpush1.msra.mxu0 0.0
    %5802 = vmatprep.subr.mxu0 0.0
    %5803 = vmatpush1.msra.mxu0 0.0
    %5804 = vmatprep.subr.mxu0 0.0
    %5805 = vmatpush1.msra.mxu0 0.0
    %5806 = vmatprep.subr.mxu0 0.0
    %5807 = vmatpush1.msra.mxu0 0.0
    %5808 = vmatprep.subr.mxu0 0.0
    %5809 = vmatpush1.msra.mxu0 0.0
    %5810 = vmatprep.subr.mxu0 0.0
    %5811 = vmatpush1.msra.mxu0 0.0
    %5812 = vmatprep.subr.mxu0 0.0
    %5813 = vmatpush1.msra.mxu0 0.0
    %5814 = vmatprep.subr.mxu0 0.0
    %5815 = vmatpush1.msra.mxu0 0.0
    %5816 = vmatprep.subr.mxu0 0.0
    %5817 = vmatpush1.msra.mxu0 0.0
    %5818 = vmatprep.subr.mxu0 0.0
    %5819 = vmatpush1.msra.mxu0 0.0
    %5820 = vmatprep.subr.mxu0 0.0
    %5821 = vmatpush1.msra.mxu0 0.0
    %5822 = vmatprep.subr.mxu0 0.0
    %5823 = vmatpush1.msra.mxu0 0.0
    %5824 = vmatprep.subr.mxu0 0.0
    %5825 = vmatpush1.msra.mxu0 0.0
    %5826 = vmatprep.subr.mxu0 0.0
    %5827 = vmatpush1.msra.mxu0 0.0
    %5828 = vmatprep.subr.mxu0 0.0
    %5829 = vmatpush1.msra.mxu0 0.0
    %5830 = vmatprep.subr.mxu0 0.0
    %5831 = vmatpush1.msra.mxu0 0.0
    %5832 = vmatprep.subr.mxu0 0.0
    %5833 = vmatpush1.msra.mxu0 0.0
    %5834 = vmatprep.mubr.f32.mxu0 0.0
    %5835 = vmatmul.mubr.f32.gmra.mrb[0].mxu0 %v5765
    %v5836 = vpop.f32.mrb[0].mxu0
    %v5837 = vadd.f32 %v5762, %v5836
    %v5838 = vpop.f32.mrb[0].mxu0
    %5839 = vmatprep.mubr.f32.mxu0 0.0
    %5840 = vmatmul.mubr.f32.gmra.mrb[0].mxu0 %v5768
    %v5841 = vpop.f32.mrb[0].mxu0
    %v5842 = vadd.f32 %v5762, %v5841
    %v5843 = vpop.f32.mrb[0].mxu0
    %5844 = vdwg.mxu0
    %v5845 = vmax.f32 %v5837, 0.0
    %v5846 = vmax.f32 %v5842, 0.0
    %v5848 = vlaneseq
    %v5849 = vshrl.u32 %v5848, 7
    %v5850 = vsub.s32 0, %v5849
    %v5851 = vrot.slane %v421, %v5850
    %v5854 = vsel %vm2251, %v5845, 0
    %v5857 = vsel %vm2251, %v5846, 0
    %5859 = vmatprep.subr.mxu0 0.0
    %5860 = vmatpush1.msra.mxu0 %v413
    %5861 = vmatprep.subr.mxu0 0.0
    %5862 = vmatpush1.msra.mxu0 %v414
    %5863 = vmatprep.subr.mxu0 0.0
    %5864 = vmatpush1.msra.mxu0 %v415
    %5865 = vmatprep.subr.mxu0 0.0
    %5866 = vmatpush1.msra.mxu0 %v416
    %5867 = vmatprep.subr.mxu0 0.0
    %5868 = vmatpush1.msra.mxu0 %v417
    %5869 = vmatprep.subr.mxu0 0.0
    %5870 = vmatpush1.msra.mxu0 %v418
    %5871 = vmatprep.subr.mxu0 0.0
    %5872 = vmatpush1.msra.mxu0 %v419
    %5873 = vmatprep.subr.mxu0 0.0
    %5874 = vmatpush1.msra.mxu0 %v420
    %5875 = vmatprep.subr.mxu0 0.0
    %5876 = vmatpush1.msra.mxu0 0.0
    %5877 = vmatprep.subr.mxu0 0.0
    %5878 = vmatpush1.msra.mxu0 0.0
    %5879 = vmatprep.subr.mxu0 0.0
    %5880 = vmatpush1.msra.mxu0 0.0
    %5881 = vmatprep.subr.mxu0 0.0
    %5882 = vmatpush1.msra.mxu0 0.0
    %5883 = vmatprep.subr.mxu0 0.0
    %5884 = vmatpush1.msra.mxu0 0.0
    %5885 = vmatprep.subr.mxu0 0.0
    %5886 = vmatpush1.msra.mxu0 0.0
    %5887 = vmatprep.subr.mxu0 0.0
    %5888 = vmatpush1.msra.mxu0 0.0
    %5889 = vmatprep.subr.mxu0 0.0
    %5890 = vmatpush1.msra.mxu0 0.0
    %5891 = vmatprep.subr.mxu0 0.0
    %5892 = vmatpush1.msra.mxu0 0.0
    %5893 = vmatprep.subr.mxu0 0.0
    %5894 = vmatpush1.msra.mxu0 0.0
    %5895 = vmatprep.subr.mxu0 0.0
    %5896 = vmatpush1.msra.mxu0 0.0
    %5897 = vmatprep.subr.mxu0 0.0
    %5898 = vmatpush1.msra.mxu0 0.0
    %5899 = vmatprep.subr.mxu0 0.0
    %5900 = vmatpush1.msra.mxu0 0.0
    %5901 = vmatprep.subr.mxu0 0.0
    %5902 = vmatpush1.msra.mxu0 0.0
    %5903 = vmatprep.subr.mxu0 0.0
    %5904 = vmatpush1.msra.mxu0 0.0
    %5905 = vmatprep.subr.mxu0 0.0
    %5906 = vmatpush1.msra.mxu0 0.0
    %5907 = vmatprep.subr.mxu0 0.0
    %5908 = vmatpush1.msra.mxu0 0.0
    %5909 = vmatprep.subr.mxu0 0.0
    %5910 = vmatpush1.msra.mxu0 0.0
    %5911 = vmatprep.subr.mxu0 0.0
    %5912 = vmatpush1.msra.mxu0 0.0
    %5913 = vmatprep.subr.mxu0 0.0
    %5914 = vmatpush1.msra.mxu0 0.0
    %5915 = vmatprep.subr.mxu0 0.0
    %5916 = vmatpush1.msra.mxu0 0.0
    %5917 = vmatprep.subr.mxu0 0.0
    %5918 = vmatpush1.msra.mxu0 0.0
    %5919 = vmatprep.subr.mxu0 0.0
    %5920 = vmatpush1.msra.mxu0 0.0
    %5921 = vmatprep.subr.mxu0 0.0
    %5922 = vmatpush1.msra.mxu0 0.0
    %5923 = vmatprep.mubr.f32.mxu0 0.0
    %5924 = vmatmul.mubr.f32.gmra.mrb[0].mxu0 %v5854
    %v5925 = vpop.f32.mrb[0].mxu0
    %v5926 = vadd.f32 %v5851, %v5925
    %v5927 = vpop.f32.mrb[0].mxu0
    %5928 = vmatprep.mubr.f32.mxu0 0.0
    %5929 = vmatmul.mubr.f32.gmra.mrb[0].mxu0 %v5857
    %v5930 = vpop.f32.mrb[0].mxu0
    %v5931 = vadd.f32 %v5851, %v5930
    %v5932 = vpop.f32.mrb[0].mxu0
    %5933 = vdwg.mxu0
    %v5934 = vadd.f32 %v5926, %v5756
    %v5935 = vadd.f32 %v5931, %v5757
    %v5936 = vsel %vm549, %v5934, 0.0
    %5937 = vadd.xlane.f32.xlu0 %v5936
    %v5938 = vpop.xlane.xlu0 %5937
    %v5939 = vsel %vm549, %v5935, 0.0
    %5940 = vadd.xlane.f32.xlu0 %v5939
    %v5941 = vpop.xlane.xlu0 %5940
    %v5942 = vmul.f32 %v5938, %v2119
    %v5943 = vmul.f32 %v5941, %v2119
    %v5944 = vsub.f32 %v5934, %v5942
    %v5945 = vsub.f32 %v5935, %v5943
    %v5946 = vmul.f32 %v5944, %v5944
    %v5947 = vmul.f32 %v5945, %v5945
    %v5948 = vsel %vm549, %v5946, 0.0
    %5949 = vadd.xlane.f32.xlu0 %v5948
    %v5950 = vpop.xlane.xlu0 %5949
    %v5951 = vsel %vm549, %v5947, 0.0
    %5952 = vadd.xlane.f32.xlu0 %v5951
    %v5953 = vpop.xlane.xlu0 %5952
    %v5954 = vmul.f32 %v5950, %v2119
    %v5955 = vmul.f32 %v5953, %v2119
    %v5956 = vadd.f32 %v5954, 1e-05
    %v5957 = vadd.f32 %v5955, 1e-05
    %v5958 = vrsqrt.pop %v5956
    %v5959 = vrsqrt.pop %v5957
    %v5960 = vmul.f32 %v5944, %v5958
    %v5961 = vmul.f32 %v5945, %v5959
    %v5963 = vlaneseq
    %v5964 = vshrl.u32 %v5963, 7
    %v5965 = vsub.s32 0, %v5964
    %v5966 = vrot.slane %v422, %v5965
    %v5968 = vmul.f32 %v5960, %v5966
    %v5969 = vmul.f32 %v5961, %v5966
    %v5971 = vlaneseq
    %v5972 = vshrl.u32 %v5971, 7
    %v5973 = vsub.s32 0, %v5972
    %v5974 = vrot.slane %v423, %v5973
    %v5976 = vadd.f32 %v5968, %v5974
    %v5977 = vadd.f32 %v5969, %v5974
    %v5979 = vlaneseq
    %v5980 = vshrl.u32 %v5979, 7
    %v5981 = vsub.s32 0, %v5980
    %v5982 = vrot.slane %v428, %v5981
    %v5985 = vsel %vm549, %v5976, 0
    %v5988 = vsel %vm549, %v5977, 0
    %5990 = vmatprep.subr.mxu0 0.0
    %5991 = vmatpush1.msra.mxu0 %v424
    %5992 = vmatprep.subr.mxu0 0.0
    %5993 = vmatpush1.msra.mxu0 %v425
    %5994 = vmatprep.subr.mxu0 0.0
    %5995 = vmatpush1.msra.mxu0 %v426
    %5996 = vmatprep.subr.mxu0 0.0
    %5997 = vmatpush1.msra.mxu0 %v427
    %5998 = vmatprep.subr.mxu0 0.0
    %5999 = vmatpush1.msra.mxu0 0.0
    %6000 = vmatprep.subr.mxu0 0.0
    %6001 = vmatpush1.msra.mxu0 0.0
    %6002 = vmatprep.subr.mxu0 0.0
    %6003 = vmatpush1.msra.mxu0 0.0
    %6004 = vmatprep.subr.mxu0 0.0
    %6005 = vmatpush1.msra.mxu0 0.0
    %6006 = vmatprep.subr.mxu0 0.0
    %6007 = vmatpush1.msra.mxu0 0.0
    %6008 = vmatprep.subr.mxu0 0.0
    %6009 = vmatpush1.msra.mxu0 0.0
    %6010 = vmatprep.subr.mxu0 0.0
    %6011 = vmatpush1.msra.mxu0 0.0
    %6012 = vmatprep.subr.mxu0 0.0
    %6013 = vmatpush1.msra.mxu0 0.0
    %6014 = vmatprep.subr.mxu0 0.0
    %6015 = vmatpush1.msra.mxu0 0.0
    %6016 = vmatprep.subr.mxu0 0.0
    %6017 = vmatpush1.msra.mxu0 0.0
    %6018 = vmatprep.subr.mxu0 0.0
    %6019 = vmatpush1.msra.mxu0 0.0
    %6020 = vmatprep.subr.mxu0 0.0
    %6021 = vmatpush1.msra.mxu0 0.0
    %6022 = vmatprep.subr.mxu0 0.0
    %6023 = vmatpush1.msra.mxu0 0.0
    %6024 = vmatprep.subr.mxu0 0.0
    %6025 = vmatpush1.msra.mxu0 0.0
    %6026 = vmatprep.subr.mxu0 0.0
    %6027 = vmatpush1.msra.mxu0 0.0
    %6028 = vmatprep.subr.mxu0 0.0
    %6029 = vmatpush1.msra.mxu0 0.0
    %6030 = vmatprep.subr.mxu0 0.0
    %6031 = vmatpush1.msra.mxu0 0.0
    %6032 = vmatprep.subr.mxu0 0.0
    %6033 = vmatpush1.msra.mxu0 0.0
    %6034 = vmatprep.subr.mxu0 0.0
    %6035 = vmatpush1.msra.mxu0 0.0
    %6036 = vmatprep.subr.mxu0 0.0
    %6037 = vmatpush1.msra.mxu0 0.0
    %6038 = vmatprep.subr.mxu0 0.0
    %6039 = vmatpush1.msra.mxu0 0.0
    %6040 = vmatprep.subr.mxu0 0.0
    %6041 = vmatpush1.msra.mxu0 0.0
    %6042 = vmatprep.subr.mxu0 0.0
    %6043 = vmatpush1.msra.mxu0 0.0
    %6044 = vmatprep.subr.mxu0 0.0
    %6045 = vmatpush1.msra.mxu0 0.0
    %6046 = vmatprep.subr.mxu0 0.0
    %6047 = vmatpush1.msra.mxu0 0.0
    %6048 = vmatprep.subr.mxu0 0.0
    %6049 = vmatpush1.msra.mxu0 0.0
    %6050 = vmatprep.subr.mxu0 0.0
    %6051 = vmatpush1.msra.mxu0 0.0
    %6052 = vmatprep.subr.mxu0 0.0
    %6053 = vmatpush1.msra.mxu0 0.0
    %6054 = vmatprep.mubr.f32.mxu0 0.0
    %6055 = vmatmul.mubr.f32.gmra.mrb[0].mxu0 %v5985
    %v6056 = vpop.f32.mrb[0].mxu0
    %v6057 = vadd.f32 %v5982, %v6056
    %v6058 = vpop.f32.mrb[0].mxu0
    %6059 = vmatprep.mubr.f32.mxu0 0.0
    %6060 = vmatmul.mubr.f32.gmra.mrb[0].mxu0 %v5988
    %v6061 = vpop.f32.mrb[0].mxu0
    %v6062 = vadd.f32 %v5982, %v6061
    %v6063 = vpop.f32.mrb[0].mxu0
    %6064 = vdwg.mxu0
    %6065 = vst [vmem:[%s85] sm:$0xff] %v6057
    %6066 = vst [vmem:[%s85 + $0x8] sm:$0xff] %v6062
    // Predicated region
    $region230: #{custom_transformer.1} parent=1 // pred_check
      _
    $region231: #{custom_transformer.1} parent=1 // pred_check_branch
      %6068 = sbr.rel (0) target = $region233
    $region232: #{custom_transformer.1} parent=1 // pred_region
      _
    $region233: #{custom_transformer.1} parent=1 // pred_fallthru
      _
    // Predicated region
    $region234: #{custom_transformer.1} parent=1 // pred_check
      _
    $region235: #{custom_transformer.1} parent=1 // pred_check_branch
      %6070 = sbr.rel (0) target = $region237
    $region236: #{custom_transformer.1} parent=1 // pred_region
      %s6072 = ssub.s32 256, 256
      %6073 = vsyncadd [#allocation4], %s6072
      %s6074 = sshll.u32 [#allocation26], 4
      %s6075 = int_to_ptr.vmem [resolvable:$true] %s6074
      %6080 = dma.vmem_to_hbm [thread:$0]  %s6075, 256, %s87, [#allocation4], 128, 128, 8
    $region237: #{custom_transformer.1} parent=1 // pred_fallthru
      _
    // Predicated region
    $region238: #{custom_transformer.1} parent=1 // pred_check
      _
    $region239: #{custom_transformer.1} parent=1 // pred_check_branch
      %6082 = sbr.rel (0) target = $region241
    $region240: #{custom_transformer.1} parent=1 // pred_region
      _
    $region241: #{custom_transformer.1} parent=1 // pred_fallthru
      _
    // Predicated region
    $region242: #{custom_transformer.1} parent=1 // pred_check
      _
    $region243: #{custom_transformer.1} parent=1 // pred_check_branch
      %6084 = sbr.rel (0) target = $region245
    $region244: #{custom_transformer.1} parent=1 // pred_region
      %6085 = dma.done [#allocation4], 256
    $region245: #{custom_transformer.1} parent=1 // pred_fallthru
      _
    %6086 = vsyncpa [#allocation3], 1
    %6087 = vsyncpa [#allocation6], 1
    %6088 = vsyncpa [#allocation9], 1
    %6089 = vsyncpa [#allocation12], 1
    %6090 = vsyncpa [#allocation15], 1
    %6091 = vsyncpa [#allocation18], 1
    %6092 = vsyncpa [#allocation21], 1
    %6093 = vsyncpa [#allocation24], 1
    %6094 = vsyncpa [#allocation4], 1

</llo_original>
